<compile_context>
chip_gen: v7x
topology: tpu7x:2x2x1
jax: 0.10.0
libtpu: 0.0.40
codegen_flags: <defaults>
</compile_context>

<pallas_src>
import math

import jax
import jax.numpy as jnp
from jax.experimental import pallas as pl
from jax.experimental.pallas import tpu as pltpu

# ---- module hyper-parameters (PyTorch __init__ defaults) --------------------
D_FEAT = 6
D_MODEL = 8
NHEAD = 4
NUM_LAYERS = 2
DIM_FF = 2048          # nn.TransformerEncoderLayer default dim_feedforward
LN_EPS = 1e-5
HEAD_DIM = D_MODEL // NHEAD

OUT_LANES = 128                         # lane-dense output width
VMEM_LIMIT_BYTES = 48 * 1024 * 1024     # fits under v7x's 64 MiB physical VMEM


def _layer_norm(x, g, b):
    mu = jnp.mean(x, axis=-1, keepdims=True)
    var = jnp.mean((x - mu) ** 2, axis=-1, keepdims=True)
    return (x - mu) * jax.lax.rsqrt(var + LN_EPS) * g + b


# ----------------------------- Pallas kernel ---------------------------------
def transformer_kernel(src_ref, pe_ref,
                       w_feat_ref, b_feat_ref,
                       in_w_ref, in_b_ref, out_w_ref, out_b_ref,
                       ln1_w_ref, ln1_b_ref, ln2_w_ref, ln2_b_ref,
                       ff1_w_ref, ff1_b_ref, ff2_w_ref, ff2_b_ref,
                       w_dec_ref, b_dec_ref, out_ref):
    f32 = jnp.float32
    B, T, F = src_ref.shape                      # tile_n sequences per grid step
    E, H, hd = D_MODEL, NHEAD, HEAD_DIM
    R = B * T
    scale = 1.0 / math.sqrt(hd)

    # feature_layer: Linear(d_feat -> d_model), then add positional encoding.
    src2 = src_ref[...].reshape(R, F)
    x = jnp.dot(src2, w_feat_ref[...], preferred_element_type=f32) + b_feat_ref[...]
    pe = jnp.broadcast_to(pe_ref[...][None, :, :], (B, T, E)).reshape(R, E)
    x = x + pe                                                        # [R, E]

    for l in range(NUM_LAYERS):                  # static unroll over 2 layers
        # ---- multi-head self attention (post-norm TransformerEncoderLayer) ----
        qkv = jnp.dot(x, in_w_ref[l], preferred_element_type=f32) + in_b_ref[l]
        q3 = (qkv[:, 0:E] * scale).reshape(B, T, E)
        k3 = qkv[:, E:2 * E].reshape(B, T, E)
        v3 = qkv[:, 2 * E:3 * E].reshape(B, T, E)

        head_outs = []
        for h in range(H):                       # static unroll over 4 heads
            c0 = h * hd
            qh = q3[:, :, c0:c0 + hd]            # [B, T, hd]
            kh = k3[:, :, c0:c0 + hd]
            vh = v3[:, :, c0:c0 + hd]
            # hd=2 score contraction on the VPU (broadcast-mul + tiny lane reduce),
            # vectorized over all sequences in the tile.
            s = jnp.sum(qh[:, :, None, :] * kh[:, None, :, :], axis=-1)   # [B, T, T]
            s = s - jnp.max(s, axis=-1, keepdims=True)
            p = jnp.exp(s)
            p = p * pl.reciprocal(jnp.sum(p, axis=-1, keepdims=True), approx=True)
            # value contraction on the VPU as well (sum over key axis).
            oh = jnp.sum(p[:, :, :, None] * vh[:, None, :, :], axis=2)    # [B, T, hd]
            head_outs.append(oh)
        o = jnp.concatenate(head_outs, axis=-1).reshape(R, E)             # [R, E]
        # out-projection folded into ONE [R,E]@[E,E] MXU matmul for the whole tile.
        attn = jnp.dot(o, out_w_ref[l], preferred_element_type=f32) + out_b_ref[l]
        x = _layer_norm(x + attn, ln1_w_ref[l], ln1_b_ref[l])

        # ---- feed forward (bf16 MXU matmuls, f32 accumulation / elementwise) ----
        h1 = jnp.dot(x.astype(jnp.bfloat16), ff1_w_ref[l],
                     preferred_element_type=f32) + ff1_b_ref[l]           # [R, 2048]
        h1 = jnp.maximum(h1, 0.0)
        h2 = jnp.dot(h1.astype(jnp.bfloat16), ff2_w_ref[l],
                     preferred_element_type=f32) + ff2_b_ref[l]           # [R, E]
        x = _layer_norm(x + h2, ln2_w_ref[l], ln2_b_ref[l])

    # decoder_layer: Linear(d_model -> 1), but only for the last timestep of each
    # sequence; VPU reduce over E=8 lanes, then a lane-dense [B, 128] store.
    x_last = x.reshape(B, T, E)[:, T - 1:T, :].reshape(B, E)              # [B, E]
    y = jnp.sum(x_last * w_dec_ref[...], axis=-1, keepdims=True) + b_dec_ref[...]
    out_ref[...] = jnp.broadcast_to(y, (B, OUT_LANES))[None, :, :]


# ------------------------------- wrapper --------------------------------------
def positional_encoding(seq_len, d_model):
    position = jnp.arange(seq_len, dtype=jnp.float32)[:, None]
    div_term = jnp.exp(jnp.arange(0, d_model, 2, dtype=jnp.float32)
                       * (-math.log(10000.0) / d_model))
    pe = jnp.zeros((seq_len, d_model), jnp.float32)
    pe = pe.at[:, 0::2].set(jnp.sin(position * div_term))
    pe = pe.at[:, 1::2].set(jnp.cos(position * div_term))
    return pe


def init_params(key):
    ks = jax.random.split(key, 12)

    def rnd(k, shape, scale=0.1):
        return scale * jax.random.normal(k, shape, dtype=jnp.float32)

    return dict(
        w_feat=rnd(ks[0], (D_FEAT, D_MODEL)),
        b_feat=rnd(ks[1], (1, D_MODEL)),
        in_w=rnd(ks[2], (NUM_LAYERS, D_MODEL, 3 * D_MODEL)),        # in_proj.weight.T
        in_b=rnd(ks[3], (NUM_LAYERS, 1, 3 * D_MODEL)),
        out_w=rnd(ks[4], (NUM_LAYERS, D_MODEL, D_MODEL)),           # out_proj.weight.T
        out_b=rnd(ks[5], (NUM_LAYERS, 1, D_MODEL)),
        ln1_w=jnp.ones((NUM_LAYERS, 1, D_MODEL), jnp.float32),
        ln1_b=jnp.zeros((NUM_LAYERS, 1, D_MODEL), jnp.float32),
        ln2_w=jnp.ones((NUM_LAYERS, 1, D_MODEL), jnp.float32),
        ln2_b=jnp.zeros((NUM_LAYERS, 1, D_MODEL), jnp.float32),
        ff1_w=rnd(ks[6], (NUM_LAYERS, D_MODEL, DIM_FF), 0.05),      # linear1.weight.T
        ff1_b=rnd(ks[7], (NUM_LAYERS, 1, DIM_FF)),
        ff2_w=rnd(ks[8], (NUM_LAYERS, DIM_FF, D_MODEL), 0.05),      # linear2.weight.T
        ff2_b=rnd(ks[9], (NUM_LAYERS, 1, D_MODEL)),
        w_dec=rnd(ks[10], (D_MODEL, 1)),
        b_dec=rnd(ks[11], (1, 1)),
    )


def _const_index_map(nd):
    def index_map(i):
        return (0,) * nd
    return index_map


def transformer_forward(src, params, tile_n=None):
    """src: [N, T, d_feat] float32 -> [N] predictions (last timestep, squeezed)."""
    N, T, F = src.shape
    assert F == D_FEAT
    src = src.astype(jnp.float32)

    if tile_n is None:
        # keep roughly <=512 rows per tile so the [rows, 2048] FF buffer stays small
        tile_n = max(1, min(N, max(1, 512 // T)))
    tile_n = int(min(tile_n, N))

    n_pad = ((N + tile_n - 1) // tile_n) * tile_n
    if n_pad != N:
        src = jnp.concatenate(
            [src, jnp.zeros((n_pad - N, T, F), jnp.float32)], axis=0)
    grid_n = n_pad // tile_n

    pe = positional_encoding(T, D_MODEL)                     # [T, E], broadcast in-kernel

    # bf16 weights for the dominant FF matmuls (halves VMEM + doubles MXU rate).
    ff1_w = params['ff1_w'].astype(jnp.bfloat16)
    ff2_w = params['ff2_w'].astype(jnp.bfloat16)

    args = (src, pe, params['w_feat'], params['b_feat'],
            params['in_w'], params['in_b'], params['out_w'], params['out_b'],
            params['ln1_w'], params['ln1_b'], params['ln2_w'], params['ln2_b'],
            ff1_w, params['ff1_b'], ff2_w, params['ff2_b'],
            params['w_dec'].reshape(1, D_MODEL), params['b_dec'])

    in_specs = [pl.BlockSpec((tile_n, T, F), lambda i: (i, 0, 0))]
    for a in args[1:]:
        in_specs.append(pl.BlockSpec(a.shape, _const_index_map(a.ndim)))

    out = pl.pallas_call(
        transformer_kernel,
        out_shape=jax.ShapeDtypeStruct((grid_n, tile_n, OUT_LANES), jnp.float32),
        grid=(grid_n,),
        in_specs=in_specs,
        out_specs=pl.BlockSpec((1, tile_n, OUT_LANES), lambda i: (i, 0, 0)),
        compiler_params=pltpu.CompilerParams(
            dimension_semantics=("parallel",),
            vmem_limit_bytes=VMEM_LIMIT_BYTES),
    )(*args)

    # PyTorch: decoder_layer(output.transpose(1,0)[:, -1, :]).squeeze() -> [N]
    return out.reshape(n_pad, OUT_LANES)[:N, 0]


# ----------------------- pure-JAX reference (PyTorch layout) ------------------
def reference_forward(src, params):
    N, T, _ = src.shape
    E, H, hd = D_MODEL, NHEAD, HEAD_DIM
    x = src.astype(jnp.float32) @ params['w_feat'] + params['b_feat']    # [N,T,E]
    x = jnp.transpose(x, (1, 0, 2))                                      # [T,N,E]
    x = x + positional_encoding(T, E)[:, None, :]
    for l in range(NUM_LAYERS):
        qkv = x @ params['in_w'][l] + params['in_b'][l]
        q, k, v = qkv[..., :E], qkv[..., E:2 * E], qkv[..., 2 * E:]
        q = q.reshape(T, N, H, hd).transpose(1, 2, 0, 3) / math.sqrt(hd)
        k = k.reshape(T, N, H, hd).transpose(1, 2, 0, 3)
        v = v.reshape(T, N, H, hd).transpose(1, 2, 0, 3)
        s = jnp.einsum('nhtd,nhsd->nhts', q, k)
        p = jax.nn.softmax(s, axis=-1)
        o = jnp.einsum('nhts,nhsd->nhtd', p, v)
        o = o.transpose(2, 0, 1, 3).reshape(T, N, E)
        attn = o @ params['out_w'][l] + params['out_b'][l]
        x = _layer_norm(x + attn, params['ln1_w'][l], params['ln1_b'][l])
        ff = jnp.maximum(x @ params['ff1_w'][l] + params['ff1_b'][l], 0.0)
        ff = ff @ params['ff2_w'][l] + params['ff2_b'][l]
        x = _layer_norm(x + ff, params['ln2_w'][l], params['ln2_b'][l])
    out = x[-1] @ params['w_dec'] + params['b_dec']                       # [N,1]
    return out[:, 0]


if __name__ == "__main__":
    key = jax.random.PRNGKey(0)
    k_x, k_p = jax.random.split(key)
    N, T = 5, 8                       # tile_n=2 -> grid of 3 steps, exercises padding
    src = jax.random.normal(k_x, (N, T, D_FEAT), dtype=jnp.float32)
    params = init_params(k_p)

    out = jax.block_until_ready(transformer_forward(src, params, tile_n=2))
    ref = reference_forward(src, params)

    assert out.shape == (N,), out.shape
    if not jnp.allclose(out, ref, atol=2e-2, rtol=2e-2):
        raise AssertionError(f"kernel/reference mismatch: {out} vs {ref}")
    print("KERNEL_OK")
</pallas_src>

<mosaic_0001>
module attributes {stable_mosaic.version = 11 : i64} {
  func.func @transformer_kernel(%arg0: i32, %arg1: memref<2x8x6xf32, #tpu.memory_space<vmem>>, %arg2: memref<8x8xf32, #tpu.memory_space<vmem>>, %arg3: memref<6x8xf32, #tpu.memory_space<vmem>>, %arg4: memref<1x8xf32, #tpu.memory_space<vmem>>, %arg5: memref<2x8x24xf32, #tpu.memory_space<vmem>>, %arg6: memref<2x1x24xf32, #tpu.memory_space<vmem>>, %arg7: memref<2x8x8xf32, #tpu.memory_space<vmem>>, %arg8: memref<2x1x8xf32, #tpu.memory_space<vmem>>, %arg9: memref<2x1x8xf32, #tpu.memory_space<vmem>>, %arg10: memref<2x1x8xf32, #tpu.memory_space<vmem>>, %arg11: memref<2x1x8xf32, #tpu.memory_space<vmem>>, %arg12: memref<2x1x8xf32, #tpu.memory_space<vmem>>, %arg13: memref<2x8x2048xbf16, #tpu.memory_space<vmem>>, %arg14: memref<2x1x2048xf32, #tpu.memory_space<vmem>>, %arg15: memref<2x2048x8xbf16, #tpu.memory_space<vmem>>, %arg16: memref<2x1x8xf32, #tpu.memory_space<vmem>>, %arg17: memref<1x8xf32, #tpu.memory_space<vmem>>, %arg18: memref<1x1xf32, #tpu.memory_space<vmem>>, %arg19: memref<1x2x128xf32, #tpu.memory_space<vmem>>) attributes {dimension_semantics = [#tpu.dimension_semantics<parallel>], iteration_bounds = array<i64: 3>, scalar_prefetch = 0 : i64, scratch_operands = 0 : i64, tpu.core_type = #tpu.core_type<tc>, window_params = [{transform_indices = @transform_0, window_bounds = array<i64: 2, 8, 6>}, {pipeline_mode = #tpu.pipeline_mode<synchronous>, transform_indices = @transform_1, window_bounds = array<i64: 8, 8>}, {pipeline_mode = #tpu.pipeline_mode<synchronous>, transform_indices = @transform_2, window_bounds = array<i64: 6, 8>}, {pipeline_mode = #tpu.pipeline_mode<synchronous>, transform_indices = @transform_3, window_bounds = array<i64: 1, 8>}, {pipeline_mode = #tpu.pipeline_mode<synchronous>, transform_indices = @transform_4, window_bounds = array<i64: 2, 8, 24>}, {pipeline_mode = #tpu.pipeline_mode<synchronous>, transform_indices = @transform_5, window_bounds = array<i64: 2, 1, 24>}, {pipeline_mode = #tpu.pipeline_mode<synchronous>, transform_indices = @transform_6, window_bounds = array<i64: 2, 8, 8>}, {pipeline_mode = #tpu.pipeline_mode<synchronous>, transform_indices = @transform_7, window_bounds = array<i64: 2, 1, 8>}, {pipeline_mode = #tpu.pipeline_mode<synchronous>, transform_indices = @transform_8, window_bounds = array<i64: 2, 1, 8>}, {pipeline_mode = #tpu.pipeline_mode<synchronous>, transform_indices = @transform_9, window_bounds = array<i64: 2, 1, 8>}, {pipeline_mode = #tpu.pipeline_mode<synchronous>, transform_indices = @transform_10, window_bounds = array<i64: 2, 1, 8>}, {pipeline_mode = #tpu.pipeline_mode<synchronous>, transform_indices = @transform_11, window_bounds = array<i64: 2, 1, 8>}, {pipeline_mode = #tpu.pipeline_mode<synchronous>, transform_indices = @transform_12, window_bounds = array<i64: 2, 8, 2048>}, {pipeline_mode = #tpu.pipeline_mode<synchronous>, transform_indices = @transform_13, window_bounds = array<i64: 2, 1, 2048>}, {pipeline_mode = #tpu.pipeline_mode<synchronous>, transform_indices = @transform_14, window_bounds = array<i64: 2, 2048, 8>}, {pipeline_mode = #tpu.pipeline_mode<synchronous>, transform_indices = @transform_15, window_bounds = array<i64: 2, 1, 8>}, {pipeline_mode = #tpu.pipeline_mode<synchronous>, transform_indices = @transform_16, window_bounds = array<i64: 1, 8>}, {pipeline_mode = #tpu.pipeline_mode<synchronous>, transform_indices = @transform_17, window_bounds = array<i64: 1, 1>}, {transform_indices = @transform_18, window_bounds = array<i64: 1, 2, 128>}]} {
    %c0 = arith.constant 0 : index
    %c0_0 = arith.constant 0 : index
    %c0_1 = arith.constant 0 : index
    %0 = vector.load %arg1[%c0, %c0_0, %c0_1] : memref<2x8x6xf32, #tpu.memory_space<vmem>>, vector<2x8x6xf32>
    %1 = vector.shape_cast %0 : vector<2x8x6xf32> to vector<16x6xf32>
    %c0_2 = arith.constant 0 : index
    %c0_3 = arith.constant 0 : index
    %2 = vector.load %arg3[%c0_2, %c0_3] : memref<6x8xf32, #tpu.memory_space<vmem>>, vector<6x8xf32>
    %cst = arith.constant dense<0.000000e+00> : vector<16x8xf32>
    %3 = tpu.matmul %1, %2, %cst {dimension_numbers = #tpu.dot_dimension_numbers<[1], [0], [0], [1], [0, 0, 1, 1], [], []>} : vector<16x6xf32>, vector<6x8xf32>, vector<16x8xf32> -> vector<16x8xf32>
    %c0_4 = arith.constant 0 : index
    %c0_5 = arith.constant 0 : index
    %4 = vector.load %arg4[%c0_4, %c0_5] : memref<1x8xf32, #tpu.memory_space<vmem>>, vector<1x8xf32>
    %5 = vector.broadcast %4 : vector<1x8xf32> to vector<16x8xf32>
    %6 = arith.addf %3, %5 : vector<16x8xf32>
    %c0_6 = arith.constant 0 : index
    %c0_7 = arith.constant 0 : index
    %7 = vector.load %arg2[%c0_6, %c0_7] : memref<8x8xf32, #tpu.memory_space<vmem>>, vector<8x8xf32>
    %8 = vector.shape_cast %7 : vector<8x8xf32> to vector<1x8x8xf32>
    %9 = vector.shape_cast %8 : vector<1x8x8xf32> to vector<1x8x8xf32>
    %10 = vector.broadcast %9 : vector<1x8x8xf32> to vector<2x8x8xf32>
    %11 = vector.shape_cast %10 : vector<2x8x8xf32> to vector<16x8xf32>
    %12 = arith.addf %6, %11 : vector<16x8xf32>
    %c0_8 = arith.constant 0 : index
    %c0_9 = arith.constant 0 : index
    %c0_10 = arith.constant 0 : index
    %13 = vector.load %arg5[%c0_8, %c0_9, %c0_10] : memref<2x8x24xf32, #tpu.memory_space<vmem>>, vector<1x8x24xf32>
    %14 = vector.shape_cast %13 : vector<1x8x24xf32> to vector<8x24xf32>
    %cst_11 = arith.constant dense<0.000000e+00> : vector<16x24xf32>
    %15 = tpu.matmul %12, %14, %cst_11 {dimension_numbers = #tpu.dot_dimension_numbers<[1], [0], [0], [1], [0, 0, 1, 1], [], []>} : vector<16x8xf32>, vector<8x24xf32>, vector<16x24xf32> -> vector<16x24xf32>
    %c0_12 = arith.constant 0 : index
    %c0_13 = arith.constant 0 : index
    %c0_14 = arith.constant 0 : index
    %16 = vector.load %arg6[%c0_12, %c0_13, %c0_14] : memref<2x1x24xf32, #tpu.memory_space<vmem>>, vector<1x1x24xf32>
    %17 = vector.shape_cast %16 : vector<1x1x24xf32> to vector<1x24xf32>
    %18 = vector.broadcast %17 : vector<1x24xf32> to vector<16x24xf32>
    %19 = arith.addf %15, %18 : vector<16x24xf32>
    %20 = vector.extract_strided_slice %19 {offsets = [0, 0], sizes = [16, 8], strides = [1, 1]} : vector<16x24xf32> to vector<16x8xf32>
    %cst_15 = arith.constant 0.707106769 : f32
    %21 = vector.broadcast %cst_15 : f32 to vector<16x8xf32>
    %22 = arith.mulf %20, %21 : vector<16x8xf32>
    %23 = vector.shape_cast %22 : vector<16x8xf32> to vector<2x8x8xf32>
    %24 = vector.extract_strided_slice %19 {offsets = [0, 8], sizes = [16, 8], strides = [1, 1]} : vector<16x24xf32> to vector<16x8xf32>
    %25 = vector.shape_cast %24 : vector<16x8xf32> to vector<2x8x8xf32>
    %26 = vector.extract_strided_slice %19 {offsets = [0, 16], sizes = [16, 8], strides = [1, 1]} : vector<16x24xf32> to vector<16x8xf32>
    %27 = vector.shape_cast %26 : vector<16x8xf32> to vector<2x8x8xf32>
    %28 = vector.extract_strided_slice %23 {offsets = [0, 0, 0], sizes = [2, 8, 2], strides = [1, 1, 1]} : vector<2x8x8xf32> to vector<2x8x2xf32>
    %29 = vector.extract_strided_slice %25 {offsets = [0, 0, 0], sizes = [2, 8, 2], strides = [1, 1, 1]} : vector<2x8x8xf32> to vector<2x8x2xf32>
    %30 = vector.extract_strided_slice %27 {offsets = [0, 0, 0], sizes = [2, 8, 2], strides = [1, 1, 1]} : vector<2x8x8xf32> to vector<2x8x2xf32>
    %31 = vector.shape_cast %28 : vector<2x8x2xf32> to vector<2x8x1x2xf32>
    %32 = vector.shape_cast %29 : vector<2x8x2xf32> to vector<2x1x8x2xf32>
    %33 = vector.broadcast %31 : vector<2x8x1x2xf32> to vector<2x8x8x2xf32>
    %34 = vector.broadcast %32 : vector<2x1x8x2xf32> to vector<2x8x8x2xf32>
    %35 = arith.mulf %33, %34 : vector<2x8x8x2xf32>
    %cst_16 = arith.constant dense<0.000000e+00> : vector<2x8x8xf32>
    %36 = vector.multi_reduction <add>, %35, %cst_16 [3] : vector<2x8x8x2xf32> to vector<2x8x8xf32>
    %cst_17 = arith.constant dense<0xFF800000> : vector<2x8xf32>
    %37 = vector.multi_reduction <maximumf>, %36, %cst_17 [2] : vector<2x8x8xf32> to vector<2x8xf32>
    %38 = vector.shape_cast %37 : vector<2x8xf32> to vector<2x8x1xf32>
    %39 = vector.broadcast %38 : vector<2x8x1xf32> to vector<2x8x8xf32>
    %40 = arith.subf %36, %39 : vector<2x8x8xf32>
    %41 = math.exp %40 : vector<2x8x8xf32>
    %cst_18 = arith.constant dense<0.000000e+00> : vector<2x8xf32>
    %42 = vector.multi_reduction <add>, %41, %cst_18 [2] : vector<2x8x8xf32> to vector<2x8xf32>
    %43 = vector.shape_cast %42 : vector<2x8xf32> to vector<2x8x1xf32>
    %44 = tpu.reciprocal %43 {approx = true} : vector<2x8x1xf32> -> vector<2x8x1xf32>
    %45 = vector.broadcast %44 : vector<2x8x1xf32> to vector<2x8x8xf32>
    %46 = arith.mulf %41, %45 : vector<2x8x8xf32>
    %47 = vector.shape_cast %46 : vector<2x8x8xf32> to vector<2x8x8x1xf32>
    %48 = vector.shape_cast %30 : vector<2x8x2xf32> to vector<2x1x8x2xf32>
    %49 = vector.broadcast %47 : vector<2x8x8x1xf32> to vector<2x8x8x2xf32>
    %50 = vector.broadcast %48 : vector<2x1x8x2xf32> to vector<2x8x8x2xf32>
    %51 = arith.mulf %49, %50 : vector<2x8x8x2xf32>
    %cst_19 = arith.constant dense<0.000000e+00> : vector<2x8x2xf32>
    %52 = vector.multi_reduction <add>, %51, %cst_19 [2] : vector<2x8x8x2xf32> to vector<2x8x2xf32>
    %53 = vector.extract_strided_slice %23 {offsets = [0, 0, 2], sizes = [2, 8, 2], strides = [1, 1, 1]} : vector<2x8x8xf32> to vector<2x8x2xf32>
    %54 = vector.extract_strided_slice %25 {offsets = [0, 0, 2], sizes = [2, 8, 2], strides = [1, 1, 1]} : vector<2x8x8xf32> to vector<2x8x2xf32>
    %55 = vector.extract_strided_slice %27 {offsets = [0, 0, 2], sizes = [2, 8, 2], strides = [1, 1, 1]} : vector<2x8x8xf32> to vector<2x8x2xf32>
    %56 = vector.shape_cast %53 : vector<2x8x2xf32> to vector<2x8x1x2xf32>
    %57 = vector.shape_cast %54 : vector<2x8x2xf32> to vector<2x1x8x2xf32>
    %58 = vector.broadcast %56 : vector<2x8x1x2xf32> to vector<2x8x8x2xf32>
    %59 = vector.broadcast %57 : vector<2x1x8x2xf32> to vector<2x8x8x2xf32>
    %60 = arith.mulf %58, %59 : vector<2x8x8x2xf32>
    %cst_20 = arith.constant dense<0.000000e+00> : vector<2x8x8xf32>
    %61 = vector.multi_reduction <add>, %60, %cst_20 [3] : vector<2x8x8x2xf32> to vector<2x8x8xf32>
    %cst_21 = arith.constant dense<0xFF800000> : vector<2x8xf32>
    %62 = vector.multi_reduction <maximumf>, %61, %cst_21 [2] : vector<2x8x8xf32> to vector<2x8xf32>
    %63 = vector.shape_cast %62 : vector<2x8xf32> to vector<2x8x1xf32>
    %64 = vector.broadcast %63 : vector<2x8x1xf32> to vector<2x8x8xf32>
    %65 = arith.subf %61, %64 : vector<2x8x8xf32>
    %66 = math.exp %65 : vector<2x8x8xf32>
    %cst_22 = arith.constant dense<0.000000e+00> : vector<2x8xf32>
    %67 = vector.multi_reduction <add>, %66, %cst_22 [2] : vector<2x8x8xf32> to vector<2x8xf32>
    %68 = vector.shape_cast %67 : vector<2x8xf32> to vector<2x8x1xf32>
    %69 = tpu.reciprocal %68 {approx = true} : vector<2x8x1xf32> -> vector<2x8x1xf32>
    %70 = vector.broadcast %69 : vector<2x8x1xf32> to vector<2x8x8xf32>
    %71 = arith.mulf %66, %70 : vector<2x8x8xf32>
    %72 = vector.shape_cast %71 : vector<2x8x8xf32> to vector<2x8x8x1xf32>
    %73 = vector.shape_cast %55 : vector<2x8x2xf32> to vector<2x1x8x2xf32>
    %74 = vector.broadcast %72 : vector<2x8x8x1xf32> to vector<2x8x8x2xf32>
    %75 = vector.broadcast %73 : vector<2x1x8x2xf32> to vector<2x8x8x2xf32>
    %76 = arith.mulf %74, %75 : vector<2x8x8x2xf32>
    %cst_23 = arith.constant dense<0.000000e+00> : vector<2x8x2xf32>
    %77 = vector.multi_reduction <add>, %76, %cst_23 [2] : vector<2x8x8x2xf32> to vector<2x8x2xf32>
    %78 = vector.extract_strided_slice %23 {offsets = [0, 0, 4], sizes = [2, 8, 2], strides = [1, 1, 1]} : vector<2x8x8xf32> to vector<2x8x2xf32>
    %79 = vector.extract_strided_slice %25 {offsets = [0, 0, 4], sizes = [2, 8, 2], strides = [1, 1, 1]} : vector<2x8x8xf32> to vector<2x8x2xf32>
    %80 = vector.extract_strided_slice %27 {offsets = [0, 0, 4], sizes = [2, 8, 2], strides = [1, 1, 1]} : vector<2x8x8xf32> to vector<2x8x2xf32>
    %81 = vector.shape_cast %78 : vector<2x8x2xf32> to vector<2x8x1x2xf32>
    %82 = vector.shape_cast %79 : vector<2x8x2xf32> to vector<2x1x8x2xf32>
    %83 = vector.broadcast %81 : vector<2x8x1x2xf32> to vector<2x8x8x2xf32>
    %84 = vector.broadcast %82 : vector<2x1x8x2xf32> to vector<2x8x8x2xf32>
    %85 = arith.mulf %83, %84 : vector<2x8x8x2xf32>
    %cst_24 = arith.constant dense<0.000000e+00> : vector<2x8x8xf32>
    %86 = vector.multi_reduction <add>, %85, %cst_24 [3] : vector<2x8x8x2xf32> to vector<2x8x8xf32>
    %cst_25 = arith.constant dense<0xFF800000> : vector<2x8xf32>
    %87 = vector.multi_reduction <maximumf>, %86, %cst_25 [2] : vector<2x8x8xf32> to vector<2x8xf32>
    %88 = vector.shape_cast %87 : vector<2x8xf32> to vector<2x8x1xf32>
    %89 = vector.broadcast %88 : vector<2x8x1xf32> to vector<2x8x8xf32>
    %90 = arith.subf %86, %89 : vector<2x8x8xf32>
    %91 = math.exp %90 : vector<2x8x8xf32>
    %cst_26 = arith.constant dense<0.000000e+00> : vector<2x8xf32>
    %92 = vector.multi_reduction <add>, %91, %cst_26 [2] : vector<2x8x8xf32> to vector<2x8xf32>
    %93 = vector.shape_cast %92 : vector<2x8xf32> to vector<2x8x1xf32>
    %94 = tpu.reciprocal %93 {approx = true} : vector<2x8x1xf32> -> vector<2x8x1xf32>
    %95 = vector.broadcast %94 : vector<2x8x1xf32> to vector<2x8x8xf32>
    %96 = arith.mulf %91, %95 : vector<2x8x8xf32>
    %97 = vector.shape_cast %96 : vector<2x8x8xf32> to vector<2x8x8x1xf32>
    %98 = vector.shape_cast %80 : vector<2x8x2xf32> to vector<2x1x8x2xf32>
    %99 = vector.broadcast %97 : vector<2x8x8x1xf32> to vector<2x8x8x2xf32>
    %100 = vector.broadcast %98 : vector<2x1x8x2xf32> to vector<2x8x8x2xf32>
    %101 = arith.mulf %99, %100 : vector<2x8x8x2xf32>
    %cst_27 = arith.constant dense<0.000000e+00> : vector<2x8x2xf32>
    %102 = vector.multi_reduction <add>, %101, %cst_27 [2] : vector<2x8x8x2xf32> to vector<2x8x2xf32>
    %103 = vector.extract_strided_slice %23 {offsets = [0, 0, 6], sizes = [2, 8, 2], strides = [1, 1, 1]} : vector<2x8x8xf32> to vector<2x8x2xf32>
    %104 = vector.extract_strided_slice %25 {offsets = [0, 0, 6], sizes = [2, 8, 2], strides = [1, 1, 1]} : vector<2x8x8xf32> to vector<2x8x2xf32>
    %105 = vector.extract_strided_slice %27 {offsets = [0, 0, 6], sizes = [2, 8, 2], strides = [1, 1, 1]} : vector<2x8x8xf32> to vector<2x8x2xf32>
    %106 = vector.shape_cast %103 : vector<2x8x2xf32> to vector<2x8x1x2xf32>
    %107 = vector.shape_cast %104 : vector<2x8x2xf32> to vector<2x1x8x2xf32>
    %108 = vector.broadcast %106 : vector<2x8x1x2xf32> to vector<2x8x8x2xf32>
    %109 = vector.broadcast %107 : vector<2x1x8x2xf32> to vector<2x8x8x2xf32>
    %110 = arith.mulf %108, %109 : vector<2x8x8x2xf32>
    %cst_28 = arith.constant dense<0.000000e+00> : vector<2x8x8xf32>
    %111 = vector.multi_reduction <add>, %110, %cst_28 [3] : vector<2x8x8x2xf32> to vector<2x8x8xf32>
    %cst_29 = arith.constant dense<0xFF800000> : vector<2x8xf32>
    %112 = vector.multi_reduction <maximumf>, %111, %cst_29 [2] : vector<2x8x8xf32> to vector<2x8xf32>
    %113 = vector.shape_cast %112 : vector<2x8xf32> to vector<2x8x1xf32>
    %114 = vector.broadcast %113 : vector<2x8x1xf32> to vector<2x8x8xf32>
    %115 = arith.subf %111, %114 : vector<2x8x8xf32>
    %116 = math.exp %115 : vector<2x8x8xf32>
    %cst_30 = arith.constant dense<0.000000e+00> : vector<2x8xf32>
    %117 = vector.multi_reduction <add>, %116, %cst_30 [2] : vector<2x8x8xf32> to vector<2x8xf32>
    %118 = vector.shape_cast %117 : vector<2x8xf32> to vector<2x8x1xf32>
    %119 = tpu.reciprocal %118 {approx = true} : vector<2x8x1xf32> -> vector<2x8x1xf32>
    %120 = vector.broadcast %119 : vector<2x8x1xf32> to vector<2x8x8xf32>
    %121 = arith.mulf %116, %120 : vector<2x8x8xf32>
    %122 = vector.shape_cast %121 : vector<2x8x8xf32> to vector<2x8x8x1xf32>
    %123 = vector.shape_cast %105 : vector<2x8x2xf32> to vector<2x1x8x2xf32>
    %124 = vector.broadcast %122 : vector<2x8x8x1xf32> to vector<2x8x8x2xf32>
    %125 = vector.broadcast %123 : vector<2x1x8x2xf32> to vector<2x8x8x2xf32>
    %126 = arith.mulf %124, %125 : vector<2x8x8x2xf32>
    %cst_31 = arith.constant dense<0.000000e+00> : vector<2x8x2xf32>
    %127 = vector.multi_reduction <add>, %126, %cst_31 [2] : vector<2x8x8x2xf32> to vector<2x8x2xf32>
    %128 = tpu.concatenate %52, %77, %102, %127 in 2 : vector<2x8x2xf32>, vector<2x8x2xf32>, vector<2x8x2xf32>, vector<2x8x2xf32> -> vector<2x8x8xf32>
    %129 = vector.shape_cast %128 : vector<2x8x8xf32> to vector<16x8xf32>
    %c0_32 = arith.constant 0 : index
    %c0_33 = arith.constant 0 : index
    %c0_34 = arith.constant 0 : index
    %130 = vector.load %arg7[%c0_32, %c0_33, %c0_34] : memref<2x8x8xf32, #tpu.memory_space<vmem>>, vector<1x8x8xf32>
    %131 = vector.shape_cast %130 : vector<1x8x8xf32> to vector<8x8xf32>
    %cst_35 = arith.constant dense<0.000000e+00> : vector<16x8xf32>
    %132 = tpu.matmul %129, %131, %cst_35 {dimension_numbers = #tpu.dot_dimension_numbers<[1], [0], [0], [1], [0, 0, 1, 1], [], []>} : vector<16x8xf32>, vector<8x8xf32>, vector<16x8xf32> -> vector<16x8xf32>
    %c0_36 = arith.constant 0 : index
    %c0_37 = arith.constant 0 : index
    %c0_38 = arith.constant 0 : index
    %133 = vector.load %arg8[%c0_36, %c0_37, %c0_38] : memref<2x1x8xf32, #tpu.memory_space<vmem>>, vector<1x1x8xf32>
    %134 = vector.shape_cast %133 : vector<1x1x8xf32> to vector<1x8xf32>
    %135 = vector.broadcast %134 : vector<1x8xf32> to vector<16x8xf32>
    %136 = arith.addf %132, %135 : vector<16x8xf32>
    %137 = arith.addf %12, %136 : vector<16x8xf32>
    %c0_39 = arith.constant 0 : index
    %c0_40 = arith.constant 0 : index
    %c0_41 = arith.constant 0 : index
    %138 = vector.load %arg9[%c0_39, %c0_40, %c0_41] : memref<2x1x8xf32, #tpu.memory_space<vmem>>, vector<1x1x8xf32>
    %139 = vector.shape_cast %138 : vector<1x1x8xf32> to vector<1x8xf32>
    %c0_42 = arith.constant 0 : index
    %c0_43 = arith.constant 0 : index
    %c0_44 = arith.constant 0 : index
    %140 = vector.load %arg10[%c0_42, %c0_43, %c0_44] : memref<2x1x8xf32, #tpu.memory_space<vmem>>, vector<1x1x8xf32>
    %141 = vector.shape_cast %140 : vector<1x1x8xf32> to vector<1x8xf32>
    %cst_45 = arith.constant dense<0.000000e+00> : vector<16xf32>
    %142 = vector.multi_reduction <add>, %137, %cst_45 [1] : vector<16x8xf32> to vector<16xf32>
    %143 = vector.shape_cast %142 : vector<16xf32> to vector<16x1xf32>
    %cst_46 = arith.constant 8.000000e+00 : f32
    %144 = vector.broadcast %cst_46 : f32 to vector<16x1xf32>
    %145 = arith.divf %143, %144 : vector<16x1xf32>
    %146 = vector.broadcast %145 : vector<16x1xf32> to vector<16x8xf32>
    %147 = arith.subf %137, %146 : vector<16x8xf32>
    %148 = arith.mulf %147, %147 : vector<16x8xf32>
    %cst_47 = arith.constant dense<0.000000e+00> : vector<16xf32>
    %149 = vector.multi_reduction <add>, %148, %cst_47 [1] : vector<16x8xf32> to vector<16xf32>
    %150 = vector.shape_cast %149 : vector<16xf32> to vector<16x1xf32>
    %cst_48 = arith.constant 8.000000e+00 : f32
    %151 = vector.broadcast %cst_48 : f32 to vector<16x1xf32>
    %152 = arith.divf %150, %151 : vector<16x1xf32>
    %153 = vector.broadcast %145 : vector<16x1xf32> to vector<16x8xf32>
    %154 = arith.subf %137, %153 : vector<16x8xf32>
    %cst_49 = arith.constant 9.99999974E-6 : f32
    %155 = vector.broadcast %cst_49 : f32 to vector<16x1xf32>
    %156 = arith.addf %152, %155 : vector<16x1xf32>
    %157 = math.rsqrt %156 : vector<16x1xf32>
    %158 = vector.broadcast %157 : vector<16x1xf32> to vector<16x8xf32>
    %159 = arith.mulf %154, %158 : vector<16x8xf32>
    %160 = vector.broadcast %139 : vector<1x8xf32> to vector<16x8xf32>
    %161 = arith.mulf %159, %160 : vector<16x8xf32>
    %162 = vector.broadcast %141 : vector<1x8xf32> to vector<16x8xf32>
    %163 = arith.addf %161, %162 : vector<16x8xf32>
    %164 = arith.truncf %163 : vector<16x8xf32> to vector<16x8xbf16>
    %c0_50 = arith.constant 0 : index
    %c0_51 = arith.constant 0 : index
    %c0_52 = arith.constant 0 : index
    %165 = vector.load %arg13[%c0_50, %c0_51, %c0_52] : memref<2x8x2048xbf16, #tpu.memory_space<vmem>>, vector<1x8x2048xbf16>
    %166 = vector.shape_cast %165 : vector<1x8x2048xbf16> to vector<8x2048xbf16>
    %cst_53 = arith.constant dense<0.000000e+00> : vector<16x2048xf32>
    %167 = tpu.matmul %164, %166, %cst_53 {dimension_numbers = #tpu.dot_dimension_numbers<[1], [0], [0], [1], [0, 0, 1, 1], [], []>} : vector<16x8xbf16>, vector<8x2048xbf16>, vector<16x2048xf32> -> vector<16x2048xf32>
    %c0_54 = arith.constant 0 : index
    %c0_55 = arith.constant 0 : index
    %c0_56 = arith.constant 0 : index
    %168 = vector.load %arg14[%c0_54, %c0_55, %c0_56] : memref<2x1x2048xf32, #tpu.memory_space<vmem>>, vector<1x1x2048xf32>
    %169 = vector.shape_cast %168 : vector<1x1x2048xf32> to vector<1x2048xf32>
    %170 = vector.broadcast %169 : vector<1x2048xf32> to vector<16x2048xf32>
    %171 = arith.addf %167, %170 : vector<16x2048xf32>
    %cst_57 = arith.constant 0.000000e+00 : f32
    %172 = vector.broadcast %cst_57 : f32 to vector<16x2048xf32>
    %173 = arith.maximumf %171, %172 : vector<16x2048xf32>
    %174 = arith.truncf %173 : vector<16x2048xf32> to vector<16x2048xbf16>
    %c0_58 = arith.constant 0 : index
    %c0_59 = arith.constant 0 : index
    %c0_60 = arith.constant 0 : index
    %175 = vector.load %arg15[%c0_58, %c0_59, %c0_60] : memref<2x2048x8xbf16, #tpu.memory_space<vmem>>, vector<1x2048x8xbf16>
    %176 = vector.shape_cast %175 : vector<1x2048x8xbf16> to vector<2048x8xbf16>
    %cst_61 = arith.constant dense<0.000000e+00> : vector<16x8xf32>
    %177 = tpu.matmul %174, %176, %cst_61 {dimension_numbers = #tpu.dot_dimension_numbers<[1], [0], [0], [1], [0, 0, 1, 1], [], []>} : vector<16x2048xbf16>, vector<2048x8xbf16>, vector<16x8xf32> -> vector<16x8xf32>
    %c0_62 = arith.constant 0 : index
    %c0_63 = arith.constant 0 : index
    %c0_64 = arith.constant 0 : index
    %178 = vector.load %arg16[%c0_62, %c0_63, %c0_64] : memref<2x1x8xf32, #tpu.memory_space<vmem>>, vector<1x1x8xf32>
    %179 = vector.shape_cast %178 : vector<1x1x8xf32> to vector<1x8xf32>
    %180 = vector.broadcast %179 : vector<1x8xf32> to vector<16x8xf32>
    %181 = arith.addf %177, %180 : vector<16x8xf32>
    %182 = arith.addf %163, %181 : vector<16x8xf32>
    %c0_65 = arith.constant 0 : index
    %c0_66 = arith.constant 0 : index
    %c0_67 = arith.constant 0 : index
    %183 = vector.load %arg11[%c0_65, %c0_66, %c0_67] : memref<2x1x8xf32, #tpu.memory_space<vmem>>, vector<1x1x8xf32>
    %184 = vector.shape_cast %183 : vector<1x1x8xf32> to vector<1x8xf32>
    %c0_68 = arith.constant 0 : index
    %c0_69 = arith.constant 0 : index
    %c0_70 = arith.constant 0 : index
    %185 = vector.load %arg12[%c0_68, %c0_69, %c0_70] : memref<2x1x8xf32, #tpu.memory_space<vmem>>, vector<1x1x8xf32>
    %186 = vector.shape_cast %185 : vector<1x1x8xf32> to vector<1x8xf32>
    %cst_71 = arith.constant dense<0.000000e+00> : vector<16xf32>
    %187 = vector.multi_reduction <add>, %182, %cst_71 [1] : vector<16x8xf32> to vector<16xf32>
    %188 = vector.shape_cast %187 : vector<16xf32> to vector<16x1xf32>
    %cst_72 = arith.constant 8.000000e+00 : f32
    %189 = vector.broadcast %cst_72 : f32 to vector<16x1xf32>
    %190 = arith.divf %188, %189 : vector<16x1xf32>
    %191 = vector.broadcast %190 : vector<16x1xf32> to vector<16x8xf32>
    %192 = arith.subf %182, %191 : vector<16x8xf32>
    %193 = arith.mulf %192, %192 : vector<16x8xf32>
    %cst_73 = arith.constant dense<0.000000e+00> : vector<16xf32>
    %194 = vector.multi_reduction <add>, %193, %cst_73 [1] : vector<16x8xf32> to vector<16xf32>
    %195 = vector.shape_cast %194 : vector<16xf32> to vector<16x1xf32>
    %cst_74 = arith.constant 8.000000e+00 : f32
    %196 = vector.broadcast %cst_74 : f32 to vector<16x1xf32>
    %197 = arith.divf %195, %196 : vector<16x1xf32>
    %198 = vector.broadcast %190 : vector<16x1xf32> to vector<16x8xf32>
    %199 = arith.subf %182, %198 : vector<16x8xf32>
    %cst_75 = arith.constant 9.99999974E-6 : f32
    %200 = vector.broadcast %cst_75 : f32 to vector<16x1xf32>
    %201 = arith.addf %197, %200 : vector<16x1xf32>
    %202 = math.rsqrt %201 : vector<16x1xf32>
    %203 = vector.broadcast %202 : vector<16x1xf32> to vector<16x8xf32>
    %204 = arith.mulf %199, %203 : vector<16x8xf32>
    %205 = vector.broadcast %184 : vector<1x8xf32> to vector<16x8xf32>
    %206 = arith.mulf %204, %205 : vector<16x8xf32>
    %207 = vector.broadcast %186 : vector<1x8xf32> to vector<16x8xf32>
    %208 = arith.addf %206, %207 : vector<16x8xf32>
    %c1 = arith.constant 1 : index
    %c0_76 = arith.constant 0 : index
    %c0_77 = arith.constant 0 : index
    %209 = vector.load %arg5[%c1, %c0_76, %c0_77] : memref<2x8x24xf32, #tpu.memory_space<vmem>>, vector<1x8x24xf32>
    %210 = vector.shape_cast %209 : vector<1x8x24xf32> to vector<8x24xf32>
    %cst_78 = arith.constant dense<0.000000e+00> : vector<16x24xf32>
    %211 = tpu.matmul %208, %210, %cst_78 {dimension_numbers = #tpu.dot_dimension_numbers<[1], [0], [0], [1], [0, 0, 1, 1], [], []>} : vector<16x8xf32>, vector<8x24xf32>, vector<16x24xf32> -> vector<16x24xf32>
    %c1_79 = arith.constant 1 : index
    %c0_80 = arith.constant 0 : index
    %c0_81 = arith.constant 0 : index
    %212 = vector.load %arg6[%c1_79, %c0_80, %c0_81] : memref<2x1x24xf32, #tpu.memory_space<vmem>>, vector<1x1x24xf32>
    %213 = vector.shape_cast %212 : vector<1x1x24xf32> to vector<1x24xf32>
    %214 = vector.broadcast %213 : vector<1x24xf32> to vector<16x24xf32>
    %215 = arith.addf %211, %214 : vector<16x24xf32>
    %216 = vector.extract_strided_slice %215 {offsets = [0, 0], sizes = [16, 8], strides = [1, 1]} : vector<16x24xf32> to vector<16x8xf32>
    %cst_82 = arith.constant 0.707106769 : f32
    %217 = vector.broadcast %cst_82 : f32 to vector<16x8xf32>
    %218 = arith.mulf %216, %217 : vector<16x8xf32>
    %219 = vector.shape_cast %218 : vector<16x8xf32> to vector<2x8x8xf32>
    %220 = vector.extract_strided_slice %215 {offsets = [0, 8], sizes = [16, 8], strides = [1, 1]} : vector<16x24xf32> to vector<16x8xf32>
    %221 = vector.shape_cast %220 : vector<16x8xf32> to vector<2x8x8xf32>
    %222 = vector.extract_strided_slice %215 {offsets = [0, 16], sizes = [16, 8], strides = [1, 1]} : vector<16x24xf32> to vector<16x8xf32>
    %223 = vector.shape_cast %222 : vector<16x8xf32> to vector<2x8x8xf32>
    %224 = vector.extract_strided_slice %219 {offsets = [0, 0, 0], sizes = [2, 8, 2], strides = [1, 1, 1]} : vector<2x8x8xf32> to vector<2x8x2xf32>
    %225 = vector.extract_strided_slice %221 {offsets = [0, 0, 0], sizes = [2, 8, 2], strides = [1, 1, 1]} : vector<2x8x8xf32> to vector<2x8x2xf32>
    %226 = vector.extract_strided_slice %223 {offsets = [0, 0, 0], sizes = [2, 8, 2], strides = [1, 1, 1]} : vector<2x8x8xf32> to vector<2x8x2xf32>
    %227 = vector.shape_cast %224 : vector<2x8x2xf32> to vector<2x8x1x2xf32>
    %228 = vector.shape_cast %225 : vector<2x8x2xf32> to vector<2x1x8x2xf32>
    %229 = vector.broadcast %227 : vector<2x8x1x2xf32> to vector<2x8x8x2xf32>
    %230 = vector.broadcast %228 : vector<2x1x8x2xf32> to vector<2x8x8x2xf32>
    %231 = arith.mulf %229, %230 : vector<2x8x8x2xf32>
    %cst_83 = arith.constant dense<0.000000e+00> : vector<2x8x8xf32>
    %232 = vector.multi_reduction <add>, %231, %cst_83 [3] : vector<2x8x8x2xf32> to vector<2x8x8xf32>
    %cst_84 = arith.constant dense<0xFF800000> : vector<2x8xf32>
    %233 = vector.multi_reduction <maximumf>, %232, %cst_84 [2] : vector<2x8x8xf32> to vector<2x8xf32>
    %234 = vector.shape_cast %233 : vector<2x8xf32> to vector<2x8x1xf32>
    %235 = vector.broadcast %234 : vector<2x8x1xf32> to vector<2x8x8xf32>
    %236 = arith.subf %232, %235 : vector<2x8x8xf32>
    %237 = math.exp %236 : vector<2x8x8xf32>
    %cst_85 = arith.constant dense<0.000000e+00> : vector<2x8xf32>
    %238 = vector.multi_reduction <add>, %237, %cst_85 [2] : vector<2x8x8xf32> to vector<2x8xf32>
    %239 = vector.shape_cast %238 : vector<2x8xf32> to vector<2x8x1xf32>
    %240 = tpu.reciprocal %239 {approx = true} : vector<2x8x1xf32> -> vector<2x8x1xf32>
    %241 = vector.broadcast %240 : vector<2x8x1xf32> to vector<2x8x8xf32>
    %242 = arith.mulf %237, %241 : vector<2x8x8xf32>
    %243 = vector.shape_cast %242 : vector<2x8x8xf32> to vector<2x8x8x1xf32>
    %244 = vector.shape_cast %226 : vector<2x8x2xf32> to vector<2x1x8x2xf32>
    %245 = vector.broadcast %243 : vector<2x8x8x1xf32> to vector<2x8x8x2xf32>
    %246 = vector.broadcast %244 : vector<2x1x8x2xf32> to vector<2x8x8x2xf32>
    %247 = arith.mulf %245, %246 : vector<2x8x8x2xf32>
    %cst_86 = arith.constant dense<0.000000e+00> : vector<2x8x2xf32>
    %248 = vector.multi_reduction <add>, %247, %cst_86 [2] : vector<2x8x8x2xf32> to vector<2x8x2xf32>
    %249 = vector.extract_strided_slice %219 {offsets = [0, 0, 2], sizes = [2, 8, 2], strides = [1, 1, 1]} : vector<2x8x8xf32> to vector<2x8x2xf32>
    %250 = vector.extract_strided_slice %221 {offsets = [0, 0, 2], sizes = [2, 8, 2], strides = [1, 1, 1]} : vector<2x8x8xf32> to vector<2x8x2xf32>
    %251 = vector.extract_strided_slice %223 {offsets = [0, 0, 2], sizes = [2, 8, 2], strides = [1, 1, 1]} : vector<2x8x8xf32> to vector<2x8x2xf32>
    %252 = vector.shape_cast %249 : vector<2x8x2xf32> to vector<2x8x1x2xf32>
    %253 = vector.shape_cast %250 : vector<2x8x2xf32> to vector<2x1x8x2xf32>
    %254 = vector.broadcast %252 : vector<2x8x1x2xf32> to vector<2x8x8x2xf32>
    %255 = vector.broadcast %253 : vector<2x1x8x2xf32> to vector<2x8x8x2xf32>
    %256 = arith.mulf %254, %255 : vector<2x8x8x2xf32>
    %cst_87 = arith.constant dense<0.000000e+00> : vector<2x8x8xf32>
    %257 = vector.multi_reduction <add>, %256, %cst_87 [3] : vector<2x8x8x2xf32> to vector<2x8x8xf32>
    %cst_88 = arith.constant dense<0xFF800000> : vector<2x8xf32>
    %258 = vector.multi_reduction <maximumf>, %257, %cst_88 [2] : vector<2x8x8xf32> to vector<2x8xf32>
    %259 = vector.shape_cast %258 : vector<2x8xf32> to vector<2x8x1xf32>
    %260 = vector.broadcast %259 : vector<2x8x1xf32> to vector<2x8x8xf32>
    %261 = arith.subf %257, %260 : vector<2x8x8xf32>
    %262 = math.exp %261 : vector<2x8x8xf32>
    %cst_89 = arith.constant dense<0.000000e+00> : vector<2x8xf32>
    %263 = vector.multi_reduction <add>, %262, %cst_89 [2] : vector<2x8x8xf32> to vector<2x8xf32>
    %264 = vector.shape_cast %263 : vector<2x8xf32> to vector<2x8x1xf32>
    %265 = tpu.reciprocal %264 {approx = true} : vector<2x8x1xf32> -> vector<2x8x1xf32>
    %266 = vector.broadcast %265 : vector<2x8x1xf32> to vector<2x8x8xf32>
    %267 = arith.mulf %262, %266 : vector<2x8x8xf32>
    %268 = vector.shape_cast %267 : vector<2x8x8xf32> to vector<2x8x8x1xf32>
    %269 = vector.shape_cast %251 : vector<2x8x2xf32> to vector<2x1x8x2xf32>
    %270 = vector.broadcast %268 : vector<2x8x8x1xf32> to vector<2x8x8x2xf32>
    %271 = vector.broadcast %269 : vector<2x1x8x2xf32> to vector<2x8x8x2xf32>
    %272 = arith.mulf %270, %271 : vector<2x8x8x2xf32>
    %cst_90 = arith.constant dense<0.000000e+00> : vector<2x8x2xf32>
    %273 = vector.multi_reduction <add>, %272, %cst_90 [2] : vector<2x8x8x2xf32> to vector<2x8x2xf32>
    %274 = vector.extract_strided_slice %219 {offsets = [0, 0, 4], sizes = [2, 8, 2], strides = [1, 1, 1]} : vector<2x8x8xf32> to vector<2x8x2xf32>
    %275 = vector.extract_strided_slice %221 {offsets = [0, 0, 4], sizes = [2, 8, 2], strides = [1, 1, 1]} : vector<2x8x8xf32> to vector<2x8x2xf32>
    %276 = vector.extract_strided_slice %223 {offsets = [0, 0, 4], sizes = [2, 8, 2], strides = [1, 1, 1]} : vector<2x8x8xf32> to vector<2x8x2xf32>
    %277 = vector.shape_cast %274 : vector<2x8x2xf32> to vector<2x8x1x2xf32>
    %278 = vector.shape_cast %275 : vector<2x8x2xf32> to vector<2x1x8x2xf32>
    %279 = vector.broadcast %277 : vector<2x8x1x2xf32> to vector<2x8x8x2xf32>
    %280 = vector.broadcast %278 : vector<2x1x8x2xf32> to vector<2x8x8x2xf32>
    %281 = arith.mulf %279, %280 : vector<2x8x8x2xf32>
    %cst_91 = arith.constant dense<0.000000e+00> : vector<2x8x8xf32>
    %282 = vector.multi_reduction <add>, %281, %cst_91 [3] : vector<2x8x8x2xf32> to vector<2x8x8xf32>
    %cst_92 = arith.constant dense<0xFF800000> : vector<2x8xf32>
    %283 = vector.multi_reduction <maximumf>, %282, %cst_92 [2] : vector<2x8x8xf32> to vector<2x8xf32>
    %284 = vector.shape_cast %283 : vector<2x8xf32> to vector<2x8x1xf32>
    %285 = vector.broadcast %284 : vector<2x8x1xf32> to vector<2x8x8xf32>
    %286 = arith.subf %282, %285 : vector<2x8x8xf32>
    %287 = math.exp %286 : vector<2x8x8xf32>
    %cst_93 = arith.constant dense<0.000000e+00> : vector<2x8xf32>
    %288 = vector.multi_reduction <add>, %287, %cst_93 [2] : vector<2x8x8xf32> to vector<2x8xf32>
    %289 = vector.shape_cast %288 : vector<2x8xf32> to vector<2x8x1xf32>
    %290 = tpu.reciprocal %289 {approx = true} : vector<2x8x1xf32> -> vector<2x8x1xf32>
    %291 = vector.broadcast %290 : vector<2x8x1xf32> to vector<2x8x8xf32>
    %292 = arith.mulf %287, %291 : vector<2x8x8xf32>
    %293 = vector.shape_cast %292 : vector<2x8x8xf32> to vector<2x8x8x1xf32>
    %294 = vector.shape_cast %276 : vector<2x8x2xf32> to vector<2x1x8x2xf32>
    %295 = vector.broadcast %293 : vector<2x8x8x1xf32> to vector<2x8x8x2xf32>
    %296 = vector.broadcast %294 : vector<2x1x8x2xf32> to vector<2x8x8x2xf32>
    %297 = arith.mulf %295, %296 : vector<2x8x8x2xf32>
    %cst_94 = arith.constant dense<0.000000e+00> : vector<2x8x2xf32>
    %298 = vector.multi_reduction <add>, %297, %cst_94 [2] : vector<2x8x8x2xf32> to vector<2x8x2xf32>
    %299 = vector.extract_strided_slice %219 {offsets = [0, 0, 6], sizes = [2, 8, 2], strides = [1, 1, 1]} : vector<2x8x8xf32> to vector<2x8x2xf32>
    %300 = vector.extract_strided_slice %221 {offsets = [0, 0, 6], sizes = [2, 8, 2], strides = [1, 1, 1]} : vector<2x8x8xf32> to vector<2x8x2xf32>
    %301 = vector.extract_strided_slice %223 {offsets = [0, 0, 6], sizes = [2, 8, 2], strides = [1, 1, 1]} : vector<2x8x8xf32> to vector<2x8x2xf32>
    %302 = vector.shape_cast %299 : vector<2x8x2xf32> to vector<2x8x1x2xf32>
    %303 = vector.shape_cast %300 : vector<2x8x2xf32> to vector<2x1x8x2xf32>
    %304 = vector.broadcast %302 : vector<2x8x1x2xf32> to vector<2x8x8x2xf32>
    %305 = vector.broadcast %303 : vector<2x1x8x2xf32> to vector<2x8x8x2xf32>
    %306 = arith.mulf %304, %305 : vector<2x8x8x2xf32>
    %cst_95 = arith.constant dense<0.000000e+00> : vector<2x8x8xf32>
    %307 = vector.multi_reduction <add>, %306, %cst_95 [3] : vector<2x8x8x2xf32> to vector<2x8x8xf32>
    %cst_96 = arith.constant dense<0xFF800000> : vector<2x8xf32>
    %308 = vector.multi_reduction <maximumf>, %307, %cst_96 [2] : vector<2x8x8xf32> to vector<2x8xf32>
    %309 = vector.shape_cast %308 : vector<2x8xf32> to vector<2x8x1xf32>
    %310 = vector.broadcast %309 : vector<2x8x1xf32> to vector<2x8x8xf32>
    %311 = arith.subf %307, %310 : vector<2x8x8xf32>
    %312 = math.exp %311 : vector<2x8x8xf32>
    %cst_97 = arith.constant dense<0.000000e+00> : vector<2x8xf32>
    %313 = vector.multi_reduction <add>, %312, %cst_97 [2] : vector<2x8x8xf32> to vector<2x8xf32>
    %314 = vector.shape_cast %313 : vector<2x8xf32> to vector<2x8x1xf32>
    %315 = tpu.reciprocal %314 {approx = true} : vector<2x8x1xf32> -> vector<2x8x1xf32>
    %316 = vector.broadcast %315 : vector<2x8x1xf32> to vector<2x8x8xf32>
    %317 = arith.mulf %312, %316 : vector<2x8x8xf32>
    %318 = vector.shape_cast %317 : vector<2x8x8xf32> to vector<2x8x8x1xf32>
    %319 = vector.shape_cast %301 : vector<2x8x2xf32> to vector<2x1x8x2xf32>
    %320 = vector.broadcast %318 : vector<2x8x8x1xf32> to vector<2x8x8x2xf32>
    %321 = vector.broadcast %319 : vector<2x1x8x2xf32> to vector<2x8x8x2xf32>
    %322 = arith.mulf %320, %321 : vector<2x8x8x2xf32>
    %cst_98 = arith.constant dense<0.000000e+00> : vector<2x8x2xf32>
    %323 = vector.multi_reduction <add>, %322, %cst_98 [2] : vector<2x8x8x2xf32> to vector<2x8x2xf32>
    %324 = tpu.concatenate %248, %273, %298, %323 in 2 : vector<2x8x2xf32>, vector<2x8x2xf32>, vector<2x8x2xf32>, vector<2x8x2xf32> -> vector<2x8x8xf32>
    %325 = vector.shape_cast %324 : vector<2x8x8xf32> to vector<16x8xf32>
    %c1_99 = arith.constant 1 : index
    %c0_100 = arith.constant 0 : index
    %c0_101 = arith.constant 0 : index
    %326 = vector.load %arg7[%c1_99, %c0_100, %c0_101] : memref<2x8x8xf32, #tpu.memory_space<vmem>>, vector<1x8x8xf32>
    %327 = vector.shape_cast %326 : vector<1x8x8xf32> to vector<8x8xf32>
    %cst_102 = arith.constant dense<0.000000e+00> : vector<16x8xf32>
    %328 = tpu.matmul %325, %327, %cst_102 {dimension_numbers = #tpu.dot_dimension_numbers<[1], [0], [0], [1], [0, 0, 1, 1], [], []>} : vector<16x8xf32>, vector<8x8xf32>, vector<16x8xf32> -> vector<16x8xf32>
    %c1_103 = arith.constant 1 : index
    %c0_104 = arith.constant 0 : index
    %c0_105 = arith.constant 0 : index
    %329 = vector.load %arg8[%c1_103, %c0_104, %c0_105] : memref<2x1x8xf32, #tpu.memory_space<vmem>>, vector<1x1x8xf32>
    %330 = vector.shape_cast %329 : vector<1x1x8xf32> to vector<1x8xf32>
    %331 = vector.broadcast %330 : vector<1x8xf32> to vector<16x8xf32>
    %332 = arith.addf %328, %331 : vector<16x8xf32>
    %333 = arith.addf %208, %332 : vector<16x8xf32>
    %c1_106 = arith.constant 1 : index
    %c0_107 = arith.constant 0 : index
    %c0_108 = arith.constant 0 : index
    %334 = vector.load %arg9[%c1_106, %c0_107, %c0_108] : memref<2x1x8xf32, #tpu.memory_space<vmem>>, vector<1x1x8xf32>
    %335 = vector.shape_cast %334 : vector<1x1x8xf32> to vector<1x8xf32>
    %c1_109 = arith.constant 1 : index
    %c0_110 = arith.constant 0 : index
    %c0_111 = arith.constant 0 : index
    %336 = vector.load %arg10[%c1_109, %c0_110, %c0_111] : memref<2x1x8xf32, #tpu.memory_space<vmem>>, vector<1x1x8xf32>
    %337 = vector.shape_cast %336 : vector<1x1x8xf32> to vector<1x8xf32>
    %cst_112 = arith.constant dense<0.000000e+00> : vector<16xf32>
    %338 = vector.multi_reduction <add>, %333, %cst_112 [1] : vector<16x8xf32> to vector<16xf32>
    %339 = vector.shape_cast %338 : vector<16xf32> to vector<16x1xf32>
    %cst_113 = arith.constant 8.000000e+00 : f32
    %340 = vector.broadcast %cst_113 : f32 to vector<16x1xf32>
    %341 = arith.divf %339, %340 : vector<16x1xf32>
    %342 = vector.broadcast %341 : vector<16x1xf32> to vector<16x8xf32>
    %343 = arith.subf %333, %342 : vector<16x8xf32>
    %344 = arith.mulf %343, %343 : vector<16x8xf32>
    %cst_114 = arith.constant dense<0.000000e+00> : vector<16xf32>
    %345 = vector.multi_reduction <add>, %344, %cst_114 [1] : vector<16x8xf32> to vector<16xf32>
    %346 = vector.shape_cast %345 : vector<16xf32> to vector<16x1xf32>
    %cst_115 = arith.constant 8.000000e+00 : f32
    %347 = vector.broadcast %cst_115 : f32 to vector<16x1xf32>
    %348 = arith.divf %346, %347 : vector<16x1xf32>
    %349 = vector.broadcast %341 : vector<16x1xf32> to vector<16x8xf32>
    %350 = arith.subf %333, %349 : vector<16x8xf32>
    %cst_116 = arith.constant 9.99999974E-6 : f32
    %351 = vector.broadcast %cst_116 : f32 to vector<16x1xf32>
    %352 = arith.addf %348, %351 : vector<16x1xf32>
    %353 = math.rsqrt %352 : vector<16x1xf32>
    %354 = vector.broadcast %353 : vector<16x1xf32> to vector<16x8xf32>
    %355 = arith.mulf %350, %354 : vector<16x8xf32>
    %356 = vector.broadcast %335 : vector<1x8xf32> to vector<16x8xf32>
    %357 = arith.mulf %355, %356 : vector<16x8xf32>
    %358 = vector.broadcast %337 : vector<1x8xf32> to vector<16x8xf32>
    %359 = arith.addf %357, %358 : vector<16x8xf32>
    %360 = arith.truncf %359 : vector<16x8xf32> to vector<16x8xbf16>
    %c1_117 = arith.constant 1 : index
    %c0_118 = arith.constant 0 : index
    %c0_119 = arith.constant 0 : index
    %361 = vector.load %arg13[%c1_117, %c0_118, %c0_119] : memref<2x8x2048xbf16, #tpu.memory_space<vmem>>, vector<1x8x2048xbf16>
    %362 = vector.shape_cast %361 : vector<1x8x2048xbf16> to vector<8x2048xbf16>
    %cst_120 = arith.constant dense<0.000000e+00> : vector<16x2048xf32>
    %363 = tpu.matmul %360, %362, %cst_120 {dimension_numbers = #tpu.dot_dimension_numbers<[1], [0], [0], [1], [0, 0, 1, 1], [], []>} : vector<16x8xbf16>, vector<8x2048xbf16>, vector<16x2048xf32> -> vector<16x2048xf32>
    %c1_121 = arith.constant 1 : index
    %c0_122 = arith.constant 0 : index
    %c0_123 = arith.constant 0 : index
    %364 = vector.load %arg14[%c1_121, %c0_122, %c0_123] : memref<2x1x2048xf32, #tpu.memory_space<vmem>>, vector<1x1x2048xf32>
    %365 = vector.shape_cast %364 : vector<1x1x2048xf32> to vector<1x2048xf32>
    %366 = vector.broadcast %365 : vector<1x2048xf32> to vector<16x2048xf32>
    %367 = arith.addf %363, %366 : vector<16x2048xf32>
    %cst_124 = arith.constant 0.000000e+00 : f32
    %368 = vector.broadcast %cst_124 : f32 to vector<16x2048xf32>
    %369 = arith.maximumf %367, %368 : vector<16x2048xf32>
    %370 = arith.truncf %369 : vector<16x2048xf32> to vector<16x2048xbf16>
    %c1_125 = arith.constant 1 : index
    %c0_126 = arith.constant 0 : index
    %c0_127 = arith.constant 0 : index
    %371 = vector.load %arg15[%c1_125, %c0_126, %c0_127] : memref<2x2048x8xbf16, #tpu.memory_space<vmem>>, vector<1x2048x8xbf16>
    %372 = vector.shape_cast %371 : vector<1x2048x8xbf16> to vector<2048x8xbf16>
    %cst_128 = arith.constant dense<0.000000e+00> : vector<16x8xf32>
    %373 = tpu.matmul %370, %372, %cst_128 {dimension_numbers = #tpu.dot_dimension_numbers<[1], [0], [0], [1], [0, 0, 1, 1], [], []>} : vector<16x2048xbf16>, vector<2048x8xbf16>, vector<16x8xf32> -> vector<16x8xf32>
    %c1_129 = arith.constant 1 : index
    %c0_130 = arith.constant 0 : index
    %c0_131 = arith.constant 0 : index
    %374 = vector.load %arg16[%c1_129, %c0_130, %c0_131] : memref<2x1x8xf32, #tpu.memory_space<vmem>>, vector<1x1x8xf32>
    %375 = vector.shape_cast %374 : vector<1x1x8xf32> to vector<1x8xf32>
    %376 = vector.broadcast %375 : vector<1x8xf32> to vector<16x8xf32>
    %377 = arith.addf %373, %376 : vector<16x8xf32>
    %378 = arith.addf %359, %377 : vector<16x8xf32>
    %c1_132 = arith.constant 1 : index
    %c0_133 = arith.constant 0 : index
    %c0_134 = arith.constant 0 : index
    %379 = vector.load %arg11[%c1_132, %c0_133, %c0_134] : memref<2x1x8xf32, #tpu.memory_space<vmem>>, vector<1x1x8xf32>
    %380 = vector.shape_cast %379 : vector<1x1x8xf32> to vector<1x8xf32>
    %c1_135 = arith.constant 1 : index
    %c0_136 = arith.constant 0 : index
    %c0_137 = arith.constant 0 : index
    %381 = vector.load %arg12[%c1_135, %c0_136, %c0_137] : memref<2x1x8xf32, #tpu.memory_space<vmem>>, vector<1x1x8xf32>
    %382 = vector.shape_cast %381 : vector<1x1x8xf32> to vector<1x8xf32>
    %cst_138 = arith.constant dense<0.000000e+00> : vector<16xf32>
    %383 = vector.multi_reduction <add>, %378, %cst_138 [1] : vector<16x8xf32> to vector<16xf32>
    %384 = vector.shape_cast %383 : vector<16xf32> to vector<16x1xf32>
    %cst_139 = arith.constant 8.000000e+00 : f32
    %385 = vector.broadcast %cst_139 : f32 to vector<16x1xf32>
    %386 = arith.divf %384, %385 : vector<16x1xf32>
    %387 = vector.broadcast %386 : vector<16x1xf32> to vector<16x8xf32>
    %388 = arith.subf %378, %387 : vector<16x8xf32>
    %389 = arith.mulf %388, %388 : vector<16x8xf32>
    %cst_140 = arith.constant dense<0.000000e+00> : vector<16xf32>
    %390 = vector.multi_reduction <add>, %389, %cst_140 [1] : vector<16x8xf32> to vector<16xf32>
    %391 = vector.shape_cast %390 : vector<16xf32> to vector<16x1xf32>
    %cst_141 = arith.constant 8.000000e+00 : f32
    %392 = vector.broadcast %cst_141 : f32 to vector<16x1xf32>
    %393 = arith.divf %391, %392 : vector<16x1xf32>
    %394 = vector.broadcast %386 : vector<16x1xf32> to vector<16x8xf32>
    %395 = arith.subf %378, %394 : vector<16x8xf32>
    %cst_142 = arith.constant 9.99999974E-6 : f32
    %396 = vector.broadcast %cst_142 : f32 to vector<16x1xf32>
    %397 = arith.addf %393, %396 : vector<16x1xf32>
    %398 = math.rsqrt %397 : vector<16x1xf32>
    %399 = vector.broadcast %398 : vector<16x1xf32> to vector<16x8xf32>
    %400 = arith.mulf %395, %399 : vector<16x8xf32>
    %401 = vector.broadcast %380 : vector<1x8xf32> to vector<16x8xf32>
    %402 = arith.mulf %400, %401 : vector<16x8xf32>
    %403 = vector.broadcast %382 : vector<1x8xf32> to vector<16x8xf32>
    %404 = arith.addf %402, %403 : vector<16x8xf32>
    %405 = vector.shape_cast %404 : vector<16x8xf32> to vector<2x8x8xf32>
    %406 = vector.extract_strided_slice %405 {offsets = [0, 7, 0], sizes = [2, 1, 8], strides = [1, 1, 1]} : vector<2x8x8xf32> to vector<2x1x8xf32>
    %407 = vector.shape_cast %406 : vector<2x1x8xf32> to vector<2x8xf32>
    %c0_143 = arith.constant 0 : index
    %c0_144 = arith.constant 0 : index
    %408 = vector.load %arg17[%c0_143, %c0_144] : memref<1x8xf32, #tpu.memory_space<vmem>>, vector<1x8xf32>
    %409 = vector.broadcast %408 : vector<1x8xf32> to vector<2x8xf32>
    %410 = arith.mulf %407, %409 : vector<2x8xf32>
    %cst_145 = arith.constant dense<0.000000e+00> : vector<2xf32>
    %411 = vector.multi_reduction <add>, %410, %cst_145 [1] : vector<2x8xf32> to vector<2xf32>
    %412 = vector.shape_cast %411 : vector<2xf32> to vector<2x1xf32>
    %c0_146 = arith.constant 0 : index
    %c0_147 = arith.constant 0 : index
    %413 = vector.load %arg18[%c0_146, %c0_147] : memref<1x1xf32, #tpu.memory_space<vmem>>, vector<1x1xf32>
    %414 = vector.broadcast %413 : vector<1x1xf32> to vector<2x1xf32>
    %415 = arith.addf %412, %414 : vector<2x1xf32>
    %416 = vector.shape_cast %415 : vector<2x1xf32> to vector<2x1xf32>
    %417 = vector.broadcast %416 : vector<2x1xf32> to vector<2x128xf32>
    %418 = vector.shape_cast %417 : vector<2x128xf32> to vector<1x2x128xf32>
    %c0_148 = arith.constant 0 : index
    %c0_149 = arith.constant 0 : index
    %c0_150 = arith.constant 0 : index
    %419 = vector.load %arg19[%c0_148, %c0_149, %c0_150] : memref<1x2x128xf32, #tpu.memory_space<vmem>>, vector<1x2x128xf32>
    tpu.vector_store %arg19[%c0_148, %c0_149, %c0_150], %418 {strides = array<i32>} : memref<1x2x128xf32, #tpu.memory_space<vmem>>, vector<1x2x128xf32>,
    return
  }
  func.func @transform_0(%arg0: i32) -> (i32, i32, i32) {
    %c0_i32 = arith.constant 0 : i32
    %c0_i32_0 = arith.constant 0 : i32
    %c0_i32_1 = arith.constant 0 : i32
    return %arg0, %c0_i32, %c0_i32_0 : i32, i32, i32
  }
  func.func @transform_1(%arg0: i32) -> (i32, i32) {
    %c0_i32 = arith.constant 0 : i32
    %c0_i32_0 = arith.constant 0 : i32
    %c0_i32_1 = arith.constant 0 : i32
    return %c0_i32, %c0_i32_0 : i32, i32
  }
  func.func @transform_2(%arg0: i32) -> (i32, i32) {
    %c0_i32 = arith.constant 0 : i32
    %c0_i32_0 = arith.constant 0 : i32
    %c0_i32_1 = arith.constant 0 : i32
    return %c0_i32, %c0_i32_0 : i32, i32
  }
  func.func @transform_3(%arg0: i32) -> (i32, i32) {
    %c0_i32 = arith.constant 0 : i32
    %c0_i32_0 = arith.constant 0 : i32
    %c0_i32_1 = arith.constant 0 : i32
    return %c0_i32, %c0_i32_0 : i32, i32
  }
  func.func @transform_4(%arg0: i32) -> (i32, i32, i32) {
    %c0_i32 = arith.constant 0 : i32
    %c0_i32_0 = arith.constant 0 : i32
    %c0_i32_1 = arith.constant 0 : i32
    %c0_i32_2 = arith.constant 0 : i32
    return %c0_i32, %c0_i32_0, %c0_i32_1 : i32, i32, i32
  }
  func.func @transform_5(%arg0: i32) -> (i32, i32, i32) {
    %c0_i32 = arith.constant 0 : i32
    %c0_i32_0 = arith.constant 0 : i32
    %c0_i32_1 = arith.constant 0 : i32
    %c0_i32_2 = arith.constant 0 : i32
    return %c0_i32, %c0_i32_0, %c0_i32_1 : i32, i32, i32
  }
  func.func @transform_6(%arg0: i32) -> (i32, i32, i32) {
    %c0_i32 = arith.constant 0 : i32
    %c0_i32_0 = arith.constant 0 : i32
    %c0_i32_1 = arith.constant 0 : i32
    %c0_i32_2 = arith.constant 0 : i32
    return %c0_i32, %c0_i32_0, %c0_i32_1 : i32, i32, i32
  }
  func.func @transform_7(%arg0: i32) -> (i32, i32, i32) {
    %c0_i32 = arith.constant 0 : i32
    %c0_i32_0 = arith.constant 0 : i32
    %c0_i32_1 = arith.constant 0 : i32
    %c0_i32_2 = arith.constant 0 : i32
    return %c0_i32, %c0_i32_0, %c0_i32_1 : i32, i32, i32
  }
  func.func @transform_8(%arg0: i32) -> (i32, i32, i32) {
    %c0_i32 = arith.constant 0 : i32
    %c0_i32_0 = arith.constant 0 : i32
    %c0_i32_1 = arith.constant 0 : i32
    %c0_i32_2 = arith.constant 0 : i32
    return %c0_i32, %c0_i32_0, %c0_i32_1 : i32, i32, i32
  }
  func.func @transform_9(%arg0: i32) -> (i32, i32, i32) {
    %c0_i32 = arith.constant 0 : i32
    %c0_i32_0 = arith.constant 0 : i32
    %c0_i32_1 = arith.constant 0 : i32
    %c0_i32_2 = arith.constant 0 : i32
    return %c0_i32, %c0_i32_0, %c0_i32_1 : i32, i32, i32
  }
  func.func @transform_10(%arg0: i32) -> (i32, i32, i32) {
    %c0_i32 = arith.constant 0 : i32
    %c0_i32_0 = arith.constant 0 : i32
    %c0_i32_1 = arith.constant 0 : i32
    %c0_i32_2 = arith.constant 0 : i32
    return %c0_i32, %c0_i32_0, %c0_i32_1 : i32, i32, i32
  }
  func.func @transform_11(%arg0: i32) -> (i32, i32, i32) {
    %c0_i32 = arith.constant 0 : i32
    %c0_i32_0 = arith.constant 0 : i32
    %c0_i32_1 = arith.constant 0 : i32
    %c0_i32_2 = arith.constant 0 : i32
    return %c0_i32, %c0_i32_0, %c0_i32_1 : i32, i32, i32
  }
  func.func @transform_12(%arg0: i32) -> (i32, i32, i32) {
    %c0_i32 = arith.constant 0 : i32
    %c0_i32_0 = arith.constant 0 : i32
    %c0_i32_1 = arith.constant 0 : i32
    %c0_i32_2 = arith.constant 0 : i32
    return %c0_i32, %c0_i32_0, %c0_i32_1 : i32, i32, i32
  }
  func.func @transform_13(%arg0: i32) -> (i32, i32, i32) {
    %c0_i32 = arith.constant 0 : i32
    %c0_i32_0 = arith.constant 0 : i32
    %c0_i32_1 = arith.constant 0 : i32
    %c0_i32_2 = arith.constant 0 : i32
    return %c0_i32, %c0_i32_0, %c0_i32_1 : i32, i32, i32
  }
  func.func @transform_14(%arg0: i32) -> (i32, i32, i32) {
    %c0_i32 = arith.constant 0 : i32
    %c0_i32_0 = arith.constant 0 : i32
    %c0_i32_1 = arith.constant 0 : i32
    %c0_i32_2 = arith.constant 0 : i32
    return %c0_i32, %c0_i32_0, %c0_i32_1 : i32, i32, i32
  }
  func.func @transform_15(%arg0: i32) -> (i32, i32, i32) {
    %c0_i32 = arith.constant 0 : i32
    %c0_i32_0 = arith.constant 0 : i32
    %c0_i32_1 = arith.constant 0 : i32
    %c0_i32_2 = arith.constant 0 : i32
    return %c0_i32, %c0_i32_0, %c0_i32_1 : i32, i32, i32
  }
  func.func @transform_16(%arg0: i32) -> (i32, i32) {
    %c0_i32 = arith.constant 0 : i32
    %c0_i32_0 = arith.constant 0 : i32
    %c0_i32_1 = arith.constant 0 : i32
    return %c0_i32, %c0_i32_0 : i32, i32
  }
  func.func @transform_17(%arg0: i32) -> (i32, i32) {
    %c0_i32 = arith.constant 0 : i32
    %c0_i32_0 = arith.constant 0 : i32
    %c0_i32_1 = arith.constant 0 : i32
    return %c0_i32, %c0_i32_0 : i32, i32
  }
  func.func @transform_18(%arg0: i32) -> (i32, i32, i32) {
    %c0_i32 = arith.constant 0 : i32
    %c0_i32_0 = arith.constant 0 : i32
    %c0_i32_1 = arith.constant 0 : i32
    return %arg0, %c0_i32, %c0_i32_0 : i32, i32, i32
  }
}

</mosaic_0001>

<llo_original>
// kernel: tpu_custom_call.1
$region0: #{tpu_custom_call.1}
  #allocation0 [shape = 'u32[]', space=smem, size = 0x4, offset = 0x4, fixed_abs, tag = 'smem constant byte address 0x4 - core index']
  #allocation1 [shape = 'u32[144,128]{1,0:T(1,128)}', space=vmem, size = 0x12000, scoped, tag = 'internal scratch']
  #allocation2 [shape = 'f32[1,1]{1,0:T(1,128)S(1)}', space=vmem, size = 0x200, scoped, tag = 'scoped memory for tpu_custom_call.1']
  %s0 = inlined_call_operand.vmem [shape: f32[6,8,6], index: 0, kind: input, shape index: {}]
  %s1 = inlined_call_operand.vmem [shape: f32[8,8], index: 1, kind: input, shape index: {}]
  %s2 = inlined_call_operand.vmem [shape: f32[6,8], index: 2, kind: input, shape index: {}]
  %s3 = inlined_call_operand.vmem [shape: f32[1,8], index: 3, kind: input, shape index: {}]
  %s4 = inlined_call_operand.vmem [shape: f32[2,8,24], index: 4, kind: input, shape index: {}]
  %s5 = inlined_call_operand.vmem [shape: f32[2,1,24], index: 5, kind: input, shape index: {}]
  %s6 = inlined_call_operand.vmem [shape: f32[2,8,8], index: 6, kind: input, shape index: {}]
  %s7 = inlined_call_operand.vmem [shape: f32[2,1,8], index: 7, kind: input, shape index: {}]
  %s8 = inlined_call_operand.vmem [shape: f32[2,1,8], index: 8, kind: input, shape index: {}]
  %s9 = inlined_call_operand.vmem [shape: f32[2,1,8], index: 9, kind: input, shape index: {}]
  %s10 = inlined_call_operand.vmem [shape: f32[2,1,8], index: 10, kind: input, shape index: {}]
  %s11 = inlined_call_operand.vmem [shape: f32[2,1,8], index: 11, kind: input, shape index: {}]
  %s12 = inlined_call_operand.vmem [shape: bf16[2,8,2048], index: 12, kind: input, shape index: {}]
  %s13 = inlined_call_operand.vmem [shape: f32[2,1,2048], index: 13, kind: input, shape index: {}]
  %s14 = inlined_call_operand.vmem [shape: bf16[2,2048,8], index: 14, kind: input, shape index: {}]
  %s15 = inlined_call_operand.vmem [shape: f32[2,1,8], index: 15, kind: input, shape index: {}]
  %s16 = inlined_call_operand.vmem [shape: f32[1,8], index: 16, kind: input, shape index: {}]
  %s17 = inlined_call_operand.<no memory space> [shape: f32[1,1], index: 17, kind: input, shape index: {}]
  %s18 = inlined_call_operand.hbm [shape: f32[3,2,128], index: 18, kind: output, shape index: {}]
  %s19 = sld [smem:[#allocation0]]
  $region105: #{tpu_custom_call.1} parent=0
    _
  %s21 = ssub.s32 1, %s19
  %s22 = scalar_select 0, %s21, %s19
  %v23 = vstv %s17
  %24 = vst [vmem:[#allocation2] sm:$0x1] %v23
  $region1: #{tpu_custom_call.1} parent=0
    #allocation3 [shape = 'u8[2048]{0}', space=vmem, size = 0x800, scoped, tag = 'output window, operand 0']
    #allocation4 [shape = 's32[2]{0}', space=sflag, size = 0x8, scoped, tag = 'scoped memory for tpu_custom_call.1']
    %25 = vsyncpa [#allocation4], 0
    %s26 = scalar_lea.sflag [#allocation4], 1
    %27 = vsyncpa %s26, 0
    loop: start=0, step=1, limit=5
    $region2: #{tpu_custom_call.1} parent=1 // loop_pre_header
      _
    $region3: #{tpu_custom_call.1} parent=1 // loop_header
      %s29 = sphi 0, %s33
      %p30 = scmp.ge.s32.totalorder %s29, 5
      %s39 = sphi 0, %s41
      %s42 = sphi 0, %s39
      %s43 = sphi 0, %s42
      %s59 = sphi 0, %s43
      %s63 = sphi 0, %s63
      %s65 = sphi 0, %s63
      %s66 = sphi 0, %s65
      %s80 = sphi 0, %s66
      %s84 = sphi 0, %s84
      %s86 = sphi 0, %s84
      %s87 = sphi 0, %s86
      %s101 = sphi 0, %s87
      %s105 = sphi 0, %s105
      %s107 = sphi 0, %s105
      %s108 = sphi 0, %s107
      %s122 = sphi 0, %s108
      %s126 = sphi 0, %s126
      %s128 = sphi 0, %s126
      %s129 = sphi 0, %s128
      %s143 = sphi 0, %s129
      %s147 = sphi 0, %s147
      %s149 = sphi 0, %s147
      %s150 = sphi 0, %s149
      %s164 = sphi 0, %s150
      %s168 = sphi 0, %s168
      %s170 = sphi 0, %s168
      %s171 = sphi 0, %s170
      %s185 = sphi 0, %s171
      %s189 = sphi 0, %s189
      %s191 = sphi 0, %s189
      %s192 = sphi 0, %s191
      %s206 = sphi 0, %s192
      %s210 = sphi 0, %s210
      %s212 = sphi 0, %s210
      %s213 = sphi 0, %s212
      %s227 = sphi 0, %s213
      %s231 = sphi 0, %s231
      %s233 = sphi 0, %s231
      %s234 = sphi 0, %s233
      %s248 = sphi 0, %s234
      %s252 = sphi 0, %s252
      %s254 = sphi 0, %s252
      %s255 = sphi 0, %s254
      %s269 = sphi 0, %s255
      %s273 = sphi 0, %s273
      %s275 = sphi 0, %s273
      %s276 = sphi 0, %s275
      %s290 = sphi 0, %s276
      %s294 = sphi 0, %s294
      %s296 = sphi 0, %s294
      %s297 = sphi 0, %s296
      %s311 = sphi 0, %s297
      %s315 = sphi 0, %s315
      %s317 = sphi 0, %s315
      %s318 = sphi 0, %s317
      %s332 = sphi 0, %s318
      %s336 = sphi 0, %s336
      %s338 = sphi 0, %s336
      %s339 = sphi 0, %s338
      %s353 = sphi 0, %s339
      %s357 = sphi 0, %s357
      %s359 = sphi 0, %s357
      %s360 = sphi 0, %s359
      %s374 = sphi 0, %s360
      %s378 = sphi 0, %s378
      %s380 = sphi 0, %s378
      %s381 = sphi 0, %s380
      %s395 = sphi 0, %s381
      %s399 = sphi 0, %s399
      %s401 = sphi 0, %s399
      %s402 = sphi 0, %s401
      %s416 = sphi 0, %s402
      %s422 = sphi 0, %s424
      %s425 = sphi 0, %s422
      %s426 = sphi 0, %s425
      %s442 = sphi 0, %s426
    $region4: #{tpu_custom_call.1} parent=1 // loop_header_branch
      %32 = sbr.rel (%p30) target = $region8
    $region5: #{tpu_custom_call.1} parent=1 // loop_body
      %s34 = ssub.s32 %s29, 1
      %s35 = ssub.s32 %s29, 2
      %s36 = sadd.s32 %s29, 1
      %s37 = ssub.s32 %s29, %s36
      %p38 = scmp.eq.s32.totalorder %s37, 0
      %s40 = sadd.s32 %s39, 1
      %s41 = scalar_select %p38, %s39, %s40
      %p44 = pneg %p38
      %p45 = scmp.eq.s32.totalorder %s29, 2
      %p46 = por %p44, %p45
      %p47 = scmp.ne.s32.totalorder %s39, %s42
      %p48 = scmp.eq.s32.totalorder %s29, 0
      %p49 = por %p47, %p48
      %p50 = scmp.ne.s32.totalorder %s39, %s42
      %p51 = scmp.eq.s32.totalorder %s34, 2
      %p52 = por %p50, %p51
      %p53 = scmp.ne.s32.totalorder %s42, %s43
      %p54 = scmp.eq.s32.totalorder %s34, 0
      %p55 = por %p53, %p54
      %p56 = scmp.ne.s32.totalorder %s42, %s43
      %p57 = scmp.eq.s32.totalorder %s35, 2
      %p58 = por %p56, %p57
      %p60 = scmp.ne.s32.totalorder %s43, %s59
      %p61 = scmp.eq.s32.totalorder %s35, 0
      %p62 = por %p60, %p61
      %s64 = sadd.s32 %s63, 1
      %p67 = scmp.eq.s32.totalorder %s29, 2
      %p68 = scmp.ne.s32.totalorder %s63, %s65
      %p69 = scmp.eq.s32.totalorder %s29, 0
      %p70 = por %p68, %p69
      %p71 = scmp.ne.s32.totalorder %s63, %s65
      %p72 = scmp.eq.s32.totalorder %s34, 2
      %p73 = por %p71, %p72
      %p74 = scmp.ne.s32.totalorder %s65, %s66
      %p75 = scmp.eq.s32.totalorder %s34, 0
      %p76 = por %p74, %p75
      %p77 = scmp.ne.s32.totalorder %s65, %s66
      %p78 = scmp.eq.s32.totalorder %s35, 2
      %p79 = por %p77, %p78
      %p81 = scmp.ne.s32.totalorder %s66, %s80
      %p82 = scmp.eq.s32.totalorder %s35, 0
      %p83 = por %p81, %p82
      %s85 = sadd.s32 %s84, 1
      %p88 = scmp.eq.s32.totalorder %s29, 2
      %p89 = scmp.ne.s32.totalorder %s84, %s86
      %p90 = scmp.eq.s32.totalorder %s29, 0
      %p91 = por %p89, %p90
      %p92 = scmp.ne.s32.totalorder %s84, %s86
      %p93 = scmp.eq.s32.totalorder %s34, 2
      %p94 = por %p92, %p93
      %p95 = scmp.ne.s32.totalorder %s86, %s87
      %p96 = scmp.eq.s32.totalorder %s34, 0
      %p97 = por %p95, %p96
      %p98 = scmp.ne.s32.totalorder %s86, %s87
      %p99 = scmp.eq.s32.totalorder %s35, 2
      %p100 = por %p98, %p99
      %p102 = scmp.ne.s32.totalorder %s87, %s101
      %p103 = scmp.eq.s32.totalorder %s35, 0
      %p104 = por %p102, %p103
      %s106 = sadd.s32 %s105, 1
      %p109 = scmp.eq.s32.totalorder %s29, 2
      %p110 = scmp.ne.s32.totalorder %s105, %s107
      %p111 = scmp.eq.s32.totalorder %s29, 0
      %p112 = por %p110, %p111
      %p113 = scmp.ne.s32.totalorder %s105, %s107
      %p114 = scmp.eq.s32.totalorder %s34, 2
      %p115 = por %p113, %p114
      %p116 = scmp.ne.s32.totalorder %s107, %s108
      %p117 = scmp.eq.s32.totalorder %s34, 0
      %p118 = por %p116, %p117
      %p119 = scmp.ne.s32.totalorder %s107, %s108
      %p120 = scmp.eq.s32.totalorder %s35, 2
      %p121 = por %p119, %p120
      %p123 = scmp.ne.s32.totalorder %s108, %s122
      %p124 = scmp.eq.s32.totalorder %s35, 0
      %p125 = por %p123, %p124
      %s127 = sadd.s32 %s126, 1
      %p130 = scmp.eq.s32.totalorder %s29, 2
      %p131 = scmp.ne.s32.totalorder %s126, %s128
      %p132 = scmp.eq.s32.totalorder %s29, 0
      %p133 = por %p131, %p132
      %p134 = scmp.ne.s32.totalorder %s126, %s128
      %p135 = scmp.eq.s32.totalorder %s34, 2
      %p136 = por %p134, %p135
      %p137 = scmp.ne.s32.totalorder %s128, %s129
      %p138 = scmp.eq.s32.totalorder %s34, 0
      %p139 = por %p137, %p138
      %p140 = scmp.ne.s32.totalorder %s128, %s129
      %p141 = scmp.eq.s32.totalorder %s35, 2
      %p142 = por %p140, %p141
      %p144 = scmp.ne.s32.totalorder %s129, %s143
      %p145 = scmp.eq.s32.totalorder %s35, 0
      %p146 = por %p144, %p145
      %s148 = sadd.s32 %s147, 1
      %p151 = scmp.eq.s32.totalorder %s29, 2
      %p152 = scmp.ne.s32.totalorder %s147, %s149
      %p153 = scmp.eq.s32.totalorder %s29, 0
      %p154 = por %p152, %p153
      %p155 = scmp.ne.s32.totalorder %s147, %s149
      %p156 = scmp.eq.s32.totalorder %s34, 2
      %p157 = por %p155, %p156
      %p158 = scmp.ne.s32.totalorder %s149, %s150
      %p159 = scmp.eq.s32.totalorder %s34, 0
      %p160 = por %p158, %p159
      %p161 = scmp.ne.s32.totalorder %s149, %s150
      %p162 = scmp.eq.s32.totalorder %s35, 2
      %p163 = por %p161, %p162
      %p165 = scmp.ne.s32.totalorder %s150, %s164
      %p166 = scmp.eq.s32.totalorder %s35, 0
      %p167 = por %p165, %p166
      %s169 = sadd.s32 %s168, 1
      %p172 = scmp.eq.s32.totalorder %s29, 2
      %p173 = scmp.ne.s32.totalorder %s168, %s170
      %p174 = scmp.eq.s32.totalorder %s29, 0
      %p175 = por %p173, %p174
      %p176 = scmp.ne.s32.totalorder %s168, %s170
      %p177 = scmp.eq.s32.totalorder %s34, 2
      %p178 = por %p176, %p177
      %p179 = scmp.ne.s32.totalorder %s170, %s171
      %p180 = scmp.eq.s32.totalorder %s34, 0
      %p181 = por %p179, %p180
      %p182 = scmp.ne.s32.totalorder %s170, %s171
      %p183 = scmp.eq.s32.totalorder %s35, 2
      %p184 = por %p182, %p183
      %p186 = scmp.ne.s32.totalorder %s171, %s185
      %p187 = scmp.eq.s32.totalorder %s35, 0
      %p188 = por %p186, %p187
      %s190 = sadd.s32 %s189, 1
      %p193 = scmp.eq.s32.totalorder %s29, 2
      %p194 = scmp.ne.s32.totalorder %s189, %s191
      %p195 = scmp.eq.s32.totalorder %s29, 0
      %p196 = por %p194, %p195
      %p197 = scmp.ne.s32.totalorder %s189, %s191
      %p198 = scmp.eq.s32.totalorder %s34, 2
      %p199 = por %p197, %p198
      %p200 = scmp.ne.s32.totalorder %s191, %s192
      %p201 = scmp.eq.s32.totalorder %s34, 0
      %p202 = por %p200, %p201
      %p203 = scmp.ne.s32.totalorder %s191, %s192
      %p204 = scmp.eq.s32.totalorder %s35, 2
      %p205 = por %p203, %p204
      %p207 = scmp.ne.s32.totalorder %s192, %s206
      %p208 = scmp.eq.s32.totalorder %s35, 0
      %p209 = por %p207, %p208
      %s211 = sadd.s32 %s210, 1
      %p214 = scmp.eq.s32.totalorder %s29, 2
      %p215 = scmp.ne.s32.totalorder %s210, %s212
      %p216 = scmp.eq.s32.totalorder %s29, 0
      %p217 = por %p215, %p216
      %p218 = scmp.ne.s32.totalorder %s210, %s212
      %p219 = scmp.eq.s32.totalorder %s34, 2
      %p220 = por %p218, %p219
      %p221 = scmp.ne.s32.totalorder %s212, %s213
      %p222 = scmp.eq.s32.totalorder %s34, 0
      %p223 = por %p221, %p222
      %p224 = scmp.ne.s32.totalorder %s212, %s213
      %p225 = scmp.eq.s32.totalorder %s35, 2
      %p226 = por %p224, %p225
      %p228 = scmp.ne.s32.totalorder %s213, %s227
      %p229 = scmp.eq.s32.totalorder %s35, 0
      %p230 = por %p228, %p229
      %s232 = sadd.s32 %s231, 1
      %p235 = scmp.eq.s32.totalorder %s29, 2
      %p236 = scmp.ne.s32.totalorder %s231, %s233
      %p237 = scmp.eq.s32.totalorder %s29, 0
      %p238 = por %p236, %p237
      %p239 = scmp.ne.s32.totalorder %s231, %s233
      %p240 = scmp.eq.s32.totalorder %s34, 2
      %p241 = por %p239, %p240
      %p242 = scmp.ne.s32.totalorder %s233, %s234
      %p243 = scmp.eq.s32.totalorder %s34, 0
      %p244 = por %p242, %p243
      %p245 = scmp.ne.s32.totalorder %s233, %s234
      %p246 = scmp.eq.s32.totalorder %s35, 2
      %p247 = por %p245, %p246
      %p249 = scmp.ne.s32.totalorder %s234, %s248
      %p250 = scmp.eq.s32.totalorder %s35, 0
      %p251 = por %p249, %p250
      %s253 = sadd.s32 %s252, 1
      %p256 = scmp.eq.s32.totalorder %s29, 2
      %p257 = scmp.ne.s32.totalorder %s252, %s254
      %p258 = scmp.eq.s32.totalorder %s29, 0
      %p259 = por %p257, %p258
      %p260 = scmp.ne.s32.totalorder %s252, %s254
      %p261 = scmp.eq.s32.totalorder %s34, 2
      %p262 = por %p260, %p261
      %p263 = scmp.ne.s32.totalorder %s254, %s255
      %p264 = scmp.eq.s32.totalorder %s34, 0
      %p265 = por %p263, %p264
      %p266 = scmp.ne.s32.totalorder %s254, %s255
      %p267 = scmp.eq.s32.totalorder %s35, 2
      %p268 = por %p266, %p267
      %p270 = scmp.ne.s32.totalorder %s255, %s269
      %p271 = scmp.eq.s32.totalorder %s35, 0
      %p272 = por %p270, %p271
      %s274 = sadd.s32 %s273, 1
      %p277 = scmp.eq.s32.totalorder %s29, 2
      %p278 = scmp.ne.s32.totalorder %s273, %s275
      %p279 = scmp.eq.s32.totalorder %s29, 0
      %p280 = por %p278, %p279
      %p281 = scmp.ne.s32.totalorder %s273, %s275
      %p282 = scmp.eq.s32.totalorder %s34, 2
      %p283 = por %p281, %p282
      %p284 = scmp.ne.s32.totalorder %s275, %s276
      %p285 = scmp.eq.s32.totalorder %s34, 0
      %p286 = por %p284, %p285
      %p287 = scmp.ne.s32.totalorder %s275, %s276
      %p288 = scmp.eq.s32.totalorder %s35, 2
      %p289 = por %p287, %p288
      %p291 = scmp.ne.s32.totalorder %s276, %s290
      %p292 = scmp.eq.s32.totalorder %s35, 0
      %p293 = por %p291, %p292
      %s295 = sadd.s32 %s294, 1
      %p298 = scmp.eq.s32.totalorder %s29, 2
      %p299 = scmp.ne.s32.totalorder %s294, %s296
      %p300 = scmp.eq.s32.totalorder %s29, 0
      %p301 = por %p299, %p300
      %p302 = scmp.ne.s32.totalorder %s294, %s296
      %p303 = scmp.eq.s32.totalorder %s34, 2
      %p304 = por %p302, %p303
      %p305 = scmp.ne.s32.totalorder %s296, %s297
      %p306 = scmp.eq.s32.totalorder %s34, 0
      %p307 = por %p305, %p306
      %p308 = scmp.ne.s32.totalorder %s296, %s297
      %p309 = scmp.eq.s32.totalorder %s35, 2
      %p310 = por %p308, %p309
      %p312 = scmp.ne.s32.totalorder %s297, %s311
      %p313 = scmp.eq.s32.totalorder %s35, 0
      %p314 = por %p312, %p313
      %s316 = sadd.s32 %s315, 1
      %p319 = scmp.eq.s32.totalorder %s29, 2
      %p320 = scmp.ne.s32.totalorder %s315, %s317
      %p321 = scmp.eq.s32.totalorder %s29, 0
      %p322 = por %p320, %p321
      %p323 = scmp.ne.s32.totalorder %s315, %s317
      %p324 = scmp.eq.s32.totalorder %s34, 2
      %p325 = por %p323, %p324
      %p326 = scmp.ne.s32.totalorder %s317, %s318
      %p327 = scmp.eq.s32.totalorder %s34, 0
      %p328 = por %p326, %p327
      %p329 = scmp.ne.s32.totalorder %s317, %s318
      %p330 = scmp.eq.s32.totalorder %s35, 2
      %p331 = por %p329, %p330
      %p333 = scmp.ne.s32.totalorder %s318, %s332
      %p334 = scmp.eq.s32.totalorder %s35, 0
      %p335 = por %p333, %p334
      %s337 = sadd.s32 %s336, 1
      %p340 = scmp.eq.s32.totalorder %s29, 2
      %p341 = scmp.ne.s32.totalorder %s336, %s338
      %p342 = scmp.eq.s32.totalorder %s29, 0
      %p343 = por %p341, %p342
      %p344 = scmp.ne.s32.totalorder %s336, %s338
      %p345 = scmp.eq.s32.totalorder %s34, 2
      %p346 = por %p344, %p345
      %p347 = scmp.ne.s32.totalorder %s338, %s339
      %p348 = scmp.eq.s32.totalorder %s34, 0
      %p349 = por %p347, %p348
      %p350 = scmp.ne.s32.totalorder %s338, %s339
      %p351 = scmp.eq.s32.totalorder %s35, 2
      %p352 = por %p350, %p351
      %p354 = scmp.ne.s32.totalorder %s339, %s353
      %p355 = scmp.eq.s32.totalorder %s35, 0
      %p356 = por %p354, %p355
      %s358 = sadd.s32 %s357, 1
      %p361 = scmp.eq.s32.totalorder %s29, 2
      %p362 = scmp.ne.s32.totalorder %s357, %s359
      %p363 = scmp.eq.s32.totalorder %s29, 0
      %p364 = por %p362, %p363
      %p365 = scmp.ne.s32.totalorder %s357, %s359
      %p366 = scmp.eq.s32.totalorder %s34, 2
      %p367 = por %p365, %p366
      %p368 = scmp.ne.s32.totalorder %s359, %s360
      %p369 = scmp.eq.s32.totalorder %s34, 0
      %p370 = por %p368, %p369
      %p371 = scmp.ne.s32.totalorder %s359, %s360
      %p372 = scmp.eq.s32.totalorder %s35, 2
      %p373 = por %p371, %p372
      %p375 = scmp.ne.s32.totalorder %s360, %s374
      %p376 = scmp.eq.s32.totalorder %s35, 0
      %p377 = por %p375, %p376
      %s379 = sadd.s32 %s378, 1
      %p382 = scmp.eq.s32.totalorder %s29, 2
      %p383 = scmp.ne.s32.totalorder %s378, %s380
      %p384 = scmp.eq.s32.totalorder %s29, 0
      %p385 = por %p383, %p384
      %p386 = scmp.ne.s32.totalorder %s378, %s380
      %p387 = scmp.eq.s32.totalorder %s34, 2
      %p388 = por %p386, %p387
      %p389 = scmp.ne.s32.totalorder %s380, %s381
      %p390 = scmp.eq.s32.totalorder %s34, 0
      %p391 = por %p389, %p390
      %p392 = scmp.ne.s32.totalorder %s380, %s381
      %p393 = scmp.eq.s32.totalorder %s35, 2
      %p394 = por %p392, %p393
      %p396 = scmp.ne.s32.totalorder %s381, %s395
      %p397 = scmp.eq.s32.totalorder %s35, 0
      %p398 = por %p396, %p397
      %s400 = sadd.s32 %s399, 1
      %p403 = scmp.eq.s32.totalorder %s29, 2
      %p404 = scmp.ne.s32.totalorder %s399, %s401
      %p405 = scmp.eq.s32.totalorder %s29, 0
      %p406 = por %p404, %p405
      %p407 = scmp.ne.s32.totalorder %s399, %s401
      %p408 = scmp.eq.s32.totalorder %s34, 2
      %p409 = por %p407, %p408
      %p410 = scmp.ne.s32.totalorder %s401, %s402
      %p411 = scmp.eq.s32.totalorder %s34, 0
      %p412 = por %p410, %p411
      %p413 = scmp.ne.s32.totalorder %s401, %s402
      %p414 = scmp.eq.s32.totalorder %s35, 2
      %p415 = por %p413, %p414
      %p417 = scmp.ne.s32.totalorder %s402, %s416
      %p418 = scmp.eq.s32.totalorder %s35, 0
      %p419 = por %p417, %p418
      %s420 = ssub.s32 %s29, %s36
      %p421 = scmp.eq.s32.totalorder %s420, 0
      %s423 = sadd.s32 %s422, 1
      %s424 = scalar_select %p421, %s422, %s423
      %p427 = pneg %p421
      %p428 = scmp.eq.s32.totalorder %s29, 2
      %p429 = por %p427, %p428
      %p430 = scmp.ne.s32.totalorder %s422, %s425
      %p431 = scmp.eq.s32.totalorder %s29, 0
      %p432 = por %p430, %p431
      %p433 = scmp.ne.s32.totalorder %s422, %s425
      %p434 = scmp.eq.s32.totalorder %s34, 2
      %p435 = por %p433, %p434
      %p436 = scmp.ne.s32.totalorder %s425, %s426
      %p437 = scmp.eq.s32.totalorder %s34, 0
      %p438 = por %p436, %p437
      %p439 = scmp.ne.s32.totalorder %s425, %s426
      %p440 = scmp.eq.s32.totalorder %s35, 2
      %p441 = por %p439, %p440
      %p443 = scmp.ne.s32.totalorder %s426, %s442
      %p444 = scmp.eq.s32.totalorder %s35, 0
      %p445 = por %p443, %p444
      %p446 = scmp.le.s32.totalorder 1, %s29
      %p447 = scmp.lt.s32.totalorder %s29, 4
      %p448 = pnand %p446, %p447
      %p449 = pneg %p448
      // Predicated region
      $region9: #{tpu_custom_call.1} parent=5 // pred_check
        _
      $region10: #{tpu_custom_call.1} parent=5 // pred_check_branch
        %451 = sbr.rel (%p448) target = $region12
      $region11: #{tpu_custom_call.1} parent=5 // pred_region
        %s452 = ssub.s32 %s29, 1
        // Predicated region
        $region13: #{tpu_custom_call.1} parent=11 // pred_check
          %p453 = pneg %p76
        $region14: #{tpu_custom_call.1} parent=11 // pred_check_branch
          %455 = sbr.rel (%p453) target = $region16
        $region15: #{tpu_custom_call.1} parent=11 // pred_region
          _
        $region16: #{tpu_custom_call.1} parent=11 // pred_fallthru
          _
        // Predicated region
        $region17: #{tpu_custom_call.1} parent=11 // pred_check
          %p456 = pneg %p97
        $region18: #{tpu_custom_call.1} parent=11 // pred_check_branch
          %458 = sbr.rel (%p456) target = $region20
        $region19: #{tpu_custom_call.1} parent=11 // pred_region
          _
        $region20: #{tpu_custom_call.1} parent=11 // pred_fallthru
          _
        // Predicated region
        $region21: #{tpu_custom_call.1} parent=11 // pred_check
          %p459 = pneg %p118
        $region22: #{tpu_custom_call.1} parent=11 // pred_check_branch
          %461 = sbr.rel (%p459) target = $region24
        $region23: #{tpu_custom_call.1} parent=11 // pred_region
          _
        $region24: #{tpu_custom_call.1} parent=11 // pred_fallthru
          _
        // Predicated region
        $region25: #{tpu_custom_call.1} parent=11 // pred_check
          %p462 = pneg %p139
        $region26: #{tpu_custom_call.1} parent=11 // pred_check_branch
          %464 = sbr.rel (%p462) target = $region28
        $region27: #{tpu_custom_call.1} parent=11 // pred_region
          _
        $region28: #{tpu_custom_call.1} parent=11 // pred_fallthru
          _
        // Predicated region
        $region29: #{tpu_custom_call.1} parent=11 // pred_check
          %p465 = pneg %p160
        $region30: #{tpu_custom_call.1} parent=11 // pred_check_branch
          %467 = sbr.rel (%p465) target = $region32
        $region31: #{tpu_custom_call.1} parent=11 // pred_region
          _
        $region32: #{tpu_custom_call.1} parent=11 // pred_fallthru
          _
        // Predicated region
        $region33: #{tpu_custom_call.1} parent=11 // pred_check
          %p468 = pneg %p181
        $region34: #{tpu_custom_call.1} parent=11 // pred_check_branch
          %470 = sbr.rel (%p468) target = $region36
        $region35: #{tpu_custom_call.1} parent=11 // pred_region
          _
        $region36: #{tpu_custom_call.1} parent=11 // pred_fallthru
          _
        // Predicated region
        $region37: #{tpu_custom_call.1} parent=11 // pred_check
          %p471 = pneg %p202
        $region38: #{tpu_custom_call.1} parent=11 // pred_check_branch
          %473 = sbr.rel (%p471) target = $region40
        $region39: #{tpu_custom_call.1} parent=11 // pred_region
          _
        $region40: #{tpu_custom_call.1} parent=11 // pred_fallthru
          _
        // Predicated region
        $region41: #{tpu_custom_call.1} parent=11 // pred_check
          %p474 = pneg %p223
        $region42: #{tpu_custom_call.1} parent=11 // pred_check_branch
          %476 = sbr.rel (%p474) target = $region44
        $region43: #{tpu_custom_call.1} parent=11 // pred_region
          _
        $region44: #{tpu_custom_call.1} parent=11 // pred_fallthru
          _
        // Predicated region
        $region45: #{tpu_custom_call.1} parent=11 // pred_check
          %p477 = pneg %p244
        $region46: #{tpu_custom_call.1} parent=11 // pred_check_branch
          %479 = sbr.rel (%p477) target = $region48
        $region47: #{tpu_custom_call.1} parent=11 // pred_region
          _
        $region48: #{tpu_custom_call.1} parent=11 // pred_fallthru
          _
        // Predicated region
        $region49: #{tpu_custom_call.1} parent=11 // pred_check
          %p480 = pneg %p265
        $region50: #{tpu_custom_call.1} parent=11 // pred_check_branch
          %482 = sbr.rel (%p480) target = $region52
        $region51: #{tpu_custom_call.1} parent=11 // pred_region
          _
        $region52: #{tpu_custom_call.1} parent=11 // pred_fallthru
          _
        // Predicated region
        $region53: #{tpu_custom_call.1} parent=11 // pred_check
          %p483 = pneg %p286
        $region54: #{tpu_custom_call.1} parent=11 // pred_check_branch
          %485 = sbr.rel (%p483) target = $region56
        $region55: #{tpu_custom_call.1} parent=11 // pred_region
          _
        $region56: #{tpu_custom_call.1} parent=11 // pred_fallthru
          _
        // Predicated region
        $region57: #{tpu_custom_call.1} parent=11 // pred_check
          %p486 = pneg %p307
        $region58: #{tpu_custom_call.1} parent=11 // pred_check_branch
          %488 = sbr.rel (%p486) target = $region60
        $region59: #{tpu_custom_call.1} parent=11 // pred_region
          _
        $region60: #{tpu_custom_call.1} parent=11 // pred_fallthru
          _
        // Predicated region
        $region61: #{tpu_custom_call.1} parent=11 // pred_check
          %p489 = pneg %p328
        $region62: #{tpu_custom_call.1} parent=11 // pred_check_branch
          %491 = sbr.rel (%p489) target = $region64
        $region63: #{tpu_custom_call.1} parent=11 // pred_region
          _
        $region64: #{tpu_custom_call.1} parent=11 // pred_fallthru
          _
        // Predicated region
        $region65: #{tpu_custom_call.1} parent=11 // pred_check
          %p492 = pneg %p349
        $region66: #{tpu_custom_call.1} parent=11 // pred_check_branch
          %494 = sbr.rel (%p492) target = $region68
        $region67: #{tpu_custom_call.1} parent=11 // pred_region
          _
        $region68: #{tpu_custom_call.1} parent=11 // pred_fallthru
          _
        // Predicated region
        $region69: #{tpu_custom_call.1} parent=11 // pred_check
          %p495 = pneg %p370
        $region70: #{tpu_custom_call.1} parent=11 // pred_check_branch
          %497 = sbr.rel (%p495) target = $region72
        $region71: #{tpu_custom_call.1} parent=11 // pred_region
          _
        $region72: #{tpu_custom_call.1} parent=11 // pred_fallthru
          _
        // Predicated region
        $region73: #{tpu_custom_call.1} parent=11 // pred_check
          %p498 = pneg %p391
        $region74: #{tpu_custom_call.1} parent=11 // pred_check_branch
          %500 = sbr.rel (%p498) target = $region76
        $region75: #{tpu_custom_call.1} parent=11 // pred_region
          _
        $region76: #{tpu_custom_call.1} parent=11 // pred_fallthru
          _
        // Predicated region
        $region77: #{tpu_custom_call.1} parent=11 // pred_check
          %p501 = pneg %p412
        $region78: #{tpu_custom_call.1} parent=11 // pred_check_branch
          %503 = sbr.rel (%p501) target = $region80
        $region79: #{tpu_custom_call.1} parent=11 // pred_region
          _
        $region80: #{tpu_custom_call.1} parent=11 // pred_fallthru
          _
      $region12: #{tpu_custom_call.1} parent=5 // pred_fallthru
        _
      %p504 = scmp.lt.s32.totalorder %s29, 3
      // Predicated region
      $region81: #{tpu_custom_call.1} parent=5 // pred_check
        %p505 = pneg %p504
      $region82: #{tpu_custom_call.1} parent=5 // pred_check_branch
        %507 = sbr.rel (%p505) target = $region84
      $region83: #{tpu_custom_call.1} parent=5 // pred_region
        // Predicated region
        $region85: #{tpu_custom_call.1} parent=83 // pred_check
          %p508 = pneg %p49
        $region86: #{tpu_custom_call.1} parent=83 // pred_check_branch
          %510 = sbr.rel (%p508) target = $region88
        $region87: #{tpu_custom_call.1} parent=83 // pred_region
          %s511 = smul.u32 2, %s29
          %p512 = scmp.lt.s32.totalorder %s511, 5
          %s513 = scalar_select %p512, %s511, 5
          %s514 = smul.addr %s513, 8
          %s515 = scalar_lea.vmem %s0, %s514
          %s516 = smul.u32 2, %s29
        $region88: #{tpu_custom_call.1} parent=83 // pred_fallthru
          _
      $region84: #{tpu_custom_call.1} parent=5 // pred_fallthru
        _
      %p517 = scmp.le.s32.totalorder 1, %s29
      %p518 = scmp.lt.s32.totalorder %s29, 4
      %p519 = pnand %p517, %p518
      %p520 = pneg %p519
      // Predicated region
      $region89: #{tpu_custom_call.1} parent=5 // pred_check
        _
      $region90: #{tpu_custom_call.1} parent=5 // pred_check_branch
        %522 = sbr.rel (%p519) target = $region92
      $region91: #{tpu_custom_call.1} parent=5 // pred_region
        %s523 = ssub.s32 %s29, 1
        %s524 = smul.u32 2, %s34
        %p525 = scmp.lt.s32.totalorder %s524, 5
        %s526 = scalar_select %p525, %s524, 5
        %s527 = smul.addr %s526, 8
        %s528 = scalar_lea.vmem %s0, %s527
        %p529 = pneg %p55
        %p530 = pneg %p52
        %p531 = pneg %p76
        %p532 = pneg %p73
        %p533 = pneg %p97
        %p534 = pneg %p94
        %p535 = pneg %p118
        %p536 = pneg %p115
        %p537 = pneg %p139
        %p538 = pneg %p136
        %p539 = pneg %p160
        %p540 = pneg %p157
        %p541 = pneg %p181
        %p542 = pneg %p178
        %p543 = pneg %p202
        %p544 = pneg %p199
        %p545 = pneg %p223
        %p546 = pneg %p220
        %p547 = pneg %p244
        %p548 = pneg %p241
        %p549 = pneg %p265
        %p550 = pneg %p262
        %p551 = pneg %p286
        %p552 = pneg %p283
        %p553 = pneg %p307
        %p554 = pneg %p304
        %p555 = pneg %p328
        %p556 = pneg %p325
        %p557 = pneg %p349
        %p558 = pneg %p346
        %p559 = pneg %p370
        %p560 = pneg %p367
        %p561 = pneg %p391
        %p562 = pneg %p388
        %p563 = pneg %p412
        %p564 = pneg %p409
        %p565 = pneg %p438
        %p566 = pneg %p435
        %s567 = sand.u32 %s425, 1
        %s568 = scalar_lea.sflag [#allocation4], %s567
        %s569 = sand.u32 %s425, 1
        %s570 = smul.addr %s569, 2
        %s571 = scalar_lea.vmem [#allocation3], %s570
        %s572 = smul.u32 2, %s34
        %p573 = scmp.lt.s32.totalorder %s572, 5
        %s574 = scalar_select %p573, %s572, 5
        %s575 = smul.addr %s574, 8
        %s576 = scalar_lea.vmem %s0, %s575
        %s577 = smul.u32 2, %s34
        %v579 = vld [vmem:[%s576] sm:$0xff]
        %v580 = vld [vmem:[%s576 + $0x8] sm:$0xff]
        %v581 = vld [vmem:[%s2] sm:$0x3f]
        %v582 = vld [vmem:[%s3] sm:$0x1]
        %v584 = vlaneseq
        %v585 = vshrl.u32 %v584, 7
        %v586 = vsub.s32 0, %v585
        %v587 = vrot.slane %v582, %v586
        %vm589 = vcmask 48128
        %v591 = vsel %vm589, %v579, 0
        %v594 = vsel %vm589, %v580, 0
        %vm596 = vcmask 1045504
        %v598 = vsel %vm596, %v581, 0
        %600 = vmatprep.subr.mxu0 0.0
        %601 = vmatpush1.msra.mxu0 %v598
        %602 = vmatprep.subr.mxu0 0.0
        %603 = vmatpush1.msra.mxu0 0.0
        %604 = vmatprep.subr.mxu0 0.0
        %605 = vmatpush1.msra.mxu0 0.0
        %606 = vmatprep.subr.mxu0 0.0
        %607 = vmatpush1.msra.mxu0 0.0
        %608 = vmatprep.subr.mxu0 0.0
        %609 = vmatpush1.msra.mxu0 0.0
        %610 = vmatprep.subr.mxu0 0.0
        %611 = vmatpush1.msra.mxu0 0.0
        %612 = vmatprep.subr.mxu0 0.0
        %613 = vmatpush1.msra.mxu0 0.0
        %614 = vmatprep.subr.mxu0 0.0
        %615 = vmatpush1.msra.mxu0 0.0
        %616 = vmatprep.subr.mxu0 0.0
        %617 = vmatpush1.msra.mxu0 0.0
        %618 = vmatprep.subr.mxu0 0.0
        %619 = vmatpush1.msra.mxu0 0.0
        %620 = vmatprep.subr.mxu0 0.0
        %621 = vmatpush1.msra.mxu0 0.0
        %622 = vmatprep.subr.mxu0 0.0
        %623 = vmatpush1.msra.mxu0 0.0
        %624 = vmatprep.subr.mxu0 0.0
        %625 = vmatpush1.msra.mxu0 0.0
        %626 = vmatprep.subr.mxu0 0.0
        %627 = vmatpush1.msra.mxu0 0.0
        %628 = vmatprep.subr.mxu0 0.0
        %629 = vmatpush1.msra.mxu0 0.0
        %630 = vmatprep.subr.mxu0 0.0
        %631 = vmatpush1.msra.mxu0 0.0
        %632 = vmatprep.subr.mxu0 0.0
        %633 = vmatpush1.msra.mxu0 0.0
        %634 = vmatprep.subr.mxu0 0.0
        %635 = vmatpush1.msra.mxu0 0.0
        %636 = vmatprep.subr.mxu0 0.0
        %637 = vmatpush1.msra.mxu0 0.0
        %638 = vmatprep.subr.mxu0 0.0
        %639 = vmatpush1.msra.mxu0 0.0
        %640 = vmatprep.subr.mxu0 0.0
        %641 = vmatpush1.msra.mxu0 0.0
        %642 = vmatprep.subr.mxu0 0.0
        %643 = vmatpush1.msra.mxu0 0.0
        %644 = vmatprep.subr.mxu0 0.0
        %645 = vmatpush1.msra.mxu0 0.0
        %646 = vmatprep.subr.mxu0 0.0
        %647 = vmatpush1.msra.mxu0 0.0
        %648 = vmatprep.subr.mxu0 0.0
        %649 = vmatpush1.msra.mxu0 0.0
        %650 = vmatprep.subr.mxu0 0.0
        %651 = vmatpush1.msra.mxu0 0.0
        %652 = vmatprep.subr.mxu0 0.0
        %653 = vmatpush1.msra.mxu0 0.0
        %654 = vmatprep.subr.mxu0 0.0
        %655 = vmatpush1.msra.mxu0 0.0
        %656 = vmatprep.subr.mxu0 0.0
        %657 = vmatpush1.msra.mxu0 0.0
        %658 = vmatprep.subr.mxu0 0.0
        %659 = vmatpush1.msra.mxu0 0.0
        %660 = vmatprep.subr.mxu0 0.0
        %661 = vmatpush1.msra.mxu0 0.0
        %662 = vmatprep.subr.mxu0 0.0
        %663 = vmatpush1.msra.mxu0 0.0
        %664 = vmatprep.mubr.f32.mxu0 0.0
        %665 = vmatmul.mubr.f32.gmra.mrb[0].mxu0 %v591
        %v666 = vpop.f32.mrb[0].mxu0
        %v667 = vadd.f32 %v587, %v666
        %v668 = vpop.f32.mrb[0].mxu0
        %669 = vmatprep.mubr.f32.mxu0 0.0
        %670 = vmatmul.mubr.f32.gmra.mrb[0].mxu0 %v594
        %v671 = vpop.f32.mrb[0].mxu0
        %v672 = vadd.f32 %v587, %v671
        %v673 = vpop.f32.mrb[0].mxu0
        %674 = vdwg.mxu0
        %v675 = vld [vmem:[%s1] sm:$0xff]
        %v676 = vadd.f32 %v667, %v675
        %v677 = vadd.f32 %v672, %v675
        %v678 = vld [vmem:[%s4] sm:$0xff]
        %v679 = vld [vmem:[%s5] sm:$0x1]
        %v681 = vlaneseq
        %v682 = vshrl.u32 %v681, 7
        %v683 = vsub.s32 0, %v682
        %v684 = vrot.slane %v679, %v683
        %vm686 = vcmask 64512
        %v688 = vsel %vm686, %v676, 0
        %v691 = vsel %vm686, %v677, 0
        %693 = vmatprep.subr.mxu0 0.0
        %694 = vmatpush1.msra.mxu0 %v678
        %695 = vmatprep.subr.mxu0 0.0
        %696 = vmatpush1.msra.mxu0 0.0
        %697 = vmatprep.subr.mxu0 0.0
        %698 = vmatpush1.msra.mxu0 0.0
        %699 = vmatprep.subr.mxu0 0.0
        %700 = vmatpush1.msra.mxu0 0.0
        %701 = vmatprep.subr.mxu0 0.0
        %702 = vmatpush1.msra.mxu0 0.0
        %703 = vmatprep.subr.mxu0 0.0
        %704 = vmatpush1.msra.mxu0 0.0
        %705 = vmatprep.subr.mxu0 0.0
        %706 = vmatpush1.msra.mxu0 0.0
        %707 = vmatprep.subr.mxu0 0.0
        %708 = vmatpush1.msra.mxu0 0.0
        %709 = vmatprep.subr.mxu0 0.0
        %710 = vmatpush1.msra.mxu0 0.0
        %711 = vmatprep.subr.mxu0 0.0
        %712 = vmatpush1.msra.mxu0 0.0
        %713 = vmatprep.subr.mxu0 0.0
        %714 = vmatpush1.msra.mxu0 0.0
        %715 = vmatprep.subr.mxu0 0.0
        %716 = vmatpush1.msra.mxu0 0.0
        %717 = vmatprep.subr.mxu0 0.0
        %718 = vmatpush1.msra.mxu0 0.0
        %719 = vmatprep.subr.mxu0 0.0
        %720 = vmatpush1.msra.mxu0 0.0
        %721 = vmatprep.subr.mxu0 0.0
        %722 = vmatpush1.msra.mxu0 0.0
        %723 = vmatprep.subr.mxu0 0.0
        %724 = vmatpush1.msra.mxu0 0.0
        %725 = vmatprep.subr.mxu0 0.0
        %726 = vmatpush1.msra.mxu0 0.0
        %727 = vmatprep.subr.mxu0 0.0
        %728 = vmatpush1.msra.mxu0 0.0
        %729 = vmatprep.subr.mxu0 0.0
        %730 = vmatpush1.msra.mxu0 0.0
        %731 = vmatprep.subr.mxu0 0.0
        %732 = vmatpush1.msra.mxu0 0.0
        %733 = vmatprep.subr.mxu0 0.0
        %734 = vmatpush1.msra.mxu0 0.0
        %735 = vmatprep.subr.mxu0 0.0
        %736 = vmatpush1.msra.mxu0 0.0
        %737 = vmatprep.subr.mxu0 0.0
        %738 = vmatpush1.msra.mxu0 0.0
        %739 = vmatprep.subr.mxu0 0.0
        %740 = vmatpush1.msra.mxu0 0.0
        %741 = vmatprep.subr.mxu0 0.0
        %742 = vmatpush1.msra.mxu0 0.0
        %743 = vmatprep.subr.mxu0 0.0
        %744 = vmatpush1.msra.mxu0 0.0
        %745 = vmatprep.subr.mxu0 0.0
        %746 = vmatpush1.msra.mxu0 0.0
        %747 = vmatprep.subr.mxu0 0.0
        %748 = vmatpush1.msra.mxu0 0.0
        %749 = vmatprep.subr.mxu0 0.0
        %750 = vmatpush1.msra.mxu0 0.0
        %751 = vmatprep.subr.mxu0 0.0
        %752 = vmatpush1.msra.mxu0 0.0
        %753 = vmatprep.subr.mxu0 0.0
        %754 = vmatpush1.msra.mxu0 0.0
        %755 = vmatprep.subr.mxu0 0.0
        %756 = vmatpush1.msra.mxu0 0.0
        %757 = vmatprep.mubr.f32.mxu0 0.0
        %758 = vmatmul.mubr.f32.gmra.mrb[0].mxu0 %v688
        %v759 = vpop.f32.mrb[0].mxu0
        %v760 = vadd.f32 %v684, %v759
        %v761 = vpop.f32.mrb[0].mxu0
        %762 = vmatprep.mubr.f32.mxu0 0.0
        %763 = vmatmul.mubr.f32.gmra.mrb[0].mxu0 %v691
        %v764 = vpop.f32.mrb[0].mxu0
        %v765 = vadd.f32 %v684, %v764
        %v766 = vpop.f32.mrb[0].mxu0
        %767 = vdwg.mxu0
        %v768 = vmul.f32 %v760, 0.70710677
        %v769 = vmul.f32 %v765, 0.70710677
        %v772 = vcombine.high %v768, %v768
        %v774 = vunpack.c.l.s4 1966171168
        %v775 = vunpack.c.0.s8 %v774
        %v776 = vlaneseq
        %v777 = vshrl.u32 %v776, 7
        %v778 = vsub.s32 %v775, %v777
        %v779 = vrot.slane %v768, %v778
        %v781 = vunpack.c.l.s4 1966171168
        %v782 = vunpack.c.0.s8 %v781
        %v783 = vlaneseq
        %v784 = vshrl.u32 %v783, 7
        %v785 = vsub.s32 %v782, %v784
        %v786 = vrot.slane %v772, %v785
        %v787 = vcombine.high %v779, %v779
        %v788 = vcombine.high %v786, %v786
        %v790 = vunpack.c.l.s4 1966171168
        %v791 = vunpack.c.0.s8 %v790
        %v792 = vlaneseq
        %v793 = vshrl.u32 %v792, 7
        %v794 = vsub.s32 %v791, %v793
        %v795 = vrot.slane %v779, %v794
        %v797 = vunpack.c.l.s4 1966171168
        %v798 = vunpack.c.0.s8 %v797
        %v799 = vlaneseq
        %v800 = vshrl.u32 %v799, 7
        %v801 = vsub.s32 %v798, %v800
        %v802 = vrot.slane %v786, %v801
        %v804 = vunpack.c.l.s4 1966171168
        %v805 = vunpack.c.0.s8 %v804
        %v806 = vlaneseq
        %v807 = vshrl.u32 %v806, 7
        %v808 = vsub.s32 %v805, %v807
        %v809 = vrot.slane %v787, %v808
        %v811 = vunpack.c.l.s4 1966171168
        %v812 = vunpack.c.0.s8 %v811
        %v813 = vlaneseq
        %v814 = vshrl.u32 %v813, 7
        %v815 = vsub.s32 %v812, %v814
        %v816 = vrot.slane %v788, %v815
        %v817 = vcombine.high %v795, %v795
        %v818 = vcombine.high %v802, %v802
        %v819 = vcombine.high %v809, %v809
        %v820 = vcombine.high %v816, %v816
        %v821 = vcombine.high %v769, %v769
        %v823 = vunpack.c.l.s4 1966171168
        %v824 = vunpack.c.0.s8 %v823
        %v825 = vlaneseq
        %v826 = vshrl.u32 %v825, 7
        %v827 = vsub.s32 %v824, %v826
        %v828 = vrot.slane %v769, %v827
        %v830 = vunpack.c.l.s4 1966171168
        %v831 = vunpack.c.0.s8 %v830
        %v832 = vlaneseq
        %v833 = vshrl.u32 %v832, 7
        %v834 = vsub.s32 %v831, %v833
        %v835 = vrot.slane %v821, %v834
        %v836 = vcombine.high %v828, %v828
        %v837 = vcombine.high %v835, %v835
        %v839 = vunpack.c.l.s4 1966171168
        %v840 = vunpack.c.0.s8 %v839
        %v841 = vlaneseq
        %v842 = vshrl.u32 %v841, 7
        %v843 = vsub.s32 %v840, %v842
        %v844 = vrot.slane %v828, %v843
        %v846 = vunpack.c.l.s4 1966171168
        %v847 = vunpack.c.0.s8 %v846
        %v848 = vlaneseq
        %v849 = vshrl.u32 %v848, 7
        %v850 = vsub.s32 %v847, %v849
        %v851 = vrot.slane %v835, %v850
        %v853 = vunpack.c.l.s4 1966171168
        %v854 = vunpack.c.0.s8 %v853
        %v855 = vlaneseq
        %v856 = vshrl.u32 %v855, 7
        %v857 = vsub.s32 %v854, %v856
        %v858 = vrot.slane %v836, %v857
        %v860 = vunpack.c.l.s4 1966171168
        %v861 = vunpack.c.0.s8 %v860
        %v862 = vlaneseq
        %v863 = vshrl.u32 %v862, 7
        %v864 = vsub.s32 %v861, %v863
        %v865 = vrot.slane %v837, %v864
        %v866 = vcombine.high %v844, %v844
        %v867 = vcombine.high %v851, %v851
        %v868 = vcombine.high %v858, %v858
        %v869 = vcombine.high %v865, %v865
        %v870 = vlaneseq
        %v871 = vshrl.u32 %v870, 7
        %v872 = vsub.s32 0, %v871
        %v873 = vrot.slane %v795, %v872
        %v874 = vlaneseq
        %v875 = vshrl.u32 %v874, 7
        %v876 = vsub.s32 0, %v875
        %v877 = vrot.slane %v809, %v876
        %v878 = vlaneseq
        %v879 = vshrl.u32 %v878, 7
        %v880 = vsub.s32 0, %v879
        %v881 = vrot.slane %v817, %v880
        %v882 = vlaneseq
        %v883 = vshrl.u32 %v882, 7
        %v884 = vsub.s32 0, %v883
        %v885 = vrot.slane %v819, %v884
        %v886 = vlaneseq
        %v887 = vshrl.u32 %v886, 7
        %v888 = vsub.s32 0, %v887
        %v889 = vrot.slane %v802, %v888
        %v890 = vlaneseq
        %v891 = vshrl.u32 %v890, 7
        %v892 = vsub.s32 0, %v891
        %v893 = vrot.slane %v816, %v892
        %v894 = vlaneseq
        %v895 = vshrl.u32 %v894, 7
        %v896 = vsub.s32 0, %v895
        %v897 = vrot.slane %v818, %v896
        %v898 = vlaneseq
        %v899 = vshrl.u32 %v898, 7
        %v900 = vsub.s32 0, %v899
        %v901 = vrot.slane %v820, %v900
        %v902 = vlaneseq
        %v903 = vshrl.u32 %v902, 7
        %v904 = vsub.s32 0, %v903
        %v905 = vrot.slane %v844, %v904
        %v906 = vlaneseq
        %v907 = vshrl.u32 %v906, 7
        %v908 = vsub.s32 0, %v907
        %v909 = vrot.slane %v858, %v908
        %v910 = vlaneseq
        %v911 = vshrl.u32 %v910, 7
        %v912 = vsub.s32 0, %v911
        %v913 = vrot.slane %v866, %v912
        %v914 = vlaneseq
        %v915 = vshrl.u32 %v914, 7
        %v916 = vsub.s32 0, %v915
        %v917 = vrot.slane %v868, %v916
        %v918 = vlaneseq
        %v919 = vshrl.u32 %v918, 7
        %v920 = vsub.s32 0, %v919
        %v921 = vrot.slane %v851, %v920
        %v922 = vlaneseq
        %v923 = vshrl.u32 %v922, 7
        %v924 = vsub.s32 0, %v923
        %v925 = vrot.slane %v865, %v924
        %v926 = vlaneseq
        %v927 = vshrl.u32 %v926, 7
        %v928 = vsub.s32 0, %v927
        %v929 = vrot.slane %v867, %v928
        %v930 = vlaneseq
        %v931 = vshrl.u32 %v930, 7
        %v932 = vsub.s32 0, %v931
        %v933 = vrot.slane %v869, %v932
        %952 = vrot.lane.b32.xlu0 %v760, 120
        %v953 = vpop.permute.xlu0 %952
        %954 = vrot.lane.b32.xlu0 %v765, 120
        %v955 = vpop.permute.xlu0 %954
        %v958 = vmul.f32 %v873, %v953
        %v959 = vmul.f32 %v877, %v953
        %v960 = vmul.f32 %v881, %v953
        %v961 = vmul.f32 %v885, %v953
        %v962 = vmul.f32 %v889, %v953
        %v963 = vmul.f32 %v893, %v953
        %v964 = vmul.f32 %v897, %v953
        %v965 = vmul.f32 %v901, %v953
        %v966 = vmul.f32 %v905, %v955
        %v967 = vmul.f32 %v909, %v955
        %v968 = vmul.f32 %v913, %v955
        %v969 = vmul.f32 %v917, %v955
        %v970 = vmul.f32 %v921, %v955
        %v971 = vmul.f32 %v925, %v955
        %v972 = vmul.f32 %v929, %v955
        %v973 = vmul.f32 %v933, %v955
        %vm974 = vcmask 15360
        %v975 = vsel %vm974, %v958, 0.0
        %976 = vadd.xlane.f32.xlu0 %v975
        %v977 = vpop.xlane.xlu0 %976
        %v978 = vsel %vm974, %v959, 0.0
        %979 = vadd.xlane.f32.xlu0 %v978
        %v980 = vpop.xlane.xlu0 %979
        %v981 = vsel %vm974, %v960, 0.0
        %982 = vadd.xlane.f32.xlu0 %v981
        %v983 = vpop.xlane.xlu0 %982
        %v984 = vsel %vm974, %v961, 0.0
        %985 = vadd.xlane.f32.xlu0 %v984
        %v986 = vpop.xlane.xlu0 %985
        %v987 = vsel %vm974, %v962, 0.0
        %988 = vadd.xlane.f32.xlu0 %v987
        %v989 = vpop.xlane.xlu0 %988
        %v990 = vsel %vm974, %v963, 0.0
        %991 = vadd.xlane.f32.xlu0 %v990
        %v992 = vpop.xlane.xlu0 %991
        %v993 = vsel %vm974, %v964, 0.0
        %994 = vadd.xlane.f32.xlu0 %v993
        %v995 = vpop.xlane.xlu0 %994
        %v996 = vsel %vm974, %v965, 0.0
        %997 = vadd.xlane.f32.xlu0 %v996
        %v998 = vpop.xlane.xlu0 %997
        %v999 = vsel %vm974, %v966, 0.0
        %1000 = vadd.xlane.f32.xlu0 %v999
        %v1001 = vpop.xlane.xlu0 %1000
        %v1002 = vsel %vm974, %v967, 0.0
        %1003 = vadd.xlane.f32.xlu0 %v1002
        %v1004 = vpop.xlane.xlu0 %1003
        %v1005 = vsel %vm974, %v968, 0.0
        %1006 = vadd.xlane.f32.xlu0 %v1005
        %v1007 = vpop.xlane.xlu0 %1006
        %v1008 = vsel %vm974, %v969, 0.0
        %1009 = vadd.xlane.f32.xlu0 %v1008
        %v1010 = vpop.xlane.xlu0 %1009
        %v1011 = vsel %vm974, %v970, 0.0
        %1012 = vadd.xlane.f32.xlu0 %v1011
        %v1013 = vpop.xlane.xlu0 %1012
        %v1014 = vsel %vm974, %v971, 0.0
        %1015 = vadd.xlane.f32.xlu0 %v1014
        %v1016 = vpop.xlane.xlu0 %1015
        %v1017 = vsel %vm974, %v972, 0.0
        %1018 = vadd.xlane.f32.xlu0 %v1017
        %v1019 = vpop.xlane.xlu0 %1018
        %v1020 = vsel %vm974, %v973, 0.0
        %1021 = vadd.xlane.f32.xlu0 %v1020
        %v1022 = vpop.xlane.xlu0 %1021
        %v1039 = vlaneseq
        %v1040 = vand.u32 %v1039, 127
        %v1041 = vlaneseq
        %v1042 = vshrl.u32 %v1041, 7
        %v1043 = vsub.s32 %v1040, %v1042
        %v1044 = vrot.slane %v977, %v1043
        %v1045 = vlaneseq
        %v1046 = vshrl.u32 %v1045, 7
        %v1047 = vsub.s32 %v1040, %v1046
        %v1048 = vrot.slane %v980, %v1047
        %v1049 = vlaneseq
        %v1050 = vshrl.u32 %v1049, 7
        %v1051 = vsub.s32 %v1040, %v1050
        %v1052 = vrot.slane %v983, %v1051
        %v1053 = vlaneseq
        %v1054 = vshrl.u32 %v1053, 7
        %v1055 = vsub.s32 %v1040, %v1054
        %v1056 = vrot.slane %v986, %v1055
        %v1057 = vlaneseq
        %v1058 = vshrl.u32 %v1057, 7
        %v1059 = vsub.s32 %v1040, %v1058
        %v1060 = vrot.slane %v989, %v1059
        %v1061 = vlaneseq
        %v1062 = vshrl.u32 %v1061, 7
        %v1063 = vsub.s32 %v1040, %v1062
        %v1064 = vrot.slane %v992, %v1063
        %v1065 = vlaneseq
        %v1066 = vshrl.u32 %v1065, 7
        %v1067 = vsub.s32 %v1040, %v1066
        %v1068 = vrot.slane %v995, %v1067
        %v1069 = vlaneseq
        %v1070 = vshrl.u32 %v1069, 7
        %v1071 = vsub.s32 %v1040, %v1070
        %v1072 = vrot.slane %v998, %v1071
        %v1073 = vlaneseq
        %v1074 = vshrl.u32 %v1073, 7
        %v1075 = vsub.s32 %v1040, %v1074
        %v1076 = vrot.slane %v1001, %v1075
        %v1077 = vlaneseq
        %v1078 = vshrl.u32 %v1077, 7
        %v1079 = vsub.s32 %v1040, %v1078
        %v1080 = vrot.slane %v1004, %v1079
        %v1081 = vlaneseq
        %v1082 = vshrl.u32 %v1081, 7
        %v1083 = vsub.s32 %v1040, %v1082
        %v1084 = vrot.slane %v1007, %v1083
        %v1085 = vlaneseq
        %v1086 = vshrl.u32 %v1085, 7
        %v1087 = vsub.s32 %v1040, %v1086
        %v1088 = vrot.slane %v1010, %v1087
        %v1089 = vlaneseq
        %v1090 = vshrl.u32 %v1089, 7
        %v1091 = vsub.s32 %v1040, %v1090
        %v1092 = vrot.slane %v1013, %v1091
        %v1093 = vlaneseq
        %v1094 = vshrl.u32 %v1093, 7
        %v1095 = vsub.s32 %v1040, %v1094
        %v1096 = vrot.slane %v1016, %v1095
        %v1097 = vlaneseq
        %v1098 = vshrl.u32 %v1097, 7
        %v1099 = vsub.s32 %v1040, %v1098
        %v1100 = vrot.slane %v1019, %v1099
        %v1101 = vlaneseq
        %v1102 = vshrl.u32 %v1101, 7
        %v1103 = vsub.s32 %v1040, %v1102
        %v1104 = vrot.slane %v1022, %v1103
        %vm1105 = vcmask 1041409
        %v1106 = vsel %vm1105, %v1048, %v1044
        %vm1107 = vcmask 1042434
        %v1108 = vsel %vm1107, %v1052, %v1106
        %vm1109 = vcmask 1043459
        %v1110 = vsel %vm1109, %v1056, %v1108
        %vm1111 = vcmask 1044484
        %v1112 = vsel %vm1111, %v1060, %v1110
        %vm1113 = vcmask 1045509
        %v1114 = vsel %vm1113, %v1064, %v1112
        %vm1115 = vcmask 1046534
        %v1116 = vsel %vm1115, %v1068, %v1114
        %vm1117 = vcmask 1047559
        %v1118 = vsel %vm1117, %v1072, %v1116
        %v1119 = vsel %vm1105, %v1080, %v1076
        %v1120 = vsel %vm1107, %v1084, %v1119
        %v1121 = vsel %vm1109, %v1088, %v1120
        %v1122 = vsel %vm1111, %v1092, %v1121
        %v1123 = vsel %vm1113, %v1096, %v1122
        %v1124 = vsel %vm1115, %v1100, %v1123
        %v1125 = vsel %vm1117, %v1104, %v1124
        %v1128 = vsel %vm686, %v1118, -inf
        %1129 = vmax.xlane.f32.xlu0 %v1128
        %v1130 = vpop.xlane.xlu0 %1129
        %v1131 = vsel %vm686, %v1125, -inf
        %1132 = vmax.xlane.f32.xlu0 %v1131
        %v1133 = vpop.xlane.xlu0 %1132
        %v1136 = vlaneseq
        %v1137 = vshrl.u32 %v1136, 7
        %v1138 = vsub.s32 0, %v1137
        %v1139 = vrot.slane %v1130, %v1138
        %v1140 = vlaneseq
        %v1141 = vshrl.u32 %v1140, 7
        %v1142 = vsub.s32 1, %v1141
        %v1143 = vrot.slane %v1130, %v1142
        %v1144 = vlaneseq
        %v1145 = vshrl.u32 %v1144, 7
        %v1146 = vsub.s32 2, %v1145
        %v1147 = vrot.slane %v1130, %v1146
        %v1148 = vlaneseq
        %v1149 = vshrl.u32 %v1148, 7
        %v1150 = vsub.s32 3, %v1149
        %v1151 = vrot.slane %v1130, %v1150
        %v1152 = vlaneseq
        %v1153 = vshrl.u32 %v1152, 7
        %v1154 = vsub.s32 4, %v1153
        %v1155 = vrot.slane %v1130, %v1154
        %v1156 = vlaneseq
        %v1157 = vshrl.u32 %v1156, 7
        %v1158 = vsub.s32 5, %v1157
        %v1159 = vrot.slane %v1130, %v1158
        %v1160 = vlaneseq
        %v1161 = vshrl.u32 %v1160, 7
        %v1162 = vsub.s32 6, %v1161
        %v1163 = vrot.slane %v1130, %v1162
        %v1164 = vlaneseq
        %v1165 = vshrl.u32 %v1164, 7
        %v1166 = vsub.s32 7, %v1165
        %v1167 = vrot.slane %v1130, %v1166
        %v1168 = vlaneseq
        %v1169 = vshrl.u32 %v1168, 7
        %v1170 = vsub.s32 0, %v1169
        %v1171 = vrot.slane %v1133, %v1170
        %v1172 = vlaneseq
        %v1173 = vshrl.u32 %v1172, 7
        %v1174 = vsub.s32 1, %v1173
        %v1175 = vrot.slane %v1133, %v1174
        %v1176 = vlaneseq
        %v1177 = vshrl.u32 %v1176, 7
        %v1178 = vsub.s32 2, %v1177
        %v1179 = vrot.slane %v1133, %v1178
        %v1180 = vlaneseq
        %v1181 = vshrl.u32 %v1180, 7
        %v1182 = vsub.s32 3, %v1181
        %v1183 = vrot.slane %v1133, %v1182
        %v1184 = vlaneseq
        %v1185 = vshrl.u32 %v1184, 7
        %v1186 = vsub.s32 4, %v1185
        %v1187 = vrot.slane %v1133, %v1186
        %v1188 = vlaneseq
        %v1189 = vshrl.u32 %v1188, 7
        %v1190 = vsub.s32 5, %v1189
        %v1191 = vrot.slane %v1133, %v1190
        %v1192 = vlaneseq
        %v1193 = vshrl.u32 %v1192, 7
        %v1194 = vsub.s32 6, %v1193
        %v1195 = vrot.slane %v1133, %v1194
        %v1196 = vlaneseq
        %v1197 = vshrl.u32 %v1196, 7
        %v1198 = vsub.s32 7, %v1197
        %v1199 = vrot.slane %v1133, %v1198
        %v1216 = vsub.f32 %v977, %v1139
        %v1217 = vsub.f32 %v980, %v1143
        %v1218 = vsub.f32 %v983, %v1147
        %v1219 = vsub.f32 %v986, %v1151
        %v1220 = vsub.f32 %v989, %v1155
        %v1221 = vsub.f32 %v992, %v1159
        %v1222 = vsub.f32 %v995, %v1163
        %v1223 = vsub.f32 %v998, %v1167
        %v1224 = vsub.f32 %v1001, %v1171
        %v1225 = vsub.f32 %v1004, %v1175
        %v1226 = vsub.f32 %v1007, %v1179
        %v1227 = vsub.f32 %v1010, %v1183
        %v1228 = vsub.f32 %v1013, %v1187
        %v1229 = vsub.f32 %v1016, %v1191
        %v1230 = vsub.f32 %v1019, %v1195
        %v1231 = vsub.f32 %v1022, %v1199
        %v1232 = vmul.f32 %v1216, 1.442695
        %v1233 = vpow.pop %v1232
        %v1234 = vmul.f32 %v1217, 1.442695
        %v1235 = vpow.pop %v1234
        %v1236 = vmul.f32 %v1218, 1.442695
        %v1237 = vpow.pop %v1236
        %v1238 = vmul.f32 %v1219, 1.442695
        %v1239 = vpow.pop %v1238
        %v1240 = vmul.f32 %v1220, 1.442695
        %v1241 = vpow.pop %v1240
        %v1242 = vmul.f32 %v1221, 1.442695
        %v1243 = vpow.pop %v1242
        %v1244 = vmul.f32 %v1222, 1.442695
        %v1245 = vpow.pop %v1244
        %v1246 = vmul.f32 %v1223, 1.442695
        %v1247 = vpow.pop %v1246
        %v1248 = vmul.f32 %v1224, 1.442695
        %v1249 = vpow.pop %v1248
        %v1250 = vmul.f32 %v1225, 1.442695
        %v1251 = vpow.pop %v1250
        %v1252 = vmul.f32 %v1226, 1.442695
        %v1253 = vpow.pop %v1252
        %v1254 = vmul.f32 %v1227, 1.442695
        %v1255 = vpow.pop %v1254
        %v1256 = vmul.f32 %v1228, 1.442695
        %v1257 = vpow.pop %v1256
        %v1258 = vmul.f32 %v1229, 1.442695
        %v1259 = vpow.pop %v1258
        %v1260 = vmul.f32 %v1230, 1.442695
        %v1261 = vpow.pop %v1260
        %v1262 = vmul.f32 %v1231, 1.442695
        %v1263 = vpow.pop %v1262
        %1280 = vset.pattern.permute.xlu0 0
        %1281 = vperm.xlu0 %1280, %v1233
        %v1282 = vpop.permute.xlu0 %1281
        %1283 = vset.pattern.permute.xlu0 0
        %1284 = vperm.xlu0 %1283, %v1235
        %v1285 = vpop.permute.xlu0 %1284
        %1286 = vset.pattern.permute.xlu0 0
        %1287 = vperm.xlu0 %1286, %v1237
        %v1288 = vpop.permute.xlu0 %1287
        %1289 = vset.pattern.permute.xlu0 0
        %1290 = vperm.xlu0 %1289, %v1239
        %v1291 = vpop.permute.xlu0 %1290
        %1292 = vset.pattern.permute.xlu0 0
        %1293 = vperm.xlu0 %1292, %v1241
        %v1294 = vpop.permute.xlu0 %1293
        %1295 = vset.pattern.permute.xlu0 0
        %1296 = vperm.xlu0 %1295, %v1243
        %v1297 = vpop.permute.xlu0 %1296
        %1298 = vset.pattern.permute.xlu0 0
        %1299 = vperm.xlu0 %1298, %v1245
        %v1300 = vpop.permute.xlu0 %1299
        %1301 = vset.pattern.permute.xlu0 0
        %1302 = vperm.xlu0 %1301, %v1247
        %v1303 = vpop.permute.xlu0 %1302
        %1304 = vset.pattern.permute.xlu0 0
        %1305 = vperm.xlu0 %1304, %v1249
        %v1306 = vpop.permute.xlu0 %1305
        %1307 = vset.pattern.permute.xlu0 0
        %1308 = vperm.xlu0 %1307, %v1251
        %v1309 = vpop.permute.xlu0 %1308
        %1310 = vset.pattern.permute.xlu0 0
        %1311 = vperm.xlu0 %1310, %v1253
        %v1312 = vpop.permute.xlu0 %1311
        %1313 = vset.pattern.permute.xlu0 0
        %1314 = vperm.xlu0 %1313, %v1255
        %v1315 = vpop.permute.xlu0 %1314
        %1316 = vset.pattern.permute.xlu0 0
        %1317 = vperm.xlu0 %1316, %v1257
        %v1318 = vpop.permute.xlu0 %1317
        %1319 = vset.pattern.permute.xlu0 0
        %1320 = vperm.xlu0 %1319, %v1259
        %v1321 = vpop.permute.xlu0 %1320
        %1322 = vset.pattern.permute.xlu0 0
        %1323 = vperm.xlu0 %1322, %v1261
        %v1324 = vpop.permute.xlu0 %1323
        %1325 = vset.pattern.permute.xlu0 0
        %1326 = vperm.xlu0 %1325, %v1263
        %v1327 = vpop.permute.xlu0 %1326
        %v1328 = vlaneseq
        %v1329 = vshrl.u32 %v1328, 7
        %v1330 = vsub.s32 %v1040, %v1329
        %v1331 = vrot.slane %v1282, %v1330
        %v1332 = vlaneseq
        %v1333 = vshrl.u32 %v1332, 7
        %v1334 = vsub.s32 %v1040, %v1333
        %v1335 = vrot.slane %v1285, %v1334
        %v1336 = vlaneseq
        %v1337 = vshrl.u32 %v1336, 7
        %v1338 = vsub.s32 %v1040, %v1337
        %v1339 = vrot.slane %v1288, %v1338
        %v1340 = vlaneseq
        %v1341 = vshrl.u32 %v1340, 7
        %v1342 = vsub.s32 %v1040, %v1341
        %v1343 = vrot.slane %v1291, %v1342
        %v1344 = vlaneseq
        %v1345 = vshrl.u32 %v1344, 7
        %v1346 = vsub.s32 %v1040, %v1345
        %v1347 = vrot.slane %v1294, %v1346
        %v1348 = vlaneseq
        %v1349 = vshrl.u32 %v1348, 7
        %v1350 = vsub.s32 %v1040, %v1349
        %v1351 = vrot.slane %v1297, %v1350
        %v1352 = vlaneseq
        %v1353 = vshrl.u32 %v1352, 7
        %v1354 = vsub.s32 %v1040, %v1353
        %v1355 = vrot.slane %v1300, %v1354
        %v1356 = vlaneseq
        %v1357 = vshrl.u32 %v1356, 7
        %v1358 = vsub.s32 %v1040, %v1357
        %v1359 = vrot.slane %v1303, %v1358
        %v1360 = vlaneseq
        %v1361 = vshrl.u32 %v1360, 7
        %v1362 = vsub.s32 %v1040, %v1361
        %v1363 = vrot.slane %v1306, %v1362
        %v1364 = vlaneseq
        %v1365 = vshrl.u32 %v1364, 7
        %v1366 = vsub.s32 %v1040, %v1365
        %v1367 = vrot.slane %v1309, %v1366
        %v1368 = vlaneseq
        %v1369 = vshrl.u32 %v1368, 7
        %v1370 = vsub.s32 %v1040, %v1369
        %v1371 = vrot.slane %v1312, %v1370
        %v1372 = vlaneseq
        %v1373 = vshrl.u32 %v1372, 7
        %v1374 = vsub.s32 %v1040, %v1373
        %v1375 = vrot.slane %v1315, %v1374
        %v1376 = vlaneseq
        %v1377 = vshrl.u32 %v1376, 7
        %v1378 = vsub.s32 %v1040, %v1377
        %v1379 = vrot.slane %v1318, %v1378
        %v1380 = vlaneseq
        %v1381 = vshrl.u32 %v1380, 7
        %v1382 = vsub.s32 %v1040, %v1381
        %v1383 = vrot.slane %v1321, %v1382
        %v1384 = vlaneseq
        %v1385 = vshrl.u32 %v1384, 7
        %v1386 = vsub.s32 %v1040, %v1385
        %v1387 = vrot.slane %v1324, %v1386
        %v1388 = vlaneseq
        %v1389 = vshrl.u32 %v1388, 7
        %v1390 = vsub.s32 %v1040, %v1389
        %v1391 = vrot.slane %v1327, %v1390
        %v1392 = vsel %vm1105, %v1335, %v1331
        %v1393 = vsel %vm1107, %v1339, %v1392
        %v1394 = vsel %vm1109, %v1343, %v1393
        %v1395 = vsel %vm1111, %v1347, %v1394
        %v1396 = vsel %vm1113, %v1351, %v1395
        %v1397 = vsel %vm1115, %v1355, %v1396
        %v1398 = vsel %vm1117, %v1359, %v1397
        %v1399 = vsel %vm1105, %v1367, %v1363
        %v1400 = vsel %vm1107, %v1371, %v1399
        %v1401 = vsel %vm1109, %v1375, %v1400
        %v1402 = vsel %vm1111, %v1379, %v1401
        %v1403 = vsel %vm1113, %v1383, %v1402
        %v1404 = vsel %vm1115, %v1387, %v1403
        %v1405 = vsel %vm1117, %v1391, %v1404
        %v1408 = vsel %vm686, %v1398, 0.0
        %1409 = vadd.xlane.f32.xlu0 %v1408
        %v1410 = vpop.xlane.xlu0 %1409
        %v1411 = vsel %vm686, %v1405, 0.0
        %1412 = vadd.xlane.f32.xlu0 %v1411
        %v1413 = vpop.xlane.xlu0 %1412
        %v1414 = vrcp.pop %v1410
        %v1415 = vrcp.pop %v1413
        %v1418 = vlaneseq
        %v1419 = vshrl.u32 %v1418, 7
        %v1420 = vsub.s32 0, %v1419
        %v1421 = vrot.slane %v1414, %v1420
        %v1422 = vlaneseq
        %v1423 = vshrl.u32 %v1422, 7
        %v1424 = vsub.s32 1, %v1423
        %v1425 = vrot.slane %v1414, %v1424
        %v1426 = vlaneseq
        %v1427 = vshrl.u32 %v1426, 7
        %v1428 = vsub.s32 2, %v1427
        %v1429 = vrot.slane %v1414, %v1428
        %v1430 = vlaneseq
        %v1431 = vshrl.u32 %v1430, 7
        %v1432 = vsub.s32 3, %v1431
        %v1433 = vrot.slane %v1414, %v1432
        %v1434 = vlaneseq
        %v1435 = vshrl.u32 %v1434, 7
        %v1436 = vsub.s32 4, %v1435
        %v1437 = vrot.slane %v1414, %v1436
        %v1438 = vlaneseq
        %v1439 = vshrl.u32 %v1438, 7
        %v1440 = vsub.s32 5, %v1439
        %v1441 = vrot.slane %v1414, %v1440
        %v1442 = vlaneseq
        %v1443 = vshrl.u32 %v1442, 7
        %v1444 = vsub.s32 6, %v1443
        %v1445 = vrot.slane %v1414, %v1444
        %v1446 = vlaneseq
        %v1447 = vshrl.u32 %v1446, 7
        %v1448 = vsub.s32 7, %v1447
        %v1449 = vrot.slane %v1414, %v1448
        %v1450 = vlaneseq
        %v1451 = vshrl.u32 %v1450, 7
        %v1452 = vsub.s32 0, %v1451
        %v1453 = vrot.slane %v1415, %v1452
        %v1454 = vlaneseq
        %v1455 = vshrl.u32 %v1454, 7
        %v1456 = vsub.s32 1, %v1455
        %v1457 = vrot.slane %v1415, %v1456
        %v1458 = vlaneseq
        %v1459 = vshrl.u32 %v1458, 7
        %v1460 = vsub.s32 2, %v1459
        %v1461 = vrot.slane %v1415, %v1460
        %v1462 = vlaneseq
        %v1463 = vshrl.u32 %v1462, 7
        %v1464 = vsub.s32 3, %v1463
        %v1465 = vrot.slane %v1415, %v1464
        %v1466 = vlaneseq
        %v1467 = vshrl.u32 %v1466, 7
        %v1468 = vsub.s32 4, %v1467
        %v1469 = vrot.slane %v1415, %v1468
        %v1470 = vlaneseq
        %v1471 = vshrl.u32 %v1470, 7
        %v1472 = vsub.s32 5, %v1471
        %v1473 = vrot.slane %v1415, %v1472
        %v1474 = vlaneseq
        %v1475 = vshrl.u32 %v1474, 7
        %v1476 = vsub.s32 6, %v1475
        %v1477 = vrot.slane %v1415, %v1476
        %v1478 = vlaneseq
        %v1479 = vshrl.u32 %v1478, 7
        %v1480 = vsub.s32 7, %v1479
        %v1481 = vrot.slane %v1415, %v1480
        %v1498 = vmul.f32 %v1233, %v1421
        %v1499 = vmul.f32 %v1235, %v1425
        %v1500 = vmul.f32 %v1237, %v1429
        %v1501 = vmul.f32 %v1239, %v1433
        %v1502 = vmul.f32 %v1241, %v1437
        %v1503 = vmul.f32 %v1243, %v1441
        %v1504 = vmul.f32 %v1245, %v1445
        %v1505 = vmul.f32 %v1247, %v1449
        %v1506 = vmul.f32 %v1249, %v1453
        %v1507 = vmul.f32 %v1251, %v1457
        %v1508 = vmul.f32 %v1253, %v1461
        %v1509 = vmul.f32 %v1255, %v1465
        %v1510 = vmul.f32 %v1257, %v1469
        %v1511 = vmul.f32 %v1259, %v1473
        %v1512 = vmul.f32 %v1261, %v1477
        %v1513 = vmul.f32 %v1263, %v1481
        %1515 = vset.pattern.permute.xlu0 0
        %1516 = vperm.xlu0 %1515, %v1498
        %v1517 = vpop.permute.xlu0 %1516
        %1520 = vset.pattern.permute.xlu0 0
        %1521 = vperm.xlu0 %1520, %v1499
        %v1522 = vpop.permute.xlu0 %1521
        %1525 = vset.pattern.permute.xlu0 0
        %1526 = vperm.xlu0 %1525, %v1500
        %v1527 = vpop.permute.xlu0 %1526
        %1530 = vset.pattern.permute.xlu0 0
        %1531 = vperm.xlu0 %1530, %v1501
        %v1532 = vpop.permute.xlu0 %1531
        %1535 = vset.pattern.permute.xlu0 0
        %1536 = vperm.xlu0 %1535, %v1502
        %v1537 = vpop.permute.xlu0 %1536
        %1540 = vset.pattern.permute.xlu0 0
        %1541 = vperm.xlu0 %1540, %v1503
        %v1542 = vpop.permute.xlu0 %1541
        %1545 = vset.pattern.permute.xlu0 0
        %1546 = vperm.xlu0 %1545, %v1504
        %v1547 = vpop.permute.xlu0 %1546
        %1550 = vset.pattern.permute.xlu0 0
        %1551 = vperm.xlu0 %1550, %v1505
        %v1552 = vpop.permute.xlu0 %1551
        %1555 = vset.pattern.permute.xlu0 0
        %1556 = vperm.xlu0 %1555, %v1506
        %v1557 = vpop.permute.xlu0 %1556
        %1560 = vset.pattern.permute.xlu0 0
        %1561 = vperm.xlu0 %1560, %v1507
        %v1562 = vpop.permute.xlu0 %1561
        %1565 = vset.pattern.permute.xlu0 0
        %1566 = vperm.xlu0 %1565, %v1508
        %v1567 = vpop.permute.xlu0 %1566
        %1570 = vset.pattern.permute.xlu0 0
        %1571 = vperm.xlu0 %1570, %v1509
        %v1572 = vpop.permute.xlu0 %1571
        %1575 = vset.pattern.permute.xlu0 0
        %1576 = vperm.xlu0 %1575, %v1510
        %v1577 = vpop.permute.xlu0 %1576
        %1580 = vset.pattern.permute.xlu0 0
        %1581 = vperm.xlu0 %1580, %v1511
        %v1582 = vpop.permute.xlu0 %1581
        %1585 = vset.pattern.permute.xlu0 0
        %1586 = vperm.xlu0 %1585, %v1512
        %v1587 = vpop.permute.xlu0 %1586
        %1590 = vset.pattern.permute.xlu0 0
        %1591 = vperm.xlu0 %1590, %v1513
        %v1592 = vpop.permute.xlu0 %1591
        %v1594 = vmul.f32 %v1517, %v760
        %v1595 = vmul.f32 %v1522, %v760
        %v1596 = vmul.f32 %v1527, %v760
        %v1597 = vmul.f32 %v1532, %v760
        %v1598 = vmul.f32 %v1537, %v760
        %v1599 = vmul.f32 %v1542, %v760
        %v1600 = vmul.f32 %v1547, %v760
        %v1601 = vmul.f32 %v1552, %v760
        %v1602 = vmul.f32 %v1557, %v765
        %v1603 = vmul.f32 %v1562, %v765
        %v1604 = vmul.f32 %v1567, %v765
        %v1605 = vmul.f32 %v1572, %v765
        %v1606 = vmul.f32 %v1577, %v765
        %v1607 = vmul.f32 %v1582, %v765
        %v1608 = vmul.f32 %v1587, %v765
        %v1609 = vmul.f32 %v1592, %v765
        %vm1610 = vcmask 146560
        %v1611 = vsel %vm1610, %v1594, 0.0
        %v1612 = vrot.slane %v1611, 4
        %v1613 = vadd.f32 %v1611, %v1612
        %v1614 = vrot.slane %v1613, 2
        %v1615 = vadd.f32 %v1613, %v1614
        %v1616 = vrot.slane %v1615, 1
        %v1617 = vadd.f32 %v1615, %v1616
        %v1618 = vsel %vm1610, %v1595, 0.0
        %v1619 = vrot.slane %v1618, 4
        %v1620 = vadd.f32 %v1618, %v1619
        %v1621 = vrot.slane %v1620, 2
        %v1622 = vadd.f32 %v1620, %v1621
        %v1623 = vrot.slane %v1622, 1
        %v1624 = vadd.f32 %v1622, %v1623
        %v1625 = vsel %vm1610, %v1596, 0.0
        %v1626 = vrot.slane %v1625, 4
        %v1627 = vadd.f32 %v1625, %v1626
        %v1628 = vrot.slane %v1627, 2
        %v1629 = vadd.f32 %v1627, %v1628
        %v1630 = vrot.slane %v1629, 1
        %v1631 = vadd.f32 %v1629, %v1630
        %v1632 = vsel %vm1610, %v1597, 0.0
        %v1633 = vrot.slane %v1632, 4
        %v1634 = vadd.f32 %v1632, %v1633
        %v1635 = vrot.slane %v1634, 2
        %v1636 = vadd.f32 %v1634, %v1635
        %v1637 = vrot.slane %v1636, 1
        %v1638 = vadd.f32 %v1636, %v1637
        %v1639 = vsel %vm1610, %v1598, 0.0
        %v1640 = vrot.slane %v1639, 4
        %v1641 = vadd.f32 %v1639, %v1640
        %v1642 = vrot.slane %v1641, 2
        %v1643 = vadd.f32 %v1641, %v1642
        %v1644 = vrot.slane %v1643, 1
        %v1645 = vadd.f32 %v1643, %v1644
        %v1646 = vsel %vm1610, %v1599, 0.0
        %v1647 = vrot.slane %v1646, 4
        %v1648 = vadd.f32 %v1646, %v1647
        %v1649 = vrot.slane %v1648, 2
        %v1650 = vadd.f32 %v1648, %v1649
        %v1651 = vrot.slane %v1650, 1
        %v1652 = vadd.f32 %v1650, %v1651
        %v1653 = vsel %vm1610, %v1600, 0.0
        %v1654 = vrot.slane %v1653, 4
        %v1655 = vadd.f32 %v1653, %v1654
        %v1656 = vrot.slane %v1655, 2
        %v1657 = vadd.f32 %v1655, %v1656
        %v1658 = vrot.slane %v1657, 1
        %v1659 = vadd.f32 %v1657, %v1658
        %v1660 = vsel %vm1610, %v1601, 0.0
        %v1661 = vrot.slane %v1660, 4
        %v1662 = vadd.f32 %v1660, %v1661
        %v1663 = vrot.slane %v1662, 2
        %v1664 = vadd.f32 %v1662, %v1663
        %v1665 = vrot.slane %v1664, 1
        %v1666 = vadd.f32 %v1664, %v1665
        %v1667 = vsel %vm1610, %v1602, 0.0
        %v1668 = vrot.slane %v1667, 4
        %v1669 = vadd.f32 %v1667, %v1668
        %v1670 = vrot.slane %v1669, 2
        %v1671 = vadd.f32 %v1669, %v1670
        %v1672 = vrot.slane %v1671, 1
        %v1673 = vadd.f32 %v1671, %v1672
        %v1674 = vsel %vm1610, %v1603, 0.0
        %v1675 = vrot.slane %v1674, 4
        %v1676 = vadd.f32 %v1674, %v1675
        %v1677 = vrot.slane %v1676, 2
        %v1678 = vadd.f32 %v1676, %v1677
        %v1679 = vrot.slane %v1678, 1
        %v1680 = vadd.f32 %v1678, %v1679
        %v1681 = vsel %vm1610, %v1604, 0.0
        %v1682 = vrot.slane %v1681, 4
        %v1683 = vadd.f32 %v1681, %v1682
        %v1684 = vrot.slane %v1683, 2
        %v1685 = vadd.f32 %v1683, %v1684
        %v1686 = vrot.slane %v1685, 1
        %v1687 = vadd.f32 %v1685, %v1686
        %v1688 = vsel %vm1610, %v1605, 0.0
        %v1689 = vrot.slane %v1688, 4
        %v1690 = vadd.f32 %v1688, %v1689
        %v1691 = vrot.slane %v1690, 2
        %v1692 = vadd.f32 %v1690, %v1691
        %v1693 = vrot.slane %v1692, 1
        %v1694 = vadd.f32 %v1692, %v1693
        %v1695 = vsel %vm1610, %v1606, 0.0
        %v1696 = vrot.slane %v1695, 4
        %v1697 = vadd.f32 %v1695, %v1696
        %v1698 = vrot.slane %v1697, 2
        %v1699 = vadd.f32 %v1697, %v1698
        %v1700 = vrot.slane %v1699, 1
        %v1701 = vadd.f32 %v1699, %v1700
        %v1702 = vsel %vm1610, %v1607, 0.0
        %v1703 = vrot.slane %v1702, 4
        %v1704 = vadd.f32 %v1702, %v1703
        %v1705 = vrot.slane %v1704, 2
        %v1706 = vadd.f32 %v1704, %v1705
        %v1707 = vrot.slane %v1706, 1
        %v1708 = vadd.f32 %v1706, %v1707
        %v1709 = vsel %vm1610, %v1608, 0.0
        %v1710 = vrot.slane %v1709, 4
        %v1711 = vadd.f32 %v1709, %v1710
        %v1712 = vrot.slane %v1711, 2
        %v1713 = vadd.f32 %v1711, %v1712
        %v1714 = vrot.slane %v1713, 1
        %v1715 = vadd.f32 %v1713, %v1714
        %v1716 = vsel %vm1610, %v1609, 0.0
        %v1717 = vrot.slane %v1716, 4
        %v1718 = vadd.f32 %v1716, %v1717
        %v1719 = vrot.slane %v1718, 2
        %v1720 = vadd.f32 %v1718, %v1719
        %v1721 = vrot.slane %v1720, 1
        %v1722 = vadd.f32 %v1720, %v1721
        %1739 = vrot.lane.b32.xlu0 %v958, 126
        %v1740 = vpop.permute.xlu0 %1739
        %1741 = vrot.lane.b32.xlu0 %v959, 126
        %v1742 = vpop.permute.xlu0 %1741
        %1743 = vrot.lane.b32.xlu0 %v960, 126
        %v1744 = vpop.permute.xlu0 %1743
        %1745 = vrot.lane.b32.xlu0 %v961, 126
        %v1746 = vpop.permute.xlu0 %1745
        %1747 = vrot.lane.b32.xlu0 %v962, 126
        %v1748 = vpop.permute.xlu0 %1747
        %1749 = vrot.lane.b32.xlu0 %v963, 126
        %v1750 = vpop.permute.xlu0 %1749
        %1751 = vrot.lane.b32.xlu0 %v964, 126
        %v1752 = vpop.permute.xlu0 %1751
        %1753 = vrot.lane.b32.xlu0 %v965, 126
        %v1754 = vpop.permute.xlu0 %1753
        %1755 = vrot.lane.b32.xlu0 %v966, 126
        %v1756 = vpop.permute.xlu0 %1755
        %1757 = vrot.lane.b32.xlu0 %v967, 126
        %v1758 = vpop.permute.xlu0 %1757
        %1759 = vrot.lane.b32.xlu0 %v968, 126
        %v1760 = vpop.permute.xlu0 %1759
        %1761 = vrot.lane.b32.xlu0 %v969, 126
        %v1762 = vpop.permute.xlu0 %1761
        %1763 = vrot.lane.b32.xlu0 %v970, 126
        %v1764 = vpop.permute.xlu0 %1763
        %1765 = vrot.lane.b32.xlu0 %v971, 126
        %v1766 = vpop.permute.xlu0 %1765
        %1767 = vrot.lane.b32.xlu0 %v972, 126
        %v1768 = vpop.permute.xlu0 %1767
        %1769 = vrot.lane.b32.xlu0 %v973, 126
        %v1770 = vpop.permute.xlu0 %1769
        %v1787 = vsel %vm974, %v1740, 0.0
        %1788 = vadd.xlane.f32.xlu0 %v1787
        %v1789 = vpop.xlane.xlu0 %1788
        %v1790 = vsel %vm974, %v1742, 0.0
        %1791 = vadd.xlane.f32.xlu0 %v1790
        %v1792 = vpop.xlane.xlu0 %1791
        %v1793 = vsel %vm974, %v1744, 0.0
        %1794 = vadd.xlane.f32.xlu0 %v1793
        %v1795 = vpop.xlane.xlu0 %1794
        %v1796 = vsel %vm974, %v1746, 0.0
        %1797 = vadd.xlane.f32.xlu0 %v1796
        %v1798 = vpop.xlane.xlu0 %1797
        %v1799 = vsel %vm974, %v1748, 0.0
        %1800 = vadd.xlane.f32.xlu0 %v1799
        %v1801 = vpop.xlane.xlu0 %1800
        %v1802 = vsel %vm974, %v1750, 0.0
        %1803 = vadd.xlane.f32.xlu0 %v1802
        %v1804 = vpop.xlane.xlu0 %1803
        %v1805 = vsel %vm974, %v1752, 0.0
        %1806 = vadd.xlane.f32.xlu0 %v1805
        %v1807 = vpop.xlane.xlu0 %1806
        %v1808 = vsel %vm974, %v1754, 0.0
        %1809 = vadd.xlane.f32.xlu0 %v1808
        %v1810 = vpop.xlane.xlu0 %1809
        %v1811 = vsel %vm974, %v1756, 0.0
        %1812 = vadd.xlane.f32.xlu0 %v1811
        %v1813 = vpop.xlane.xlu0 %1812
        %v1814 = vsel %vm974, %v1758, 0.0
        %1815 = vadd.xlane.f32.xlu0 %v1814
        %v1816 = vpop.xlane.xlu0 %1815
        %v1817 = vsel %vm974, %v1760, 0.0
        %1818 = vadd.xlane.f32.xlu0 %v1817
        %v1819 = vpop.xlane.xlu0 %1818
        %v1820 = vsel %vm974, %v1762, 0.0
        %1821 = vadd.xlane.f32.xlu0 %v1820
        %v1822 = vpop.xlane.xlu0 %1821
        %v1823 = vsel %vm974, %v1764, 0.0
        %1824 = vadd.xlane.f32.xlu0 %v1823
        %v1825 = vpop.xlane.xlu0 %1824
        %v1826 = vsel %vm974, %v1766, 0.0
        %1827 = vadd.xlane.f32.xlu0 %v1826
        %v1828 = vpop.xlane.xlu0 %1827
        %v1829 = vsel %vm974, %v1768, 0.0
        %1830 = vadd.xlane.f32.xlu0 %v1829
        %v1831 = vpop.xlane.xlu0 %1830
        %v1832 = vsel %vm974, %v1770, 0.0
        %1833 = vadd.xlane.f32.xlu0 %v1832
        %v1834 = vpop.xlane.xlu0 %1833
        %v1851 = vlaneseq
        %v1852 = vshrl.u32 %v1851, 7
        %v1853 = vsub.s32 %v1040, %v1852
        %v1854 = vrot.slane %v1789, %v1853
        %v1855 = vlaneseq
        %v1856 = vshrl.u32 %v1855, 7
        %v1857 = vsub.s32 %v1040, %v1856
        %v1858 = vrot.slane %v1792, %v1857
        %v1859 = vlaneseq
        %v1860 = vshrl.u32 %v1859, 7
        %v1861 = vsub.s32 %v1040, %v1860
        %v1862 = vrot.slane %v1795, %v1861
        %v1863 = vlaneseq
        %v1864 = vshrl.u32 %v1863, 7
        %v1865 = vsub.s32 %v1040, %v1864
        %v1866 = vrot.slane %v1798, %v1865
        %v1867 = vlaneseq
        %v1868 = vshrl.u32 %v1867, 7
        %v1869 = vsub.s32 %v1040, %v1868
        %v1870 = vrot.slane %v1801, %v1869
        %v1871 = vlaneseq
        %v1872 = vshrl.u32 %v1871, 7
        %v1873 = vsub.s32 %v1040, %v1872
        %v1874 = vrot.slane %v1804, %v1873
        %v1875 = vlaneseq
        %v1876 = vshrl.u32 %v1875, 7
        %v1877 = vsub.s32 %v1040, %v1876
        %v1878 = vrot.slane %v1807, %v1877
        %v1879 = vlaneseq
        %v1880 = vshrl.u32 %v1879, 7
        %v1881 = vsub.s32 %v1040, %v1880
        %v1882 = vrot.slane %v1810, %v1881
        %v1883 = vlaneseq
        %v1884 = vshrl.u32 %v1883, 7
        %v1885 = vsub.s32 %v1040, %v1884
        %v1886 = vrot.slane %v1813, %v1885
        %v1887 = vlaneseq
        %v1888 = vshrl.u32 %v1887, 7
        %v1889 = vsub.s32 %v1040, %v1888
        %v1890 = vrot.slane %v1816, %v1889
        %v1891 = vlaneseq
        %v1892 = vshrl.u32 %v1891, 7
        %v1893 = vsub.s32 %v1040, %v1892
        %v1894 = vrot.slane %v1819, %v1893
        %v1895 = vlaneseq
        %v1896 = vshrl.u32 %v1895, 7
        %v1897 = vsub.s32 %v1040, %v1896
        %v1898 = vrot.slane %v1822, %v1897
        %v1899 = vlaneseq
        %v1900 = vshrl.u32 %v1899, 7
        %v1901 = vsub.s32 %v1040, %v1900
        %v1902 = vrot.slane %v1825, %v1901
        %v1903 = vlaneseq
        %v1904 = vshrl.u32 %v1903, 7
        %v1905 = vsub.s32 %v1040, %v1904
        %v1906 = vrot.slane %v1828, %v1905
        %v1907 = vlaneseq
        %v1908 = vshrl.u32 %v1907, 7
        %v1909 = vsub.s32 %v1040, %v1908
        %v1910 = vrot.slane %v1831, %v1909
        %v1911 = vlaneseq
        %v1912 = vshrl.u32 %v1911, 7
        %v1913 = vsub.s32 %v1040, %v1912
        %v1914 = vrot.slane %v1834, %v1913
        %v1915 = vsel %vm1105, %v1858, %v1854
        %v1916 = vsel %vm1107, %v1862, %v1915
        %v1917 = vsel %vm1109, %v1866, %v1916
        %v1918 = vsel %vm1111, %v1870, %v1917
        %v1919 = vsel %vm1113, %v1874, %v1918
        %v1920 = vsel %vm1115, %v1878, %v1919
        %v1921 = vsel %vm1117, %v1882, %v1920
        %v1922 = vsel %vm1105, %v1890, %v1886
        %v1923 = vsel %vm1107, %v1894, %v1922
        %v1924 = vsel %vm1109, %v1898, %v1923
        %v1925 = vsel %vm1111, %v1902, %v1924
        %v1926 = vsel %vm1113, %v1906, %v1925
        %v1927 = vsel %vm1115, %v1910, %v1926
        %v1928 = vsel %vm1117, %v1914, %v1927
        %v1931 = vsel %vm686, %v1921, -inf
        %1932 = vmax.xlane.f32.xlu0 %v1931
        %v1933 = vpop.xlane.xlu0 %1932
        %v1934 = vsel %vm686, %v1928, -inf
        %1935 = vmax.xlane.f32.xlu0 %v1934
        %v1936 = vpop.xlane.xlu0 %1935
        %v1939 = vlaneseq
        %v1940 = vshrl.u32 %v1939, 7
        %v1941 = vsub.s32 0, %v1940
        %v1942 = vrot.slane %v1933, %v1941
        %v1943 = vlaneseq
        %v1944 = vshrl.u32 %v1943, 7
        %v1945 = vsub.s32 1, %v1944
        %v1946 = vrot.slane %v1933, %v1945
        %v1947 = vlaneseq
        %v1948 = vshrl.u32 %v1947, 7
        %v1949 = vsub.s32 2, %v1948
        %v1950 = vrot.slane %v1933, %v1949
        %v1951 = vlaneseq
        %v1952 = vshrl.u32 %v1951, 7
        %v1953 = vsub.s32 3, %v1952
        %v1954 = vrot.slane %v1933, %v1953
        %v1955 = vlaneseq
        %v1956 = vshrl.u32 %v1955, 7
        %v1957 = vsub.s32 4, %v1956
        %v1958 = vrot.slane %v1933, %v1957
        %v1959 = vlaneseq
        %v1960 = vshrl.u32 %v1959, 7
        %v1961 = vsub.s32 5, %v1960
        %v1962 = vrot.slane %v1933, %v1961
        %v1963 = vlaneseq
        %v1964 = vshrl.u32 %v1963, 7
        %v1965 = vsub.s32 6, %v1964
        %v1966 = vrot.slane %v1933, %v1965
        %v1967 = vlaneseq
        %v1968 = vshrl.u32 %v1967, 7
        %v1969 = vsub.s32 7, %v1968
        %v1970 = vrot.slane %v1933, %v1969
        %v1971 = vlaneseq
        %v1972 = vshrl.u32 %v1971, 7
        %v1973 = vsub.s32 0, %v1972
        %v1974 = vrot.slane %v1936, %v1973
        %v1975 = vlaneseq
        %v1976 = vshrl.u32 %v1975, 7
        %v1977 = vsub.s32 1, %v1976
        %v1978 = vrot.slane %v1936, %v1977
        %v1979 = vlaneseq
        %v1980 = vshrl.u32 %v1979, 7
        %v1981 = vsub.s32 2, %v1980
        %v1982 = vrot.slane %v1936, %v1981
        %v1983 = vlaneseq
        %v1984 = vshrl.u32 %v1983, 7
        %v1985 = vsub.s32 3, %v1984
        %v1986 = vrot.slane %v1936, %v1985
        %v1987 = vlaneseq
        %v1988 = vshrl.u32 %v1987, 7
        %v1989 = vsub.s32 4, %v1988
        %v1990 = vrot.slane %v1936, %v1989
        %v1991 = vlaneseq
        %v1992 = vshrl.u32 %v1991, 7
        %v1993 = vsub.s32 5, %v1992
        %v1994 = vrot.slane %v1936, %v1993
        %v1995 = vlaneseq
        %v1996 = vshrl.u32 %v1995, 7
        %v1997 = vsub.s32 6, %v1996
        %v1998 = vrot.slane %v1936, %v1997
        %v1999 = vlaneseq
        %v2000 = vshrl.u32 %v1999, 7
        %v2001 = vsub.s32 7, %v2000
        %v2002 = vrot.slane %v1936, %v2001
        %v2019 = vsub.f32 %v1789, %v1942
        %v2020 = vsub.f32 %v1792, %v1946
        %v2021 = vsub.f32 %v1795, %v1950
        %v2022 = vsub.f32 %v1798, %v1954
        %v2023 = vsub.f32 %v1801, %v1958
        %v2024 = vsub.f32 %v1804, %v1962
        %v2025 = vsub.f32 %v1807, %v1966
        %v2026 = vsub.f32 %v1810, %v1970
        %v2027 = vsub.f32 %v1813, %v1974
        %v2028 = vsub.f32 %v1816, %v1978
        %v2029 = vsub.f32 %v1819, %v1982
        %v2030 = vsub.f32 %v1822, %v1986
        %v2031 = vsub.f32 %v1825, %v1990
        %v2032 = vsub.f32 %v1828, %v1994
        %v2033 = vsub.f32 %v1831, %v1998
        %v2034 = vsub.f32 %v1834, %v2002
        %v2035 = vmul.f32 %v2019, 1.442695
        %v2036 = vpow.pop %v2035
        %v2037 = vmul.f32 %v2020, 1.442695
        %v2038 = vpow.pop %v2037
        %v2039 = vmul.f32 %v2021, 1.442695
        %v2040 = vpow.pop %v2039
        %v2041 = vmul.f32 %v2022, 1.442695
        %v2042 = vpow.pop %v2041
        %v2043 = vmul.f32 %v2023, 1.442695
        %v2044 = vpow.pop %v2043
        %v2045 = vmul.f32 %v2024, 1.442695
        %v2046 = vpow.pop %v2045
        %v2047 = vmul.f32 %v2025, 1.442695
        %v2048 = vpow.pop %v2047
        %v2049 = vmul.f32 %v2026, 1.442695
        %v2050 = vpow.pop %v2049
        %v2051 = vmul.f32 %v2027, 1.442695
        %v2052 = vpow.pop %v2051
        %v2053 = vmul.f32 %v2028, 1.442695
        %v2054 = vpow.pop %v2053
        %v2055 = vmul.f32 %v2029, 1.442695
        %v2056 = vpow.pop %v2055
        %v2057 = vmul.f32 %v2030, 1.442695
        %v2058 = vpow.pop %v2057
        %v2059 = vmul.f32 %v2031, 1.442695
        %v2060 = vpow.pop %v2059
        %v2061 = vmul.f32 %v2032, 1.442695
        %v2062 = vpow.pop %v2061
        %v2063 = vmul.f32 %v2033, 1.442695
        %v2064 = vpow.pop %v2063
        %v2065 = vmul.f32 %v2034, 1.442695
        %v2066 = vpow.pop %v2065
        %2083 = vset.pattern.permute.xlu0 0
        %2084 = vperm.xlu0 %2083, %v2036
        %v2085 = vpop.permute.xlu0 %2084
        %2086 = vset.pattern.permute.xlu0 0
        %2087 = vperm.xlu0 %2086, %v2038
        %v2088 = vpop.permute.xlu0 %2087
        %2089 = vset.pattern.permute.xlu0 0
        %2090 = vperm.xlu0 %2089, %v2040
        %v2091 = vpop.permute.xlu0 %2090
        %2092 = vset.pattern.permute.xlu0 0
        %2093 = vperm.xlu0 %2092, %v2042
        %v2094 = vpop.permute.xlu0 %2093
        %2095 = vset.pattern.permute.xlu0 0
        %2096 = vperm.xlu0 %2095, %v2044
        %v2097 = vpop.permute.xlu0 %2096
        %2098 = vset.pattern.permute.xlu0 0
        %2099 = vperm.xlu0 %2098, %v2046
        %v2100 = vpop.permute.xlu0 %2099
        %2101 = vset.pattern.permute.xlu0 0
        %2102 = vperm.xlu0 %2101, %v2048
        %v2103 = vpop.permute.xlu0 %2102
        %2104 = vset.pattern.permute.xlu0 0
        %2105 = vperm.xlu0 %2104, %v2050
        %v2106 = vpop.permute.xlu0 %2105
        %2107 = vset.pattern.permute.xlu0 0
        %2108 = vperm.xlu0 %2107, %v2052
        %v2109 = vpop.permute.xlu0 %2108
        %2110 = vset.pattern.permute.xlu0 0
        %2111 = vperm.xlu0 %2110, %v2054
        %v2112 = vpop.permute.xlu0 %2111
        %2113 = vset.pattern.permute.xlu0 0
        %2114 = vperm.xlu0 %2113, %v2056
        %v2115 = vpop.permute.xlu0 %2114
        %2116 = vset.pattern.permute.xlu0 0
        %2117 = vperm.xlu0 %2116, %v2058
        %v2118 = vpop.permute.xlu0 %2117
        %2119 = vset.pattern.permute.xlu0 0
        %2120 = vperm.xlu0 %2119, %v2060
        %v2121 = vpop.permute.xlu0 %2120
        %2122 = vset.pattern.permute.xlu0 0
        %2123 = vperm.xlu0 %2122, %v2062
        %v2124 = vpop.permute.xlu0 %2123
        %2125 = vset.pattern.permute.xlu0 0
        %2126 = vperm.xlu0 %2125, %v2064
        %v2127 = vpop.permute.xlu0 %2126
        %2128 = vset.pattern.permute.xlu0 0
        %2129 = vperm.xlu0 %2128, %v2066
        %v2130 = vpop.permute.xlu0 %2129
        %v2131 = vlaneseq
        %v2132 = vshrl.u32 %v2131, 7
        %v2133 = vsub.s32 %v1040, %v2132
        %v2134 = vrot.slane %v2085, %v2133
        %v2135 = vlaneseq
        %v2136 = vshrl.u32 %v2135, 7
        %v2137 = vsub.s32 %v1040, %v2136
        %v2138 = vrot.slane %v2088, %v2137
        %v2139 = vlaneseq
        %v2140 = vshrl.u32 %v2139, 7
        %v2141 = vsub.s32 %v1040, %v2140
        %v2142 = vrot.slane %v2091, %v2141
        %v2143 = vlaneseq
        %v2144 = vshrl.u32 %v2143, 7
        %v2145 = vsub.s32 %v1040, %v2144
        %v2146 = vrot.slane %v2094, %v2145
        %v2147 = vlaneseq
        %v2148 = vshrl.u32 %v2147, 7
        %v2149 = vsub.s32 %v1040, %v2148
        %v2150 = vrot.slane %v2097, %v2149
        %v2151 = vlaneseq
        %v2152 = vshrl.u32 %v2151, 7
        %v2153 = vsub.s32 %v1040, %v2152
        %v2154 = vrot.slane %v2100, %v2153
        %v2155 = vlaneseq
        %v2156 = vshrl.u32 %v2155, 7
        %v2157 = vsub.s32 %v1040, %v2156
        %v2158 = vrot.slane %v2103, %v2157
        %v2159 = vlaneseq
        %v2160 = vshrl.u32 %v2159, 7
        %v2161 = vsub.s32 %v1040, %v2160
        %v2162 = vrot.slane %v2106, %v2161
        %v2163 = vlaneseq
        %v2164 = vshrl.u32 %v2163, 7
        %v2165 = vsub.s32 %v1040, %v2164
        %v2166 = vrot.slane %v2109, %v2165
        %v2167 = vlaneseq
        %v2168 = vshrl.u32 %v2167, 7
        %v2169 = vsub.s32 %v1040, %v2168
        %v2170 = vrot.slane %v2112, %v2169
        %v2171 = vlaneseq
        %v2172 = vshrl.u32 %v2171, 7
        %v2173 = vsub.s32 %v1040, %v2172
        %v2174 = vrot.slane %v2115, %v2173
        %v2175 = vlaneseq
        %v2176 = vshrl.u32 %v2175, 7
        %v2177 = vsub.s32 %v1040, %v2176
        %v2178 = vrot.slane %v2118, %v2177
        %v2179 = vlaneseq
        %v2180 = vshrl.u32 %v2179, 7
        %v2181 = vsub.s32 %v1040, %v2180
        %v2182 = vrot.slane %v2121, %v2181
        %v2183 = vlaneseq
        %v2184 = vshrl.u32 %v2183, 7
        %v2185 = vsub.s32 %v1040, %v2184
        %v2186 = vrot.slane %v2124, %v2185
        %v2187 = vlaneseq
        %v2188 = vshrl.u32 %v2187, 7
        %v2189 = vsub.s32 %v1040, %v2188
        %v2190 = vrot.slane %v2127, %v2189
        %v2191 = vlaneseq
        %v2192 = vshrl.u32 %v2191, 7
        %v2193 = vsub.s32 %v1040, %v2192
        %v2194 = vrot.slane %v2130, %v2193
        %v2195 = vsel %vm1105, %v2138, %v2134
        %v2196 = vsel %vm1107, %v2142, %v2195
        %v2197 = vsel %vm1109, %v2146, %v2196
        %v2198 = vsel %vm1111, %v2150, %v2197
        %v2199 = vsel %vm1113, %v2154, %v2198
        %v2200 = vsel %vm1115, %v2158, %v2199
        %v2201 = vsel %vm1117, %v2162, %v2200
        %v2202 = vsel %vm1105, %v2170, %v2166
        %v2203 = vsel %vm1107, %v2174, %v2202
        %v2204 = vsel %vm1109, %v2178, %v2203
        %v2205 = vsel %vm1111, %v2182, %v2204
        %v2206 = vsel %vm1113, %v2186, %v2205
        %v2207 = vsel %vm1115, %v2190, %v2206
        %v2208 = vsel %vm1117, %v2194, %v2207
        %v2211 = vsel %vm686, %v2201, 0.0
        %2212 = vadd.xlane.f32.xlu0 %v2211
        %v2213 = vpop.xlane.xlu0 %2212
        %v2214 = vsel %vm686, %v2208, 0.0
        %2215 = vadd.xlane.f32.xlu0 %v2214
        %v2216 = vpop.xlane.xlu0 %2215
        %v2217 = vrcp.pop %v2213
        %v2218 = vrcp.pop %v2216
        %v2221 = vlaneseq
        %v2222 = vshrl.u32 %v2221, 7
        %v2223 = vsub.s32 0, %v2222
        %v2224 = vrot.slane %v2217, %v2223
        %v2225 = vlaneseq
        %v2226 = vshrl.u32 %v2225, 7
        %v2227 = vsub.s32 1, %v2226
        %v2228 = vrot.slane %v2217, %v2227
        %v2229 = vlaneseq
        %v2230 = vshrl.u32 %v2229, 7
        %v2231 = vsub.s32 2, %v2230
        %v2232 = vrot.slane %v2217, %v2231
        %v2233 = vlaneseq
        %v2234 = vshrl.u32 %v2233, 7
        %v2235 = vsub.s32 3, %v2234
        %v2236 = vrot.slane %v2217, %v2235
        %v2237 = vlaneseq
        %v2238 = vshrl.u32 %v2237, 7
        %v2239 = vsub.s32 4, %v2238
        %v2240 = vrot.slane %v2217, %v2239
        %v2241 = vlaneseq
        %v2242 = vshrl.u32 %v2241, 7
        %v2243 = vsub.s32 5, %v2242
        %v2244 = vrot.slane %v2217, %v2243
        %v2245 = vlaneseq
        %v2246 = vshrl.u32 %v2245, 7
        %v2247 = vsub.s32 6, %v2246
        %v2248 = vrot.slane %v2217, %v2247
        %v2249 = vlaneseq
        %v2250 = vshrl.u32 %v2249, 7
        %v2251 = vsub.s32 7, %v2250
        %v2252 = vrot.slane %v2217, %v2251
        %v2253 = vlaneseq
        %v2254 = vshrl.u32 %v2253, 7
        %v2255 = vsub.s32 0, %v2254
        %v2256 = vrot.slane %v2218, %v2255
        %v2257 = vlaneseq
        %v2258 = vshrl.u32 %v2257, 7
        %v2259 = vsub.s32 1, %v2258
        %v2260 = vrot.slane %v2218, %v2259
        %v2261 = vlaneseq
        %v2262 = vshrl.u32 %v2261, 7
        %v2263 = vsub.s32 2, %v2262
        %v2264 = vrot.slane %v2218, %v2263
        %v2265 = vlaneseq
        %v2266 = vshrl.u32 %v2265, 7
        %v2267 = vsub.s32 3, %v2266
        %v2268 = vrot.slane %v2218, %v2267
        %v2269 = vlaneseq
        %v2270 = vshrl.u32 %v2269, 7
        %v2271 = vsub.s32 4, %v2270
        %v2272 = vrot.slane %v2218, %v2271
        %v2273 = vlaneseq
        %v2274 = vshrl.u32 %v2273, 7
        %v2275 = vsub.s32 5, %v2274
        %v2276 = vrot.slane %v2218, %v2275
        %v2277 = vlaneseq
        %v2278 = vshrl.u32 %v2277, 7
        %v2279 = vsub.s32 6, %v2278
        %v2280 = vrot.slane %v2218, %v2279
        %v2281 = vlaneseq
        %v2282 = vshrl.u32 %v2281, 7
        %v2283 = vsub.s32 7, %v2282
        %v2284 = vrot.slane %v2218, %v2283
        %v2301 = vmul.f32 %v2036, %v2224
        %v2302 = vmul.f32 %v2038, %v2228
        %v2303 = vmul.f32 %v2040, %v2232
        %v2304 = vmul.f32 %v2042, %v2236
        %v2305 = vmul.f32 %v2044, %v2240
        %v2306 = vmul.f32 %v2046, %v2244
        %v2307 = vmul.f32 %v2048, %v2248
        %v2308 = vmul.f32 %v2050, %v2252
        %v2309 = vmul.f32 %v2052, %v2256
        %v2310 = vmul.f32 %v2054, %v2260
        %v2311 = vmul.f32 %v2056, %v2264
        %v2312 = vmul.f32 %v2058, %v2268
        %v2313 = vmul.f32 %v2060, %v2272
        %v2314 = vmul.f32 %v2062, %v2276
        %v2315 = vmul.f32 %v2064, %v2280
        %v2316 = vmul.f32 %v2066, %v2284
        %2318 = vset.pattern.permute.xlu0 0
        %2319 = vperm.xlu0 %2318, %v2301
        %v2320 = vpop.permute.xlu0 %2319
        %2323 = vset.pattern.permute.xlu0 0
        %2324 = vperm.xlu0 %2323, %v2302
        %v2325 = vpop.permute.xlu0 %2324
        %2328 = vset.pattern.permute.xlu0 0
        %2329 = vperm.xlu0 %2328, %v2303
        %v2330 = vpop.permute.xlu0 %2329
        %2333 = vset.pattern.permute.xlu0 0
        %2334 = vperm.xlu0 %2333, %v2304
        %v2335 = vpop.permute.xlu0 %2334
        %2338 = vset.pattern.permute.xlu0 0
        %2339 = vperm.xlu0 %2338, %v2305
        %v2340 = vpop.permute.xlu0 %2339
        %2343 = vset.pattern.permute.xlu0 0
        %2344 = vperm.xlu0 %2343, %v2306
        %v2345 = vpop.permute.xlu0 %2344
        %2348 = vset.pattern.permute.xlu0 0
        %2349 = vperm.xlu0 %2348, %v2307
        %v2350 = vpop.permute.xlu0 %2349
        %2353 = vset.pattern.permute.xlu0 0
        %2354 = vperm.xlu0 %2353, %v2308
        %v2355 = vpop.permute.xlu0 %2354
        %2358 = vset.pattern.permute.xlu0 0
        %2359 = vperm.xlu0 %2358, %v2309
        %v2360 = vpop.permute.xlu0 %2359
        %2363 = vset.pattern.permute.xlu0 0
        %2364 = vperm.xlu0 %2363, %v2310
        %v2365 = vpop.permute.xlu0 %2364
        %2368 = vset.pattern.permute.xlu0 0
        %2369 = vperm.xlu0 %2368, %v2311
        %v2370 = vpop.permute.xlu0 %2369
        %2373 = vset.pattern.permute.xlu0 0
        %2374 = vperm.xlu0 %2373, %v2312
        %v2375 = vpop.permute.xlu0 %2374
        %2378 = vset.pattern.permute.xlu0 0
        %2379 = vperm.xlu0 %2378, %v2313
        %v2380 = vpop.permute.xlu0 %2379
        %2383 = vset.pattern.permute.xlu0 0
        %2384 = vperm.xlu0 %2383, %v2314
        %v2385 = vpop.permute.xlu0 %2384
        %2388 = vset.pattern.permute.xlu0 0
        %2389 = vperm.xlu0 %2388, %v2315
        %v2390 = vpop.permute.xlu0 %2389
        %2393 = vset.pattern.permute.xlu0 0
        %2394 = vperm.xlu0 %2393, %v2316
        %v2395 = vpop.permute.xlu0 %2394
        %v2397 = vmul.f32 %v2320, %v760
        %v2398 = vmul.f32 %v2325, %v760
        %v2399 = vmul.f32 %v2330, %v760
        %v2400 = vmul.f32 %v2335, %v760
        %v2401 = vmul.f32 %v2340, %v760
        %v2402 = vmul.f32 %v2345, %v760
        %v2403 = vmul.f32 %v2350, %v760
        %v2404 = vmul.f32 %v2355, %v760
        %v2405 = vmul.f32 %v2360, %v765
        %v2406 = vmul.f32 %v2365, %v765
        %v2407 = vmul.f32 %v2370, %v765
        %v2408 = vmul.f32 %v2375, %v765
        %v2409 = vmul.f32 %v2380, %v765
        %v2410 = vmul.f32 %v2385, %v765
        %v2411 = vmul.f32 %v2390, %v765
        %v2412 = vmul.f32 %v2395, %v765
        %vm2413 = vcmask 162960
        %v2414 = vsel %vm2413, %v2397, 0.0
        %v2415 = vrot.slane %v2414, 4
        %v2416 = vadd.f32 %v2414, %v2415
        %v2417 = vrot.slane %v2416, 2
        %v2418 = vadd.f32 %v2416, %v2417
        %v2419 = vrot.slane %v2418, 1
        %v2420 = vadd.f32 %v2418, %v2419
        %v2421 = vsel %vm2413, %v2398, 0.0
        %v2422 = vrot.slane %v2421, 4
        %v2423 = vadd.f32 %v2421, %v2422
        %v2424 = vrot.slane %v2423, 2
        %v2425 = vadd.f32 %v2423, %v2424
        %v2426 = vrot.slane %v2425, 1
        %v2427 = vadd.f32 %v2425, %v2426
        %v2428 = vsel %vm2413, %v2399, 0.0
        %v2429 = vrot.slane %v2428, 4
        %v2430 = vadd.f32 %v2428, %v2429
        %v2431 = vrot.slane %v2430, 2
        %v2432 = vadd.f32 %v2430, %v2431
        %v2433 = vrot.slane %v2432, 1
        %v2434 = vadd.f32 %v2432, %v2433
        %v2435 = vsel %vm2413, %v2400, 0.0
        %v2436 = vrot.slane %v2435, 4
        %v2437 = vadd.f32 %v2435, %v2436
        %v2438 = vrot.slane %v2437, 2
        %v2439 = vadd.f32 %v2437, %v2438
        %v2440 = vrot.slane %v2439, 1
        %v2441 = vadd.f32 %v2439, %v2440
        %v2442 = vsel %vm2413, %v2401, 0.0
        %v2443 = vrot.slane %v2442, 4
        %v2444 = vadd.f32 %v2442, %v2443
        %v2445 = vrot.slane %v2444, 2
        %v2446 = vadd.f32 %v2444, %v2445
        %v2447 = vrot.slane %v2446, 1
        %v2448 = vadd.f32 %v2446, %v2447
        %v2449 = vsel %vm2413, %v2402, 0.0
        %v2450 = vrot.slane %v2449, 4
        %v2451 = vadd.f32 %v2449, %v2450
        %v2452 = vrot.slane %v2451, 2
        %v2453 = vadd.f32 %v2451, %v2452
        %v2454 = vrot.slane %v2453, 1
        %v2455 = vadd.f32 %v2453, %v2454
        %v2456 = vsel %vm2413, %v2403, 0.0
        %v2457 = vrot.slane %v2456, 4
        %v2458 = vadd.f32 %v2456, %v2457
        %v2459 = vrot.slane %v2458, 2
        %v2460 = vadd.f32 %v2458, %v2459
        %v2461 = vrot.slane %v2460, 1
        %v2462 = vadd.f32 %v2460, %v2461
        %v2463 = vsel %vm2413, %v2404, 0.0
        %v2464 = vrot.slane %v2463, 4
        %v2465 = vadd.f32 %v2463, %v2464
        %v2466 = vrot.slane %v2465, 2
        %v2467 = vadd.f32 %v2465, %v2466
        %v2468 = vrot.slane %v2467, 1
        %v2469 = vadd.f32 %v2467, %v2468
        %v2470 = vsel %vm2413, %v2405, 0.0
        %v2471 = vrot.slane %v2470, 4
        %v2472 = vadd.f32 %v2470, %v2471
        %v2473 = vrot.slane %v2472, 2
        %v2474 = vadd.f32 %v2472, %v2473
        %v2475 = vrot.slane %v2474, 1
        %v2476 = vadd.f32 %v2474, %v2475
        %v2477 = vsel %vm2413, %v2406, 0.0
        %v2478 = vrot.slane %v2477, 4
        %v2479 = vadd.f32 %v2477, %v2478
        %v2480 = vrot.slane %v2479, 2
        %v2481 = vadd.f32 %v2479, %v2480
        %v2482 = vrot.slane %v2481, 1
        %v2483 = vadd.f32 %v2481, %v2482
        %v2484 = vsel %vm2413, %v2407, 0.0
        %v2485 = vrot.slane %v2484, 4
        %v2486 = vadd.f32 %v2484, %v2485
        %v2487 = vrot.slane %v2486, 2
        %v2488 = vadd.f32 %v2486, %v2487
        %v2489 = vrot.slane %v2488, 1
        %v2490 = vadd.f32 %v2488, %v2489
        %v2491 = vsel %vm2413, %v2408, 0.0
        %v2492 = vrot.slane %v2491, 4
        %v2493 = vadd.f32 %v2491, %v2492
        %v2494 = vrot.slane %v2493, 2
        %v2495 = vadd.f32 %v2493, %v2494
        %v2496 = vrot.slane %v2495, 1
        %v2497 = vadd.f32 %v2495, %v2496
        %v2498 = vsel %vm2413, %v2409, 0.0
        %v2499 = vrot.slane %v2498, 4
        %v2500 = vadd.f32 %v2498, %v2499
        %v2501 = vrot.slane %v2500, 2
        %v2502 = vadd.f32 %v2500, %v2501
        %v2503 = vrot.slane %v2502, 1
        %v2504 = vadd.f32 %v2502, %v2503
        %v2505 = vsel %vm2413, %v2410, 0.0
        %v2506 = vrot.slane %v2505, 4
        %v2507 = vadd.f32 %v2505, %v2506
        %v2508 = vrot.slane %v2507, 2
        %v2509 = vadd.f32 %v2507, %v2508
        %v2510 = vrot.slane %v2509, 1
        %v2511 = vadd.f32 %v2509, %v2510
        %v2512 = vsel %vm2413, %v2411, 0.0
        %v2513 = vrot.slane %v2512, 4
        %v2514 = vadd.f32 %v2512, %v2513
        %v2515 = vrot.slane %v2514, 2
        %v2516 = vadd.f32 %v2514, %v2515
        %v2517 = vrot.slane %v2516, 1
        %v2518 = vadd.f32 %v2516, %v2517
        %v2519 = vsel %vm2413, %v2412, 0.0
        %v2520 = vrot.slane %v2519, 4
        %v2521 = vadd.f32 %v2519, %v2520
        %v2522 = vrot.slane %v2521, 2
        %v2523 = vadd.f32 %v2521, %v2522
        %v2524 = vrot.slane %v2523, 1
        %v2525 = vadd.f32 %v2523, %v2524
        %2526 = vrot.lane.b32.xlu0 %v958, 124
        %v2527 = vpop.permute.xlu0 %2526
        %2528 = vrot.lane.b32.xlu0 %v959, 124
        %v2529 = vpop.permute.xlu0 %2528
        %2530 = vrot.lane.b32.xlu0 %v960, 124
        %v2531 = vpop.permute.xlu0 %2530
        %2532 = vrot.lane.b32.xlu0 %v961, 124
        %v2533 = vpop.permute.xlu0 %2532
        %2534 = vrot.lane.b32.xlu0 %v962, 124
        %v2535 = vpop.permute.xlu0 %2534
        %2536 = vrot.lane.b32.xlu0 %v963, 124
        %v2537 = vpop.permute.xlu0 %2536
        %2538 = vrot.lane.b32.xlu0 %v964, 124
        %v2539 = vpop.permute.xlu0 %2538
        %2540 = vrot.lane.b32.xlu0 %v965, 124
        %v2541 = vpop.permute.xlu0 %2540
        %2542 = vrot.lane.b32.xlu0 %v966, 124
        %v2543 = vpop.permute.xlu0 %2542
        %2544 = vrot.lane.b32.xlu0 %v967, 124
        %v2545 = vpop.permute.xlu0 %2544
        %2546 = vrot.lane.b32.xlu0 %v968, 124
        %v2547 = vpop.permute.xlu0 %2546
        %2548 = vrot.lane.b32.xlu0 %v969, 124
        %v2549 = vpop.permute.xlu0 %2548
        %2550 = vrot.lane.b32.xlu0 %v970, 124
        %v2551 = vpop.permute.xlu0 %2550
        %2552 = vrot.lane.b32.xlu0 %v971, 124
        %v2553 = vpop.permute.xlu0 %2552
        %2554 = vrot.lane.b32.xlu0 %v972, 124
        %v2555 = vpop.permute.xlu0 %2554
        %2556 = vrot.lane.b32.xlu0 %v973, 124
        %v2557 = vpop.permute.xlu0 %2556
        %v2574 = vsel %vm974, %v2527, 0.0
        %2575 = vadd.xlane.f32.xlu0 %v2574
        %v2576 = vpop.xlane.xlu0 %2575
        %v2577 = vsel %vm974, %v2529, 0.0
        %2578 = vadd.xlane.f32.xlu0 %v2577
        %v2579 = vpop.xlane.xlu0 %2578
        %v2580 = vsel %vm974, %v2531, 0.0
        %2581 = vadd.xlane.f32.xlu0 %v2580
        %v2582 = vpop.xlane.xlu0 %2581
        %v2583 = vsel %vm974, %v2533, 0.0
        %2584 = vadd.xlane.f32.xlu0 %v2583
        %v2585 = vpop.xlane.xlu0 %2584
        %v2586 = vsel %vm974, %v2535, 0.0
        %2587 = vadd.xlane.f32.xlu0 %v2586
        %v2588 = vpop.xlane.xlu0 %2587
        %v2589 = vsel %vm974, %v2537, 0.0
        %2590 = vadd.xlane.f32.xlu0 %v2589
        %v2591 = vpop.xlane.xlu0 %2590
        %v2592 = vsel %vm974, %v2539, 0.0
        %2593 = vadd.xlane.f32.xlu0 %v2592
        %v2594 = vpop.xlane.xlu0 %2593
        %v2595 = vsel %vm974, %v2541, 0.0
        %2596 = vadd.xlane.f32.xlu0 %v2595
        %v2597 = vpop.xlane.xlu0 %2596
        %v2598 = vsel %vm974, %v2543, 0.0
        %2599 = vadd.xlane.f32.xlu0 %v2598
        %v2600 = vpop.xlane.xlu0 %2599
        %v2601 = vsel %vm974, %v2545, 0.0
        %2602 = vadd.xlane.f32.xlu0 %v2601
        %v2603 = vpop.xlane.xlu0 %2602
        %v2604 = vsel %vm974, %v2547, 0.0
        %2605 = vadd.xlane.f32.xlu0 %v2604
        %v2606 = vpop.xlane.xlu0 %2605
        %v2607 = vsel %vm974, %v2549, 0.0
        %2608 = vadd.xlane.f32.xlu0 %v2607
        %v2609 = vpop.xlane.xlu0 %2608
        %v2610 = vsel %vm974, %v2551, 0.0
        %2611 = vadd.xlane.f32.xlu0 %v2610
        %v2612 = vpop.xlane.xlu0 %2611
        %v2613 = vsel %vm974, %v2553, 0.0
        %2614 = vadd.xlane.f32.xlu0 %v2613
        %v2615 = vpop.xlane.xlu0 %2614
        %v2616 = vsel %vm974, %v2555, 0.0
        %2617 = vadd.xlane.f32.xlu0 %v2616
        %v2618 = vpop.xlane.xlu0 %2617
        %v2619 = vsel %vm974, %v2557, 0.0
        %2620 = vadd.xlane.f32.xlu0 %v2619
        %v2621 = vpop.xlane.xlu0 %2620
        %v2638 = vlaneseq
        %v2639 = vshrl.u32 %v2638, 7
        %v2640 = vsub.s32 %v1040, %v2639
        %v2641 = vrot.slane %v2576, %v2640
        %v2642 = vlaneseq
        %v2643 = vshrl.u32 %v2642, 7
        %v2644 = vsub.s32 %v1040, %v2643
        %v2645 = vrot.slane %v2579, %v2644
        %v2646 = vlaneseq
        %v2647 = vshrl.u32 %v2646, 7
        %v2648 = vsub.s32 %v1040, %v2647
        %v2649 = vrot.slane %v2582, %v2648
        %v2650 = vlaneseq
        %v2651 = vshrl.u32 %v2650, 7
        %v2652 = vsub.s32 %v1040, %v2651
        %v2653 = vrot.slane %v2585, %v2652
        %v2654 = vlaneseq
        %v2655 = vshrl.u32 %v2654, 7
        %v2656 = vsub.s32 %v1040, %v2655
        %v2657 = vrot.slane %v2588, %v2656
        %v2658 = vlaneseq
        %v2659 = vshrl.u32 %v2658, 7
        %v2660 = vsub.s32 %v1040, %v2659
        %v2661 = vrot.slane %v2591, %v2660
        %v2662 = vlaneseq
        %v2663 = vshrl.u32 %v2662, 7
        %v2664 = vsub.s32 %v1040, %v2663
        %v2665 = vrot.slane %v2594, %v2664
        %v2666 = vlaneseq
        %v2667 = vshrl.u32 %v2666, 7
        %v2668 = vsub.s32 %v1040, %v2667
        %v2669 = vrot.slane %v2597, %v2668
        %v2670 = vlaneseq
        %v2671 = vshrl.u32 %v2670, 7
        %v2672 = vsub.s32 %v1040, %v2671
        %v2673 = vrot.slane %v2600, %v2672
        %v2674 = vlaneseq
        %v2675 = vshrl.u32 %v2674, 7
        %v2676 = vsub.s32 %v1040, %v2675
        %v2677 = vrot.slane %v2603, %v2676
        %v2678 = vlaneseq
        %v2679 = vshrl.u32 %v2678, 7
        %v2680 = vsub.s32 %v1040, %v2679
        %v2681 = vrot.slane %v2606, %v2680
        %v2682 = vlaneseq
        %v2683 = vshrl.u32 %v2682, 7
        %v2684 = vsub.s32 %v1040, %v2683
        %v2685 = vrot.slane %v2609, %v2684
        %v2686 = vlaneseq
        %v2687 = vshrl.u32 %v2686, 7
        %v2688 = vsub.s32 %v1040, %v2687
        %v2689 = vrot.slane %v2612, %v2688
        %v2690 = vlaneseq
        %v2691 = vshrl.u32 %v2690, 7
        %v2692 = vsub.s32 %v1040, %v2691
        %v2693 = vrot.slane %v2615, %v2692
        %v2694 = vlaneseq
        %v2695 = vshrl.u32 %v2694, 7
        %v2696 = vsub.s32 %v1040, %v2695
        %v2697 = vrot.slane %v2618, %v2696
        %v2698 = vlaneseq
        %v2699 = vshrl.u32 %v2698, 7
        %v2700 = vsub.s32 %v1040, %v2699
        %v2701 = vrot.slane %v2621, %v2700
        %v2702 = vsel %vm1105, %v2645, %v2641
        %v2703 = vsel %vm1107, %v2649, %v2702
        %v2704 = vsel %vm1109, %v2653, %v2703
        %v2705 = vsel %vm1111, %v2657, %v2704
        %v2706 = vsel %vm1113, %v2661, %v2705
        %v2707 = vsel %vm1115, %v2665, %v2706
        %v2708 = vsel %vm1117, %v2669, %v2707
        %v2709 = vsel %vm1105, %v2677, %v2673
        %v2710 = vsel %vm1107, %v2681, %v2709
        %v2711 = vsel %vm1109, %v2685, %v2710
        %v2712 = vsel %vm1111, %v2689, %v2711
        %v2713 = vsel %vm1113, %v2693, %v2712
        %v2714 = vsel %vm1115, %v2697, %v2713
        %v2715 = vsel %vm1117, %v2701, %v2714
        %v2718 = vsel %vm686, %v2708, -inf
        %2719 = vmax.xlane.f32.xlu0 %v2718
        %v2720 = vpop.xlane.xlu0 %2719
        %v2721 = vsel %vm686, %v2715, -inf
        %2722 = vmax.xlane.f32.xlu0 %v2721
        %v2723 = vpop.xlane.xlu0 %2722
        %v2726 = vlaneseq
        %v2727 = vshrl.u32 %v2726, 7
        %v2728 = vsub.s32 0, %v2727
        %v2729 = vrot.slane %v2720, %v2728
        %v2730 = vlaneseq
        %v2731 = vshrl.u32 %v2730, 7
        %v2732 = vsub.s32 1, %v2731
        %v2733 = vrot.slane %v2720, %v2732
        %v2734 = vlaneseq
        %v2735 = vshrl.u32 %v2734, 7
        %v2736 = vsub.s32 2, %v2735
        %v2737 = vrot.slane %v2720, %v2736
        %v2738 = vlaneseq
        %v2739 = vshrl.u32 %v2738, 7
        %v2740 = vsub.s32 3, %v2739
        %v2741 = vrot.slane %v2720, %v2740
        %v2742 = vlaneseq
        %v2743 = vshrl.u32 %v2742, 7
        %v2744 = vsub.s32 4, %v2743
        %v2745 = vrot.slane %v2720, %v2744
        %v2746 = vlaneseq
        %v2747 = vshrl.u32 %v2746, 7
        %v2748 = vsub.s32 5, %v2747
        %v2749 = vrot.slane %v2720, %v2748
        %v2750 = vlaneseq
        %v2751 = vshrl.u32 %v2750, 7
        %v2752 = vsub.s32 6, %v2751
        %v2753 = vrot.slane %v2720, %v2752
        %v2754 = vlaneseq
        %v2755 = vshrl.u32 %v2754, 7
        %v2756 = vsub.s32 7, %v2755
        %v2757 = vrot.slane %v2720, %v2756
        %v2758 = vlaneseq
        %v2759 = vshrl.u32 %v2758, 7
        %v2760 = vsub.s32 0, %v2759
        %v2761 = vrot.slane %v2723, %v2760
        %v2762 = vlaneseq
        %v2763 = vshrl.u32 %v2762, 7
        %v2764 = vsub.s32 1, %v2763
        %v2765 = vrot.slane %v2723, %v2764
        %v2766 = vlaneseq
        %v2767 = vshrl.u32 %v2766, 7
        %v2768 = vsub.s32 2, %v2767
        %v2769 = vrot.slane %v2723, %v2768
        %v2770 = vlaneseq
        %v2771 = vshrl.u32 %v2770, 7
        %v2772 = vsub.s32 3, %v2771
        %v2773 = vrot.slane %v2723, %v2772
        %v2774 = vlaneseq
        %v2775 = vshrl.u32 %v2774, 7
        %v2776 = vsub.s32 4, %v2775
        %v2777 = vrot.slane %v2723, %v2776
        %v2778 = vlaneseq
        %v2779 = vshrl.u32 %v2778, 7
        %v2780 = vsub.s32 5, %v2779
        %v2781 = vrot.slane %v2723, %v2780
        %v2782 = vlaneseq
        %v2783 = vshrl.u32 %v2782, 7
        %v2784 = vsub.s32 6, %v2783
        %v2785 = vrot.slane %v2723, %v2784
        %v2786 = vlaneseq
        %v2787 = vshrl.u32 %v2786, 7
        %v2788 = vsub.s32 7, %v2787
        %v2789 = vrot.slane %v2723, %v2788
        %v2806 = vsub.f32 %v2576, %v2729
        %v2807 = vsub.f32 %v2579, %v2733
        %v2808 = vsub.f32 %v2582, %v2737
        %v2809 = vsub.f32 %v2585, %v2741
        %v2810 = vsub.f32 %v2588, %v2745
        %v2811 = vsub.f32 %v2591, %v2749
        %v2812 = vsub.f32 %v2594, %v2753
        %v2813 = vsub.f32 %v2597, %v2757
        %v2814 = vsub.f32 %v2600, %v2761
        %v2815 = vsub.f32 %v2603, %v2765
        %v2816 = vsub.f32 %v2606, %v2769
        %v2817 = vsub.f32 %v2609, %v2773
        %v2818 = vsub.f32 %v2612, %v2777
        %v2819 = vsub.f32 %v2615, %v2781
        %v2820 = vsub.f32 %v2618, %v2785
        %v2821 = vsub.f32 %v2621, %v2789
        %v2822 = vmul.f32 %v2806, 1.442695
        %v2823 = vpow.pop %v2822
        %v2824 = vmul.f32 %v2807, 1.442695
        %v2825 = vpow.pop %v2824
        %v2826 = vmul.f32 %v2808, 1.442695
        %v2827 = vpow.pop %v2826
        %v2828 = vmul.f32 %v2809, 1.442695
        %v2829 = vpow.pop %v2828
        %v2830 = vmul.f32 %v2810, 1.442695
        %v2831 = vpow.pop %v2830
        %v2832 = vmul.f32 %v2811, 1.442695
        %v2833 = vpow.pop %v2832
        %v2834 = vmul.f32 %v2812, 1.442695
        %v2835 = vpow.pop %v2834
        %v2836 = vmul.f32 %v2813, 1.442695
        %v2837 = vpow.pop %v2836
        %v2838 = vmul.f32 %v2814, 1.442695
        %v2839 = vpow.pop %v2838
        %v2840 = vmul.f32 %v2815, 1.442695
        %v2841 = vpow.pop %v2840
        %v2842 = vmul.f32 %v2816, 1.442695
        %v2843 = vpow.pop %v2842
        %v2844 = vmul.f32 %v2817, 1.442695
        %v2845 = vpow.pop %v2844
        %v2846 = vmul.f32 %v2818, 1.442695
        %v2847 = vpow.pop %v2846
        %v2848 = vmul.f32 %v2819, 1.442695
        %v2849 = vpow.pop %v2848
        %v2850 = vmul.f32 %v2820, 1.442695
        %v2851 = vpow.pop %v2850
        %v2852 = vmul.f32 %v2821, 1.442695
        %v2853 = vpow.pop %v2852
        %2870 = vset.pattern.permute.xlu0 0
        %2871 = vperm.xlu0 %2870, %v2823
        %v2872 = vpop.permute.xlu0 %2871
        %2873 = vset.pattern.permute.xlu0 0
        %2874 = vperm.xlu0 %2873, %v2825
        %v2875 = vpop.permute.xlu0 %2874
        %2876 = vset.pattern.permute.xlu0 0
        %2877 = vperm.xlu0 %2876, %v2827
        %v2878 = vpop.permute.xlu0 %2877
        %2879 = vset.pattern.permute.xlu0 0
        %2880 = vperm.xlu0 %2879, %v2829
        %v2881 = vpop.permute.xlu0 %2880
        %2882 = vset.pattern.permute.xlu0 0
        %2883 = vperm.xlu0 %2882, %v2831
        %v2884 = vpop.permute.xlu0 %2883
        %2885 = vset.pattern.permute.xlu0 0
        %2886 = vperm.xlu0 %2885, %v2833
        %v2887 = vpop.permute.xlu0 %2886
        %2888 = vset.pattern.permute.xlu0 0
        %2889 = vperm.xlu0 %2888, %v2835
        %v2890 = vpop.permute.xlu0 %2889
        %2891 = vset.pattern.permute.xlu0 0
        %2892 = vperm.xlu0 %2891, %v2837
        %v2893 = vpop.permute.xlu0 %2892
        %2894 = vset.pattern.permute.xlu0 0
        %2895 = vperm.xlu0 %2894, %v2839
        %v2896 = vpop.permute.xlu0 %2895
        %2897 = vset.pattern.permute.xlu0 0
        %2898 = vperm.xlu0 %2897, %v2841
        %v2899 = vpop.permute.xlu0 %2898
        %2900 = vset.pattern.permute.xlu0 0
        %2901 = vperm.xlu0 %2900, %v2843
        %v2902 = vpop.permute.xlu0 %2901
        %2903 = vset.pattern.permute.xlu0 0
        %2904 = vperm.xlu0 %2903, %v2845
        %v2905 = vpop.permute.xlu0 %2904
        %2906 = vset.pattern.permute.xlu0 0
        %2907 = vperm.xlu0 %2906, %v2847
        %v2908 = vpop.permute.xlu0 %2907
        %2909 = vset.pattern.permute.xlu0 0
        %2910 = vperm.xlu0 %2909, %v2849
        %v2911 = vpop.permute.xlu0 %2910
        %2912 = vset.pattern.permute.xlu0 0
        %2913 = vperm.xlu0 %2912, %v2851
        %v2914 = vpop.permute.xlu0 %2913
        %2915 = vset.pattern.permute.xlu0 0
        %2916 = vperm.xlu0 %2915, %v2853
        %v2917 = vpop.permute.xlu0 %2916
        %v2918 = vlaneseq
        %v2919 = vshrl.u32 %v2918, 7
        %v2920 = vsub.s32 %v1040, %v2919
        %v2921 = vrot.slane %v2872, %v2920
        %v2922 = vlaneseq
        %v2923 = vshrl.u32 %v2922, 7
        %v2924 = vsub.s32 %v1040, %v2923
        %v2925 = vrot.slane %v2875, %v2924
        %v2926 = vlaneseq
        %v2927 = vshrl.u32 %v2926, 7
        %v2928 = vsub.s32 %v1040, %v2927
        %v2929 = vrot.slane %v2878, %v2928
        %v2930 = vlaneseq
        %v2931 = vshrl.u32 %v2930, 7
        %v2932 = vsub.s32 %v1040, %v2931
        %v2933 = vrot.slane %v2881, %v2932
        %v2934 = vlaneseq
        %v2935 = vshrl.u32 %v2934, 7
        %v2936 = vsub.s32 %v1040, %v2935
        %v2937 = vrot.slane %v2884, %v2936
        %v2938 = vlaneseq
        %v2939 = vshrl.u32 %v2938, 7
        %v2940 = vsub.s32 %v1040, %v2939
        %v2941 = vrot.slane %v2887, %v2940
        %v2942 = vlaneseq
        %v2943 = vshrl.u32 %v2942, 7
        %v2944 = vsub.s32 %v1040, %v2943
        %v2945 = vrot.slane %v2890, %v2944
        %v2946 = vlaneseq
        %v2947 = vshrl.u32 %v2946, 7
        %v2948 = vsub.s32 %v1040, %v2947
        %v2949 = vrot.slane %v2893, %v2948
        %v2950 = vlaneseq
        %v2951 = vshrl.u32 %v2950, 7
        %v2952 = vsub.s32 %v1040, %v2951
        %v2953 = vrot.slane %v2896, %v2952
        %v2954 = vlaneseq
        %v2955 = vshrl.u32 %v2954, 7
        %v2956 = vsub.s32 %v1040, %v2955
        %v2957 = vrot.slane %v2899, %v2956
        %v2958 = vlaneseq
        %v2959 = vshrl.u32 %v2958, 7
        %v2960 = vsub.s32 %v1040, %v2959
        %v2961 = vrot.slane %v2902, %v2960
        %v2962 = vlaneseq
        %v2963 = vshrl.u32 %v2962, 7
        %v2964 = vsub.s32 %v1040, %v2963
        %v2965 = vrot.slane %v2905, %v2964
        %v2966 = vlaneseq
        %v2967 = vshrl.u32 %v2966, 7
        %v2968 = vsub.s32 %v1040, %v2967
        %v2969 = vrot.slane %v2908, %v2968
        %v2970 = vlaneseq
        %v2971 = vshrl.u32 %v2970, 7
        %v2972 = vsub.s32 %v1040, %v2971
        %v2973 = vrot.slane %v2911, %v2972
        %v2974 = vlaneseq
        %v2975 = vshrl.u32 %v2974, 7
        %v2976 = vsub.s32 %v1040, %v2975
        %v2977 = vrot.slane %v2914, %v2976
        %v2978 = vlaneseq
        %v2979 = vshrl.u32 %v2978, 7
        %v2980 = vsub.s32 %v1040, %v2979
        %v2981 = vrot.slane %v2917, %v2980
        %v2982 = vsel %vm1105, %v2925, %v2921
        %v2983 = vsel %vm1107, %v2929, %v2982
        %v2984 = vsel %vm1109, %v2933, %v2983
        %v2985 = vsel %vm1111, %v2937, %v2984
        %v2986 = vsel %vm1113, %v2941, %v2985
        %v2987 = vsel %vm1115, %v2945, %v2986
        %v2988 = vsel %vm1117, %v2949, %v2987
        %v2989 = vsel %vm1105, %v2957, %v2953
        %v2990 = vsel %vm1107, %v2961, %v2989
        %v2991 = vsel %vm1109, %v2965, %v2990
        %v2992 = vsel %vm1111, %v2969, %v2991
        %v2993 = vsel %vm1113, %v2973, %v2992
        %v2994 = vsel %vm1115, %v2977, %v2993
        %v2995 = vsel %vm1117, %v2981, %v2994
        %v2998 = vsel %vm686, %v2988, 0.0
        %2999 = vadd.xlane.f32.xlu0 %v2998
        %v3000 = vpop.xlane.xlu0 %2999
        %v3001 = vsel %vm686, %v2995, 0.0
        %3002 = vadd.xlane.f32.xlu0 %v3001
        %v3003 = vpop.xlane.xlu0 %3002
        %v3004 = vrcp.pop %v3000
        %v3005 = vrcp.pop %v3003
        %v3008 = vlaneseq
        %v3009 = vshrl.u32 %v3008, 7
        %v3010 = vsub.s32 0, %v3009
        %v3011 = vrot.slane %v3004, %v3010
        %v3012 = vlaneseq
        %v3013 = vshrl.u32 %v3012, 7
        %v3014 = vsub.s32 1, %v3013
        %v3015 = vrot.slane %v3004, %v3014
        %v3016 = vlaneseq
        %v3017 = vshrl.u32 %v3016, 7
        %v3018 = vsub.s32 2, %v3017
        %v3019 = vrot.slane %v3004, %v3018
        %v3020 = vlaneseq
        %v3021 = vshrl.u32 %v3020, 7
        %v3022 = vsub.s32 3, %v3021
        %v3023 = vrot.slane %v3004, %v3022
        %v3024 = vlaneseq
        %v3025 = vshrl.u32 %v3024, 7
        %v3026 = vsub.s32 4, %v3025
        %v3027 = vrot.slane %v3004, %v3026
        %v3028 = vlaneseq
        %v3029 = vshrl.u32 %v3028, 7
        %v3030 = vsub.s32 5, %v3029
        %v3031 = vrot.slane %v3004, %v3030
        %v3032 = vlaneseq
        %v3033 = vshrl.u32 %v3032, 7
        %v3034 = vsub.s32 6, %v3033
        %v3035 = vrot.slane %v3004, %v3034
        %v3036 = vlaneseq
        %v3037 = vshrl.u32 %v3036, 7
        %v3038 = vsub.s32 7, %v3037
        %v3039 = vrot.slane %v3004, %v3038
        %v3040 = vlaneseq
        %v3041 = vshrl.u32 %v3040, 7
        %v3042 = vsub.s32 0, %v3041
        %v3043 = vrot.slane %v3005, %v3042
        %v3044 = vlaneseq
        %v3045 = vshrl.u32 %v3044, 7
        %v3046 = vsub.s32 1, %v3045
        %v3047 = vrot.slane %v3005, %v3046
        %v3048 = vlaneseq
        %v3049 = vshrl.u32 %v3048, 7
        %v3050 = vsub.s32 2, %v3049
        %v3051 = vrot.slane %v3005, %v3050
        %v3052 = vlaneseq
        %v3053 = vshrl.u32 %v3052, 7
        %v3054 = vsub.s32 3, %v3053
        %v3055 = vrot.slane %v3005, %v3054
        %v3056 = vlaneseq
        %v3057 = vshrl.u32 %v3056, 7
        %v3058 = vsub.s32 4, %v3057
        %v3059 = vrot.slane %v3005, %v3058
        %v3060 = vlaneseq
        %v3061 = vshrl.u32 %v3060, 7
        %v3062 = vsub.s32 5, %v3061
        %v3063 = vrot.slane %v3005, %v3062
        %v3064 = vlaneseq
        %v3065 = vshrl.u32 %v3064, 7
        %v3066 = vsub.s32 6, %v3065
        %v3067 = vrot.slane %v3005, %v3066
        %v3068 = vlaneseq
        %v3069 = vshrl.u32 %v3068, 7
        %v3070 = vsub.s32 7, %v3069
        %v3071 = vrot.slane %v3005, %v3070
        %v3088 = vmul.f32 %v2823, %v3011
        %v3089 = vmul.f32 %v2825, %v3015
        %v3090 = vmul.f32 %v2827, %v3019
        %v3091 = vmul.f32 %v2829, %v3023
        %v3092 = vmul.f32 %v2831, %v3027
        %v3093 = vmul.f32 %v2833, %v3031
        %v3094 = vmul.f32 %v2835, %v3035
        %v3095 = vmul.f32 %v2837, %v3039
        %v3096 = vmul.f32 %v2839, %v3043
        %v3097 = vmul.f32 %v2841, %v3047
        %v3098 = vmul.f32 %v2843, %v3051
        %v3099 = vmul.f32 %v2845, %v3055
        %v3100 = vmul.f32 %v2847, %v3059
        %v3101 = vmul.f32 %v2849, %v3063
        %v3102 = vmul.f32 %v2851, %v3067
        %v3103 = vmul.f32 %v2853, %v3071
        %3105 = vset.pattern.permute.xlu0 0
        %3106 = vperm.xlu0 %3105, %v3088
        %v3107 = vpop.permute.xlu0 %3106
        %3110 = vset.pattern.permute.xlu0 0
        %3111 = vperm.xlu0 %3110, %v3089
        %v3112 = vpop.permute.xlu0 %3111
        %3115 = vset.pattern.permute.xlu0 0
        %3116 = vperm.xlu0 %3115, %v3090
        %v3117 = vpop.permute.xlu0 %3116
        %3120 = vset.pattern.permute.xlu0 0
        %3121 = vperm.xlu0 %3120, %v3091
        %v3122 = vpop.permute.xlu0 %3121
        %3125 = vset.pattern.permute.xlu0 0
        %3126 = vperm.xlu0 %3125, %v3092
        %v3127 = vpop.permute.xlu0 %3126
        %3130 = vset.pattern.permute.xlu0 0
        %3131 = vperm.xlu0 %3130, %v3093
        %v3132 = vpop.permute.xlu0 %3131
        %3135 = vset.pattern.permute.xlu0 0
        %3136 = vperm.xlu0 %3135, %v3094
        %v3137 = vpop.permute.xlu0 %3136
        %3140 = vset.pattern.permute.xlu0 0
        %3141 = vperm.xlu0 %3140, %v3095
        %v3142 = vpop.permute.xlu0 %3141
        %3145 = vset.pattern.permute.xlu0 0
        %3146 = vperm.xlu0 %3145, %v3096
        %v3147 = vpop.permute.xlu0 %3146
        %3150 = vset.pattern.permute.xlu0 0
        %3151 = vperm.xlu0 %3150, %v3097
        %v3152 = vpop.permute.xlu0 %3151
        %3155 = vset.pattern.permute.xlu0 0
        %3156 = vperm.xlu0 %3155, %v3098
        %v3157 = vpop.permute.xlu0 %3156
        %3160 = vset.pattern.permute.xlu0 0
        %3161 = vperm.xlu0 %3160, %v3099
        %v3162 = vpop.permute.xlu0 %3161
        %3165 = vset.pattern.permute.xlu0 0
        %3166 = vperm.xlu0 %3165, %v3100
        %v3167 = vpop.permute.xlu0 %3166
        %3170 = vset.pattern.permute.xlu0 0
        %3171 = vperm.xlu0 %3170, %v3101
        %v3172 = vpop.permute.xlu0 %3171
        %3175 = vset.pattern.permute.xlu0 0
        %3176 = vperm.xlu0 %3175, %v3102
        %v3177 = vpop.permute.xlu0 %3176
        %3180 = vset.pattern.permute.xlu0 0
        %3181 = vperm.xlu0 %3180, %v3103
        %v3182 = vpop.permute.xlu0 %3181
        %v3184 = vmul.f32 %v3107, %v760
        %v3185 = vmul.f32 %v3112, %v760
        %v3186 = vmul.f32 %v3117, %v760
        %v3187 = vmul.f32 %v3122, %v760
        %v3188 = vmul.f32 %v3127, %v760
        %v3189 = vmul.f32 %v3132, %v760
        %v3190 = vmul.f32 %v3137, %v760
        %v3191 = vmul.f32 %v3142, %v760
        %v3192 = vmul.f32 %v3147, %v765
        %v3193 = vmul.f32 %v3152, %v765
        %v3194 = vmul.f32 %v3157, %v765
        %v3195 = vmul.f32 %v3162, %v765
        %v3196 = vmul.f32 %v3167, %v765
        %v3197 = vmul.f32 %v3172, %v765
        %v3198 = vmul.f32 %v3177, %v765
        %v3199 = vmul.f32 %v3182, %v765
        %vm3200 = vcmask 179360
        %v3201 = vsel %vm3200, %v3184, 0.0
        %v3202 = vrot.slane %v3201, 4
        %v3203 = vadd.f32 %v3201, %v3202
        %v3204 = vrot.slane %v3203, 2
        %v3205 = vadd.f32 %v3203, %v3204
        %v3206 = vrot.slane %v3205, 1
        %v3207 = vadd.f32 %v3205, %v3206
        %v3208 = vsel %vm3200, %v3185, 0.0
        %v3209 = vrot.slane %v3208, 4
        %v3210 = vadd.f32 %v3208, %v3209
        %v3211 = vrot.slane %v3210, 2
        %v3212 = vadd.f32 %v3210, %v3211
        %v3213 = vrot.slane %v3212, 1
        %v3214 = vadd.f32 %v3212, %v3213
        %v3215 = vsel %vm3200, %v3186, 0.0
        %v3216 = vrot.slane %v3215, 4
        %v3217 = vadd.f32 %v3215, %v3216
        %v3218 = vrot.slane %v3217, 2
        %v3219 = vadd.f32 %v3217, %v3218
        %v3220 = vrot.slane %v3219, 1
        %v3221 = vadd.f32 %v3219, %v3220
        %v3222 = vsel %vm3200, %v3187, 0.0
        %v3223 = vrot.slane %v3222, 4
        %v3224 = vadd.f32 %v3222, %v3223
        %v3225 = vrot.slane %v3224, 2
        %v3226 = vadd.f32 %v3224, %v3225
        %v3227 = vrot.slane %v3226, 1
        %v3228 = vadd.f32 %v3226, %v3227
        %v3229 = vsel %vm3200, %v3188, 0.0
        %v3230 = vrot.slane %v3229, 4
        %v3231 = vadd.f32 %v3229, %v3230
        %v3232 = vrot.slane %v3231, 2
        %v3233 = vadd.f32 %v3231, %v3232
        %v3234 = vrot.slane %v3233, 1
        %v3235 = vadd.f32 %v3233, %v3234
        %v3236 = vsel %vm3200, %v3189, 0.0
        %v3237 = vrot.slane %v3236, 4
        %v3238 = vadd.f32 %v3236, %v3237
        %v3239 = vrot.slane %v3238, 2
        %v3240 = vadd.f32 %v3238, %v3239
        %v3241 = vrot.slane %v3240, 1
        %v3242 = vadd.f32 %v3240, %v3241
        %v3243 = vsel %vm3200, %v3190, 0.0
        %v3244 = vrot.slane %v3243, 4
        %v3245 = vadd.f32 %v3243, %v3244
        %v3246 = vrot.slane %v3245, 2
        %v3247 = vadd.f32 %v3245, %v3246
        %v3248 = vrot.slane %v3247, 1
        %v3249 = vadd.f32 %v3247, %v3248
        %v3250 = vsel %vm3200, %v3191, 0.0
        %v3251 = vrot.slane %v3250, 4
        %v3252 = vadd.f32 %v3250, %v3251
        %v3253 = vrot.slane %v3252, 2
        %v3254 = vadd.f32 %v3252, %v3253
        %v3255 = vrot.slane %v3254, 1
        %v3256 = vadd.f32 %v3254, %v3255
        %v3257 = vsel %vm3200, %v3192, 0.0
        %v3258 = vrot.slane %v3257, 4
        %v3259 = vadd.f32 %v3257, %v3258
        %v3260 = vrot.slane %v3259, 2
        %v3261 = vadd.f32 %v3259, %v3260
        %v3262 = vrot.slane %v3261, 1
        %v3263 = vadd.f32 %v3261, %v3262
        %v3264 = vsel %vm3200, %v3193, 0.0
        %v3265 = vrot.slane %v3264, 4
        %v3266 = vadd.f32 %v3264, %v3265
        %v3267 = vrot.slane %v3266, 2
        %v3268 = vadd.f32 %v3266, %v3267
        %v3269 = vrot.slane %v3268, 1
        %v3270 = vadd.f32 %v3268, %v3269
        %v3271 = vsel %vm3200, %v3194, 0.0
        %v3272 = vrot.slane %v3271, 4
        %v3273 = vadd.f32 %v3271, %v3272
        %v3274 = vrot.slane %v3273, 2
        %v3275 = vadd.f32 %v3273, %v3274
        %v3276 = vrot.slane %v3275, 1
        %v3277 = vadd.f32 %v3275, %v3276
        %v3278 = vsel %vm3200, %v3195, 0.0
        %v3279 = vrot.slane %v3278, 4
        %v3280 = vadd.f32 %v3278, %v3279
        %v3281 = vrot.slane %v3280, 2
        %v3282 = vadd.f32 %v3280, %v3281
        %v3283 = vrot.slane %v3282, 1
        %v3284 = vadd.f32 %v3282, %v3283
        %v3285 = vsel %vm3200, %v3196, 0.0
        %v3286 = vrot.slane %v3285, 4
        %v3287 = vadd.f32 %v3285, %v3286
        %v3288 = vrot.slane %v3287, 2
        %v3289 = vadd.f32 %v3287, %v3288
        %v3290 = vrot.slane %v3289, 1
        %v3291 = vadd.f32 %v3289, %v3290
        %v3292 = vsel %vm3200, %v3197, 0.0
        %v3293 = vrot.slane %v3292, 4
        %v3294 = vadd.f32 %v3292, %v3293
        %v3295 = vrot.slane %v3294, 2
        %v3296 = vadd.f32 %v3294, %v3295
        %v3297 = vrot.slane %v3296, 1
        %v3298 = vadd.f32 %v3296, %v3297
        %v3299 = vsel %vm3200, %v3198, 0.0
        %v3300 = vrot.slane %v3299, 4
        %v3301 = vadd.f32 %v3299, %v3300
        %v3302 = vrot.slane %v3301, 2
        %v3303 = vadd.f32 %v3301, %v3302
        %v3304 = vrot.slane %v3303, 1
        %v3305 = vadd.f32 %v3303, %v3304
        %v3306 = vsel %vm3200, %v3199, 0.0
        %v3307 = vrot.slane %v3306, 4
        %v3308 = vadd.f32 %v3306, %v3307
        %v3309 = vrot.slane %v3308, 2
        %v3310 = vadd.f32 %v3308, %v3309
        %v3311 = vrot.slane %v3310, 1
        %v3312 = vadd.f32 %v3310, %v3311
        %3313 = vrot.lane.b32.xlu0 %v958, 122
        %v3314 = vpop.permute.xlu0 %3313
        %3315 = vrot.lane.b32.xlu0 %v959, 122
        %v3316 = vpop.permute.xlu0 %3315
        %3317 = vrot.lane.b32.xlu0 %v960, 122
        %v3318 = vpop.permute.xlu0 %3317
        %3319 = vrot.lane.b32.xlu0 %v961, 122
        %v3320 = vpop.permute.xlu0 %3319
        %3321 = vrot.lane.b32.xlu0 %v962, 122
        %v3322 = vpop.permute.xlu0 %3321
        %3323 = vrot.lane.b32.xlu0 %v963, 122
        %v3324 = vpop.permute.xlu0 %3323
        %3325 = vrot.lane.b32.xlu0 %v964, 122
        %v3326 = vpop.permute.xlu0 %3325
        %3327 = vrot.lane.b32.xlu0 %v965, 122
        %v3328 = vpop.permute.xlu0 %3327
        %3329 = vrot.lane.b32.xlu0 %v966, 122
        %v3330 = vpop.permute.xlu0 %3329
        %3331 = vrot.lane.b32.xlu0 %v967, 122
        %v3332 = vpop.permute.xlu0 %3331
        %3333 = vrot.lane.b32.xlu0 %v968, 122
        %v3334 = vpop.permute.xlu0 %3333
        %3335 = vrot.lane.b32.xlu0 %v969, 122
        %v3336 = vpop.permute.xlu0 %3335
        %3337 = vrot.lane.b32.xlu0 %v970, 122
        %v3338 = vpop.permute.xlu0 %3337
        %3339 = vrot.lane.b32.xlu0 %v971, 122
        %v3340 = vpop.permute.xlu0 %3339
        %3341 = vrot.lane.b32.xlu0 %v972, 122
        %v3342 = vpop.permute.xlu0 %3341
        %3343 = vrot.lane.b32.xlu0 %v973, 122
        %v3344 = vpop.permute.xlu0 %3343
        %v3361 = vsel %vm974, %v3314, 0.0
        %3362 = vadd.xlane.f32.xlu0 %v3361
        %v3363 = vpop.xlane.xlu0 %3362
        %v3364 = vsel %vm974, %v3316, 0.0
        %3365 = vadd.xlane.f32.xlu0 %v3364
        %v3366 = vpop.xlane.xlu0 %3365
        %v3367 = vsel %vm974, %v3318, 0.0
        %3368 = vadd.xlane.f32.xlu0 %v3367
        %v3369 = vpop.xlane.xlu0 %3368
        %v3370 = vsel %vm974, %v3320, 0.0
        %3371 = vadd.xlane.f32.xlu0 %v3370
        %v3372 = vpop.xlane.xlu0 %3371
        %v3373 = vsel %vm974, %v3322, 0.0
        %3374 = vadd.xlane.f32.xlu0 %v3373
        %v3375 = vpop.xlane.xlu0 %3374
        %v3376 = vsel %vm974, %v3324, 0.0
        %3377 = vadd.xlane.f32.xlu0 %v3376
        %v3378 = vpop.xlane.xlu0 %3377
        %v3379 = vsel %vm974, %v3326, 0.0
        %3380 = vadd.xlane.f32.xlu0 %v3379
        %v3381 = vpop.xlane.xlu0 %3380
        %v3382 = vsel %vm974, %v3328, 0.0
        %3383 = vadd.xlane.f32.xlu0 %v3382
        %v3384 = vpop.xlane.xlu0 %3383
        %v3385 = vsel %vm974, %v3330, 0.0
        %3386 = vadd.xlane.f32.xlu0 %v3385
        %v3387 = vpop.xlane.xlu0 %3386
        %v3388 = vsel %vm974, %v3332, 0.0
        %3389 = vadd.xlane.f32.xlu0 %v3388
        %v3390 = vpop.xlane.xlu0 %3389
        %v3391 = vsel %vm974, %v3334, 0.0
        %3392 = vadd.xlane.f32.xlu0 %v3391
        %v3393 = vpop.xlane.xlu0 %3392
        %v3394 = vsel %vm974, %v3336, 0.0
        %3395 = vadd.xlane.f32.xlu0 %v3394
        %v3396 = vpop.xlane.xlu0 %3395
        %v3397 = vsel %vm974, %v3338, 0.0
        %3398 = vadd.xlane.f32.xlu0 %v3397
        %v3399 = vpop.xlane.xlu0 %3398
        %v3400 = vsel %vm974, %v3340, 0.0
        %3401 = vadd.xlane.f32.xlu0 %v3400
        %v3402 = vpop.xlane.xlu0 %3401
        %v3403 = vsel %vm974, %v3342, 0.0
        %3404 = vadd.xlane.f32.xlu0 %v3403
        %v3405 = vpop.xlane.xlu0 %3404
        %v3406 = vsel %vm974, %v3344, 0.0
        %3407 = vadd.xlane.f32.xlu0 %v3406
        %v3408 = vpop.xlane.xlu0 %3407
        %v3425 = vlaneseq
        %v3426 = vshrl.u32 %v3425, 7
        %v3427 = vsub.s32 %v1040, %v3426
        %v3428 = vrot.slane %v3363, %v3427
        %v3429 = vlaneseq
        %v3430 = vshrl.u32 %v3429, 7
        %v3431 = vsub.s32 %v1040, %v3430
        %v3432 = vrot.slane %v3366, %v3431
        %v3433 = vlaneseq
        %v3434 = vshrl.u32 %v3433, 7
        %v3435 = vsub.s32 %v1040, %v3434
        %v3436 = vrot.slane %v3369, %v3435
        %v3437 = vlaneseq
        %v3438 = vshrl.u32 %v3437, 7
        %v3439 = vsub.s32 %v1040, %v3438
        %v3440 = vrot.slane %v3372, %v3439
        %v3441 = vlaneseq
        %v3442 = vshrl.u32 %v3441, 7
        %v3443 = vsub.s32 %v1040, %v3442
        %v3444 = vrot.slane %v3375, %v3443
        %v3445 = vlaneseq
        %v3446 = vshrl.u32 %v3445, 7
        %v3447 = vsub.s32 %v1040, %v3446
        %v3448 = vrot.slane %v3378, %v3447
        %v3449 = vlaneseq
        %v3450 = vshrl.u32 %v3449, 7
        %v3451 = vsub.s32 %v1040, %v3450
        %v3452 = vrot.slane %v3381, %v3451
        %v3453 = vlaneseq
        %v3454 = vshrl.u32 %v3453, 7
        %v3455 = vsub.s32 %v1040, %v3454
        %v3456 = vrot.slane %v3384, %v3455
        %v3457 = vlaneseq
        %v3458 = vshrl.u32 %v3457, 7
        %v3459 = vsub.s32 %v1040, %v3458
        %v3460 = vrot.slane %v3387, %v3459
        %v3461 = vlaneseq
        %v3462 = vshrl.u32 %v3461, 7
        %v3463 = vsub.s32 %v1040, %v3462
        %v3464 = vrot.slane %v3390, %v3463
        %v3465 = vlaneseq
        %v3466 = vshrl.u32 %v3465, 7
        %v3467 = vsub.s32 %v1040, %v3466
        %v3468 = vrot.slane %v3393, %v3467
        %v3469 = vlaneseq
        %v3470 = vshrl.u32 %v3469, 7
        %v3471 = vsub.s32 %v1040, %v3470
        %v3472 = vrot.slane %v3396, %v3471
        %v3473 = vlaneseq
        %v3474 = vshrl.u32 %v3473, 7
        %v3475 = vsub.s32 %v1040, %v3474
        %v3476 = vrot.slane %v3399, %v3475
        %v3477 = vlaneseq
        %v3478 = vshrl.u32 %v3477, 7
        %v3479 = vsub.s32 %v1040, %v3478
        %v3480 = vrot.slane %v3402, %v3479
        %v3481 = vlaneseq
        %v3482 = vshrl.u32 %v3481, 7
        %v3483 = vsub.s32 %v1040, %v3482
        %v3484 = vrot.slane %v3405, %v3483
        %v3485 = vlaneseq
        %v3486 = vshrl.u32 %v3485, 7
        %v3487 = vsub.s32 %v1040, %v3486
        %v3488 = vrot.slane %v3408, %v3487
        %v3489 = vsel %vm1105, %v3432, %v3428
        %v3490 = vsel %vm1107, %v3436, %v3489
        %v3491 = vsel %vm1109, %v3440, %v3490
        %v3492 = vsel %vm1111, %v3444, %v3491
        %v3493 = vsel %vm1113, %v3448, %v3492
        %v3494 = vsel %vm1115, %v3452, %v3493
        %v3495 = vsel %vm1117, %v3456, %v3494
        %v3496 = vsel %vm1105, %v3464, %v3460
        %v3497 = vsel %vm1107, %v3468, %v3496
        %v3498 = vsel %vm1109, %v3472, %v3497
        %v3499 = vsel %vm1111, %v3476, %v3498
        %v3500 = vsel %vm1113, %v3480, %v3499
        %v3501 = vsel %vm1115, %v3484, %v3500
        %v3502 = vsel %vm1117, %v3488, %v3501
        %v3505 = vsel %vm686, %v3495, -inf
        %3506 = vmax.xlane.f32.xlu0 %v3505
        %v3507 = vpop.xlane.xlu0 %3506
        %v3508 = vsel %vm686, %v3502, -inf
        %3509 = vmax.xlane.f32.xlu0 %v3508
        %v3510 = vpop.xlane.xlu0 %3509
        %v3513 = vlaneseq
        %v3514 = vshrl.u32 %v3513, 7
        %v3515 = vsub.s32 0, %v3514
        %v3516 = vrot.slane %v3507, %v3515
        %v3517 = vlaneseq
        %v3518 = vshrl.u32 %v3517, 7
        %v3519 = vsub.s32 1, %v3518
        %v3520 = vrot.slane %v3507, %v3519
        %v3521 = vlaneseq
        %v3522 = vshrl.u32 %v3521, 7
        %v3523 = vsub.s32 2, %v3522
        %v3524 = vrot.slane %v3507, %v3523
        %v3525 = vlaneseq
        %v3526 = vshrl.u32 %v3525, 7
        %v3527 = vsub.s32 3, %v3526
        %v3528 = vrot.slane %v3507, %v3527
        %v3529 = vlaneseq
        %v3530 = vshrl.u32 %v3529, 7
        %v3531 = vsub.s32 4, %v3530
        %v3532 = vrot.slane %v3507, %v3531
        %v3533 = vlaneseq
        %v3534 = vshrl.u32 %v3533, 7
        %v3535 = vsub.s32 5, %v3534
        %v3536 = vrot.slane %v3507, %v3535
        %v3537 = vlaneseq
        %v3538 = vshrl.u32 %v3537, 7
        %v3539 = vsub.s32 6, %v3538
        %v3540 = vrot.slane %v3507, %v3539
        %v3541 = vlaneseq
        %v3542 = vshrl.u32 %v3541, 7
        %v3543 = vsub.s32 7, %v3542
        %v3544 = vrot.slane %v3507, %v3543
        %v3545 = vlaneseq
        %v3546 = vshrl.u32 %v3545, 7
        %v3547 = vsub.s32 0, %v3546
        %v3548 = vrot.slane %v3510, %v3547
        %v3549 = vlaneseq
        %v3550 = vshrl.u32 %v3549, 7
        %v3551 = vsub.s32 1, %v3550
        %v3552 = vrot.slane %v3510, %v3551
        %v3553 = vlaneseq
        %v3554 = vshrl.u32 %v3553, 7
        %v3555 = vsub.s32 2, %v3554
        %v3556 = vrot.slane %v3510, %v3555
        %v3557 = vlaneseq
        %v3558 = vshrl.u32 %v3557, 7
        %v3559 = vsub.s32 3, %v3558
        %v3560 = vrot.slane %v3510, %v3559
        %v3561 = vlaneseq
        %v3562 = vshrl.u32 %v3561, 7
        %v3563 = vsub.s32 4, %v3562
        %v3564 = vrot.slane %v3510, %v3563
        %v3565 = vlaneseq
        %v3566 = vshrl.u32 %v3565, 7
        %v3567 = vsub.s32 5, %v3566
        %v3568 = vrot.slane %v3510, %v3567
        %v3569 = vlaneseq
        %v3570 = vshrl.u32 %v3569, 7
        %v3571 = vsub.s32 6, %v3570
        %v3572 = vrot.slane %v3510, %v3571
        %v3573 = vlaneseq
        %v3574 = vshrl.u32 %v3573, 7
        %v3575 = vsub.s32 7, %v3574
        %v3576 = vrot.slane %v3510, %v3575
        %v3593 = vsub.f32 %v3363, %v3516
        %v3594 = vsub.f32 %v3366, %v3520
        %v3595 = vsub.f32 %v3369, %v3524
        %v3596 = vsub.f32 %v3372, %v3528
        %v3597 = vsub.f32 %v3375, %v3532
        %v3598 = vsub.f32 %v3378, %v3536
        %v3599 = vsub.f32 %v3381, %v3540
        %v3600 = vsub.f32 %v3384, %v3544
        %v3601 = vsub.f32 %v3387, %v3548
        %v3602 = vsub.f32 %v3390, %v3552
        %v3603 = vsub.f32 %v3393, %v3556
        %v3604 = vsub.f32 %v3396, %v3560
        %v3605 = vsub.f32 %v3399, %v3564
        %v3606 = vsub.f32 %v3402, %v3568
        %v3607 = vsub.f32 %v3405, %v3572
        %v3608 = vsub.f32 %v3408, %v3576
        %v3609 = vmul.f32 %v3593, 1.442695
        %v3610 = vpow.pop %v3609
        %v3611 = vmul.f32 %v3594, 1.442695
        %v3612 = vpow.pop %v3611
        %v3613 = vmul.f32 %v3595, 1.442695
        %v3614 = vpow.pop %v3613
        %v3615 = vmul.f32 %v3596, 1.442695
        %v3616 = vpow.pop %v3615
        %v3617 = vmul.f32 %v3597, 1.442695
        %v3618 = vpow.pop %v3617
        %v3619 = vmul.f32 %v3598, 1.442695
        %v3620 = vpow.pop %v3619
        %v3621 = vmul.f32 %v3599, 1.442695
        %v3622 = vpow.pop %v3621
        %v3623 = vmul.f32 %v3600, 1.442695
        %v3624 = vpow.pop %v3623
        %v3625 = vmul.f32 %v3601, 1.442695
        %v3626 = vpow.pop %v3625
        %v3627 = vmul.f32 %v3602, 1.442695
        %v3628 = vpow.pop %v3627
        %v3629 = vmul.f32 %v3603, 1.442695
        %v3630 = vpow.pop %v3629
        %v3631 = vmul.f32 %v3604, 1.442695
        %v3632 = vpow.pop %v3631
        %v3633 = vmul.f32 %v3605, 1.442695
        %v3634 = vpow.pop %v3633
        %v3635 = vmul.f32 %v3606, 1.442695
        %v3636 = vpow.pop %v3635
        %v3637 = vmul.f32 %v3607, 1.442695
        %v3638 = vpow.pop %v3637
        %v3639 = vmul.f32 %v3608, 1.442695
        %v3640 = vpow.pop %v3639
        %3657 = vset.pattern.permute.xlu0 0
        %3658 = vperm.xlu0 %3657, %v3610
        %v3659 = vpop.permute.xlu0 %3658
        %3660 = vset.pattern.permute.xlu0 0
        %3661 = vperm.xlu0 %3660, %v3612
        %v3662 = vpop.permute.xlu0 %3661
        %3663 = vset.pattern.permute.xlu0 0
        %3664 = vperm.xlu0 %3663, %v3614
        %v3665 = vpop.permute.xlu0 %3664
        %3666 = vset.pattern.permute.xlu0 0
        %3667 = vperm.xlu0 %3666, %v3616
        %v3668 = vpop.permute.xlu0 %3667
        %3669 = vset.pattern.permute.xlu0 0
        %3670 = vperm.xlu0 %3669, %v3618
        %v3671 = vpop.permute.xlu0 %3670
        %3672 = vset.pattern.permute.xlu0 0
        %3673 = vperm.xlu0 %3672, %v3620
        %v3674 = vpop.permute.xlu0 %3673
        %3675 = vset.pattern.permute.xlu0 0
        %3676 = vperm.xlu0 %3675, %v3622
        %v3677 = vpop.permute.xlu0 %3676
        %3678 = vset.pattern.permute.xlu0 0
        %3679 = vperm.xlu0 %3678, %v3624
        %v3680 = vpop.permute.xlu0 %3679
        %3681 = vset.pattern.permute.xlu0 0
        %3682 = vperm.xlu0 %3681, %v3626
        %v3683 = vpop.permute.xlu0 %3682
        %3684 = vset.pattern.permute.xlu0 0
        %3685 = vperm.xlu0 %3684, %v3628
        %v3686 = vpop.permute.xlu0 %3685
        %3687 = vset.pattern.permute.xlu0 0
        %3688 = vperm.xlu0 %3687, %v3630
        %v3689 = vpop.permute.xlu0 %3688
        %3690 = vset.pattern.permute.xlu0 0
        %3691 = vperm.xlu0 %3690, %v3632
        %v3692 = vpop.permute.xlu0 %3691
        %3693 = vset.pattern.permute.xlu0 0
        %3694 = vperm.xlu0 %3693, %v3634
        %v3695 = vpop.permute.xlu0 %3694
        %3696 = vset.pattern.permute.xlu0 0
        %3697 = vperm.xlu0 %3696, %v3636
        %v3698 = vpop.permute.xlu0 %3697
        %3699 = vset.pattern.permute.xlu0 0
        %3700 = vperm.xlu0 %3699, %v3638
        %v3701 = vpop.permute.xlu0 %3700
        %3702 = vset.pattern.permute.xlu0 0
        %3703 = vperm.xlu0 %3702, %v3640
        %v3704 = vpop.permute.xlu0 %3703
        %v3705 = vlaneseq
        %v3706 = vshrl.u32 %v3705, 7
        %v3707 = vsub.s32 %v1040, %v3706
        %v3708 = vrot.slane %v3659, %v3707
        %v3709 = vlaneseq
        %v3710 = vshrl.u32 %v3709, 7
        %v3711 = vsub.s32 %v1040, %v3710
        %v3712 = vrot.slane %v3662, %v3711
        %v3713 = vlaneseq
        %v3714 = vshrl.u32 %v3713, 7
        %v3715 = vsub.s32 %v1040, %v3714
        %v3716 = vrot.slane %v3665, %v3715
        %v3717 = vlaneseq
        %v3718 = vshrl.u32 %v3717, 7
        %v3719 = vsub.s32 %v1040, %v3718
        %v3720 = vrot.slane %v3668, %v3719
        %v3721 = vlaneseq
        %v3722 = vshrl.u32 %v3721, 7
        %v3723 = vsub.s32 %v1040, %v3722
        %v3724 = vrot.slane %v3671, %v3723
        %v3725 = vlaneseq
        %v3726 = vshrl.u32 %v3725, 7
        %v3727 = vsub.s32 %v1040, %v3726
        %v3728 = vrot.slane %v3674, %v3727
        %v3729 = vlaneseq
        %v3730 = vshrl.u32 %v3729, 7
        %v3731 = vsub.s32 %v1040, %v3730
        %v3732 = vrot.slane %v3677, %v3731
        %v3733 = vlaneseq
        %v3734 = vshrl.u32 %v3733, 7
        %v3735 = vsub.s32 %v1040, %v3734
        %v3736 = vrot.slane %v3680, %v3735
        %v3737 = vlaneseq
        %v3738 = vshrl.u32 %v3737, 7
        %v3739 = vsub.s32 %v1040, %v3738
        %v3740 = vrot.slane %v3683, %v3739
        %v3741 = vlaneseq
        %v3742 = vshrl.u32 %v3741, 7
        %v3743 = vsub.s32 %v1040, %v3742
        %v3744 = vrot.slane %v3686, %v3743
        %v3745 = vlaneseq
        %v3746 = vshrl.u32 %v3745, 7
        %v3747 = vsub.s32 %v1040, %v3746
        %v3748 = vrot.slane %v3689, %v3747
        %v3749 = vlaneseq
        %v3750 = vshrl.u32 %v3749, 7
        %v3751 = vsub.s32 %v1040, %v3750
        %v3752 = vrot.slane %v3692, %v3751
        %v3753 = vlaneseq
        %v3754 = vshrl.u32 %v3753, 7
        %v3755 = vsub.s32 %v1040, %v3754
        %v3756 = vrot.slane %v3695, %v3755
        %v3757 = vlaneseq
        %v3758 = vshrl.u32 %v3757, 7
        %v3759 = vsub.s32 %v1040, %v3758
        %v3760 = vrot.slane %v3698, %v3759
        %v3761 = vlaneseq
        %v3762 = vshrl.u32 %v3761, 7
        %v3763 = vsub.s32 %v1040, %v3762
        %v3764 = vrot.slane %v3701, %v3763
        %v3765 = vlaneseq
        %v3766 = vshrl.u32 %v3765, 7
        %v3767 = vsub.s32 %v1040, %v3766
        %v3768 = vrot.slane %v3704, %v3767
        %v3769 = vsel %vm1105, %v3712, %v3708
        %v3770 = vsel %vm1107, %v3716, %v3769
        %v3771 = vsel %vm1109, %v3720, %v3770
        %v3772 = vsel %vm1111, %v3724, %v3771
        %v3773 = vsel %vm1113, %v3728, %v3772
        %v3774 = vsel %vm1115, %v3732, %v3773
        %v3775 = vsel %vm1117, %v3736, %v3774
        %v3776 = vsel %vm1105, %v3744, %v3740
        %v3777 = vsel %vm1107, %v3748, %v3776
        %v3778 = vsel %vm1109, %v3752, %v3777
        %v3779 = vsel %vm1111, %v3756, %v3778
        %v3780 = vsel %vm1113, %v3760, %v3779
        %v3781 = vsel %vm1115, %v3764, %v3780
        %v3782 = vsel %vm1117, %v3768, %v3781
        %v3785 = vsel %vm686, %v3775, 0.0
        %3786 = vadd.xlane.f32.xlu0 %v3785
        %v3787 = vpop.xlane.xlu0 %3786
        %v3788 = vsel %vm686, %v3782, 0.0
        %3789 = vadd.xlane.f32.xlu0 %v3788
        %v3790 = vpop.xlane.xlu0 %3789
        %v3791 = vrcp.pop %v3787
        %v3792 = vrcp.pop %v3790
        %v3795 = vlaneseq
        %v3796 = vshrl.u32 %v3795, 7
        %v3797 = vsub.s32 0, %v3796
        %v3798 = vrot.slane %v3791, %v3797
        %v3799 = vlaneseq
        %v3800 = vshrl.u32 %v3799, 7
        %v3801 = vsub.s32 1, %v3800
        %v3802 = vrot.slane %v3791, %v3801
        %v3803 = vlaneseq
        %v3804 = vshrl.u32 %v3803, 7
        %v3805 = vsub.s32 2, %v3804
        %v3806 = vrot.slane %v3791, %v3805
        %v3807 = vlaneseq
        %v3808 = vshrl.u32 %v3807, 7
        %v3809 = vsub.s32 3, %v3808
        %v3810 = vrot.slane %v3791, %v3809
        %v3811 = vlaneseq
        %v3812 = vshrl.u32 %v3811, 7
        %v3813 = vsub.s32 4, %v3812
        %v3814 = vrot.slane %v3791, %v3813
        %v3815 = vlaneseq
        %v3816 = vshrl.u32 %v3815, 7
        %v3817 = vsub.s32 5, %v3816
        %v3818 = vrot.slane %v3791, %v3817
        %v3819 = vlaneseq
        %v3820 = vshrl.u32 %v3819, 7
        %v3821 = vsub.s32 6, %v3820
        %v3822 = vrot.slane %v3791, %v3821
        %v3823 = vlaneseq
        %v3824 = vshrl.u32 %v3823, 7
        %v3825 = vsub.s32 7, %v3824
        %v3826 = vrot.slane %v3791, %v3825
        %v3827 = vlaneseq
        %v3828 = vshrl.u32 %v3827, 7
        %v3829 = vsub.s32 0, %v3828
        %v3830 = vrot.slane %v3792, %v3829
        %v3831 = vlaneseq
        %v3832 = vshrl.u32 %v3831, 7
        %v3833 = vsub.s32 1, %v3832
        %v3834 = vrot.slane %v3792, %v3833
        %v3835 = vlaneseq
        %v3836 = vshrl.u32 %v3835, 7
        %v3837 = vsub.s32 2, %v3836
        %v3838 = vrot.slane %v3792, %v3837
        %v3839 = vlaneseq
        %v3840 = vshrl.u32 %v3839, 7
        %v3841 = vsub.s32 3, %v3840
        %v3842 = vrot.slane %v3792, %v3841
        %v3843 = vlaneseq
        %v3844 = vshrl.u32 %v3843, 7
        %v3845 = vsub.s32 4, %v3844
        %v3846 = vrot.slane %v3792, %v3845
        %v3847 = vlaneseq
        %v3848 = vshrl.u32 %v3847, 7
        %v3849 = vsub.s32 5, %v3848
        %v3850 = vrot.slane %v3792, %v3849
        %v3851 = vlaneseq
        %v3852 = vshrl.u32 %v3851, 7
        %v3853 = vsub.s32 6, %v3852
        %v3854 = vrot.slane %v3792, %v3853
        %v3855 = vlaneseq
        %v3856 = vshrl.u32 %v3855, 7
        %v3857 = vsub.s32 7, %v3856
        %v3858 = vrot.slane %v3792, %v3857
        %v3875 = vmul.f32 %v3610, %v3798
        %v3876 = vmul.f32 %v3612, %v3802
        %v3877 = vmul.f32 %v3614, %v3806
        %v3878 = vmul.f32 %v3616, %v3810
        %v3879 = vmul.f32 %v3618, %v3814
        %v3880 = vmul.f32 %v3620, %v3818
        %v3881 = vmul.f32 %v3622, %v3822
        %v3882 = vmul.f32 %v3624, %v3826
        %v3883 = vmul.f32 %v3626, %v3830
        %v3884 = vmul.f32 %v3628, %v3834
        %v3885 = vmul.f32 %v3630, %v3838
        %v3886 = vmul.f32 %v3632, %v3842
        %v3887 = vmul.f32 %v3634, %v3846
        %v3888 = vmul.f32 %v3636, %v3850
        %v3889 = vmul.f32 %v3638, %v3854
        %v3890 = vmul.f32 %v3640, %v3858
        %3892 = vset.pattern.permute.xlu0 0
        %3893 = vperm.xlu0 %3892, %v3875
        %v3894 = vpop.permute.xlu0 %3893
        %3897 = vset.pattern.permute.xlu0 0
        %3898 = vperm.xlu0 %3897, %v3876
        %v3899 = vpop.permute.xlu0 %3898
        %3902 = vset.pattern.permute.xlu0 0
        %3903 = vperm.xlu0 %3902, %v3877
        %v3904 = vpop.permute.xlu0 %3903
        %3907 = vset.pattern.permute.xlu0 0
        %3908 = vperm.xlu0 %3907, %v3878
        %v3909 = vpop.permute.xlu0 %3908
        %3912 = vset.pattern.permute.xlu0 0
        %3913 = vperm.xlu0 %3912, %v3879
        %v3914 = vpop.permute.xlu0 %3913
        %3917 = vset.pattern.permute.xlu0 0
        %3918 = vperm.xlu0 %3917, %v3880
        %v3919 = vpop.permute.xlu0 %3918
        %3922 = vset.pattern.permute.xlu0 0
        %3923 = vperm.xlu0 %3922, %v3881
        %v3924 = vpop.permute.xlu0 %3923
        %3927 = vset.pattern.permute.xlu0 0
        %3928 = vperm.xlu0 %3927, %v3882
        %v3929 = vpop.permute.xlu0 %3928
        %3932 = vset.pattern.permute.xlu0 0
        %3933 = vperm.xlu0 %3932, %v3883
        %v3934 = vpop.permute.xlu0 %3933
        %3937 = vset.pattern.permute.xlu0 0
        %3938 = vperm.xlu0 %3937, %v3884
        %v3939 = vpop.permute.xlu0 %3938
        %3942 = vset.pattern.permute.xlu0 0
        %3943 = vperm.xlu0 %3942, %v3885
        %v3944 = vpop.permute.xlu0 %3943
        %3947 = vset.pattern.permute.xlu0 0
        %3948 = vperm.xlu0 %3947, %v3886
        %v3949 = vpop.permute.xlu0 %3948
        %3952 = vset.pattern.permute.xlu0 0
        %3953 = vperm.xlu0 %3952, %v3887
        %v3954 = vpop.permute.xlu0 %3953
        %3957 = vset.pattern.permute.xlu0 0
        %3958 = vperm.xlu0 %3957, %v3888
        %v3959 = vpop.permute.xlu0 %3958
        %3962 = vset.pattern.permute.xlu0 0
        %3963 = vperm.xlu0 %3962, %v3889
        %v3964 = vpop.permute.xlu0 %3963
        %3967 = vset.pattern.permute.xlu0 0
        %3968 = vperm.xlu0 %3967, %v3890
        %v3969 = vpop.permute.xlu0 %3968
        %v3971 = vmul.f32 %v3894, %v760
        %v3972 = vmul.f32 %v3899, %v760
        %v3973 = vmul.f32 %v3904, %v760
        %v3974 = vmul.f32 %v3909, %v760
        %v3975 = vmul.f32 %v3914, %v760
        %v3976 = vmul.f32 %v3919, %v760
        %v3977 = vmul.f32 %v3924, %v760
        %v3978 = vmul.f32 %v3929, %v760
        %v3979 = vmul.f32 %v3934, %v765
        %v3980 = vmul.f32 %v3939, %v765
        %v3981 = vmul.f32 %v3944, %v765
        %v3982 = vmul.f32 %v3949, %v765
        %v3983 = vmul.f32 %v3954, %v765
        %v3984 = vmul.f32 %v3959, %v765
        %v3985 = vmul.f32 %v3964, %v765
        %v3986 = vmul.f32 %v3969, %v765
        %vm3987 = vcmask 195760
        %v3988 = vsel %vm3987, %v3971, 0.0
        %v3989 = vrot.slane %v3988, 4
        %v3990 = vadd.f32 %v3988, %v3989
        %v3991 = vrot.slane %v3990, 2
        %v3992 = vadd.f32 %v3990, %v3991
        %v3993 = vrot.slane %v3992, 1
        %v3994 = vadd.f32 %v3992, %v3993
        %v3995 = vsel %vm3987, %v3972, 0.0
        %v3996 = vrot.slane %v3995, 4
        %v3997 = vadd.f32 %v3995, %v3996
        %v3998 = vrot.slane %v3997, 2
        %v3999 = vadd.f32 %v3997, %v3998
        %v4000 = vrot.slane %v3999, 1
        %v4001 = vadd.f32 %v3999, %v4000
        %v4002 = vsel %vm3987, %v3973, 0.0
        %v4003 = vrot.slane %v4002, 4
        %v4004 = vadd.f32 %v4002, %v4003
        %v4005 = vrot.slane %v4004, 2
        %v4006 = vadd.f32 %v4004, %v4005
        %v4007 = vrot.slane %v4006, 1
        %v4008 = vadd.f32 %v4006, %v4007
        %v4009 = vsel %vm3987, %v3974, 0.0
        %v4010 = vrot.slane %v4009, 4
        %v4011 = vadd.f32 %v4009, %v4010
        %v4012 = vrot.slane %v4011, 2
        %v4013 = vadd.f32 %v4011, %v4012
        %v4014 = vrot.slane %v4013, 1
        %v4015 = vadd.f32 %v4013, %v4014
        %v4016 = vsel %vm3987, %v3975, 0.0
        %v4017 = vrot.slane %v4016, 4
        %v4018 = vadd.f32 %v4016, %v4017
        %v4019 = vrot.slane %v4018, 2
        %v4020 = vadd.f32 %v4018, %v4019
        %v4021 = vrot.slane %v4020, 1
        %v4022 = vadd.f32 %v4020, %v4021
        %v4023 = vsel %vm3987, %v3976, 0.0
        %v4024 = vrot.slane %v4023, 4
        %v4025 = vadd.f32 %v4023, %v4024
        %v4026 = vrot.slane %v4025, 2
        %v4027 = vadd.f32 %v4025, %v4026
        %v4028 = vrot.slane %v4027, 1
        %v4029 = vadd.f32 %v4027, %v4028
        %v4030 = vsel %vm3987, %v3977, 0.0
        %v4031 = vrot.slane %v4030, 4
        %v4032 = vadd.f32 %v4030, %v4031
        %v4033 = vrot.slane %v4032, 2
        %v4034 = vadd.f32 %v4032, %v4033
        %v4035 = vrot.slane %v4034, 1
        %v4036 = vadd.f32 %v4034, %v4035
        %v4037 = vsel %vm3987, %v3978, 0.0
        %v4038 = vrot.slane %v4037, 4
        %v4039 = vadd.f32 %v4037, %v4038
        %v4040 = vrot.slane %v4039, 2
        %v4041 = vadd.f32 %v4039, %v4040
        %v4042 = vrot.slane %v4041, 1
        %v4043 = vadd.f32 %v4041, %v4042
        %v4044 = vsel %vm3987, %v3979, 0.0
        %v4045 = vrot.slane %v4044, 4
        %v4046 = vadd.f32 %v4044, %v4045
        %v4047 = vrot.slane %v4046, 2
        %v4048 = vadd.f32 %v4046, %v4047
        %v4049 = vrot.slane %v4048, 1
        %v4050 = vadd.f32 %v4048, %v4049
        %v4051 = vsel %vm3987, %v3980, 0.0
        %v4052 = vrot.slane %v4051, 4
        %v4053 = vadd.f32 %v4051, %v4052
        %v4054 = vrot.slane %v4053, 2
        %v4055 = vadd.f32 %v4053, %v4054
        %v4056 = vrot.slane %v4055, 1
        %v4057 = vadd.f32 %v4055, %v4056
        %v4058 = vsel %vm3987, %v3981, 0.0
        %v4059 = vrot.slane %v4058, 4
        %v4060 = vadd.f32 %v4058, %v4059
        %v4061 = vrot.slane %v4060, 2
        %v4062 = vadd.f32 %v4060, %v4061
        %v4063 = vrot.slane %v4062, 1
        %v4064 = vadd.f32 %v4062, %v4063
        %v4065 = vsel %vm3987, %v3982, 0.0
        %v4066 = vrot.slane %v4065, 4
        %v4067 = vadd.f32 %v4065, %v4066
        %v4068 = vrot.slane %v4067, 2
        %v4069 = vadd.f32 %v4067, %v4068
        %v4070 = vrot.slane %v4069, 1
        %v4071 = vadd.f32 %v4069, %v4070
        %v4072 = vsel %vm3987, %v3983, 0.0
        %v4073 = vrot.slane %v4072, 4
        %v4074 = vadd.f32 %v4072, %v4073
        %v4075 = vrot.slane %v4074, 2
        %v4076 = vadd.f32 %v4074, %v4075
        %v4077 = vrot.slane %v4076, 1
        %v4078 = vadd.f32 %v4076, %v4077
        %v4079 = vsel %vm3987, %v3984, 0.0
        %v4080 = vrot.slane %v4079, 4
        %v4081 = vadd.f32 %v4079, %v4080
        %v4082 = vrot.slane %v4081, 2
        %v4083 = vadd.f32 %v4081, %v4082
        %v4084 = vrot.slane %v4083, 1
        %v4085 = vadd.f32 %v4083, %v4084
        %v4086 = vsel %vm3987, %v3985, 0.0
        %v4087 = vrot.slane %v4086, 4
        %v4088 = vadd.f32 %v4086, %v4087
        %v4089 = vrot.slane %v4088, 2
        %v4090 = vadd.f32 %v4088, %v4089
        %v4091 = vrot.slane %v4090, 1
        %v4092 = vadd.f32 %v4090, %v4091
        %v4093 = vsel %vm3987, %v3986, 0.0
        %v4094 = vrot.slane %v4093, 4
        %v4095 = vadd.f32 %v4093, %v4094
        %v4096 = vrot.slane %v4095, 2
        %v4097 = vadd.f32 %v4095, %v4096
        %v4098 = vrot.slane %v4097, 1
        %v4099 = vadd.f32 %v4097, %v4098
        %v4116 = vsel %vm1105, %v1624, %v1617
        %v4117 = vsel %vm1107, %v1631, %v4116
        %v4118 = vsel %vm1109, %v1638, %v4117
        %v4119 = vsel %vm1111, %v1645, %v4118
        %v4120 = vsel %vm1113, %v1652, %v4119
        %v4121 = vsel %vm1115, %v1659, %v4120
        %v4122 = vsel %vm1117, %v1666, %v4121
        %v4123 = vsel %vm1105, %v1680, %v1673
        %v4124 = vsel %vm1107, %v1687, %v4123
        %v4125 = vsel %vm1109, %v1694, %v4124
        %v4126 = vsel %vm1111, %v1701, %v4125
        %v4127 = vsel %vm1113, %v1708, %v4126
        %v4128 = vsel %vm1115, %v1715, %v4127
        %v4129 = vsel %vm1117, %v1722, %v4128
        %4130 = vrot.lane.b32.xlu0 %v4122, 112
        %v4131 = vpop.permute.xlu0 %4130
        %4132 = vrot.lane.b32.xlu0 %v4129, 112
        %v4133 = vpop.permute.xlu0 %4132
        %v4152 = vsel %vm1105, %v2427, %v2420
        %v4153 = vsel %vm1107, %v2434, %v4152
        %v4154 = vsel %vm1109, %v2441, %v4153
        %v4155 = vsel %vm1111, %v2448, %v4154
        %v4156 = vsel %vm1113, %v2455, %v4155
        %v4157 = vsel %vm1115, %v2462, %v4156
        %v4158 = vsel %vm1117, %v2469, %v4157
        %v4159 = vsel %vm1105, %v2483, %v2476
        %v4160 = vsel %vm1107, %v2490, %v4159
        %v4161 = vsel %vm1109, %v2497, %v4160
        %v4162 = vsel %vm1111, %v2504, %v4161
        %v4163 = vsel %vm1113, %v2511, %v4162
        %v4164 = vsel %vm1115, %v2518, %v4163
        %v4165 = vsel %vm1117, %v2525, %v4164
        %4166 = vrot.lane.b32.xlu0 %v4158, 112
        %v4167 = vpop.permute.xlu0 %4166
        %4168 = vrot.lane.b32.xlu0 %v4165, 112
        %v4169 = vpop.permute.xlu0 %4168
        %v4188 = vsel %vm1105, %v3214, %v3207
        %v4189 = vsel %vm1107, %v3221, %v4188
        %v4190 = vsel %vm1109, %v3228, %v4189
        %v4191 = vsel %vm1111, %v3235, %v4190
        %v4192 = vsel %vm1113, %v3242, %v4191
        %v4193 = vsel %vm1115, %v3249, %v4192
        %v4194 = vsel %vm1117, %v3256, %v4193
        %v4195 = vsel %vm1105, %v3270, %v3263
        %v4196 = vsel %vm1107, %v3277, %v4195
        %v4197 = vsel %vm1109, %v3284, %v4196
        %v4198 = vsel %vm1111, %v3291, %v4197
        %v4199 = vsel %vm1113, %v3298, %v4198
        %v4200 = vsel %vm1115, %v3305, %v4199
        %v4201 = vsel %vm1117, %v3312, %v4200
        %4202 = vrot.lane.b32.xlu0 %v4194, 112
        %v4203 = vpop.permute.xlu0 %4202
        %4204 = vrot.lane.b32.xlu0 %v4201, 112
        %v4205 = vpop.permute.xlu0 %4204
        %v4224 = vsel %vm1105, %v4001, %v3994
        %v4225 = vsel %vm1107, %v4008, %v4224
        %v4226 = vsel %vm1109, %v4015, %v4225
        %v4227 = vsel %vm1111, %v4022, %v4226
        %v4228 = vsel %vm1113, %v4029, %v4227
        %v4229 = vsel %vm1115, %v4036, %v4228
        %v4230 = vsel %vm1117, %v4043, %v4229
        %v4231 = vsel %vm1105, %v4057, %v4050
        %v4232 = vsel %vm1107, %v4064, %v4231
        %v4233 = vsel %vm1109, %v4071, %v4232
        %v4234 = vsel %vm1111, %v4078, %v4233
        %v4235 = vsel %vm1113, %v4085, %v4234
        %v4236 = vsel %vm1115, %v4092, %v4235
        %v4237 = vsel %vm1117, %v4099, %v4236
        %4238 = vrot.lane.b32.xlu0 %v4230, 112
        %v4239 = vpop.permute.xlu0 %4238
        %4240 = vrot.lane.b32.xlu0 %v4237, 112
        %v4241 = vpop.permute.xlu0 %4240
        %v4244 = vsel %vm974, %v4131, %v4167
        %v4245 = vsel %vm974, %v4133, %v4169
        %vm4246 = vcmask 31744
        %v4247 = vsel %vm4246, %v4244, %v4203
        %v4248 = vsel %vm4246, %v4245, %v4205
        %v4249 = vsel %vm589, %v4247, %v4239
        %v4250 = vsel %vm589, %v4248, %v4241
        %v4251 = vld [vmem:[%s6] sm:$0xff]
        %v4252 = vld [vmem:[%s7] sm:$0x1]
        %v4254 = vlaneseq
        %v4255 = vshrl.u32 %v4254, 7
        %v4256 = vsub.s32 0, %v4255
        %v4257 = vrot.slane %v4252, %v4256
        %v4260 = vsel %vm686, %v4249, 0
        %v4263 = vsel %vm686, %v4250, 0
        %4265 = vmatprep.subr.mxu0 0.0
        %4266 = vmatpush1.msra.mxu0 %v4251
        %4267 = vmatprep.subr.mxu0 0.0
        %4268 = vmatpush1.msra.mxu0 0.0
        %4269 = vmatprep.subr.mxu0 0.0
        %4270 = vmatpush1.msra.mxu0 0.0
        %4271 = vmatprep.subr.mxu0 0.0
        %4272 = vmatpush1.msra.mxu0 0.0
        %4273 = vmatprep.subr.mxu0 0.0
        %4274 = vmatpush1.msra.mxu0 0.0
        %4275 = vmatprep.subr.mxu0 0.0
        %4276 = vmatpush1.msra.mxu0 0.0
        %4277 = vmatprep.subr.mxu0 0.0
        %4278 = vmatpush1.msra.mxu0 0.0
        %4279 = vmatprep.subr.mxu0 0.0
        %4280 = vmatpush1.msra.mxu0 0.0
        %4281 = vmatprep.subr.mxu0 0.0
        %4282 = vmatpush1.msra.mxu0 0.0
        %4283 = vmatprep.subr.mxu0 0.0
        %4284 = vmatpush1.msra.mxu0 0.0
        %4285 = vmatprep.subr.mxu0 0.0
        %4286 = vmatpush1.msra.mxu0 0.0
        %4287 = vmatprep.subr.mxu0 0.0
        %4288 = vmatpush1.msra.mxu0 0.0
        %4289 = vmatprep.subr.mxu0 0.0
        %4290 = vmatpush1.msra.mxu0 0.0
        %4291 = vmatprep.subr.mxu0 0.0
        %4292 = vmatpush1.msra.mxu0 0.0
        %4293 = vmatprep.subr.mxu0 0.0
        %4294 = vmatpush1.msra.mxu0 0.0
        %4295 = vmatprep.subr.mxu0 0.0
        %4296 = vmatpush1.msra.mxu0 0.0
        %4297 = vmatprep.subr.mxu0 0.0
        %4298 = vmatpush1.msra.mxu0 0.0
        %4299 = vmatprep.subr.mxu0 0.0
        %4300 = vmatpush1.msra.mxu0 0.0
        %4301 = vmatprep.subr.mxu0 0.0
        %4302 = vmatpush1.msra.mxu0 0.0
        %4303 = vmatprep.subr.mxu0 0.0
        %4304 = vmatpush1.msra.mxu0 0.0
        %4305 = vmatprep.subr.mxu0 0.0
        %4306 = vmatpush1.msra.mxu0 0.0
        %4307 = vmatprep.subr.mxu0 0.0
        %4308 = vmatpush1.msra.mxu0 0.0
        %4309 = vmatprep.subr.mxu0 0.0
        %4310 = vmatpush1.msra.mxu0 0.0
        %4311 = vmatprep.subr.mxu0 0.0
        %4312 = vmatpush1.msra.mxu0 0.0
        %4313 = vmatprep.subr.mxu0 0.0
        %4314 = vmatpush1.msra.mxu0 0.0
        %4315 = vmatprep.subr.mxu0 0.0
        %4316 = vmatpush1.msra.mxu0 0.0
        %4317 = vmatprep.subr.mxu0 0.0
        %4318 = vmatpush1.msra.mxu0 0.0
        %4319 = vmatprep.subr.mxu0 0.0
        %4320 = vmatpush1.msra.mxu0 0.0
        %4321 = vmatprep.subr.mxu0 0.0
        %4322 = vmatpush1.msra.mxu0 0.0
        %4323 = vmatprep.subr.mxu0 0.0
        %4324 = vmatpush1.msra.mxu0 0.0
        %4325 = vmatprep.subr.mxu0 0.0
        %4326 = vmatpush1.msra.mxu0 0.0
        %4327 = vmatprep.subr.mxu0 0.0
        %4328 = vmatpush1.msra.mxu0 0.0
        %4329 = vmatprep.mubr.f32.mxu0 0.0
        %4330 = vmatmul.mubr.f32.gmra.mrb[0].mxu0 %v4260
        %v4331 = vpop.f32.mrb[0].mxu0
        %v4332 = vadd.f32 %v4257, %v4331
        %v4333 = vpop.f32.mrb[0].mxu0
        %4334 = vmatprep.mubr.f32.mxu0 0.0
        %4335 = vmatmul.mubr.f32.gmra.mrb[0].mxu0 %v4263
        %v4336 = vpop.f32.mrb[0].mxu0
        %v4337 = vadd.f32 %v4257, %v4336
        %v4338 = vpop.f32.mrb[0].mxu0
        %4339 = vdwg.mxu0
        %v4340 = vadd.f32 %v676, %v4332
        %v4341 = vadd.f32 %v677, %v4337
        %v4342 = vld [vmem:[%s8] sm:$0x1]
        %v4343 = vld [vmem:[%s9] sm:$0x1]
        %v4344 = vsel %vm686, %v4340, 0.0
        %4345 = vadd.xlane.f32.xlu0 %v4344
        %v4346 = vpop.xlane.xlu0 %4345
        %v4347 = vsel %vm686, %v4341, 0.0
        %4348 = vadd.xlane.f32.xlu0 %v4347
        %v4349 = vpop.xlane.xlu0 %4348
        %v4350 = vrcp.pop 8.0
        %v4351 = vmul.f32 %v4346, %v4350
        %v4352 = vmul.f32 %v4349, %v4350
        %v4353 = vsub.f32 %v4340, %v4351
        %v4354 = vsub.f32 %v4341, %v4352
        %v4355 = vmul.f32 %v4353, %v4353
        %v4356 = vmul.f32 %v4354, %v4354
        %v4357 = vsel %vm686, %v4355, 0.0
        %4358 = vadd.xlane.f32.xlu0 %v4357
        %v4359 = vpop.xlane.xlu0 %4358
        %v4360 = vsel %vm686, %v4356, 0.0
        %4361 = vadd.xlane.f32.xlu0 %v4360
        %v4362 = vpop.xlane.xlu0 %4361
        %v4363 = vmul.f32 %v4359, %v4350
        %v4364 = vmul.f32 %v4362, %v4350
        %v4365 = vadd.f32 %v4363, 1e-05
        %v4366 = vadd.f32 %v4364, 1e-05
        %v4367 = vrsqrt.pop %v4365
        %v4368 = vrsqrt.pop %v4366
        %v4369 = vmul.f32 %v4353, %v4367
        %v4370 = vmul.f32 %v4354, %v4368
        %v4372 = vlaneseq
        %v4373 = vshrl.u32 %v4372, 7
        %v4374 = vsub.s32 0, %v4373
        %v4375 = vrot.slane %v4342, %v4374
        %v4377 = vmul.f32 %v4369, %v4375
        %v4378 = vmul.f32 %v4370, %v4375
        %v4380 = vlaneseq
        %v4381 = vshrl.u32 %v4380, 7
        %v4382 = vsub.s32 0, %v4381
        %v4383 = vrot.slane %v4343, %v4382
        %v4385 = vadd.f32 %v4377, %v4383
        %v4386 = vadd.f32 %v4378, %v4383
        %v4387 = vpack.c.bf16 %v4386, %v4385
        %v4388 = vld [vmem:[%s12] sm:$0xff]
        %v4389 = vld [vmem:[%s12 + $0x8] sm:$0xff]
        %v4390 = vld [vmem:[%s12 + $0x10] sm:$0xff]
        %v4391 = vld [vmem:[%s12 + $0x18] sm:$0xff]
        %v4392 = vld [vmem:[%s12 + $0x20] sm:$0xff]
        %v4393 = vld [vmem:[%s12 + $0x28] sm:$0xff]
        %v4394 = vld [vmem:[%s12 + $0x30] sm:$0xff]
        %v4395 = vld [vmem:[%s12 + $0x38] sm:$0xff]
        %v4396 = vld [vmem:[%s13] sm:$0xff]
        %v4397 = vld [vmem:[%s13 + $0x8] sm:$0xff]
        %v4400 = vlaneseq
        %v4401 = vshrl.u32 %v4400, 7
        %v4402 = vsub.s32 0, %v4401
        %v4403 = vrot.slane %v4396, %v4402
        %v4404 = vlaneseq
        %v4405 = vshrl.u32 %v4404, 7
        %v4406 = vsub.s32 1, %v4405
        %v4407 = vrot.slane %v4396, %v4406
        %v4408 = vlaneseq
        %v4409 = vshrl.u32 %v4408, 7
        %v4410 = vsub.s32 2, %v4409
        %v4411 = vrot.slane %v4396, %v4410
        %v4412 = vlaneseq
        %v4413 = vshrl.u32 %v4412, 7
        %v4414 = vsub.s32 3, %v4413
        %v4415 = vrot.slane %v4396, %v4414
        %v4416 = vlaneseq
        %v4417 = vshrl.u32 %v4416, 7
        %v4418 = vsub.s32 4, %v4417
        %v4419 = vrot.slane %v4396, %v4418
        %v4420 = vlaneseq
        %v4421 = vshrl.u32 %v4420, 7
        %v4422 = vsub.s32 5, %v4421
        %v4423 = vrot.slane %v4396, %v4422
        %v4424 = vlaneseq
        %v4425 = vshrl.u32 %v4424, 7
        %v4426 = vsub.s32 6, %v4425
        %v4427 = vrot.slane %v4396, %v4426
        %v4428 = vlaneseq
        %v4429 = vshrl.u32 %v4428, 7
        %v4430 = vsub.s32 7, %v4429
        %v4431 = vrot.slane %v4396, %v4430
        %v4432 = vlaneseq
        %v4433 = vshrl.u32 %v4432, 7
        %v4434 = vsub.s32 0, %v4433
        %v4435 = vrot.slane %v4397, %v4434
        %v4436 = vlaneseq
        %v4437 = vshrl.u32 %v4436, 7
        %v4438 = vsub.s32 1, %v4437
        %v4439 = vrot.slane %v4397, %v4438
        %v4440 = vlaneseq
        %v4441 = vshrl.u32 %v4440, 7
        %v4442 = vsub.s32 2, %v4441
        %v4443 = vrot.slane %v4397, %v4442
        %v4444 = vlaneseq
        %v4445 = vshrl.u32 %v4444, 7
        %v4446 = vsub.s32 3, %v4445
        %v4447 = vrot.slane %v4397, %v4446
        %v4448 = vlaneseq
        %v4449 = vshrl.u32 %v4448, 7
        %v4450 = vsub.s32 4, %v4449
        %v4451 = vrot.slane %v4397, %v4450
        %v4452 = vlaneseq
        %v4453 = vshrl.u32 %v4452, 7
        %v4454 = vsub.s32 5, %v4453
        %v4455 = vrot.slane %v4397, %v4454
        %v4456 = vlaneseq
        %v4457 = vshrl.u32 %v4456, 7
        %v4458 = vsub.s32 6, %v4457
        %v4459 = vrot.slane %v4397, %v4458
        %v4460 = vlaneseq
        %v4461 = vshrl.u32 %v4460, 7
        %v4462 = vsub.s32 7, %v4461
        %v4463 = vrot.slane %v4397, %v4462
        %v4488 = vunpack.c.l.b16 %v4388
        %v4489 = vunpack.c.h.b16 %v4388
        %v4490 = vunpack.c.l.b16 %v4389
        %v4491 = vunpack.c.h.b16 %v4389
        %v4492 = vunpack.c.l.b16 %v4390
        %v4493 = vunpack.c.h.b16 %v4390
        %v4494 = vunpack.c.l.b16 %v4391
        %v4495 = vunpack.c.h.b16 %v4391
        %v4496 = vunpack.c.l.b16 %v4392
        %v4497 = vunpack.c.h.b16 %v4392
        %v4498 = vunpack.c.l.b16 %v4393
        %v4499 = vunpack.c.h.b16 %v4393
        %v4500 = vunpack.c.l.b16 %v4394
        %v4501 = vunpack.c.h.b16 %v4394
        %v4502 = vunpack.c.l.b16 %v4395
        %v4503 = vunpack.c.h.b16 %v4395
        %v4504 = vpack.c.b16 %v4488, %v4488
        %v4505 = vpack.c.b16 %v4489, %v4489
        %v4506 = vpack.c.b16 %v4490, %v4490
        %v4507 = vpack.c.b16 %v4491, %v4491
        %v4508 = vpack.c.b16 %v4492, %v4492
        %v4509 = vpack.c.b16 %v4493, %v4493
        %v4510 = vpack.c.b16 %v4494, %v4494
        %v4511 = vpack.c.b16 %v4495, %v4495
        %v4512 = vpack.c.b16 %v4496, %v4496
        %v4513 = vpack.c.b16 %v4497, %v4497
        %v4514 = vpack.c.b16 %v4498, %v4498
        %v4515 = vpack.c.b16 %v4499, %v4499
        %v4516 = vpack.c.b16 %v4500, %v4500
        %v4517 = vpack.c.b16 %v4501, %v4501
        %v4518 = vpack.c.b16 %v4502, %v4502
        %v4519 = vpack.c.b16 %v4503, %v4503
        %v4521 = vsel %vm686, %v4387, 0
        %vm4523 = vcmask 1043456
        %v4525 = vsel %vm4523, %v4504, 0
        %v4528 = vsel %vm4523, %v4505, 0
        %v4531 = vsel %vm4523, %v4506, 0
        %v4534 = vsel %vm4523, %v4507, 0
        %v4537 = vsel %vm4523, %v4508, 0
        %v4540 = vsel %vm4523, %v4509, 0
        %v4543 = vsel %vm4523, %v4510, 0
        %v4546 = vsel %vm4523, %v4511, 0
        %v4549 = vsel %vm4523, %v4512, 0
        %v4552 = vsel %vm4523, %v4513, 0
        %v4555 = vsel %vm4523, %v4514, 0
        %v4558 = vsel %vm4523, %v4515, 0
        %v4561 = vsel %vm4523, %v4516, 0
        %v4564 = vsel %vm4523, %v4517, 0
        %v4567 = vsel %vm4523, %v4518, 0
        %v4570 = vsel %vm4523, %v4519, 0
        %4572 = vmatprep.subr.bf16.mxu0 %v4528
        %4573 = vmatpush1.bf16.msra.mxu0 %v4525
        %4574 = vmatprep.subr.bf16.mxu0 0
        %4575 = vmatpush1.bf16.msra.mxu0 0
        %4576 = vmatprep.subr.bf16.mxu0 0
        %4577 = vmatpush1.bf16.msra.mxu0 0
        %4578 = vmatprep.subr.bf16.mxu0 0
        %4579 = vmatpush1.bf16.msra.mxu0 0
        %4580 = vmatprep.subr.bf16.mxu0 0
        %4581 = vmatpush1.bf16.msra.mxu0 0
        %4582 = vmatprep.subr.bf16.mxu0 0
        %4583 = vmatpush1.bf16.msra.mxu0 0
        %4584 = vmatprep.subr.bf16.mxu0 0
        %4585 = vmatpush1.bf16.msra.mxu0 0
        %4586 = vmatprep.subr.bf16.mxu0 0
        %4587 = vmatpush1.bf16.msra.mxu0 0
        %4588 = vmatprep.subr.bf16.mxu0 0
        %4589 = vmatpush1.bf16.msra.mxu0 0
        %4590 = vmatprep.subr.bf16.mxu0 0
        %4591 = vmatpush1.bf16.msra.mxu0 0
        %4592 = vmatprep.subr.bf16.mxu0 0
        %4593 = vmatpush1.bf16.msra.mxu0 0
        %4594 = vmatprep.subr.bf16.mxu0 0
        %4595 = vmatpush1.bf16.msra.mxu0 0
        %4596 = vmatprep.subr.bf16.mxu0 0
        %4597 = vmatpush1.bf16.msra.mxu0 0
        %4598 = vmatprep.subr.bf16.mxu0 0
        %4599 = vmatpush1.bf16.msra.mxu0 0
        %4600 = vmatprep.subr.bf16.mxu0 0
        %4601 = vmatpush1.bf16.msra.mxu0 0
        %4602 = vmatprep.subr.bf16.mxu0 0
        %4603 = vmatpush1.bf16.msra.mxu0 0
        %4604 = vmatprep.mubr.bf16.mxu0 0
        %4605 = vmatmul.mubr.bf16.gmra.mrb[0].mxu0 %v4521
        %v4606 = vpop.f32.mrb[0].mxu0
        %v4607 = vadd.f32 %v4403, %v4606
        %v4608 = vpop.f32.mrb[0].mxu0
        %v4609 = vadd.f32 %v4407, %v4608
        %v4610 = vpop.f32.mrb[0].mxu0
        %v4611 = vadd.f32 %v4403, %v4610
        %v4612 = vpop.f32.mrb[0].mxu0
        %v4613 = vadd.f32 %v4407, %v4612
        %4614 = vdwg.mxu0
        %4615 = vmatprep.subr.bf16.mxu0 %v4534
        %4616 = vmatpush1.bf16.msra.mxu0 %v4531
        %4617 = vmatprep.subr.bf16.mxu0 0
        %4618 = vmatpush1.bf16.msra.mxu0 0
        %4619 = vmatprep.subr.bf16.mxu0 0
        %4620 = vmatpush1.bf16.msra.mxu0 0
        %4621 = vmatprep.subr.bf16.mxu0 0
        %4622 = vmatpush1.bf16.msra.mxu0 0
        %4623 = vmatprep.subr.bf16.mxu0 0
        %4624 = vmatpush1.bf16.msra.mxu0 0
        %4625 = vmatprep.subr.bf16.mxu0 0
        %4626 = vmatpush1.bf16.msra.mxu0 0
        %4627 = vmatprep.subr.bf16.mxu0 0
        %4628 = vmatpush1.bf16.msra.mxu0 0
        %4629 = vmatprep.subr.bf16.mxu0 0
        %4630 = vmatpush1.bf16.msra.mxu0 0
        %4631 = vmatprep.subr.bf16.mxu0 0
        %4632 = vmatpush1.bf16.msra.mxu0 0
        %4633 = vmatprep.subr.bf16.mxu0 0
        %4634 = vmatpush1.bf16.msra.mxu0 0
        %4635 = vmatprep.subr.bf16.mxu0 0
        %4636 = vmatpush1.bf16.msra.mxu0 0
        %4637 = vmatprep.subr.bf16.mxu0 0
        %4638 = vmatpush1.bf16.msra.mxu0 0
        %4639 = vmatprep.subr.bf16.mxu0 0
        %4640 = vmatpush1.bf16.msra.mxu0 0
        %4641 = vmatprep.subr.bf16.mxu0 0
        %4642 = vmatpush1.bf16.msra.mxu0 0
        %4643 = vmatprep.subr.bf16.mxu0 0
        %4644 = vmatpush1.bf16.msra.mxu0 0
        %4645 = vmatprep.subr.bf16.mxu0 0
        %4646 = vmatpush1.bf16.msra.mxu0 0
        %4647 = vmatprep.mubr.bf16.mxu0 0
        %4648 = vmatmul.mubr.bf16.gmra.mrb[0].mxu0 %v4521
        %v4649 = vpop.f32.mrb[0].mxu0
        %v4650 = vadd.f32 %v4411, %v4649
        %v4651 = vpop.f32.mrb[0].mxu0
        %v4652 = vadd.f32 %v4415, %v4651
        %v4653 = vpop.f32.mrb[0].mxu0
        %v4654 = vadd.f32 %v4411, %v4653
        %v4655 = vpop.f32.mrb[0].mxu0
        %v4656 = vadd.f32 %v4415, %v4655
        %4657 = vdwg.mxu0
        %4658 = vmatprep.subr.bf16.mxu0 %v4540
        %4659 = vmatpush1.bf16.msra.mxu0 %v4537
        %4660 = vmatprep.subr.bf16.mxu0 0
        %4661 = vmatpush1.bf16.msra.mxu0 0
        %4662 = vmatprep.subr.bf16.mxu0 0
        %4663 = vmatpush1.bf16.msra.mxu0 0
        %4664 = vmatprep.subr.bf16.mxu0 0
        %4665 = vmatpush1.bf16.msra.mxu0 0
        %4666 = vmatprep.subr.bf16.mxu0 0
        %4667 = vmatpush1.bf16.msra.mxu0 0
        %4668 = vmatprep.subr.bf16.mxu0 0
        %4669 = vmatpush1.bf16.msra.mxu0 0
        %4670 = vmatprep.subr.bf16.mxu0 0
        %4671 = vmatpush1.bf16.msra.mxu0 0
        %4672 = vmatprep.subr.bf16.mxu0 0
        %4673 = vmatpush1.bf16.msra.mxu0 0
        %4674 = vmatprep.subr.bf16.mxu0 0
        %4675 = vmatpush1.bf16.msra.mxu0 0
        %4676 = vmatprep.subr.bf16.mxu0 0
        %4677 = vmatpush1.bf16.msra.mxu0 0
        %4678 = vmatprep.subr.bf16.mxu0 0
        %4679 = vmatpush1.bf16.msra.mxu0 0
        %4680 = vmatprep.subr.bf16.mxu0 0
        %4681 = vmatpush1.bf16.msra.mxu0 0
        %4682 = vmatprep.subr.bf16.mxu0 0
        %4683 = vmatpush1.bf16.msra.mxu0 0
        %4684 = vmatprep.subr.bf16.mxu0 0
        %4685 = vmatpush1.bf16.msra.mxu0 0
        %4686 = vmatprep.subr.bf16.mxu0 0
        %4687 = vmatpush1.bf16.msra.mxu0 0
        %4688 = vmatprep.subr.bf16.mxu0 0
        %4689 = vmatpush1.bf16.msra.mxu0 0
        %4690 = vmatprep.mubr.bf16.mxu0 0
        %4691 = vmatmul.mubr.bf16.gmra.mrb[0].mxu0 %v4521
        %v4692 = vpop.f32.mrb[0].mxu0
        %v4693 = vadd.f32 %v4419, %v4692
        %v4694 = vpop.f32.mrb[0].mxu0
        %v4695 = vadd.f32 %v4423, %v4694
        %v4696 = vpop.f32.mrb[0].mxu0
        %v4697 = vadd.f32 %v4419, %v4696
        %v4698 = vpop.f32.mrb[0].mxu0
        %v4699 = vadd.f32 %v4423, %v4698
        %4700 = vdwg.mxu0
        %4701 = vmatprep.subr.bf16.mxu0 %v4546
        %4702 = vmatpush1.bf16.msra.mxu0 %v4543
        %4703 = vmatprep.subr.bf16.mxu0 0
        %4704 = vmatpush1.bf16.msra.mxu0 0
        %4705 = vmatprep.subr.bf16.mxu0 0
        %4706 = vmatpush1.bf16.msra.mxu0 0
        %4707 = vmatprep.subr.bf16.mxu0 0
        %4708 = vmatpush1.bf16.msra.mxu0 0
        %4709 = vmatprep.subr.bf16.mxu0 0
        %4710 = vmatpush1.bf16.msra.mxu0 0
        %4711 = vmatprep.subr.bf16.mxu0 0
        %4712 = vmatpush1.bf16.msra.mxu0 0
        %4713 = vmatprep.subr.bf16.mxu0 0
        %4714 = vmatpush1.bf16.msra.mxu0 0
        %4715 = vmatprep.subr.bf16.mxu0 0
        %4716 = vmatpush1.bf16.msra.mxu0 0
        %4717 = vmatprep.subr.bf16.mxu0 0
        %4718 = vmatpush1.bf16.msra.mxu0 0
        %4719 = vmatprep.subr.bf16.mxu0 0
        %4720 = vmatpush1.bf16.msra.mxu0 0
        %4721 = vmatprep.subr.bf16.mxu0 0
        %4722 = vmatpush1.bf16.msra.mxu0 0
        %4723 = vmatprep.subr.bf16.mxu0 0
        %4724 = vmatpush1.bf16.msra.mxu0 0
        %4725 = vmatprep.subr.bf16.mxu0 0
        %4726 = vmatpush1.bf16.msra.mxu0 0
        %4727 = vmatprep.subr.bf16.mxu0 0
        %4728 = vmatpush1.bf16.msra.mxu0 0
        %4729 = vmatprep.subr.bf16.mxu0 0
        %4730 = vmatpush1.bf16.msra.mxu0 0
        %4731 = vmatprep.subr.bf16.mxu0 0
        %4732 = vmatpush1.bf16.msra.mxu0 0
        %4733 = vmatprep.mubr.bf16.mxu0 0
        %4734 = vmatmul.mubr.bf16.gmra.mrb[0].mxu0 %v4521
        %v4735 = vpop.f32.mrb[0].mxu0
        %v4736 = vadd.f32 %v4427, %v4735
        %v4737 = vpop.f32.mrb[0].mxu0
        %v4738 = vadd.f32 %v4431, %v4737
        %v4739 = vpop.f32.mrb[0].mxu0
        %v4740 = vadd.f32 %v4427, %v4739
        %v4741 = vpop.f32.mrb[0].mxu0
        %v4742 = vadd.f32 %v4431, %v4741
        %4743 = vdwg.mxu0
        %4744 = vmatprep.subr.bf16.mxu0 %v4552
        %4745 = vmatpush1.bf16.msra.mxu0 %v4549
        %4746 = vmatprep.subr.bf16.mxu0 0
        %4747 = vmatpush1.bf16.msra.mxu0 0
        %4748 = vmatprep.subr.bf16.mxu0 0
        %4749 = vmatpush1.bf16.msra.mxu0 0
        %4750 = vmatprep.subr.bf16.mxu0 0
        %4751 = vmatpush1.bf16.msra.mxu0 0
        %4752 = vmatprep.subr.bf16.mxu0 0
        %4753 = vmatpush1.bf16.msra.mxu0 0
        %4754 = vmatprep.subr.bf16.mxu0 0
        %4755 = vmatpush1.bf16.msra.mxu0 0
        %4756 = vmatprep.subr.bf16.mxu0 0
        %4757 = vmatpush1.bf16.msra.mxu0 0
        %4758 = vmatprep.subr.bf16.mxu0 0
        %4759 = vmatpush1.bf16.msra.mxu0 0
        %4760 = vmatprep.subr.bf16.mxu0 0
        %4761 = vmatpush1.bf16.msra.mxu0 0
        %4762 = vmatprep.subr.bf16.mxu0 0
        %4763 = vmatpush1.bf16.msra.mxu0 0
        %4764 = vmatprep.subr.bf16.mxu0 0
        %4765 = vmatpush1.bf16.msra.mxu0 0
        %4766 = vmatprep.subr.bf16.mxu0 0
        %4767 = vmatpush1.bf16.msra.mxu0 0
        %4768 = vmatprep.subr.bf16.mxu0 0
        %4769 = vmatpush1.bf16.msra.mxu0 0
        %4770 = vmatprep.subr.bf16.mxu0 0
        %4771 = vmatpush1.bf16.msra.mxu0 0
        %4772 = vmatprep.subr.bf16.mxu0 0
        %4773 = vmatpush1.bf16.msra.mxu0 0
        %4774 = vmatprep.subr.bf16.mxu0 0
        %4775 = vmatpush1.bf16.msra.mxu0 0
        %4776 = vmatprep.mubr.bf16.mxu0 0
        %4777 = vmatmul.mubr.bf16.gmra.mrb[0].mxu0 %v4521
        %v4778 = vpop.f32.mrb[0].mxu0
        %v4779 = vadd.f32 %v4435, %v4778
        %v4780 = vpop.f32.mrb[0].mxu0
        %v4781 = vadd.f32 %v4439, %v4780
        %v4782 = vpop.f32.mrb[0].mxu0
        %v4783 = vadd.f32 %v4435, %v4782
        %v4784 = vpop.f32.mrb[0].mxu0
        %v4785 = vadd.f32 %v4439, %v4784
        %4786 = vdwg.mxu0
        %4787 = vmatprep.subr.bf16.mxu0 %v4558
        %4788 = vmatpush1.bf16.msra.mxu0 %v4555
        %4789 = vmatprep.subr.bf16.mxu0 0
        %4790 = vmatpush1.bf16.msra.mxu0 0
        %4791 = vmatprep.subr.bf16.mxu0 0
        %4792 = vmatpush1.bf16.msra.mxu0 0
        %4793 = vmatprep.subr.bf16.mxu0 0
        %4794 = vmatpush1.bf16.msra.mxu0 0
        %4795 = vmatprep.subr.bf16.mxu0 0
        %4796 = vmatpush1.bf16.msra.mxu0 0
        %4797 = vmatprep.subr.bf16.mxu0 0
        %4798 = vmatpush1.bf16.msra.mxu0 0
        %4799 = vmatprep.subr.bf16.mxu0 0
        %4800 = vmatpush1.bf16.msra.mxu0 0
        %4801 = vmatprep.subr.bf16.mxu0 0
        %4802 = vmatpush1.bf16.msra.mxu0 0
        %4803 = vmatprep.subr.bf16.mxu0 0
        %4804 = vmatpush1.bf16.msra.mxu0 0
        %4805 = vmatprep.subr.bf16.mxu0 0
        %4806 = vmatpush1.bf16.msra.mxu0 0
        %4807 = vmatprep.subr.bf16.mxu0 0
        %4808 = vmatpush1.bf16.msra.mxu0 0
        %4809 = vmatprep.subr.bf16.mxu0 0
        %4810 = vmatpush1.bf16.msra.mxu0 0
        %4811 = vmatprep.subr.bf16.mxu0 0
        %4812 = vmatpush1.bf16.msra.mxu0 0
        %4813 = vmatprep.subr.bf16.mxu0 0
        %4814 = vmatpush1.bf16.msra.mxu0 0
        %4815 = vmatprep.subr.bf16.mxu0 0
        %4816 = vmatpush1.bf16.msra.mxu0 0
        %4817 = vmatprep.subr.bf16.mxu0 0
        %4818 = vmatpush1.bf16.msra.mxu0 0
        %4819 = vmatprep.mubr.bf16.mxu0 0
        %4820 = vmatmul.mubr.bf16.gmra.mrb[0].mxu0 %v4521
        %v4821 = vpop.f32.mrb[0].mxu0
        %v4822 = vadd.f32 %v4443, %v4821
        %v4823 = vpop.f32.mrb[0].mxu0
        %v4824 = vadd.f32 %v4447, %v4823
        %v4825 = vpop.f32.mrb[0].mxu0
        %v4826 = vadd.f32 %v4443, %v4825
        %v4827 = vpop.f32.mrb[0].mxu0
        %v4828 = vadd.f32 %v4447, %v4827
        %4829 = vdwg.mxu0
        %4830 = vmatprep.subr.bf16.mxu0 %v4564
        %4831 = vmatpush1.bf16.msra.mxu0 %v4561
        %4832 = vmatprep.subr.bf16.mxu0 0
        %4833 = vmatpush1.bf16.msra.mxu0 0
        %4834 = vmatprep.subr.bf16.mxu0 0
        %4835 = vmatpush1.bf16.msra.mxu0 0
        %4836 = vmatprep.subr.bf16.mxu0 0
        %4837 = vmatpush1.bf16.msra.mxu0 0
        %4838 = vmatprep.subr.bf16.mxu0 0
        %4839 = vmatpush1.bf16.msra.mxu0 0
        %4840 = vmatprep.subr.bf16.mxu0 0
        %4841 = vmatpush1.bf16.msra.mxu0 0
        %4842 = vmatprep.subr.bf16.mxu0 0
        %4843 = vmatpush1.bf16.msra.mxu0 0
        %4844 = vmatprep.subr.bf16.mxu0 0
        %4845 = vmatpush1.bf16.msra.mxu0 0
        %4846 = vmatprep.subr.bf16.mxu0 0
        %4847 = vmatpush1.bf16.msra.mxu0 0
        %4848 = vmatprep.subr.bf16.mxu0 0
        %4849 = vmatpush1.bf16.msra.mxu0 0
        %4850 = vmatprep.subr.bf16.mxu0 0
        %4851 = vmatpush1.bf16.msra.mxu0 0
        %4852 = vmatprep.subr.bf16.mxu0 0
        %4853 = vmatpush1.bf16.msra.mxu0 0
        %4854 = vmatprep.subr.bf16.mxu0 0
        %4855 = vmatpush1.bf16.msra.mxu0 0
        %4856 = vmatprep.subr.bf16.mxu0 0
        %4857 = vmatpush1.bf16.msra.mxu0 0
        %4858 = vmatprep.subr.bf16.mxu0 0
        %4859 = vmatpush1.bf16.msra.mxu0 0
        %4860 = vmatprep.subr.bf16.mxu0 0
        %4861 = vmatpush1.bf16.msra.mxu0 0
        %4862 = vmatprep.mubr.bf16.mxu0 0
        %4863 = vmatmul.mubr.bf16.gmra.mrb[0].mxu0 %v4521
        %v4864 = vpop.f32.mrb[0].mxu0
        %v4865 = vadd.f32 %v4451, %v4864
        %v4866 = vpop.f32.mrb[0].mxu0
        %v4867 = vadd.f32 %v4455, %v4866
        %v4868 = vpop.f32.mrb[0].mxu0
        %v4869 = vadd.f32 %v4451, %v4868
        %v4870 = vpop.f32.mrb[0].mxu0
        %v4871 = vadd.f32 %v4455, %v4870
        %4872 = vdwg.mxu0
        %4873 = vmatprep.subr.bf16.mxu0 %v4570
        %4874 = vmatpush1.bf16.msra.mxu0 %v4567
        %4875 = vmatprep.subr.bf16.mxu0 0
        %4876 = vmatpush1.bf16.msra.mxu0 0
        %4877 = vmatprep.subr.bf16.mxu0 0
        %4878 = vmatpush1.bf16.msra.mxu0 0
        %4879 = vmatprep.subr.bf16.mxu0 0
        %4880 = vmatpush1.bf16.msra.mxu0 0
        %4881 = vmatprep.subr.bf16.mxu0 0
        %4882 = vmatpush1.bf16.msra.mxu0 0
        %4883 = vmatprep.subr.bf16.mxu0 0
        %4884 = vmatpush1.bf16.msra.mxu0 0
        %4885 = vmatprep.subr.bf16.mxu0 0
        %4886 = vmatpush1.bf16.msra.mxu0 0
        %4887 = vmatprep.subr.bf16.mxu0 0
        %4888 = vmatpush1.bf16.msra.mxu0 0
        %4889 = vmatprep.subr.bf16.mxu0 0
        %4890 = vmatpush1.bf16.msra.mxu0 0
        %4891 = vmatprep.subr.bf16.mxu0 0
        %4892 = vmatpush1.bf16.msra.mxu0 0
        %4893 = vmatprep.subr.bf16.mxu0 0
        %4894 = vmatpush1.bf16.msra.mxu0 0
        %4895 = vmatprep.subr.bf16.mxu0 0
        %4896 = vmatpush1.bf16.msra.mxu0 0
        %4897 = vmatprep.subr.bf16.mxu0 0
        %4898 = vmatpush1.bf16.msra.mxu0 0
        %4899 = vmatprep.subr.bf16.mxu0 0
        %4900 = vmatpush1.bf16.msra.mxu0 0
        %4901 = vmatprep.subr.bf16.mxu0 0
        %4902 = vmatpush1.bf16.msra.mxu0 0
        %4903 = vmatprep.subr.bf16.mxu0 0
        %4904 = vmatpush1.bf16.msra.mxu0 0
        %4905 = vmatprep.mubr.bf16.mxu0 0
        %4906 = vmatmul.mubr.bf16.gmra.mrb[0].mxu0 %v4521
        %v4907 = vpop.f32.mrb[0].mxu0
        %v4908 = vadd.f32 %v4459, %v4907
        %v4909 = vpop.f32.mrb[0].mxu0
        %v4910 = vadd.f32 %v4463, %v4909
        %v4911 = vpop.f32.mrb[0].mxu0
        %v4912 = vadd.f32 %v4459, %v4911
        %v4913 = vpop.f32.mrb[0].mxu0
        %v4914 = vadd.f32 %v4463, %v4913
        %4915 = vdwg.mxu0
        %v4916 = vmax.f32 %v4607, 0.0
        %v4917 = vmax.f32 %v4609, 0.0
        %v4918 = vmax.f32 %v4650, 0.0
        %v4919 = vmax.f32 %v4652, 0.0
        %v4920 = vmax.f32 %v4693, 0.0
        %v4921 = vmax.f32 %v4695, 0.0
        %v4922 = vmax.f32 %v4736, 0.0
        %v4923 = vmax.f32 %v4738, 0.0
        %v4924 = vmax.f32 %v4779, 0.0
        %v4925 = vmax.f32 %v4781, 0.0
        %v4926 = vmax.f32 %v4822, 0.0
        %v4927 = vmax.f32 %v4824, 0.0
        %v4928 = vmax.f32 %v4865, 0.0
        %v4929 = vmax.f32 %v4867, 0.0
        %v4930 = vmax.f32 %v4908, 0.0
        %v4931 = vmax.f32 %v4910, 0.0
        %v4932 = vmax.f32 %v4611, 0.0
        %v4933 = vmax.f32 %v4613, 0.0
        %v4934 = vmax.f32 %v4654, 0.0
        %v4935 = vmax.f32 %v4656, 0.0
        %v4936 = vmax.f32 %v4697, 0.0
        %v4937 = vmax.f32 %v4699, 0.0
        %v4938 = vmax.f32 %v4740, 0.0
        %v4939 = vmax.f32 %v4742, 0.0
        %v4940 = vmax.f32 %v4783, 0.0
        %v4941 = vmax.f32 %v4785, 0.0
        %v4942 = vmax.f32 %v4826, 0.0
        %v4943 = vmax.f32 %v4828, 0.0
        %v4944 = vmax.f32 %v4869, 0.0
        %v4945 = vmax.f32 %v4871, 0.0
        %v4946 = vmax.f32 %v4912, 0.0
        %v4947 = vmax.f32 %v4914, 0.0
        %v4948 = vpack.c.bf16 %v4932, %v4916
        %v4949 = vpack.c.bf16 %v4933, %v4917
        %v4950 = vpack.c.bf16 %v4934, %v4918
        %v4951 = vpack.c.bf16 %v4935, %v4919
        %v4952 = vpack.c.bf16 %v4936, %v4920
        %v4953 = vpack.c.bf16 %v4937, %v4921
        %v4954 = vpack.c.bf16 %v4938, %v4922
        %v4955 = vpack.c.bf16 %v4939, %v4923
        %v4956 = vpack.c.bf16 %v4940, %v4924
        %v4957 = vpack.c.bf16 %v4941, %v4925
        %v4958 = vpack.c.bf16 %v4942, %v4926
        %v4959 = vpack.c.bf16 %v4943, %v4927
        %v4960 = vpack.c.bf16 %v4944, %v4928
        %v4961 = vpack.c.bf16 %v4945, %v4929
        %v4962 = vpack.c.bf16 %v4946, %v4930
        %v4963 = vpack.c.bf16 %v4947, %v4931
        %v4964 = vld [vmem:[%s14] sm:$0xf]
        %v4965 = vld [vmem:[%s14 + $0x4] sm:$0xf]
        %v4966 = vld [vmem:[%s14 + $0x8] sm:$0xf]
        %v4967 = vld [vmem:[%s14 + $0xc] sm:$0xf]
        %v4968 = vld [vmem:[%s14 + $0x10] sm:$0xf]
        %v4969 = vld [vmem:[%s14 + $0x14] sm:$0xf]
        %v4970 = vld [vmem:[%s14 + $0x18] sm:$0xf]
        %v4971 = vld [vmem:[%s14 + $0x1c] sm:$0xf]
        %v4972 = vld [vmem:[%s14 + $0x20] sm:$0xf]
        %v4973 = vld [vmem:[%s14 + $0x24] sm:$0xf]
        %v4974 = vld [vmem:[%s14 + $0x28] sm:$0xf]
        %v4975 = vld [vmem:[%s14 + $0x2c] sm:$0xf]
        %v4976 = vld [vmem:[%s14 + $0x30] sm:$0xf]
        %v4977 = vld [vmem:[%s14 + $0x34] sm:$0xf]
        %v4978 = vld [vmem:[%s14 + $0x38] sm:$0xf]
        %v4979 = vld [vmem:[%s14 + $0x3c] sm:$0xf]
        %v4980 = vld [vmem:[%s14 + $0x40] sm:$0xf]
        %v4981 = vld [vmem:[%s14 + $0x44] sm:$0xf]
        %v4982 = vld [vmem:[%s14 + $0x48] sm:$0xf]
        %v4983 = vld [vmem:[%s14 + $0x4c] sm:$0xf]
        %v4984 = vld [vmem:[%s14 + $0x50] sm:$0xf]
        %v4985 = vld [vmem:[%s14 + $0x54] sm:$0xf]
        %v4986 = vld [vmem:[%s14 + $0x58] sm:$0xf]
        %v4987 = vld [vmem:[%s14 + $0x5c] sm:$0xf]
        %v4988 = vld [vmem:[%s14 + $0x60] sm:$0xf]
        %v4989 = vld [vmem:[%s14 + $0x64] sm:$0xf]
        %v4990 = vld [vmem:[%s14 + $0x68] sm:$0xf]
        %v4991 = vld [vmem:[%s14 + $0x6c] sm:$0xf]
        %v4992 = vld [vmem:[%s14 + $0x70] sm:$0xf]
        %v4993 = vld [vmem:[%s14 + $0x74] sm:$0xf]
        %v4994 = vld [vmem:[%s14 + $0x78] sm:$0xf]
        %v4995 = vld [vmem:[%s14 + $0x7c] sm:$0xf]
        %v4996 = vld [vmem:[%s14 + $0x80] sm:$0xf]
        %v4997 = vld [vmem:[%s14 + $0x84] sm:$0xf]
        %v4998 = vld [vmem:[%s14 + $0x88] sm:$0xf]
        %v4999 = vld [vmem:[%s14 + $0x8c] sm:$0xf]
        %v5000 = vld [vmem:[%s14 + $0x90] sm:$0xf]
        %v5001 = vld [vmem:[%s14 + $0x94] sm:$0xf]
        %v5002 = vld [vmem:[%s14 + $0x98] sm:$0xf]
        %v5003 = vld [vmem:[%s14 + $0x9c] sm:$0xf]
        %v5004 = vld [vmem:[%s14 + $0xa0] sm:$0xf]
        %v5005 = vld [vmem:[%s14 + $0xa4] sm:$0xf]
        %v5006 = vld [vmem:[%s14 + $0xa8] sm:$0xf]
        %v5007 = vld [vmem:[%s14 + $0xac] sm:$0xf]
        %v5008 = vld [vmem:[%s14 + $0xb0] sm:$0xf]
        %v5009 = vld [vmem:[%s14 + $0xb4] sm:$0xf]
        %v5010 = vld [vmem:[%s14 + $0xb8] sm:$0xf]
        %v5011 = vld [vmem:[%s14 + $0xbc] sm:$0xf]
        %v5012 = vld [vmem:[%s14 + $0xc0] sm:$0xf]
        %v5013 = vld [vmem:[%s14 + $0xc4] sm:$0xf]
        %v5014 = vld [vmem:[%s14 + $0xc8] sm:$0xf]
        %v5015 = vld [vmem:[%s14 + $0xcc] sm:$0xf]
        %v5016 = vld [vmem:[%s14 + $0xd0] sm:$0xf]
        %v5017 = vld [vmem:[%s14 + $0xd4] sm:$0xf]
        %v5018 = vld [vmem:[%s14 + $0xd8] sm:$0xf]
        %v5019 = vld [vmem:[%s14 + $0xdc] sm:$0xf]
        %v5020 = vld [vmem:[%s14 + $0xe0] sm:$0xf]
        %v5021 = vld [vmem:[%s14 + $0xe4] sm:$0xf]
        %v5022 = vld [vmem:[%s14 + $0xe8] sm:$0xf]
        %v5023 = vld [vmem:[%s14 + $0xec] sm:$0xf]
        %v5024 = vld [vmem:[%s14 + $0xf0] sm:$0xf]
        %v5025 = vld [vmem:[%s14 + $0xf4] sm:$0xf]
        %v5026 = vld [vmem:[%s14 + $0xf8] sm:$0xf]
        %v5027 = vld [vmem:[%s14 + $0xfc] sm:$0xf]
        %v5028 = vld [vmem:[%s14 + $0x100] sm:$0xf]
        %v5029 = vld [vmem:[%s14 + $0x104] sm:$0xf]
        %v5030 = vld [vmem:[%s14 + $0x108] sm:$0xf]
        %v5031 = vld [vmem:[%s14 + $0x10c] sm:$0xf]
        %v5032 = vld [vmem:[%s14 + $0x110] sm:$0xf]
        %v5033 = vld [vmem:[%s14 + $0x114] sm:$0xf]
        %v5034 = vld [vmem:[%s14 + $0x118] sm:$0xf]
        %v5035 = vld [vmem:[%s14 + $0x11c] sm:$0xf]
        %v5036 = vld [vmem:[%s14 + $0x120] sm:$0xf]
        %v5037 = vld [vmem:[%s14 + $0x124] sm:$0xf]
        %v5038 = vld [vmem:[%s14 + $0x128] sm:$0xf]
        %v5039 = vld [vmem:[%s14 + $0x12c] sm:$0xf]
        %v5040 = vld [vmem:[%s14 + $0x130] sm:$0xf]
        %v5041 = vld [vmem:[%s14 + $0x134] sm:$0xf]
        %v5042 = vld [vmem:[%s14 + $0x138] sm:$0xf]
        %v5043 = vld [vmem:[%s14 + $0x13c] sm:$0xf]
        %v5044 = vld [vmem:[%s14 + $0x140] sm:$0xf]
        %v5045 = vld [vmem:[%s14 + $0x144] sm:$0xf]
        %v5046 = vld [vmem:[%s14 + $0x148] sm:$0xf]
        %v5047 = vld [vmem:[%s14 + $0x14c] sm:$0xf]
        %v5048 = vld [vmem:[%s14 + $0x150] sm:$0xf]
        %v5049 = vld [vmem:[%s14 + $0x154] sm:$0xf]
        %v5050 = vld [vmem:[%s14 + $0x158] sm:$0xf]
        %v5051 = vld [vmem:[%s14 + $0x15c] sm:$0xf]
        %v5052 = vld [vmem:[%s14 + $0x160] sm:$0xf]
        %v5053 = vld [vmem:[%s14 + $0x164] sm:$0xf]
        %v5054 = vld [vmem:[%s14 + $0x168] sm:$0xf]
        %v5055 = vld [vmem:[%s14 + $0x16c] sm:$0xf]
        %v5056 = vld [vmem:[%s14 + $0x170] sm:$0xf]
        %v5057 = vld [vmem:[%s14 + $0x174] sm:$0xf]
        %v5058 = vld [vmem:[%s14 + $0x178] sm:$0xf]
        %v5059 = vld [vmem:[%s14 + $0x17c] sm:$0xf]
        %v5060 = vld [vmem:[%s14 + $0x180] sm:$0xf]
        %v5061 = vld [vmem:[%s14 + $0x184] sm:$0xf]
        %v5062 = vld [vmem:[%s14 + $0x188] sm:$0xf]
        %v5063 = vld [vmem:[%s14 + $0x18c] sm:$0xf]
        %v5064 = vld [vmem:[%s14 + $0x190] sm:$0xf]
        %v5065 = vld [vmem:[%s14 + $0x194] sm:$0xf]
        %v5066 = vld [vmem:[%s14 + $0x198] sm:$0xf]
        %v5067 = vld [vmem:[%s14 + $0x19c] sm:$0xf]
        %v5068 = vld [vmem:[%s14 + $0x1a0] sm:$0xf]
        %v5069 = vld [vmem:[%s14 + $0x1a4] sm:$0xf]
        %v5070 = vld [vmem:[%s14 + $0x1a8] sm:$0xf]
        %v5071 = vld [vmem:[%s14 + $0x1ac] sm:$0xf]
        %v5072 = vld [vmem:[%s14 + $0x1b0] sm:$0xf]
        %v5073 = vld [vmem:[%s14 + $0x1b4] sm:$0xf]
        %v5074 = vld [vmem:[%s14 + $0x1b8] sm:$0xf]
        %v5075 = vld [vmem:[%s14 + $0x1bc] sm:$0xf]
        %v5076 = vld [vmem:[%s14 + $0x1c0] sm:$0xf]
        %v5077 = vld [vmem:[%s14 + $0x1c4] sm:$0xf]
        %v5078 = vld [vmem:[%s14 + $0x1c8] sm:$0xf]
        %v5079 = vld [vmem:[%s14 + $0x1cc] sm:$0xf]
        %v5080 = vld [vmem:[%s14 + $0x1d0] sm:$0xf]
        %v5081 = vld [vmem:[%s14 + $0x1d4] sm:$0xf]
        %v5082 = vld [vmem:[%s14 + $0x1d8] sm:$0xf]
        %v5083 = vld [vmem:[%s14 + $0x1dc] sm:$0xf]
        %v5084 = vld [vmem:[%s14 + $0x1e0] sm:$0xf]
        %v5085 = vld [vmem:[%s14 + $0x1e4] sm:$0xf]
        %v5086 = vld [vmem:[%s14 + $0x1e8] sm:$0xf]
        %v5087 = vld [vmem:[%s14 + $0x1ec] sm:$0xf]
        %v5088 = vld [vmem:[%s14 + $0x1f0] sm:$0xf]
        %v5089 = vld [vmem:[%s14 + $0x1f4] sm:$0xf]
        %v5090 = vld [vmem:[%s14 + $0x1f8] sm:$0xf]
        %v5091 = vld [vmem:[%s14 + $0x1fc] sm:$0xf]
        %v5092 = vld [vmem:[%s14 + $0x200] sm:$0xf]
        %v5093 = vld [vmem:[%s14 + $0x204] sm:$0xf]
        %v5094 = vld [vmem:[%s14 + $0x208] sm:$0xf]
        %v5095 = vld [vmem:[%s14 + $0x20c] sm:$0xf]
        %v5096 = vld [vmem:[%s14 + $0x210] sm:$0xf]
        %v5097 = vld [vmem:[%s14 + $0x214] sm:$0xf]
        %v5098 = vld [vmem:[%s14 + $0x218] sm:$0xf]
        %v5099 = vld [vmem:[%s14 + $0x21c] sm:$0xf]
        %v5100 = vld [vmem:[%s14 + $0x220] sm:$0xf]
        %v5101 = vld [vmem:[%s14 + $0x224] sm:$0xf]
        %v5102 = vld [vmem:[%s14 + $0x228] sm:$0xf]
        %v5103 = vld [vmem:[%s14 + $0x22c] sm:$0xf]
        %v5104 = vld [vmem:[%s14 + $0x230] sm:$0xf]
        %v5105 = vld [vmem:[%s14 + $0x234] sm:$0xf]
        %v5106 = vld [vmem:[%s14 + $0x238] sm:$0xf]
        %v5107 = vld [vmem:[%s14 + $0x23c] sm:$0xf]
        %v5108 = vld [vmem:[%s14 + $0x240] sm:$0xf]
        %v5109 = vld [vmem:[%s14 + $0x244] sm:$0xf]
        %v5110 = vld [vmem:[%s14 + $0x248] sm:$0xf]
        %v5111 = vld [vmem:[%s14 + $0x24c] sm:$0xf]
        %v5112 = vld [vmem:[%s14 + $0x250] sm:$0xf]
        %v5113 = vld [vmem:[%s14 + $0x254] sm:$0xf]
        %v5114 = vld [vmem:[%s14 + $0x258] sm:$0xf]
        %v5115 = vld [vmem:[%s14 + $0x25c] sm:$0xf]
        %v5116 = vld [vmem:[%s14 + $0x260] sm:$0xf]
        %v5117 = vld [vmem:[%s14 + $0x264] sm:$0xf]
        %v5118 = vld [vmem:[%s14 + $0x268] sm:$0xf]
        %v5119 = vld [vmem:[%s14 + $0x26c] sm:$0xf]
        %v5120 = vld [vmem:[%s14 + $0x270] sm:$0xf]
        %v5121 = vld [vmem:[%s14 + $0x274] sm:$0xf]
        %v5122 = vld [vmem:[%s14 + $0x278] sm:$0xf]
        %v5123 = vld [vmem:[%s14 + $0x27c] sm:$0xf]
        %v5124 = vld [vmem:[%s14 + $0x280] sm:$0xf]
        %v5125 = vld [vmem:[%s14 + $0x284] sm:$0xf]
        %v5126 = vld [vmem:[%s14 + $0x288] sm:$0xf]
        %v5127 = vld [vmem:[%s14 + $0x28c] sm:$0xf]
        %v5128 = vld [vmem:[%s14 + $0x290] sm:$0xf]
        %v5129 = vld [vmem:[%s14 + $0x294] sm:$0xf]
        %v5130 = vld [vmem:[%s14 + $0x298] sm:$0xf]
        %v5131 = vld [vmem:[%s14 + $0x29c] sm:$0xf]
        %v5132 = vld [vmem:[%s14 + $0x2a0] sm:$0xf]
        %v5133 = vld [vmem:[%s14 + $0x2a4] sm:$0xf]
        %v5134 = vld [vmem:[%s14 + $0x2a8] sm:$0xf]
        %v5135 = vld [vmem:[%s14 + $0x2ac] sm:$0xf]
        %v5136 = vld [vmem:[%s14 + $0x2b0] sm:$0xf]
        %v5137 = vld [vmem:[%s14 + $0x2b4] sm:$0xf]
        %v5138 = vld [vmem:[%s14 + $0x2b8] sm:$0xf]
        %v5139 = vld [vmem:[%s14 + $0x2bc] sm:$0xf]
        %v5140 = vld [vmem:[%s14 + $0x2c0] sm:$0xf]
        %v5141 = vld [vmem:[%s14 + $0x2c4] sm:$0xf]
        %v5142 = vld [vmem:[%s14 + $0x2c8] sm:$0xf]
        %v5143 = vld [vmem:[%s14 + $0x2cc] sm:$0xf]
        %v5144 = vld [vmem:[%s14 + $0x2d0] sm:$0xf]
        %v5145 = vld [vmem:[%s14 + $0x2d4] sm:$0xf]
        %v5146 = vld [vmem:[%s14 + $0x2d8] sm:$0xf]
        %v5147 = vld [vmem:[%s14 + $0x2dc] sm:$0xf]
        %v5148 = vld [vmem:[%s14 + $0x2e0] sm:$0xf]
        %v5149 = vld [vmem:[%s14 + $0x2e4] sm:$0xf]
        %v5150 = vld [vmem:[%s14 + $0x2e8] sm:$0xf]
        %v5151 = vld [vmem:[%s14 + $0x2ec] sm:$0xf]
        %v5152 = vld [vmem:[%s14 + $0x2f0] sm:$0xf]
        %v5153 = vld [vmem:[%s14 + $0x2f4] sm:$0xf]
        %v5154 = vld [vmem:[%s14 + $0x2f8] sm:$0xf]
        %v5155 = vld [vmem:[%s14 + $0x2fc] sm:$0xf]
        %v5156 = vld [vmem:[%s14 + $0x300] sm:$0xf]
        %v5157 = vld [vmem:[%s14 + $0x304] sm:$0xf]
        %v5158 = vld [vmem:[%s14 + $0x308] sm:$0xf]
        %v5159 = vld [vmem:[%s14 + $0x30c] sm:$0xf]
        %v5160 = vld [vmem:[%s14 + $0x310] sm:$0xf]
        %v5161 = vld [vmem:[%s14 + $0x314] sm:$0xf]
        %v5162 = vld [vmem:[%s14 + $0x318] sm:$0xf]
        %v5163 = vld [vmem:[%s14 + $0x31c] sm:$0xf]
        %v5164 = vld [vmem:[%s14 + $0x320] sm:$0xf]
        %v5165 = vld [vmem:[%s14 + $0x324] sm:$0xf]
        %v5166 = vld [vmem:[%s14 + $0x328] sm:$0xf]
        %v5167 = vld [vmem:[%s14 + $0x32c] sm:$0xf]
        %v5168 = vld [vmem:[%s14 + $0x330] sm:$0xf]
        %v5169 = vld [vmem:[%s14 + $0x334] sm:$0xf]
        %v5170 = vld [vmem:[%s14 + $0x338] sm:$0xf]
        %v5171 = vld [vmem:[%s14 + $0x33c] sm:$0xf]
        %v5172 = vld [vmem:[%s14 + $0x340] sm:$0xf]
        %v5173 = vld [vmem:[%s14 + $0x344] sm:$0xf]
        %v5174 = vld [vmem:[%s14 + $0x348] sm:$0xf]
        %v5175 = vld [vmem:[%s14 + $0x34c] sm:$0xf]
        %v5176 = vld [vmem:[%s14 + $0x350] sm:$0xf]
        %v5177 = vld [vmem:[%s14 + $0x354] sm:$0xf]
        %v5178 = vld [vmem:[%s14 + $0x358] sm:$0xf]
        %v5179 = vld [vmem:[%s14 + $0x35c] sm:$0xf]
        %v5180 = vld [vmem:[%s14 + $0x360] sm:$0xf]
        %v5181 = vld [vmem:[%s14 + $0x364] sm:$0xf]
        %v5182 = vld [vmem:[%s14 + $0x368] sm:$0xf]
        %v5183 = vld [vmem:[%s14 + $0x36c] sm:$0xf]
        %v5184 = vld [vmem:[%s14 + $0x370] sm:$0xf]
        %v5185 = vld [vmem:[%s14 + $0x374] sm:$0xf]
        %v5186 = vld [vmem:[%s14 + $0x378] sm:$0xf]
        %v5187 = vld [vmem:[%s14 + $0x37c] sm:$0xf]
        %v5188 = vld [vmem:[%s14 + $0x380] sm:$0xf]
        %v5189 = vld [vmem:[%s14 + $0x384] sm:$0xf]
        %v5190 = vld [vmem:[%s14 + $0x388] sm:$0xf]
        %v5191 = vld [vmem:[%s14 + $0x38c] sm:$0xf]
        %v5192 = vld [vmem:[%s14 + $0x390] sm:$0xf]
        %v5193 = vld [vmem:[%s14 + $0x394] sm:$0xf]
        %v5194 = vld [vmem:[%s14 + $0x398] sm:$0xf]
        %v5195 = vld [vmem:[%s14 + $0x39c] sm:$0xf]
        %v5196 = vld [vmem:[%s14 + $0x3a0] sm:$0xf]
        %v5197 = vld [vmem:[%s14 + $0x3a4] sm:$0xf]
        %v5198 = vld [vmem:[%s14 + $0x3a8] sm:$0xf]
        %v5199 = vld [vmem:[%s14 + $0x3ac] sm:$0xf]
        %v5200 = vld [vmem:[%s14 + $0x3b0] sm:$0xf]
        %v5201 = vld [vmem:[%s14 + $0x3b4] sm:$0xf]
        %v5202 = vld [vmem:[%s14 + $0x3b8] sm:$0xf]
        %v5203 = vld [vmem:[%s14 + $0x3bc] sm:$0xf]
        %v5204 = vld [vmem:[%s14 + $0x3c0] sm:$0xf]
        %v5205 = vld [vmem:[%s14 + $0x3c4] sm:$0xf]
        %v5206 = vld [vmem:[%s14 + $0x3c8] sm:$0xf]
        %v5207 = vld [vmem:[%s14 + $0x3cc] sm:$0xf]
        %v5208 = vld [vmem:[%s14 + $0x3d0] sm:$0xf]
        %v5209 = vld [vmem:[%s14 + $0x3d4] sm:$0xf]
        %v5210 = vld [vmem:[%s14 + $0x3d8] sm:$0xf]
        %v5211 = vld [vmem:[%s14 + $0x3dc] sm:$0xf]
        %v5212 = vld [vmem:[%s14 + $0x3e0] sm:$0xf]
        %v5213 = vld [vmem:[%s14 + $0x3e4] sm:$0xf]
        %v5214 = vld [vmem:[%s14 + $0x3e8] sm:$0xf]
        %v5215 = vld [vmem:[%s14 + $0x3ec] sm:$0xf]
        %v5216 = vld [vmem:[%s14 + $0x3f0] sm:$0xf]
        %v5217 = vld [vmem:[%s14 + $0x3f4] sm:$0xf]
        %v5218 = vld [vmem:[%s14 + $0x3f8] sm:$0xf]
        %v5219 = vld [vmem:[%s14 + $0x3fc] sm:$0xf]
        %v5220 = vld [vmem:[%s15] sm:$0x1]
        %v5222 = vlaneseq
        %v5223 = vshrl.u32 %v5222, 7
        %v5224 = vsub.s32 0, %v5223
        %v5225 = vrot.slane %v5220, %v5224
        %v5483 = vunpack.c.l.b16 %v4964
        %v5484 = vunpack.c.l.b16 %v4965
        %v5485 = vunpack.c.l.b16 %v4966
        %v5486 = vunpack.c.l.b16 %v4967
        %v5487 = vunpack.c.l.b16 %v4968
        %v5488 = vunpack.c.l.b16 %v4969
        %v5489 = vunpack.c.l.b16 %v4970
        %v5490 = vunpack.c.l.b16 %v4971
        %v5491 = vunpack.c.l.b16 %v4972
        %v5492 = vunpack.c.l.b16 %v4973
        %v5493 = vunpack.c.l.b16 %v4974
        %v5494 = vunpack.c.l.b16 %v4975
        %v5495 = vunpack.c.l.b16 %v4976
        %v5496 = vunpack.c.l.b16 %v4977
        %v5497 = vunpack.c.l.b16 %v4978
        %v5498 = vunpack.c.l.b16 %v4979
        %v5499 = vunpack.c.l.b16 %v4980
        %v5500 = vunpack.c.l.b16 %v4981
        %v5501 = vunpack.c.l.b16 %v4982
        %v5502 = vunpack.c.l.b16 %v4983
        %v5503 = vunpack.c.l.b16 %v4984
        %v5504 = vunpack.c.l.b16 %v4985
        %v5505 = vunpack.c.l.b16 %v4986
        %v5506 = vunpack.c.l.b16 %v4987
        %v5507 = vunpack.c.l.b16 %v4988
        %v5508 = vunpack.c.l.b16 %v4989
        %v5509 = vunpack.c.l.b16 %v4990
        %v5510 = vunpack.c.l.b16 %v4991
        %v5511 = vunpack.c.l.b16 %v4992
        %v5512 = vunpack.c.l.b16 %v4993
        %v5513 = vunpack.c.l.b16 %v4994
        %v5514 = vunpack.c.l.b16 %v4995
        %v5515 = vunpack.c.l.b16 %v4996
        %v5516 = vunpack.c.l.b16 %v4997
        %v5517 = vunpack.c.l.b16 %v4998
        %v5518 = vunpack.c.l.b16 %v4999
        %v5519 = vunpack.c.l.b16 %v5000
        %v5520 = vunpack.c.l.b16 %v5001
        %v5521 = vunpack.c.l.b16 %v5002
        %v5522 = vunpack.c.l.b16 %v5003
        %v5523 = vunpack.c.l.b16 %v5004
        %v5524 = vunpack.c.l.b16 %v5005
        %v5525 = vunpack.c.l.b16 %v5006
        %v5526 = vunpack.c.l.b16 %v5007
        %v5527 = vunpack.c.l.b16 %v5008
        %v5528 = vunpack.c.l.b16 %v5009
        %v5529 = vunpack.c.l.b16 %v5010
        %v5530 = vunpack.c.l.b16 %v5011
        %v5531 = vunpack.c.l.b16 %v5012
        %v5532 = vunpack.c.l.b16 %v5013
        %v5533 = vunpack.c.l.b16 %v5014
        %v5534 = vunpack.c.l.b16 %v5015
        %v5535 = vunpack.c.l.b16 %v5016
        %v5536 = vunpack.c.l.b16 %v5017
        %v5537 = vunpack.c.l.b16 %v5018
        %v5538 = vunpack.c.l.b16 %v5019
        %v5539 = vunpack.c.l.b16 %v5020
        %v5540 = vunpack.c.l.b16 %v5021
        %v5541 = vunpack.c.l.b16 %v5022
        %v5542 = vunpack.c.l.b16 %v5023
        %v5543 = vunpack.c.l.b16 %v5024
        %v5544 = vunpack.c.l.b16 %v5025
        %v5545 = vunpack.c.l.b16 %v5026
        %v5546 = vunpack.c.l.b16 %v5027
        %v5547 = vunpack.c.l.b16 %v5028
        %v5548 = vunpack.c.l.b16 %v5029
        %v5549 = vunpack.c.l.b16 %v5030
        %v5550 = vunpack.c.l.b16 %v5031
        %v5551 = vunpack.c.l.b16 %v5032
        %v5552 = vunpack.c.l.b16 %v5033
        %v5553 = vunpack.c.l.b16 %v5034
        %v5554 = vunpack.c.l.b16 %v5035
        %v5555 = vunpack.c.l.b16 %v5036
        %v5556 = vunpack.c.l.b16 %v5037
        %v5557 = vunpack.c.l.b16 %v5038
        %v5558 = vunpack.c.l.b16 %v5039
        %v5559 = vunpack.c.l.b16 %v5040
        %v5560 = vunpack.c.l.b16 %v5041
        %v5561 = vunpack.c.l.b16 %v5042
        %v5562 = vunpack.c.l.b16 %v5043
        %v5563 = vunpack.c.l.b16 %v5044
        %v5564 = vunpack.c.l.b16 %v5045
        %v5565 = vunpack.c.l.b16 %v5046
        %v5566 = vunpack.c.l.b16 %v5047
        %v5567 = vunpack.c.l.b16 %v5048
        %v5568 = vunpack.c.l.b16 %v5049
        %v5569 = vunpack.c.l.b16 %v5050
        %v5570 = vunpack.c.l.b16 %v5051
        %v5571 = vunpack.c.l.b16 %v5052
        %v5572 = vunpack.c.l.b16 %v5053
        %v5573 = vunpack.c.l.b16 %v5054
        %v5574 = vunpack.c.l.b16 %v5055
        %v5575 = vunpack.c.l.b16 %v5056
        %v5576 = vunpack.c.l.b16 %v5057
        %v5577 = vunpack.c.l.b16 %v5058
        %v5578 = vunpack.c.l.b16 %v5059
        %v5579 = vunpack.c.l.b16 %v5060
        %v5580 = vunpack.c.l.b16 %v5061
        %v5581 = vunpack.c.l.b16 %v5062
        %v5582 = vunpack.c.l.b16 %v5063
        %v5583 = vunpack.c.l.b16 %v5064
        %v5584 = vunpack.c.l.b16 %v5065
        %v5585 = vunpack.c.l.b16 %v5066
        %v5586 = vunpack.c.l.b16 %v5067
        %v5587 = vunpack.c.l.b16 %v5068
        %v5588 = vunpack.c.l.b16 %v5069
        %v5589 = vunpack.c.l.b16 %v5070
        %v5590 = vunpack.c.l.b16 %v5071
        %v5591 = vunpack.c.l.b16 %v5072
        %v5592 = vunpack.c.l.b16 %v5073
        %v5593 = vunpack.c.l.b16 %v5074
        %v5594 = vunpack.c.l.b16 %v5075
        %v5595 = vunpack.c.l.b16 %v5076
        %v5596 = vunpack.c.l.b16 %v5077
        %v5597 = vunpack.c.l.b16 %v5078
        %v5598 = vunpack.c.l.b16 %v5079
        %v5599 = vunpack.c.l.b16 %v5080
        %v5600 = vunpack.c.l.b16 %v5081
        %v5601 = vunpack.c.l.b16 %v5082
        %v5602 = vunpack.c.l.b16 %v5083
        %v5603 = vunpack.c.l.b16 %v5084
        %v5604 = vunpack.c.l.b16 %v5085
        %v5605 = vunpack.c.l.b16 %v5086
        %v5606 = vunpack.c.l.b16 %v5087
        %v5607 = vunpack.c.l.b16 %v5088
        %v5608 = vunpack.c.l.b16 %v5089
        %v5609 = vunpack.c.l.b16 %v5090
        %v5610 = vunpack.c.l.b16 %v5091
        %v5611 = vunpack.c.l.b16 %v5092
        %v5612 = vunpack.c.l.b16 %v5093
        %v5613 = vunpack.c.l.b16 %v5094
        %v5614 = vunpack.c.l.b16 %v5095
        %v5615 = vunpack.c.l.b16 %v5096
        %v5616 = vunpack.c.l.b16 %v5097
        %v5617 = vunpack.c.l.b16 %v5098
        %v5618 = vunpack.c.l.b16 %v5099
        %v5619 = vunpack.c.l.b16 %v5100
        %v5620 = vunpack.c.l.b16 %v5101
        %v5621 = vunpack.c.l.b16 %v5102
        %v5622 = vunpack.c.l.b16 %v5103
        %v5623 = vunpack.c.l.b16 %v5104
        %v5624 = vunpack.c.l.b16 %v5105
        %v5625 = vunpack.c.l.b16 %v5106
        %v5626 = vunpack.c.l.b16 %v5107
        %v5627 = vunpack.c.l.b16 %v5108
        %v5628 = vunpack.c.l.b16 %v5109
        %v5629 = vunpack.c.l.b16 %v5110
        %v5630 = vunpack.c.l.b16 %v5111
        %v5631 = vunpack.c.l.b16 %v5112
        %v5632 = vunpack.c.l.b16 %v5113
        %v5633 = vunpack.c.l.b16 %v5114
        %v5634 = vunpack.c.l.b16 %v5115
        %v5635 = vunpack.c.l.b16 %v5116
        %v5636 = vunpack.c.l.b16 %v5117
        %v5637 = vunpack.c.l.b16 %v5118
        %v5638 = vunpack.c.l.b16 %v5119
        %v5639 = vunpack.c.l.b16 %v5120
        %v5640 = vunpack.c.l.b16 %v5121
        %v5641 = vunpack.c.l.b16 %v5122
        %v5642 = vunpack.c.l.b16 %v5123
        %v5643 = vunpack.c.l.b16 %v5124
        %v5644 = vunpack.c.l.b16 %v5125
        %v5645 = vunpack.c.l.b16 %v5126
        %v5646 = vunpack.c.l.b16 %v5127
        %v5647 = vunpack.c.l.b16 %v5128
        %v5648 = vunpack.c.l.b16 %v5129
        %v5649 = vunpack.c.l.b16 %v5130
        %v5650 = vunpack.c.l.b16 %v5131
        %v5651 = vunpack.c.l.b16 %v5132
        %v5652 = vunpack.c.l.b16 %v5133
        %v5653 = vunpack.c.l.b16 %v5134
        %v5654 = vunpack.c.l.b16 %v5135
        %v5655 = vunpack.c.l.b16 %v5136
        %v5656 = vunpack.c.l.b16 %v5137
        %v5657 = vunpack.c.l.b16 %v5138
        %v5658 = vunpack.c.l.b16 %v5139
        %v5659 = vunpack.c.l.b16 %v5140
        %v5660 = vunpack.c.l.b16 %v5141
        %v5661 = vunpack.c.l.b16 %v5142
        %v5662 = vunpack.c.l.b16 %v5143
        %v5663 = vunpack.c.l.b16 %v5144
        %v5664 = vunpack.c.l.b16 %v5145
        %v5665 = vunpack.c.l.b16 %v5146
        %v5666 = vunpack.c.l.b16 %v5147
        %v5667 = vunpack.c.l.b16 %v5148
        %v5668 = vunpack.c.l.b16 %v5149
        %v5669 = vunpack.c.l.b16 %v5150
        %v5670 = vunpack.c.l.b16 %v5151
        %v5671 = vunpack.c.l.b16 %v5152
        %v5672 = vunpack.c.l.b16 %v5153
        %v5673 = vunpack.c.l.b16 %v5154
        %v5674 = vunpack.c.l.b16 %v5155
        %v5675 = vunpack.c.l.b16 %v5156
        %v5676 = vunpack.c.l.b16 %v5157
        %v5677 = vunpack.c.l.b16 %v5158
        %v5678 = vunpack.c.l.b16 %v5159
        %v5679 = vunpack.c.l.b16 %v5160
        %v5680 = vunpack.c.l.b16 %v5161
        %v5681 = vunpack.c.l.b16 %v5162
        %v5682 = vunpack.c.l.b16 %v5163
        %v5683 = vunpack.c.l.b16 %v5164
        %v5684 = vunpack.c.l.b16 %v5165
        %v5685 = vunpack.c.l.b16 %v5166
        %v5686 = vunpack.c.l.b16 %v5167
        %v5687 = vunpack.c.l.b16 %v5168
        %v5688 = vunpack.c.l.b16 %v5169
        %v5689 = vunpack.c.l.b16 %v5170
        %v5690 = vunpack.c.l.b16 %v5171
        %v5691 = vunpack.c.l.b16 %v5172
        %v5692 = vunpack.c.l.b16 %v5173
        %v5693 = vunpack.c.l.b16 %v5174
        %v5694 = vunpack.c.l.b16 %v5175
        %v5695 = vunpack.c.l.b16 %v5176
        %v5696 = vunpack.c.l.b16 %v5177
        %v5697 = vunpack.c.l.b16 %v5178
        %v5698 = vunpack.c.l.b16 %v5179
        %v5699 = vunpack.c.l.b16 %v5180
        %v5700 = vunpack.c.l.b16 %v5181
        %v5701 = vunpack.c.l.b16 %v5182
        %v5702 = vunpack.c.l.b16 %v5183
        %v5703 = vunpack.c.l.b16 %v5184
        %v5704 = vunpack.c.l.b16 %v5185
        %v5705 = vunpack.c.l.b16 %v5186
        %v5706 = vunpack.c.l.b16 %v5187
        %v5707 = vunpack.c.l.b16 %v5188
        %v5708 = vunpack.c.l.b16 %v5189
        %v5709 = vunpack.c.l.b16 %v5190
        %v5710 = vunpack.c.l.b16 %v5191
        %v5711 = vunpack.c.l.b16 %v5192
        %v5712 = vunpack.c.l.b16 %v5193
        %v5713 = vunpack.c.l.b16 %v5194
        %v5714 = vunpack.c.l.b16 %v5195
        %v5715 = vunpack.c.l.b16 %v5196
        %v5716 = vunpack.c.l.b16 %v5197
        %v5717 = vunpack.c.l.b16 %v5198
        %v5718 = vunpack.c.l.b16 %v5199
        %v5719 = vunpack.c.l.b16 %v5200
        %v5720 = vunpack.c.l.b16 %v5201
        %v5721 = vunpack.c.l.b16 %v5202
        %v5722 = vunpack.c.l.b16 %v5203
        %v5723 = vunpack.c.l.b16 %v5204
        %v5724 = vunpack.c.l.b16 %v5205
        %v5725 = vunpack.c.l.b16 %v5206
        %v5726 = vunpack.c.l.b16 %v5207
        %v5727 = vunpack.c.l.b16 %v5208
        %v5728 = vunpack.c.l.b16 %v5209
        %v5729 = vunpack.c.l.b16 %v5210
        %v5730 = vunpack.c.l.b16 %v5211
        %v5731 = vunpack.c.l.b16 %v5212
        %v5732 = vunpack.c.l.b16 %v5213
        %v5733 = vunpack.c.l.b16 %v5214
        %v5734 = vunpack.c.l.b16 %v5215
        %v5735 = vunpack.c.l.b16 %v5216
        %v5736 = vunpack.c.l.b16 %v5217
        %v5737 = vunpack.c.l.b16 %v5218
        %v5738 = vunpack.c.l.b16 %v5219
        %v5739 = vpack.c.b16 %v5484, %v5483
        %v5740 = vpack.c.b16 %v5486, %v5485
        %v5741 = vpack.c.b16 %v5488, %v5487
        %v5742 = vpack.c.b16 %v5490, %v5489
        %v5743 = vpack.c.b16 %v5492, %v5491
        %v5744 = vpack.c.b16 %v5494, %v5493
        %v5745 = vpack.c.b16 %v5496, %v5495
        %v5746 = vpack.c.b16 %v5498, %v5497
        %v5747 = vpack.c.b16 %v5500, %v5499
        %v5748 = vpack.c.b16 %v5502, %v5501
        %v5749 = vpack.c.b16 %v5504, %v5503
        %v5750 = vpack.c.b16 %v5506, %v5505
        %v5751 = vpack.c.b16 %v5508, %v5507
        %v5752 = vpack.c.b16 %v5510, %v5509
        %v5753 = vpack.c.b16 %v5512, %v5511
        %v5754 = vpack.c.b16 %v5514, %v5513
        %v5755 = vpack.c.b16 %v5516, %v5515
        %v5756 = vpack.c.b16 %v5518, %v5517
        %v5757 = vpack.c.b16 %v5520, %v5519
        %v5758 = vpack.c.b16 %v5522, %v5521
        %v5759 = vpack.c.b16 %v5524, %v5523
        %v5760 = vpack.c.b16 %v5526, %v5525
        %v5761 = vpack.c.b16 %v5528, %v5527
        %v5762 = vpack.c.b16 %v5530, %v5529
        %v5763 = vpack.c.b16 %v5532, %v5531
        %v5764 = vpack.c.b16 %v5534, %v5533
        %v5765 = vpack.c.b16 %v5536, %v5535
        %v5766 = vpack.c.b16 %v5538, %v5537
        %v5767 = vpack.c.b16 %v5540, %v5539
        %v5768 = vpack.c.b16 %v5542, %v5541
        %v5769 = vpack.c.b16 %v5544, %v5543
        %v5770 = vpack.c.b16 %v5546, %v5545
        %v5771 = vpack.c.b16 %v5548, %v5547
        %v5772 = vpack.c.b16 %v5550, %v5549
        %v5773 = vpack.c.b16 %v5552, %v5551
        %v5774 = vpack.c.b16 %v5554, %v5553
        %v5775 = vpack.c.b16 %v5556, %v5555
        %v5776 = vpack.c.b16 %v5558, %v5557
        %v5777 = vpack.c.b16 %v5560, %v5559
        %v5778 = vpack.c.b16 %v5562, %v5561
        %v5779 = vpack.c.b16 %v5564, %v5563
        %v5780 = vpack.c.b16 %v5566, %v5565
        %v5781 = vpack.c.b16 %v5568, %v5567
        %v5782 = vpack.c.b16 %v5570, %v5569
        %v5783 = vpack.c.b16 %v5572, %v5571
        %v5784 = vpack.c.b16 %v5574, %v5573
        %v5785 = vpack.c.b16 %v5576, %v5575
        %v5786 = vpack.c.b16 %v5578, %v5577
        %v5787 = vpack.c.b16 %v5580, %v5579
        %v5788 = vpack.c.b16 %v5582, %v5581
        %v5789 = vpack.c.b16 %v5584, %v5583
        %v5790 = vpack.c.b16 %v5586, %v5585
        %v5791 = vpack.c.b16 %v5588, %v5587
        %v5792 = vpack.c.b16 %v5590, %v5589
        %v5793 = vpack.c.b16 %v5592, %v5591
        %v5794 = vpack.c.b16 %v5594, %v5593
        %v5795 = vpack.c.b16 %v5596, %v5595
        %v5796 = vpack.c.b16 %v5598, %v5597
        %v5797 = vpack.c.b16 %v5600, %v5599
        %v5798 = vpack.c.b16 %v5602, %v5601
        %v5799 = vpack.c.b16 %v5604, %v5603
        %v5800 = vpack.c.b16 %v5606, %v5605
        %v5801 = vpack.c.b16 %v5608, %v5607
        %v5802 = vpack.c.b16 %v5610, %v5609
        %v5803 = vpack.c.b16 %v5612, %v5611
        %v5804 = vpack.c.b16 %v5614, %v5613
        %v5805 = vpack.c.b16 %v5616, %v5615
        %v5806 = vpack.c.b16 %v5618, %v5617
        %v5807 = vpack.c.b16 %v5620, %v5619
        %v5808 = vpack.c.b16 %v5622, %v5621
        %v5809 = vpack.c.b16 %v5624, %v5623
        %v5810 = vpack.c.b16 %v5626, %v5625
        %v5811 = vpack.c.b16 %v5628, %v5627
        %v5812 = vpack.c.b16 %v5630, %v5629
        %v5813 = vpack.c.b16 %v5632, %v5631
        %v5814 = vpack.c.b16 %v5634, %v5633
        %v5815 = vpack.c.b16 %v5636, %v5635
        %v5816 = vpack.c.b16 %v5638, %v5637
        %v5817 = vpack.c.b16 %v5640, %v5639
        %v5818 = vpack.c.b16 %v5642, %v5641
        %v5819 = vpack.c.b16 %v5644, %v5643
        %v5820 = vpack.c.b16 %v5646, %v5645
        %v5821 = vpack.c.b16 %v5648, %v5647
        %v5822 = vpack.c.b16 %v5650, %v5649
        %v5823 = vpack.c.b16 %v5652, %v5651
        %v5824 = vpack.c.b16 %v5654, %v5653
        %v5825 = vpack.c.b16 %v5656, %v5655
        %v5826 = vpack.c.b16 %v5658, %v5657
        %v5827 = vpack.c.b16 %v5660, %v5659
        %v5828 = vpack.c.b16 %v5662, %v5661
        %v5829 = vpack.c.b16 %v5664, %v5663
        %v5830 = vpack.c.b16 %v5666, %v5665
        %v5831 = vpack.c.b16 %v5668, %v5667
        %v5832 = vpack.c.b16 %v5670, %v5669
        %v5833 = vpack.c.b16 %v5672, %v5671
        %v5834 = vpack.c.b16 %v5674, %v5673
        %v5835 = vpack.c.b16 %v5676, %v5675
        %v5836 = vpack.c.b16 %v5678, %v5677
        %v5837 = vpack.c.b16 %v5680, %v5679
        %v5838 = vpack.c.b16 %v5682, %v5681
        %v5839 = vpack.c.b16 %v5684, %v5683
        %v5840 = vpack.c.b16 %v5686, %v5685
        %v5841 = vpack.c.b16 %v5688, %v5687
        %v5842 = vpack.c.b16 %v5690, %v5689
        %v5843 = vpack.c.b16 %v5692, %v5691
        %v5844 = vpack.c.b16 %v5694, %v5693
        %v5845 = vpack.c.b16 %v5696, %v5695
        %v5846 = vpack.c.b16 %v5698, %v5697
        %v5847 = vpack.c.b16 %v5700, %v5699
        %v5848 = vpack.c.b16 %v5702, %v5701
        %v5849 = vpack.c.b16 %v5704, %v5703
        %v5850 = vpack.c.b16 %v5706, %v5705
        %v5851 = vpack.c.b16 %v5708, %v5707
        %v5852 = vpack.c.b16 %v5710, %v5709
        %v5853 = vpack.c.b16 %v5712, %v5711
        %v5854 = vpack.c.b16 %v5714, %v5713
        %v5855 = vpack.c.b16 %v5716, %v5715
        %v5856 = vpack.c.b16 %v5718, %v5717
        %v5857 = vpack.c.b16 %v5720, %v5719
        %v5858 = vpack.c.b16 %v5722, %v5721
        %v5859 = vpack.c.b16 %v5724, %v5723
        %v5860 = vpack.c.b16 %v5726, %v5725
        %v5861 = vpack.c.b16 %v5728, %v5727
        %v5862 = vpack.c.b16 %v5730, %v5729
        %v5863 = vpack.c.b16 %v5732, %v5731
        %v5864 = vpack.c.b16 %v5734, %v5733
        %v5865 = vpack.c.b16 %v5736, %v5735
        %v5866 = vpack.c.b16 %v5738, %v5737
        %5995 = vmatprep.subr.bf16.mxu0 0
        %5996 = vmatpush1.bf16.msra.mxu0 %v5739
        %5997 = vmatprep.subr.bf16.mxu0 0
        %5998 = vmatpush1.bf16.msra.mxu0 %v5740
        %5999 = vmatprep.subr.bf16.mxu0 0
        %6000 = vmatpush1.bf16.msra.mxu0 %v5741
        %6001 = vmatprep.subr.bf16.mxu0 0
        %6002 = vmatpush1.bf16.msra.mxu0 %v5742
        %6003 = vmatprep.subr.bf16.mxu0 0
        %6004 = vmatpush1.bf16.msra.mxu0 %v5743
        %6005 = vmatprep.subr.bf16.mxu0 0
        %6006 = vmatpush1.bf16.msra.mxu0 %v5744
        %6007 = vmatprep.subr.bf16.mxu0 0
        %6008 = vmatpush1.bf16.msra.mxu0 %v5745
        %6009 = vmatprep.subr.bf16.mxu0 0
        %6010 = vmatpush1.bf16.msra.mxu0 %v5746
        %6011 = vmatprep.subr.bf16.mxu0 0
        %6012 = vmatpush1.bf16.msra.mxu0 %v5747
        %6013 = vmatprep.subr.bf16.mxu0 0
        %6014 = vmatpush1.bf16.msra.mxu0 %v5748
        %6015 = vmatprep.subr.bf16.mxu0 0
        %6016 = vmatpush1.bf16.msra.mxu0 %v5749
        %6017 = vmatprep.subr.bf16.mxu0 0
        %6018 = vmatpush1.bf16.msra.mxu0 %v5750
        %6019 = vmatprep.subr.bf16.mxu0 0
        %6020 = vmatpush1.bf16.msra.mxu0 %v5751
        %6021 = vmatprep.subr.bf16.mxu0 0
        %6022 = vmatpush1.bf16.msra.mxu0 %v5752
        %6023 = vmatprep.subr.bf16.mxu0 0
        %6024 = vmatpush1.bf16.msra.mxu0 %v5753
        %6025 = vmatprep.subr.bf16.mxu0 0
        %6026 = vmatpush1.bf16.msra.mxu0 %v5754
        %6027 = vmatprep.mubr.bf16.mxu0 %v4949
        %6028 = vmatmul.mubr.bf16.gmra.mrb[0].mxu0 %v4948
        %v6029 = vpop.f32.mrb[0].mxu0
        %v6030 = vadd.f32 %v5225, %v6029
        %v6031 = vpop.f32.mrb[0].mxu0
        %v6032 = vpop.f32.mrb[0].mxu0
        %v6033 = vadd.f32 %v5225, %v6032
        %v6034 = vpop.f32.mrb[0].mxu0
        %6035 = vdwg.mxu0
        %6036 = vmatprep.subr.bf16.mxu0 0
        %6037 = vmatpush1.bf16.msra.mxu0 %v5755
        %6038 = vmatprep.subr.bf16.mxu0 0
        %6039 = vmatpush1.bf16.msra.mxu0 %v5756
        %6040 = vmatprep.subr.bf16.mxu0 0
        %6041 = vmatpush1.bf16.msra.mxu0 %v5757
        %6042 = vmatprep.subr.bf16.mxu0 0
        %6043 = vmatpush1.bf16.msra.mxu0 %v5758
        %6044 = vmatprep.subr.bf16.mxu0 0
        %6045 = vmatpush1.bf16.msra.mxu0 %v5759
        %6046 = vmatprep.subr.bf16.mxu0 0
        %6047 = vmatpush1.bf16.msra.mxu0 %v5760
        %6048 = vmatprep.subr.bf16.mxu0 0
        %6049 = vmatpush1.bf16.msra.mxu0 %v5761
        %6050 = vmatprep.subr.bf16.mxu0 0
        %6051 = vmatpush1.bf16.msra.mxu0 %v5762
        %6052 = vmatprep.subr.bf16.mxu0 0
        %6053 = vmatpush1.bf16.msra.mxu0 %v5763
        %6054 = vmatprep.subr.bf16.mxu0 0
        %6055 = vmatpush1.bf16.msra.mxu0 %v5764
        %6056 = vmatprep.subr.bf16.mxu0 0
        %6057 = vmatpush1.bf16.msra.mxu0 %v5765
        %6058 = vmatprep.subr.bf16.mxu0 0
        %6059 = vmatpush1.bf16.msra.mxu0 %v5766
        %6060 = vmatprep.subr.bf16.mxu0 0
        %6061 = vmatpush1.bf16.msra.mxu0 %v5767
        %6062 = vmatprep.subr.bf16.mxu0 0
        %6063 = vmatpush1.bf16.msra.mxu0 %v5768
        %6064 = vmatprep.subr.bf16.mxu0 0
        %6065 = vmatpush1.bf16.msra.mxu0 %v5769
        %6066 = vmatprep.subr.bf16.mxu0 0
        %6067 = vmatpush1.bf16.msra.mxu0 %v5770
        %6068 = vmatprep.mubr.bf16.mxu0 %v4951
        %6069 = vmatmul.mubr.bf16.gmra.mrb[0].mxu0 %v4950
        %v6070 = vpop.f32.mrb[0].mxu0
        %v6071 = vadd.f32 %v6030, %v6070
        %v6072 = vpop.f32.mrb[0].mxu0
        %v6073 = vpop.f32.mrb[0].mxu0
        %v6074 = vadd.f32 %v6033, %v6073
        %v6075 = vpop.f32.mrb[0].mxu0
        %6076 = vdwg.mxu0
        %6077 = vmatprep.subr.bf16.mxu0 0
        %6078 = vmatpush1.bf16.msra.mxu0 %v5771
        %6079 = vmatprep.subr.bf16.mxu0 0
        %6080 = vmatpush1.bf16.msra.mxu0 %v5772
        %6081 = vmatprep.subr.bf16.mxu0 0
        %6082 = vmatpush1.bf16.msra.mxu0 %v5773
        %6083 = vmatprep.subr.bf16.mxu0 0
        %6084 = vmatpush1.bf16.msra.mxu0 %v5774
        %6085 = vmatprep.subr.bf16.mxu0 0
        %6086 = vmatpush1.bf16.msra.mxu0 %v5775
        %6087 = vmatprep.subr.bf16.mxu0 0
        %6088 = vmatpush1.bf16.msra.mxu0 %v5776
        %6089 = vmatprep.subr.bf16.mxu0 0
        %6090 = vmatpush1.bf16.msra.mxu0 %v5777
        %6091 = vmatprep.subr.bf16.mxu0 0
        %6092 = vmatpush1.bf16.msra.mxu0 %v5778
        %6093 = vmatprep.subr.bf16.mxu0 0
        %6094 = vmatpush1.bf16.msra.mxu0 %v5779
        %6095 = vmatprep.subr.bf16.mxu0 0
        %6096 = vmatpush1.bf16.msra.mxu0 %v5780
        %6097 = vmatprep.subr.bf16.mxu0 0
        %6098 = vmatpush1.bf16.msra.mxu0 %v5781
        %6099 = vmatprep.subr.bf16.mxu0 0
        %6100 = vmatpush1.bf16.msra.mxu0 %v5782
        %6101 = vmatprep.subr.bf16.mxu0 0
        %6102 = vmatpush1.bf16.msra.mxu0 %v5783
        %6103 = vmatprep.subr.bf16.mxu0 0
        %6104 = vmatpush1.bf16.msra.mxu0 %v5784
        %6105 = vmatprep.subr.bf16.mxu0 0
        %6106 = vmatpush1.bf16.msra.mxu0 %v5785
        %6107 = vmatprep.subr.bf16.mxu0 0
        %6108 = vmatpush1.bf16.msra.mxu0 %v5786
        %6109 = vmatprep.mubr.bf16.mxu0 %v4953
        %6110 = vmatmul.mubr.bf16.gmra.mrb[0].mxu0 %v4952
        %v6111 = vpop.f32.mrb[0].mxu0
        %v6112 = vadd.f32 %v6071, %v6111
        %v6113 = vpop.f32.mrb[0].mxu0
        %v6114 = vpop.f32.mrb[0].mxu0
        %v6115 = vadd.f32 %v6074, %v6114
        %v6116 = vpop.f32.mrb[0].mxu0
        %6117 = vdwg.mxu0
        %6118 = vmatprep.subr.bf16.mxu0 0
        %6119 = vmatpush1.bf16.msra.mxu0 %v5787
        %6120 = vmatprep.subr.bf16.mxu0 0
        %6121 = vmatpush1.bf16.msra.mxu0 %v5788
        %6122 = vmatprep.subr.bf16.mxu0 0
        %6123 = vmatpush1.bf16.msra.mxu0 %v5789
        %6124 = vmatprep.subr.bf16.mxu0 0
        %6125 = vmatpush1.bf16.msra.mxu0 %v5790
        %6126 = vmatprep.subr.bf16.mxu0 0
        %6127 = vmatpush1.bf16.msra.mxu0 %v5791
        %6128 = vmatprep.subr.bf16.mxu0 0
        %6129 = vmatpush1.bf16.msra.mxu0 %v5792
        %6130 = vmatprep.subr.bf16.mxu0 0
        %6131 = vmatpush1.bf16.msra.mxu0 %v5793
        %6132 = vmatprep.subr.bf16.mxu0 0
        %6133 = vmatpush1.bf16.msra.mxu0 %v5794
        %6134 = vmatprep.subr.bf16.mxu0 0
        %6135 = vmatpush1.bf16.msra.mxu0 %v5795
        %6136 = vmatprep.subr.bf16.mxu0 0
        %6137 = vmatpush1.bf16.msra.mxu0 %v5796
        %6138 = vmatprep.subr.bf16.mxu0 0
        %6139 = vmatpush1.bf16.msra.mxu0 %v5797
        %6140 = vmatprep.subr.bf16.mxu0 0
        %6141 = vmatpush1.bf16.msra.mxu0 %v5798
        %6142 = vmatprep.subr.bf16.mxu0 0
        %6143 = vmatpush1.bf16.msra.mxu0 %v5799
        %6144 = vmatprep.subr.bf16.mxu0 0
        %6145 = vmatpush1.bf16.msra.mxu0 %v5800
        %6146 = vmatprep.subr.bf16.mxu0 0
        %6147 = vmatpush1.bf16.msra.mxu0 %v5801
        %6148 = vmatprep.subr.bf16.mxu0 0
        %6149 = vmatpush1.bf16.msra.mxu0 %v5802
        %6150 = vmatprep.mubr.bf16.mxu0 %v4955
        %6151 = vmatmul.mubr.bf16.gmra.mrb[0].mxu0 %v4954
        %v6152 = vpop.f32.mrb[0].mxu0
        %v6153 = vadd.f32 %v6112, %v6152
        %v6154 = vpop.f32.mrb[0].mxu0
        %v6155 = vpop.f32.mrb[0].mxu0
        %v6156 = vadd.f32 %v6115, %v6155
        %v6157 = vpop.f32.mrb[0].mxu0
        %6158 = vdwg.mxu0
        %6159 = vmatprep.subr.bf16.mxu0 0
        %6160 = vmatpush1.bf16.msra.mxu0 %v5803
        %6161 = vmatprep.subr.bf16.mxu0 0
        %6162 = vmatpush1.bf16.msra.mxu0 %v5804
        %6163 = vmatprep.subr.bf16.mxu0 0
        %6164 = vmatpush1.bf16.msra.mxu0 %v5805
        %6165 = vmatprep.subr.bf16.mxu0 0
        %6166 = vmatpush1.bf16.msra.mxu0 %v5806
        %6167 = vmatprep.subr.bf16.mxu0 0
        %6168 = vmatpush1.bf16.msra.mxu0 %v5807
        %6169 = vmatprep.subr.bf16.mxu0 0
        %6170 = vmatpush1.bf16.msra.mxu0 %v5808
        %6171 = vmatprep.subr.bf16.mxu0 0
        %6172 = vmatpush1.bf16.msra.mxu0 %v5809
        %6173 = vmatprep.subr.bf16.mxu0 0
        %6174 = vmatpush1.bf16.msra.mxu0 %v5810
        %6175 = vmatprep.subr.bf16.mxu0 0
        %6176 = vmatpush1.bf16.msra.mxu0 %v5811
        %6177 = vmatprep.subr.bf16.mxu0 0
        %6178 = vmatpush1.bf16.msra.mxu0 %v5812
        %6179 = vmatprep.subr.bf16.mxu0 0
        %6180 = vmatpush1.bf16.msra.mxu0 %v5813
        %6181 = vmatprep.subr.bf16.mxu0 0
        %6182 = vmatpush1.bf16.msra.mxu0 %v5814
        %6183 = vmatprep.subr.bf16.mxu0 0
        %6184 = vmatpush1.bf16.msra.mxu0 %v5815
        %6185 = vmatprep.subr.bf16.mxu0 0
        %6186 = vmatpush1.bf16.msra.mxu0 %v5816
        %6187 = vmatprep.subr.bf16.mxu0 0
        %6188 = vmatpush1.bf16.msra.mxu0 %v5817
        %6189 = vmatprep.subr.bf16.mxu0 0
        %6190 = vmatpush1.bf16.msra.mxu0 %v5818
        %6191 = vmatprep.mubr.bf16.mxu0 %v4957
        %6192 = vmatmul.mubr.bf16.gmra.mrb[0].mxu0 %v4956
        %v6193 = vpop.f32.mrb[0].mxu0
        %v6194 = vadd.f32 %v6153, %v6193
        %v6195 = vpop.f32.mrb[0].mxu0
        %v6196 = vpop.f32.mrb[0].mxu0
        %v6197 = vadd.f32 %v6156, %v6196
        %v6198 = vpop.f32.mrb[0].mxu0
        %6199 = vdwg.mxu0
        %6200 = vmatprep.subr.bf16.mxu0 0
        %6201 = vmatpush1.bf16.msra.mxu0 %v5819
        %6202 = vmatprep.subr.bf16.mxu0 0
        %6203 = vmatpush1.bf16.msra.mxu0 %v5820
        %6204 = vmatprep.subr.bf16.mxu0 0
        %6205 = vmatpush1.bf16.msra.mxu0 %v5821
        %6206 = vmatprep.subr.bf16.mxu0 0
        %6207 = vmatpush1.bf16.msra.mxu0 %v5822
        %6208 = vmatprep.subr.bf16.mxu0 0
        %6209 = vmatpush1.bf16.msra.mxu0 %v5823
        %6210 = vmatprep.subr.bf16.mxu0 0
        %6211 = vmatpush1.bf16.msra.mxu0 %v5824
        %6212 = vmatprep.subr.bf16.mxu0 0
        %6213 = vmatpush1.bf16.msra.mxu0 %v5825
        %6214 = vmatprep.subr.bf16.mxu0 0
        %6215 = vmatpush1.bf16.msra.mxu0 %v5826
        %6216 = vmatprep.subr.bf16.mxu0 0
        %6217 = vmatpush1.bf16.msra.mxu0 %v5827
        %6218 = vmatprep.subr.bf16.mxu0 0
        %6219 = vmatpush1.bf16.msra.mxu0 %v5828
        %6220 = vmatprep.subr.bf16.mxu0 0
        %6221 = vmatpush1.bf16.msra.mxu0 %v5829
        %6222 = vmatprep.subr.bf16.mxu0 0
        %6223 = vmatpush1.bf16.msra.mxu0 %v5830
        %6224 = vmatprep.subr.bf16.mxu0 0
        %6225 = vmatpush1.bf16.msra.mxu0 %v5831
        %6226 = vmatprep.subr.bf16.mxu0 0
        %6227 = vmatpush1.bf16.msra.mxu0 %v5832
        %6228 = vmatprep.subr.bf16.mxu0 0
        %6229 = vmatpush1.bf16.msra.mxu0 %v5833
        %6230 = vmatprep.subr.bf16.mxu0 0
        %6231 = vmatpush1.bf16.msra.mxu0 %v5834
        %6232 = vmatprep.mubr.bf16.mxu0 %v4959
        %6233 = vmatmul.mubr.bf16.gmra.mrb[0].mxu0 %v4958
        %v6234 = vpop.f32.mrb[0].mxu0
        %v6235 = vadd.f32 %v6194, %v6234
        %v6236 = vpop.f32.mrb[0].mxu0
        %v6237 = vpop.f32.mrb[0].mxu0
        %v6238 = vadd.f32 %v6197, %v6237
        %v6239 = vpop.f32.mrb[0].mxu0
        %6240 = vdwg.mxu0
        %6241 = vmatprep.subr.bf16.mxu0 0
        %6242 = vmatpush1.bf16.msra.mxu0 %v5835
        %6243 = vmatprep.subr.bf16.mxu0 0
        %6244 = vmatpush1.bf16.msra.mxu0 %v5836
        %6245 = vmatprep.subr.bf16.mxu0 0
        %6246 = vmatpush1.bf16.msra.mxu0 %v5837
        %6247 = vmatprep.subr.bf16.mxu0 0
        %6248 = vmatpush1.bf16.msra.mxu0 %v5838
        %6249 = vmatprep.subr.bf16.mxu0 0
        %6250 = vmatpush1.bf16.msra.mxu0 %v5839
        %6251 = vmatprep.subr.bf16.mxu0 0
        %6252 = vmatpush1.bf16.msra.mxu0 %v5840
        %6253 = vmatprep.subr.bf16.mxu0 0
        %6254 = vmatpush1.bf16.msra.mxu0 %v5841
        %6255 = vmatprep.subr.bf16.mxu0 0
        %6256 = vmatpush1.bf16.msra.mxu0 %v5842
        %6257 = vmatprep.subr.bf16.mxu0 0
        %6258 = vmatpush1.bf16.msra.mxu0 %v5843
        %6259 = vmatprep.subr.bf16.mxu0 0
        %6260 = vmatpush1.bf16.msra.mxu0 %v5844
        %6261 = vmatprep.subr.bf16.mxu0 0
        %6262 = vmatpush1.bf16.msra.mxu0 %v5845
        %6263 = vmatprep.subr.bf16.mxu0 0
        %6264 = vmatpush1.bf16.msra.mxu0 %v5846
        %6265 = vmatprep.subr.bf16.mxu0 0
        %6266 = vmatpush1.bf16.msra.mxu0 %v5847
        %6267 = vmatprep.subr.bf16.mxu0 0
        %6268 = vmatpush1.bf16.msra.mxu0 %v5848
        %6269 = vmatprep.subr.bf16.mxu0 0
        %6270 = vmatpush1.bf16.msra.mxu0 %v5849
        %6271 = vmatprep.subr.bf16.mxu0 0
        %6272 = vmatpush1.bf16.msra.mxu0 %v5850
        %6273 = vmatprep.mubr.bf16.mxu0 %v4961
        %6274 = vmatmul.mubr.bf16.gmra.mrb[0].mxu0 %v4960
        %v6275 = vpop.f32.mrb[0].mxu0
        %v6276 = vadd.f32 %v6235, %v6275
        %v6277 = vpop.f32.mrb[0].mxu0
        %v6278 = vpop.f32.mrb[0].mxu0
        %v6279 = vadd.f32 %v6238, %v6278
        %v6280 = vpop.f32.mrb[0].mxu0
        %6281 = vdwg.mxu0
        %6282 = vmatprep.subr.bf16.mxu0 0
        %6283 = vmatpush1.bf16.msra.mxu0 %v5851
        %6284 = vmatprep.subr.bf16.mxu0 0
        %6285 = vmatpush1.bf16.msra.mxu0 %v5852
        %6286 = vmatprep.subr.bf16.mxu0 0
        %6287 = vmatpush1.bf16.msra.mxu0 %v5853
        %6288 = vmatprep.subr.bf16.mxu0 0
        %6289 = vmatpush1.bf16.msra.mxu0 %v5854
        %6290 = vmatprep.subr.bf16.mxu0 0
        %6291 = vmatpush1.bf16.msra.mxu0 %v5855
        %6292 = vmatprep.subr.bf16.mxu0 0
        %6293 = vmatpush1.bf16.msra.mxu0 %v5856
        %6294 = vmatprep.subr.bf16.mxu0 0
        %6295 = vmatpush1.bf16.msra.mxu0 %v5857
        %6296 = vmatprep.subr.bf16.mxu0 0
        %6297 = vmatpush1.bf16.msra.mxu0 %v5858
        %6298 = vmatprep.subr.bf16.mxu0 0
        %6299 = vmatpush1.bf16.msra.mxu0 %v5859
        %6300 = vmatprep.subr.bf16.mxu0 0
        %6301 = vmatpush1.bf16.msra.mxu0 %v5860
        %6302 = vmatprep.subr.bf16.mxu0 0
        %6303 = vmatpush1.bf16.msra.mxu0 %v5861
        %6304 = vmatprep.subr.bf16.mxu0 0
        %6305 = vmatpush1.bf16.msra.mxu0 %v5862
        %6306 = vmatprep.subr.bf16.mxu0 0
        %6307 = vmatpush1.bf16.msra.mxu0 %v5863
        %6308 = vmatprep.subr.bf16.mxu0 0
        %6309 = vmatpush1.bf16.msra.mxu0 %v5864
        %6310 = vmatprep.subr.bf16.mxu0 0
        %6311 = vmatpush1.bf16.msra.mxu0 %v5865
        %6312 = vmatprep.subr.bf16.mxu0 0
        %6313 = vmatpush1.bf16.msra.mxu0 %v5866
        %6314 = vmatprep.mubr.bf16.mxu0 %v4963
        %6315 = vmatmul.mubr.bf16.gmra.mrb[0].mxu0 %v4962
        %v6316 = vpop.f32.mrb[0].mxu0
        %v6317 = vadd.f32 %v6276, %v6316
        %v6318 = vpop.f32.mrb[0].mxu0
        %v6319 = vpop.f32.mrb[0].mxu0
        %v6320 = vadd.f32 %v6279, %v6319
        %v6321 = vpop.f32.mrb[0].mxu0
        %6322 = vdwg.mxu0
        %v6323 = vadd.f32 %v4385, %v6317
        %v6324 = vadd.f32 %v4386, %v6320
        %v6325 = vld [vmem:[%s10] sm:$0x1]
        %v6326 = vld [vmem:[%s11] sm:$0x1]
        %v6327 = vsel %vm686, %v6323, 0.0
        %6328 = vadd.xlane.f32.xlu0 %v6327
        %v6329 = vpop.xlane.xlu0 %6328
        %v6330 = vsel %vm686, %v6324, 0.0
        %6331 = vadd.xlane.f32.xlu0 %v6330
        %v6332 = vpop.xlane.xlu0 %6331
        %v6333 = vmul.f32 %v6329, %v4350
        %v6334 = vmul.f32 %v6332, %v4350
        %v6335 = vsub.f32 %v6323, %v6333
        %v6336 = vsub.f32 %v6324, %v6334
        %v6337 = vmul.f32 %v6335, %v6335
        %v6338 = vmul.f32 %v6336, %v6336
        %v6339 = vsel %vm686, %v6337, 0.0
        %6340 = vadd.xlane.f32.xlu0 %v6339
        %v6341 = vpop.xlane.xlu0 %6340
        %v6342 = vsel %vm686, %v6338, 0.0
        %6343 = vadd.xlane.f32.xlu0 %v6342
        %v6344 = vpop.xlane.xlu0 %6343
        %v6345 = vmul.f32 %v6341, %v4350
        %v6346 = vmul.f32 %v6344, %v4350
        %v6347 = vadd.f32 %v6345, 1e-05
        %v6348 = vadd.f32 %v6346, 1e-05
        %v6349 = vrsqrt.pop %v6347
        %v6350 = vrsqrt.pop %v6348
        %v6351 = vmul.f32 %v6335, %v6349
        %v6352 = vmul.f32 %v6336, %v6350
        %v6354 = vlaneseq
        %v6355 = vshrl.u32 %v6354, 7
        %v6356 = vsub.s32 0, %v6355
        %v6357 = vrot.slane %v6325, %v6356
        %v6359 = vmul.f32 %v6351, %v6357
        %v6360 = vmul.f32 %v6352, %v6357
        %v6362 = vlaneseq
        %v6363 = vshrl.u32 %v6362, 7
        %v6364 = vsub.s32 0, %v6363
        %v6365 = vrot.slane %v6326, %v6364
        %v6367 = vadd.f32 %v6359, %v6365
        %v6368 = vadd.f32 %v6360, %v6365
        %s6369 = scalar_lea.vmem %s4, 8
        %v6370 = vld [vmem:[%s6369] sm:$0xff]
        %s6371 = scalar_lea.vmem %s5, 1
        %v6372 = vld [vmem:[%s6371] sm:$0x1]
        %v6374 = vlaneseq
        %v6375 = vshrl.u32 %v6374, 7
        %v6376 = vsub.s32 0, %v6375
        %v6377 = vrot.slane %v6372, %v6376
        %v6380 = vsel %vm686, %v6367, 0
        %v6383 = vsel %vm686, %v6368, 0
        %6385 = vmatprep.subr.mxu0 0.0
        %6386 = vmatpush1.msra.mxu0 %v6370
        %6387 = vmatprep.subr.mxu0 0.0
        %6388 = vmatpush1.msra.mxu0 0.0
        %6389 = vmatprep.subr.mxu0 0.0
        %6390 = vmatpush1.msra.mxu0 0.0
        %6391 = vmatprep.subr.mxu0 0.0
        %6392 = vmatpush1.msra.mxu0 0.0
        %6393 = vmatprep.subr.mxu0 0.0
        %6394 = vmatpush1.msra.mxu0 0.0
        %6395 = vmatprep.subr.mxu0 0.0
        %6396 = vmatpush1.msra.mxu0 0.0
        %6397 = vmatprep.subr.mxu0 0.0
        %6398 = vmatpush1.msra.mxu0 0.0
        %6399 = vmatprep.subr.mxu0 0.0
        %6400 = vmatpush1.msra.mxu0 0.0
        %6401 = vmatprep.subr.mxu0 0.0
        %6402 = vmatpush1.msra.mxu0 0.0
        %6403 = vmatprep.subr.mxu0 0.0
        %6404 = vmatpush1.msra.mxu0 0.0
        %6405 = vmatprep.subr.mxu0 0.0
        %6406 = vmatpush1.msra.mxu0 0.0
        %6407 = vmatprep.subr.mxu0 0.0
        %6408 = vmatpush1.msra.mxu0 0.0
        %6409 = vmatprep.subr.mxu0 0.0
        %6410 = vmatpush1.msra.mxu0 0.0
        %6411 = vmatprep.subr.mxu0 0.0
        %6412 = vmatpush1.msra.mxu0 0.0
        %6413 = vmatprep.subr.mxu0 0.0
        %6414 = vmatpush1.msra.mxu0 0.0
        %6415 = vmatprep.subr.mxu0 0.0
        %6416 = vmatpush1.msra.mxu0 0.0
        %6417 = vmatprep.subr.mxu0 0.0
        %6418 = vmatpush1.msra.mxu0 0.0
        %6419 = vmatprep.subr.mxu0 0.0
        %6420 = vmatpush1.msra.mxu0 0.0
        %6421 = vmatprep.subr.mxu0 0.0
        %6422 = vmatpush1.msra.mxu0 0.0
        %6423 = vmatprep.subr.mxu0 0.0
        %6424 = vmatpush1.msra.mxu0 0.0
        %6425 = vmatprep.subr.mxu0 0.0
        %6426 = vmatpush1.msra.mxu0 0.0
        %6427 = vmatprep.subr.mxu0 0.0
        %6428 = vmatpush1.msra.mxu0 0.0
        %6429 = vmatprep.subr.mxu0 0.0
        %6430 = vmatpush1.msra.mxu0 0.0
        %6431 = vmatprep.subr.mxu0 0.0
        %6432 = vmatpush1.msra.mxu0 0.0
        %6433 = vmatprep.subr.mxu0 0.0
        %6434 = vmatpush1.msra.mxu0 0.0
        %6435 = vmatprep.subr.mxu0 0.0
        %6436 = vmatpush1.msra.mxu0 0.0
        %6437 = vmatprep.subr.mxu0 0.0
        %6438 = vmatpush1.msra.mxu0 0.0
        %6439 = vmatprep.subr.mxu0 0.0
        %6440 = vmatpush1.msra.mxu0 0.0
        %6441 = vmatprep.subr.mxu0 0.0
        %6442 = vmatpush1.msra.mxu0 0.0
        %6443 = vmatprep.subr.mxu0 0.0
        %6444 = vmatpush1.msra.mxu0 0.0
        %6445 = vmatprep.subr.mxu0 0.0
        %6446 = vmatpush1.msra.mxu0 0.0
        %6447 = vmatprep.subr.mxu0 0.0
        %6448 = vmatpush1.msra.mxu0 0.0
        %6449 = vmatprep.mubr.f32.mxu0 0.0
        %6450 = vmatmul.mubr.f32.gmra.mrb[0].mxu0 %v6380
        %v6451 = vpop.f32.mrb[0].mxu0
        %v6452 = vadd.f32 %v6377, %v6451
        %v6453 = vpop.f32.mrb[0].mxu0
        %6454 = vmatprep.mubr.f32.mxu0 0.0
        %6455 = vmatmul.mubr.f32.gmra.mrb[0].mxu0 %v6383
        %v6456 = vpop.f32.mrb[0].mxu0
        %v6457 = vadd.f32 %v6377, %v6456
        %v6458 = vpop.f32.mrb[0].mxu0
        %6459 = vdwg.mxu0
        %v6460 = vmul.f32 %v6452, 0.70710677
        %v6461 = vmul.f32 %v6457, 0.70710677
        %v6464 = vcombine.high %v6460, %v6460
        %v6466 = vunpack.c.l.s4 1966171168
        %v6467 = vunpack.c.0.s8 %v6466
        %v6468 = vlaneseq
        %v6469 = vshrl.u32 %v6468, 7
        %v6470 = vsub.s32 %v6467, %v6469
        %v6471 = vrot.slane %v6460, %v6470
        %v6473 = vunpack.c.l.s4 1966171168
        %v6474 = vunpack.c.0.s8 %v6473
        %v6475 = vlaneseq
        %v6476 = vshrl.u32 %v6475, 7
        %v6477 = vsub.s32 %v6474, %v6476
        %v6478 = vrot.slane %v6464, %v6477
        %v6479 = vcombine.high %v6471, %v6471
        %v6480 = vcombine.high %v6478, %v6478
        %v6482 = vunpack.c.l.s4 1966171168
        %v6483 = vunpack.c.0.s8 %v6482
        %v6484 = vlaneseq
        %v6485 = vshrl.u32 %v6484, 7
        %v6486 = vsub.s32 %v6483, %v6485
        %v6487 = vrot.slane %v6471, %v6486
        %v6489 = vunpack.c.l.s4 1966171168
        %v6490 = vunpack.c.0.s8 %v6489
        %v6491 = vlaneseq
        %v6492 = vshrl.u32 %v6491, 7
        %v6493 = vsub.s32 %v6490, %v6492
        %v6494 = vrot.slane %v6478, %v6493
        %v6496 = vunpack.c.l.s4 1966171168
        %v6497 = vunpack.c.0.s8 %v6496
        %v6498 = vlaneseq
        %v6499 = vshrl.u32 %v6498, 7
        %v6500 = vsub.s32 %v6497, %v6499
        %v6501 = vrot.slane %v6479, %v6500
        %v6503 = vunpack.c.l.s4 1966171168
        %v6504 = vunpack.c.0.s8 %v6503
        %v6505 = vlaneseq
        %v6506 = vshrl.u32 %v6505, 7
        %v6507 = vsub.s32 %v6504, %v6506
        %v6508 = vrot.slane %v6480, %v6507
        %v6509 = vcombine.high %v6487, %v6487
        %v6510 = vcombine.high %v6494, %v6494
        %v6511 = vcombine.high %v6501, %v6501
        %v6512 = vcombine.high %v6508, %v6508
        %v6513 = vcombine.high %v6461, %v6461
        %v6515 = vunpack.c.l.s4 1966171168
        %v6516 = vunpack.c.0.s8 %v6515
        %v6517 = vlaneseq
        %v6518 = vshrl.u32 %v6517, 7
        %v6519 = vsub.s32 %v6516, %v6518
        %v6520 = vrot.slane %v6461, %v6519
        %v6522 = vunpack.c.l.s4 1966171168
        %v6523 = vunpack.c.0.s8 %v6522
        %v6524 = vlaneseq
        %v6525 = vshrl.u32 %v6524, 7
        %v6526 = vsub.s32 %v6523, %v6525
        %v6527 = vrot.slane %v6513, %v6526
        %v6528 = vcombine.high %v6520, %v6520
        %v6529 = vcombine.high %v6527, %v6527
        %v6531 = vunpack.c.l.s4 1966171168
        %v6532 = vunpack.c.0.s8 %v6531
        %v6533 = vlaneseq
        %v6534 = vshrl.u32 %v6533, 7
        %v6535 = vsub.s32 %v6532, %v6534
        %v6536 = vrot.slane %v6520, %v6535
        %v6538 = vunpack.c.l.s4 1966171168
        %v6539 = vunpack.c.0.s8 %v6538
        %v6540 = vlaneseq
        %v6541 = vshrl.u32 %v6540, 7
        %v6542 = vsub.s32 %v6539, %v6541
        %v6543 = vrot.slane %v6527, %v6542
        %v6545 = vunpack.c.l.s4 1966171168
        %v6546 = vunpack.c.0.s8 %v6545
        %v6547 = vlaneseq
        %v6548 = vshrl.u32 %v6547, 7
        %v6549 = vsub.s32 %v6546, %v6548
        %v6550 = vrot.slane %v6528, %v6549
        %v6552 = vunpack.c.l.s4 1966171168
        %v6553 = vunpack.c.0.s8 %v6552
        %v6554 = vlaneseq
        %v6555 = vshrl.u32 %v6554, 7
        %v6556 = vsub.s32 %v6553, %v6555
        %v6557 = vrot.slane %v6529, %v6556
        %v6558 = vcombine.high %v6536, %v6536
        %v6559 = vcombine.high %v6543, %v6543
        %v6560 = vcombine.high %v6550, %v6550
        %v6561 = vcombine.high %v6557, %v6557
        %v6562 = vlaneseq
        %v6563 = vshrl.u32 %v6562, 7
        %v6564 = vsub.s32 0, %v6563
        %v6565 = vrot.slane %v6487, %v6564
        %v6566 = vlaneseq
        %v6567 = vshrl.u32 %v6566, 7
        %v6568 = vsub.s32 0, %v6567
        %v6569 = vrot.slane %v6501, %v6568
        %v6570 = vlaneseq
        %v6571 = vshrl.u32 %v6570, 7
        %v6572 = vsub.s32 0, %v6571
        %v6573 = vrot.slane %v6509, %v6572
        %v6574 = vlaneseq
        %v6575 = vshrl.u32 %v6574, 7
        %v6576 = vsub.s32 0, %v6575
        %v6577 = vrot.slane %v6511, %v6576
        %v6578 = vlaneseq
        %v6579 = vshrl.u32 %v6578, 7
        %v6580 = vsub.s32 0, %v6579
        %v6581 = vrot.slane %v6494, %v6580
        %v6582 = vlaneseq
        %v6583 = vshrl.u32 %v6582, 7
        %v6584 = vsub.s32 0, %v6583
        %v6585 = vrot.slane %v6508, %v6584
        %v6586 = vlaneseq
        %v6587 = vshrl.u32 %v6586, 7
        %v6588 = vsub.s32 0, %v6587
        %v6589 = vrot.slane %v6510, %v6588
        %v6590 = vlaneseq
        %v6591 = vshrl.u32 %v6590, 7
        %v6592 = vsub.s32 0, %v6591
        %v6593 = vrot.slane %v6512, %v6592
        %v6594 = vlaneseq
        %v6595 = vshrl.u32 %v6594, 7
        %v6596 = vsub.s32 0, %v6595
        %v6597 = vrot.slane %v6536, %v6596
        %v6598 = vlaneseq
        %v6599 = vshrl.u32 %v6598, 7
        %v6600 = vsub.s32 0, %v6599
        %v6601 = vrot.slane %v6550, %v6600
        %v6602 = vlaneseq
        %v6603 = vshrl.u32 %v6602, 7
        %v6604 = vsub.s32 0, %v6603
        %v6605 = vrot.slane %v6558, %v6604
        %v6606 = vlaneseq
        %v6607 = vshrl.u32 %v6606, 7
        %v6608 = vsub.s32 0, %v6607
        %v6609 = vrot.slane %v6560, %v6608
        %v6610 = vlaneseq
        %v6611 = vshrl.u32 %v6610, 7
        %v6612 = vsub.s32 0, %v6611
        %v6613 = vrot.slane %v6543, %v6612
        %v6614 = vlaneseq
        %v6615 = vshrl.u32 %v6614, 7
        %v6616 = vsub.s32 0, %v6615
        %v6617 = vrot.slane %v6557, %v6616
        %v6618 = vlaneseq
        %v6619 = vshrl.u32 %v6618, 7
        %v6620 = vsub.s32 0, %v6619
        %v6621 = vrot.slane %v6559, %v6620
        %v6622 = vlaneseq
        %v6623 = vshrl.u32 %v6622, 7
        %v6624 = vsub.s32 0, %v6623
        %v6625 = vrot.slane %v6561, %v6624
        %6644 = vrot.lane.b32.xlu0 %v6452, 120
        %v6645 = vpop.permute.xlu0 %6644
        %6646 = vrot.lane.b32.xlu0 %v6457, 120
        %v6647 = vpop.permute.xlu0 %6646
        %v6650 = vmul.f32 %v6565, %v6645
        %v6651 = vmul.f32 %v6569, %v6645
        %v6652 = vmul.f32 %v6573, %v6645
        %v6653 = vmul.f32 %v6577, %v6645
        %v6654 = vmul.f32 %v6581, %v6645
        %v6655 = vmul.f32 %v6585, %v6645
        %v6656 = vmul.f32 %v6589, %v6645
        %v6657 = vmul.f32 %v6593, %v6645
        %v6658 = vmul.f32 %v6597, %v6647
        %v6659 = vmul.f32 %v6601, %v6647
        %v6660 = vmul.f32 %v6605, %v6647
        %v6661 = vmul.f32 %v6609, %v6647
        %v6662 = vmul.f32 %v6613, %v6647
        %v6663 = vmul.f32 %v6617, %v6647
        %v6664 = vmul.f32 %v6621, %v6647
        %v6665 = vmul.f32 %v6625, %v6647
        %v6666 = vsel %vm974, %v6650, 0.0
        %6667 = vadd.xlane.f32.xlu0 %v6666
        %v6668 = vpop.xlane.xlu0 %6667
        %v6669 = vsel %vm974, %v6651, 0.0
        %6670 = vadd.xlane.f32.xlu0 %v6669
        %v6671 = vpop.xlane.xlu0 %6670
        %v6672 = vsel %vm974, %v6652, 0.0
        %6673 = vadd.xlane.f32.xlu0 %v6672
        %v6674 = vpop.xlane.xlu0 %6673
        %v6675 = vsel %vm974, %v6653, 0.0
        %6676 = vadd.xlane.f32.xlu0 %v6675
        %v6677 = vpop.xlane.xlu0 %6676
        %v6678 = vsel %vm974, %v6654, 0.0
        %6679 = vadd.xlane.f32.xlu0 %v6678
        %v6680 = vpop.xlane.xlu0 %6679
        %v6681 = vsel %vm974, %v6655, 0.0
        %6682 = vadd.xlane.f32.xlu0 %v6681
        %v6683 = vpop.xlane.xlu0 %6682
        %v6684 = vsel %vm974, %v6656, 0.0
        %6685 = vadd.xlane.f32.xlu0 %v6684
        %v6686 = vpop.xlane.xlu0 %6685
        %v6687 = vsel %vm974, %v6657, 0.0
        %6688 = vadd.xlane.f32.xlu0 %v6687
        %v6689 = vpop.xlane.xlu0 %6688
        %v6690 = vsel %vm974, %v6658, 0.0
        %6691 = vadd.xlane.f32.xlu0 %v6690
        %v6692 = vpop.xlane.xlu0 %6691
        %v6693 = vsel %vm974, %v6659, 0.0
        %6694 = vadd.xlane.f32.xlu0 %v6693
        %v6695 = vpop.xlane.xlu0 %6694
        %v6696 = vsel %vm974, %v6660, 0.0
        %6697 = vadd.xlane.f32.xlu0 %v6696
        %v6698 = vpop.xlane.xlu0 %6697
        %v6699 = vsel %vm974, %v6661, 0.0
        %6700 = vadd.xlane.f32.xlu0 %v6699
        %v6701 = vpop.xlane.xlu0 %6700
        %v6702 = vsel %vm974, %v6662, 0.0
        %6703 = vadd.xlane.f32.xlu0 %v6702
        %v6704 = vpop.xlane.xlu0 %6703
        %v6705 = vsel %vm974, %v6663, 0.0
        %6706 = vadd.xlane.f32.xlu0 %v6705
        %v6707 = vpop.xlane.xlu0 %6706
        %v6708 = vsel %vm974, %v6664, 0.0
        %6709 = vadd.xlane.f32.xlu0 %v6708
        %v6710 = vpop.xlane.xlu0 %6709
        %v6711 = vsel %vm974, %v6665, 0.0
        %6712 = vadd.xlane.f32.xlu0 %v6711
        %v6713 = vpop.xlane.xlu0 %6712
        %v6730 = vlaneseq
        %v6731 = vshrl.u32 %v6730, 7
        %v6732 = vsub.s32 %v1040, %v6731
        %v6733 = vrot.slane %v6668, %v6732
        %v6734 = vlaneseq
        %v6735 = vshrl.u32 %v6734, 7
        %v6736 = vsub.s32 %v1040, %v6735
        %v6737 = vrot.slane %v6671, %v6736
        %v6738 = vlaneseq
        %v6739 = vshrl.u32 %v6738, 7
        %v6740 = vsub.s32 %v1040, %v6739
        %v6741 = vrot.slane %v6674, %v6740
        %v6742 = vlaneseq
        %v6743 = vshrl.u32 %v6742, 7
        %v6744 = vsub.s32 %v1040, %v6743
        %v6745 = vrot.slane %v6677, %v6744
        %v6746 = vlaneseq
        %v6747 = vshrl.u32 %v6746, 7
        %v6748 = vsub.s32 %v1040, %v6747
        %v6749 = vrot.slane %v6680, %v6748
        %v6750 = vlaneseq
        %v6751 = vshrl.u32 %v6750, 7
        %v6752 = vsub.s32 %v1040, %v6751
        %v6753 = vrot.slane %v6683, %v6752
        %v6754 = vlaneseq
        %v6755 = vshrl.u32 %v6754, 7
        %v6756 = vsub.s32 %v1040, %v6755
        %v6757 = vrot.slane %v6686, %v6756
        %v6758 = vlaneseq
        %v6759 = vshrl.u32 %v6758, 7
        %v6760 = vsub.s32 %v1040, %v6759
        %v6761 = vrot.slane %v6689, %v6760
        %v6762 = vlaneseq
        %v6763 = vshrl.u32 %v6762, 7
        %v6764 = vsub.s32 %v1040, %v6763
        %v6765 = vrot.slane %v6692, %v6764
        %v6766 = vlaneseq
        %v6767 = vshrl.u32 %v6766, 7
        %v6768 = vsub.s32 %v1040, %v6767
        %v6769 = vrot.slane %v6695, %v6768
        %v6770 = vlaneseq
        %v6771 = vshrl.u32 %v6770, 7
        %v6772 = vsub.s32 %v1040, %v6771
        %v6773 = vrot.slane %v6698, %v6772
        %v6774 = vlaneseq
        %v6775 = vshrl.u32 %v6774, 7
        %v6776 = vsub.s32 %v1040, %v6775
        %v6777 = vrot.slane %v6701, %v6776
        %v6778 = vlaneseq
        %v6779 = vshrl.u32 %v6778, 7
        %v6780 = vsub.s32 %v1040, %v6779
        %v6781 = vrot.slane %v6704, %v6780
        %v6782 = vlaneseq
        %v6783 = vshrl.u32 %v6782, 7
        %v6784 = vsub.s32 %v1040, %v6783
        %v6785 = vrot.slane %v6707, %v6784
        %v6786 = vlaneseq
        %v6787 = vshrl.u32 %v6786, 7
        %v6788 = vsub.s32 %v1040, %v6787
        %v6789 = vrot.slane %v6710, %v6788
        %v6790 = vlaneseq
        %v6791 = vshrl.u32 %v6790, 7
        %v6792 = vsub.s32 %v1040, %v6791
        %v6793 = vrot.slane %v6713, %v6792
        %v6794 = vsel %vm1105, %v6737, %v6733
        %v6795 = vsel %vm1107, %v6741, %v6794
        %v6796 = vsel %vm1109, %v6745, %v6795
        %v6797 = vsel %vm1111, %v6749, %v6796
        %v6798 = vsel %vm1113, %v6753, %v6797
        %v6799 = vsel %vm1115, %v6757, %v6798
        %v6800 = vsel %vm1117, %v6761, %v6799
        %v6801 = vsel %vm1105, %v6769, %v6765
        %v6802 = vsel %vm1107, %v6773, %v6801
        %v6803 = vsel %vm1109, %v6777, %v6802
        %v6804 = vsel %vm1111, %v6781, %v6803
        %v6805 = vsel %vm1113, %v6785, %v6804
        %v6806 = vsel %vm1115, %v6789, %v6805
        %v6807 = vsel %vm1117, %v6793, %v6806
        %v6810 = vsel %vm686, %v6800, -inf
        %6811 = vmax.xlane.f32.xlu0 %v6810
        %v6812 = vpop.xlane.xlu0 %6811
        %v6813 = vsel %vm686, %v6807, -inf
        %6814 = vmax.xlane.f32.xlu0 %v6813
        %v6815 = vpop.xlane.xlu0 %6814
        %v6818 = vlaneseq
        %v6819 = vshrl.u32 %v6818, 7
        %v6820 = vsub.s32 0, %v6819
        %v6821 = vrot.slane %v6812, %v6820
        %v6822 = vlaneseq
        %v6823 = vshrl.u32 %v6822, 7
        %v6824 = vsub.s32 1, %v6823
        %v6825 = vrot.slane %v6812, %v6824
        %v6826 = vlaneseq
        %v6827 = vshrl.u32 %v6826, 7
        %v6828 = vsub.s32 2, %v6827
        %v6829 = vrot.slane %v6812, %v6828
        %v6830 = vlaneseq
        %v6831 = vshrl.u32 %v6830, 7
        %v6832 = vsub.s32 3, %v6831
        %v6833 = vrot.slane %v6812, %v6832
        %v6834 = vlaneseq
        %v6835 = vshrl.u32 %v6834, 7
        %v6836 = vsub.s32 4, %v6835
        %v6837 = vrot.slane %v6812, %v6836
        %v6838 = vlaneseq
        %v6839 = vshrl.u32 %v6838, 7
        %v6840 = vsub.s32 5, %v6839
        %v6841 = vrot.slane %v6812, %v6840
        %v6842 = vlaneseq
        %v6843 = vshrl.u32 %v6842, 7
        %v6844 = vsub.s32 6, %v6843
        %v6845 = vrot.slane %v6812, %v6844
        %v6846 = vlaneseq
        %v6847 = vshrl.u32 %v6846, 7
        %v6848 = vsub.s32 7, %v6847
        %v6849 = vrot.slane %v6812, %v6848
        %v6850 = vlaneseq
        %v6851 = vshrl.u32 %v6850, 7
        %v6852 = vsub.s32 0, %v6851
        %v6853 = vrot.slane %v6815, %v6852
        %v6854 = vlaneseq
        %v6855 = vshrl.u32 %v6854, 7
        %v6856 = vsub.s32 1, %v6855
        %v6857 = vrot.slane %v6815, %v6856
        %v6858 = vlaneseq
        %v6859 = vshrl.u32 %v6858, 7
        %v6860 = vsub.s32 2, %v6859
        %v6861 = vrot.slane %v6815, %v6860
        %v6862 = vlaneseq
        %v6863 = vshrl.u32 %v6862, 7
        %v6864 = vsub.s32 3, %v6863
        %v6865 = vrot.slane %v6815, %v6864
        %v6866 = vlaneseq
        %v6867 = vshrl.u32 %v6866, 7
        %v6868 = vsub.s32 4, %v6867
        %v6869 = vrot.slane %v6815, %v6868
        %v6870 = vlaneseq
        %v6871 = vshrl.u32 %v6870, 7
        %v6872 = vsub.s32 5, %v6871
        %v6873 = vrot.slane %v6815, %v6872
        %v6874 = vlaneseq
        %v6875 = vshrl.u32 %v6874, 7
        %v6876 = vsub.s32 6, %v6875
        %v6877 = vrot.slane %v6815, %v6876
        %v6878 = vlaneseq
        %v6879 = vshrl.u32 %v6878, 7
        %v6880 = vsub.s32 7, %v6879
        %v6881 = vrot.slane %v6815, %v6880
        %v6898 = vsub.f32 %v6668, %v6821
        %v6899 = vsub.f32 %v6671, %v6825
        %v6900 = vsub.f32 %v6674, %v6829
        %v6901 = vsub.f32 %v6677, %v6833
        %v6902 = vsub.f32 %v6680, %v6837
        %v6903 = vsub.f32 %v6683, %v6841
        %v6904 = vsub.f32 %v6686, %v6845
        %v6905 = vsub.f32 %v6689, %v6849
        %v6906 = vsub.f32 %v6692, %v6853
        %v6907 = vsub.f32 %v6695, %v6857
        %v6908 = vsub.f32 %v6698, %v6861
        %v6909 = vsub.f32 %v6701, %v6865
        %v6910 = vsub.f32 %v6704, %v6869
        %v6911 = vsub.f32 %v6707, %v6873
        %v6912 = vsub.f32 %v6710, %v6877
        %v6913 = vsub.f32 %v6713, %v6881
        %v6914 = vmul.f32 %v6898, 1.442695
        %v6915 = vpow.pop %v6914
        %v6916 = vmul.f32 %v6899, 1.442695
        %v6917 = vpow.pop %v6916
        %v6918 = vmul.f32 %v6900, 1.442695
        %v6919 = vpow.pop %v6918
        %v6920 = vmul.f32 %v6901, 1.442695
        %v6921 = vpow.pop %v6920
        %v6922 = vmul.f32 %v6902, 1.442695
        %v6923 = vpow.pop %v6922
        %v6924 = vmul.f32 %v6903, 1.442695
        %v6925 = vpow.pop %v6924
        %v6926 = vmul.f32 %v6904, 1.442695
        %v6927 = vpow.pop %v6926
        %v6928 = vmul.f32 %v6905, 1.442695
        %v6929 = vpow.pop %v6928
        %v6930 = vmul.f32 %v6906, 1.442695
        %v6931 = vpow.pop %v6930
        %v6932 = vmul.f32 %v6907, 1.442695
        %v6933 = vpow.pop %v6932
        %v6934 = vmul.f32 %v6908, 1.442695
        %v6935 = vpow.pop %v6934
        %v6936 = vmul.f32 %v6909, 1.442695
        %v6937 = vpow.pop %v6936
        %v6938 = vmul.f32 %v6910, 1.442695
        %v6939 = vpow.pop %v6938
        %v6940 = vmul.f32 %v6911, 1.442695
        %v6941 = vpow.pop %v6940
        %v6942 = vmul.f32 %v6912, 1.442695
        %v6943 = vpow.pop %v6942
        %v6944 = vmul.f32 %v6913, 1.442695
        %v6945 = vpow.pop %v6944
        %6962 = vset.pattern.permute.xlu0 0
        %6963 = vperm.xlu0 %6962, %v6915
        %v6964 = vpop.permute.xlu0 %6963
        %6965 = vset.pattern.permute.xlu0 0
        %6966 = vperm.xlu0 %6965, %v6917
        %v6967 = vpop.permute.xlu0 %6966
        %6968 = vset.pattern.permute.xlu0 0
        %6969 = vperm.xlu0 %6968, %v6919
        %v6970 = vpop.permute.xlu0 %6969
        %6971 = vset.pattern.permute.xlu0 0
        %6972 = vperm.xlu0 %6971, %v6921
        %v6973 = vpop.permute.xlu0 %6972
        %6974 = vset.pattern.permute.xlu0 0
        %6975 = vperm.xlu0 %6974, %v6923
        %v6976 = vpop.permute.xlu0 %6975
        %6977 = vset.pattern.permute.xlu0 0
        %6978 = vperm.xlu0 %6977, %v6925
        %v6979 = vpop.permute.xlu0 %6978
        %6980 = vset.pattern.permute.xlu0 0
        %6981 = vperm.xlu0 %6980, %v6927
        %v6982 = vpop.permute.xlu0 %6981
        %6983 = vset.pattern.permute.xlu0 0
        %6984 = vperm.xlu0 %6983, %v6929
        %v6985 = vpop.permute.xlu0 %6984
        %6986 = vset.pattern.permute.xlu0 0
        %6987 = vperm.xlu0 %6986, %v6931
        %v6988 = vpop.permute.xlu0 %6987
        %6989 = vset.pattern.permute.xlu0 0
        %6990 = vperm.xlu0 %6989, %v6933
        %v6991 = vpop.permute.xlu0 %6990
        %6992 = vset.pattern.permute.xlu0 0
        %6993 = vperm.xlu0 %6992, %v6935
        %v6994 = vpop.permute.xlu0 %6993
        %6995 = vset.pattern.permute.xlu0 0
        %6996 = vperm.xlu0 %6995, %v6937
        %v6997 = vpop.permute.xlu0 %6996
        %6998 = vset.pattern.permute.xlu0 0
        %6999 = vperm.xlu0 %6998, %v6939
        %v7000 = vpop.permute.xlu0 %6999
        %7001 = vset.pattern.permute.xlu0 0
        %7002 = vperm.xlu0 %7001, %v6941
        %v7003 = vpop.permute.xlu0 %7002
        %7004 = vset.pattern.permute.xlu0 0
        %7005 = vperm.xlu0 %7004, %v6943
        %v7006 = vpop.permute.xlu0 %7005
        %7007 = vset.pattern.permute.xlu0 0
        %7008 = vperm.xlu0 %7007, %v6945
        %v7009 = vpop.permute.xlu0 %7008
        %v7010 = vlaneseq
        %v7011 = vshrl.u32 %v7010, 7
        %v7012 = vsub.s32 %v1040, %v7011
        %v7013 = vrot.slane %v6964, %v7012
        %v7014 = vlaneseq
        %v7015 = vshrl.u32 %v7014, 7
        %v7016 = vsub.s32 %v1040, %v7015
        %v7017 = vrot.slane %v6967, %v7016
        %v7018 = vlaneseq
        %v7019 = vshrl.u32 %v7018, 7
        %v7020 = vsub.s32 %v1040, %v7019
        %v7021 = vrot.slane %v6970, %v7020
        %v7022 = vlaneseq
        %v7023 = vshrl.u32 %v7022, 7
        %v7024 = vsub.s32 %v1040, %v7023
        %v7025 = vrot.slane %v6973, %v7024
        %v7026 = vlaneseq
        %v7027 = vshrl.u32 %v7026, 7
        %v7028 = vsub.s32 %v1040, %v7027
        %v7029 = vrot.slane %v6976, %v7028
        %v7030 = vlaneseq
        %v7031 = vshrl.u32 %v7030, 7
        %v7032 = vsub.s32 %v1040, %v7031
        %v7033 = vrot.slane %v6979, %v7032
        %v7034 = vlaneseq
        %v7035 = vshrl.u32 %v7034, 7
        %v7036 = vsub.s32 %v1040, %v7035
        %v7037 = vrot.slane %v6982, %v7036
        %v7038 = vlaneseq
        %v7039 = vshrl.u32 %v7038, 7
        %v7040 = vsub.s32 %v1040, %v7039
        %v7041 = vrot.slane %v6985, %v7040
        %v7042 = vlaneseq
        %v7043 = vshrl.u32 %v7042, 7
        %v7044 = vsub.s32 %v1040, %v7043
        %v7045 = vrot.slane %v6988, %v7044
        %v7046 = vlaneseq
        %v7047 = vshrl.u32 %v7046, 7
        %v7048 = vsub.s32 %v1040, %v7047
        %v7049 = vrot.slane %v6991, %v7048
        %v7050 = vlaneseq
        %v7051 = vshrl.u32 %v7050, 7
        %v7052 = vsub.s32 %v1040, %v7051
        %v7053 = vrot.slane %v6994, %v7052
        %v7054 = vlaneseq
        %v7055 = vshrl.u32 %v7054, 7
        %v7056 = vsub.s32 %v1040, %v7055
        %v7057 = vrot.slane %v6997, %v7056
        %v7058 = vlaneseq
        %v7059 = vshrl.u32 %v7058, 7
        %v7060 = vsub.s32 %v1040, %v7059
        %v7061 = vrot.slane %v7000, %v7060
        %v7062 = vlaneseq
        %v7063 = vshrl.u32 %v7062, 7
        %v7064 = vsub.s32 %v1040, %v7063
        %v7065 = vrot.slane %v7003, %v7064
        %v7066 = vlaneseq
        %v7067 = vshrl.u32 %v7066, 7
        %v7068 = vsub.s32 %v1040, %v7067
        %v7069 = vrot.slane %v7006, %v7068
        %v7070 = vlaneseq
        %v7071 = vshrl.u32 %v7070, 7
        %v7072 = vsub.s32 %v1040, %v7071
        %v7073 = vrot.slane %v7009, %v7072
        %v7074 = vsel %vm1105, %v7017, %v7013
        %v7075 = vsel %vm1107, %v7021, %v7074
        %v7076 = vsel %vm1109, %v7025, %v7075
        %v7077 = vsel %vm1111, %v7029, %v7076
        %v7078 = vsel %vm1113, %v7033, %v7077
        %v7079 = vsel %vm1115, %v7037, %v7078
        %v7080 = vsel %vm1117, %v7041, %v7079
        %v7081 = vsel %vm1105, %v7049, %v7045
        %v7082 = vsel %vm1107, %v7053, %v7081
        %v7083 = vsel %vm1109, %v7057, %v7082
        %v7084 = vsel %vm1111, %v7061, %v7083
        %v7085 = vsel %vm1113, %v7065, %v7084
        %v7086 = vsel %vm1115, %v7069, %v7085
        %v7087 = vsel %vm1117, %v7073, %v7086
        %v7090 = vsel %vm686, %v7080, 0.0
        %7091 = vadd.xlane.f32.xlu0 %v7090
        %v7092 = vpop.xlane.xlu0 %7091
        %v7093 = vsel %vm686, %v7087, 0.0
        %7094 = vadd.xlane.f32.xlu0 %v7093
        %v7095 = vpop.xlane.xlu0 %7094
        %v7096 = vrcp.pop %v7092
        %v7097 = vrcp.pop %v7095
        %v7100 = vlaneseq
        %v7101 = vshrl.u32 %v7100, 7
        %v7102 = vsub.s32 0, %v7101
        %v7103 = vrot.slane %v7096, %v7102
        %v7104 = vlaneseq
        %v7105 = vshrl.u32 %v7104, 7
        %v7106 = vsub.s32 1, %v7105
        %v7107 = vrot.slane %v7096, %v7106
        %v7108 = vlaneseq
        %v7109 = vshrl.u32 %v7108, 7
        %v7110 = vsub.s32 2, %v7109
        %v7111 = vrot.slane %v7096, %v7110
        %v7112 = vlaneseq
        %v7113 = vshrl.u32 %v7112, 7
        %v7114 = vsub.s32 3, %v7113
        %v7115 = vrot.slane %v7096, %v7114
        %v7116 = vlaneseq
        %v7117 = vshrl.u32 %v7116, 7
        %v7118 = vsub.s32 4, %v7117
        %v7119 = vrot.slane %v7096, %v7118
        %v7120 = vlaneseq
        %v7121 = vshrl.u32 %v7120, 7
        %v7122 = vsub.s32 5, %v7121
        %v7123 = vrot.slane %v7096, %v7122
        %v7124 = vlaneseq
        %v7125 = vshrl.u32 %v7124, 7
        %v7126 = vsub.s32 6, %v7125
        %v7127 = vrot.slane %v7096, %v7126
        %v7128 = vlaneseq
        %v7129 = vshrl.u32 %v7128, 7
        %v7130 = vsub.s32 7, %v7129
        %v7131 = vrot.slane %v7096, %v7130
        %v7132 = vlaneseq
        %v7133 = vshrl.u32 %v7132, 7
        %v7134 = vsub.s32 0, %v7133
        %v7135 = vrot.slane %v7097, %v7134
        %v7136 = vlaneseq
        %v7137 = vshrl.u32 %v7136, 7
        %v7138 = vsub.s32 1, %v7137
        %v7139 = vrot.slane %v7097, %v7138
        %v7140 = vlaneseq
        %v7141 = vshrl.u32 %v7140, 7
        %v7142 = vsub.s32 2, %v7141
        %v7143 = vrot.slane %v7097, %v7142
        %v7144 = vlaneseq
        %v7145 = vshrl.u32 %v7144, 7
        %v7146 = vsub.s32 3, %v7145
        %v7147 = vrot.slane %v7097, %v7146
        %v7148 = vlaneseq
        %v7149 = vshrl.u32 %v7148, 7
        %v7150 = vsub.s32 4, %v7149
        %v7151 = vrot.slane %v7097, %v7150
        %v7152 = vlaneseq
        %v7153 = vshrl.u32 %v7152, 7
        %v7154 = vsub.s32 5, %v7153
        %v7155 = vrot.slane %v7097, %v7154
        %v7156 = vlaneseq
        %v7157 = vshrl.u32 %v7156, 7
        %v7158 = vsub.s32 6, %v7157
        %v7159 = vrot.slane %v7097, %v7158
        %v7160 = vlaneseq
        %v7161 = vshrl.u32 %v7160, 7
        %v7162 = vsub.s32 7, %v7161
        %v7163 = vrot.slane %v7097, %v7162
        %v7180 = vmul.f32 %v6915, %v7103
        %v7181 = vmul.f32 %v6917, %v7107
        %v7182 = vmul.f32 %v6919, %v7111
        %v7183 = vmul.f32 %v6921, %v7115
        %v7184 = vmul.f32 %v6923, %v7119
        %v7185 = vmul.f32 %v6925, %v7123
        %v7186 = vmul.f32 %v6927, %v7127
        %v7187 = vmul.f32 %v6929, %v7131
        %v7188 = vmul.f32 %v6931, %v7135
        %v7189 = vmul.f32 %v6933, %v7139
        %v7190 = vmul.f32 %v6935, %v7143
        %v7191 = vmul.f32 %v6937, %v7147
        %v7192 = vmul.f32 %v6939, %v7151
        %v7193 = vmul.f32 %v6941, %v7155
        %v7194 = vmul.f32 %v6943, %v7159
        %v7195 = vmul.f32 %v6945, %v7163
        %7197 = vset.pattern.permute.xlu0 0
        %7198 = vperm.xlu0 %7197, %v7180
        %v7199 = vpop.permute.xlu0 %7198
        %7202 = vset.pattern.permute.xlu0 0
        %7203 = vperm.xlu0 %7202, %v7181
        %v7204 = vpop.permute.xlu0 %7203
        %7207 = vset.pattern.permute.xlu0 0
        %7208 = vperm.xlu0 %7207, %v7182
        %v7209 = vpop.permute.xlu0 %7208
        %7212 = vset.pattern.permute.xlu0 0
        %7213 = vperm.xlu0 %7212, %v7183
        %v7214 = vpop.permute.xlu0 %7213
        %7217 = vset.pattern.permute.xlu0 0
        %7218 = vperm.xlu0 %7217, %v7184
        %v7219 = vpop.permute.xlu0 %7218
        %7222 = vset.pattern.permute.xlu0 0
        %7223 = vperm.xlu0 %7222, %v7185
        %v7224 = vpop.permute.xlu0 %7223
        %7227 = vset.pattern.permute.xlu0 0
        %7228 = vperm.xlu0 %7227, %v7186
        %v7229 = vpop.permute.xlu0 %7228
        %7232 = vset.pattern.permute.xlu0 0
        %7233 = vperm.xlu0 %7232, %v7187
        %v7234 = vpop.permute.xlu0 %7233
        %7237 = vset.pattern.permute.xlu0 0
        %7238 = vperm.xlu0 %7237, %v7188
        %v7239 = vpop.permute.xlu0 %7238
        %7242 = vset.pattern.permute.xlu0 0
        %7243 = vperm.xlu0 %7242, %v7189
        %v7244 = vpop.permute.xlu0 %7243
        %7247 = vset.pattern.permute.xlu0 0
        %7248 = vperm.xlu0 %7247, %v7190
        %v7249 = vpop.permute.xlu0 %7248
        %7252 = vset.pattern.permute.xlu0 0
        %7253 = vperm.xlu0 %7252, %v7191
        %v7254 = vpop.permute.xlu0 %7253
        %7257 = vset.pattern.permute.xlu0 0
        %7258 = vperm.xlu0 %7257, %v7192
        %v7259 = vpop.permute.xlu0 %7258
        %7262 = vset.pattern.permute.xlu0 0
        %7263 = vperm.xlu0 %7262, %v7193
        %v7264 = vpop.permute.xlu0 %7263
        %7267 = vset.pattern.permute.xlu0 0
        %7268 = vperm.xlu0 %7267, %v7194
        %v7269 = vpop.permute.xlu0 %7268
        %7272 = vset.pattern.permute.xlu0 0
        %7273 = vperm.xlu0 %7272, %v7195
        %v7274 = vpop.permute.xlu0 %7273
        %v7276 = vmul.f32 %v7199, %v6452
        %v7277 = vmul.f32 %v7204, %v6452
        %v7278 = vmul.f32 %v7209, %v6452
        %v7279 = vmul.f32 %v7214, %v6452
        %v7280 = vmul.f32 %v7219, %v6452
        %v7281 = vmul.f32 %v7224, %v6452
        %v7282 = vmul.f32 %v7229, %v6452
        %v7283 = vmul.f32 %v7234, %v6452
        %v7284 = vmul.f32 %v7239, %v6457
        %v7285 = vmul.f32 %v7244, %v6457
        %v7286 = vmul.f32 %v7249, %v6457
        %v7287 = vmul.f32 %v7254, %v6457
        %v7288 = vmul.f32 %v7259, %v6457
        %v7289 = vmul.f32 %v7264, %v6457
        %v7290 = vmul.f32 %v7269, %v6457
        %v7291 = vmul.f32 %v7274, %v6457
        %v7292 = vsel %vm1610, %v7276, 0.0
        %v7293 = vrot.slane %v7292, 4
        %v7294 = vadd.f32 %v7292, %v7293
        %v7295 = vrot.slane %v7294, 2
        %v7296 = vadd.f32 %v7294, %v7295
        %v7297 = vrot.slane %v7296, 1
        %v7298 = vadd.f32 %v7296, %v7297
        %v7299 = vsel %vm1610, %v7277, 0.0
        %v7300 = vrot.slane %v7299, 4
        %v7301 = vadd.f32 %v7299, %v7300
        %v7302 = vrot.slane %v7301, 2
        %v7303 = vadd.f32 %v7301, %v7302
        %v7304 = vrot.slane %v7303, 1
        %v7305 = vadd.f32 %v7303, %v7304
        %v7306 = vsel %vm1610, %v7278, 0.0
        %v7307 = vrot.slane %v7306, 4
        %v7308 = vadd.f32 %v7306, %v7307
        %v7309 = vrot.slane %v7308, 2
        %v7310 = vadd.f32 %v7308, %v7309
        %v7311 = vrot.slane %v7310, 1
        %v7312 = vadd.f32 %v7310, %v7311
        %v7313 = vsel %vm1610, %v7279, 0.0
        %v7314 = vrot.slane %v7313, 4
        %v7315 = vadd.f32 %v7313, %v7314
        %v7316 = vrot.slane %v7315, 2
        %v7317 = vadd.f32 %v7315, %v7316
        %v7318 = vrot.slane %v7317, 1
        %v7319 = vadd.f32 %v7317, %v7318
        %v7320 = vsel %vm1610, %v7280, 0.0
        %v7321 = vrot.slane %v7320, 4
        %v7322 = vadd.f32 %v7320, %v7321
        %v7323 = vrot.slane %v7322, 2
        %v7324 = vadd.f32 %v7322, %v7323
        %v7325 = vrot.slane %v7324, 1
        %v7326 = vadd.f32 %v7324, %v7325
        %v7327 = vsel %vm1610, %v7281, 0.0
        %v7328 = vrot.slane %v7327, 4
        %v7329 = vadd.f32 %v7327, %v7328
        %v7330 = vrot.slane %v7329, 2
        %v7331 = vadd.f32 %v7329, %v7330
        %v7332 = vrot.slane %v7331, 1
        %v7333 = vadd.f32 %v7331, %v7332
        %v7334 = vsel %vm1610, %v7282, 0.0
        %v7335 = vrot.slane %v7334, 4
        %v7336 = vadd.f32 %v7334, %v7335
        %v7337 = vrot.slane %v7336, 2
        %v7338 = vadd.f32 %v7336, %v7337
        %v7339 = vrot.slane %v7338, 1
        %v7340 = vadd.f32 %v7338, %v7339
        %v7341 = vsel %vm1610, %v7283, 0.0
        %v7342 = vrot.slane %v7341, 4
        %v7343 = vadd.f32 %v7341, %v7342
        %v7344 = vrot.slane %v7343, 2
        %v7345 = vadd.f32 %v7343, %v7344
        %v7346 = vrot.slane %v7345, 1
        %v7347 = vadd.f32 %v7345, %v7346
        %v7348 = vsel %vm1610, %v7284, 0.0
        %v7349 = vrot.slane %v7348, 4
        %v7350 = vadd.f32 %v7348, %v7349
        %v7351 = vrot.slane %v7350, 2
        %v7352 = vadd.f32 %v7350, %v7351
        %v7353 = vrot.slane %v7352, 1
        %v7354 = vadd.f32 %v7352, %v7353
        %v7355 = vsel %vm1610, %v7285, 0.0
        %v7356 = vrot.slane %v7355, 4
        %v7357 = vadd.f32 %v7355, %v7356
        %v7358 = vrot.slane %v7357, 2
        %v7359 = vadd.f32 %v7357, %v7358
        %v7360 = vrot.slane %v7359, 1
        %v7361 = vadd.f32 %v7359, %v7360
        %v7362 = vsel %vm1610, %v7286, 0.0
        %v7363 = vrot.slane %v7362, 4
        %v7364 = vadd.f32 %v7362, %v7363
        %v7365 = vrot.slane %v7364, 2
        %v7366 = vadd.f32 %v7364, %v7365
        %v7367 = vrot.slane %v7366, 1
        %v7368 = vadd.f32 %v7366, %v7367
        %v7369 = vsel %vm1610, %v7287, 0.0
        %v7370 = vrot.slane %v7369, 4
        %v7371 = vadd.f32 %v7369, %v7370
        %v7372 = vrot.slane %v7371, 2
        %v7373 = vadd.f32 %v7371, %v7372
        %v7374 = vrot.slane %v7373, 1
        %v7375 = vadd.f32 %v7373, %v7374
        %v7376 = vsel %vm1610, %v7288, 0.0
        %v7377 = vrot.slane %v7376, 4
        %v7378 = vadd.f32 %v7376, %v7377
        %v7379 = vrot.slane %v7378, 2
        %v7380 = vadd.f32 %v7378, %v7379
        %v7381 = vrot.slane %v7380, 1
        %v7382 = vadd.f32 %v7380, %v7381
        %v7383 = vsel %vm1610, %v7289, 0.0
        %v7384 = vrot.slane %v7383, 4
        %v7385 = vadd.f32 %v7383, %v7384
        %v7386 = vrot.slane %v7385, 2
        %v7387 = vadd.f32 %v7385, %v7386
        %v7388 = vrot.slane %v7387, 1
        %v7389 = vadd.f32 %v7387, %v7388
        %v7390 = vsel %vm1610, %v7290, 0.0
        %v7391 = vrot.slane %v7390, 4
        %v7392 = vadd.f32 %v7390, %v7391
        %v7393 = vrot.slane %v7392, 2
        %v7394 = vadd.f32 %v7392, %v7393
        %v7395 = vrot.slane %v7394, 1
        %v7396 = vadd.f32 %v7394, %v7395
        %v7397 = vsel %vm1610, %v7291, 0.0
        %v7398 = vrot.slane %v7397, 4
        %v7399 = vadd.f32 %v7397, %v7398
        %v7400 = vrot.slane %v7399, 2
        %v7401 = vadd.f32 %v7399, %v7400
        %v7402 = vrot.slane %v7401, 1
        %v7403 = vadd.f32 %v7401, %v7402
        %7420 = vrot.lane.b32.xlu0 %v6650, 126
        %v7421 = vpop.permute.xlu0 %7420
        %7422 = vrot.lane.b32.xlu0 %v6651, 126
        %v7423 = vpop.permute.xlu0 %7422
        %7424 = vrot.lane.b32.xlu0 %v6652, 126
        %v7425 = vpop.permute.xlu0 %7424
        %7426 = vrot.lane.b32.xlu0 %v6653, 126
        %v7427 = vpop.permute.xlu0 %7426
        %7428 = vrot.lane.b32.xlu0 %v6654, 126
        %v7429 = vpop.permute.xlu0 %7428
        %7430 = vrot.lane.b32.xlu0 %v6655, 126
        %v7431 = vpop.permute.xlu0 %7430
        %7432 = vrot.lane.b32.xlu0 %v6656, 126
        %v7433 = vpop.permute.xlu0 %7432
        %7434 = vrot.lane.b32.xlu0 %v6657, 126
        %v7435 = vpop.permute.xlu0 %7434
        %7436 = vrot.lane.b32.xlu0 %v6658, 126
        %v7437 = vpop.permute.xlu0 %7436
        %7438 = vrot.lane.b32.xlu0 %v6659, 126
        %v7439 = vpop.permute.xlu0 %7438
        %7440 = vrot.lane.b32.xlu0 %v6660, 126
        %v7441 = vpop.permute.xlu0 %7440
        %7442 = vrot.lane.b32.xlu0 %v6661, 126
        %v7443 = vpop.permute.xlu0 %7442
        %7444 = vrot.lane.b32.xlu0 %v6662, 126
        %v7445 = vpop.permute.xlu0 %7444
        %7446 = vrot.lane.b32.xlu0 %v6663, 126
        %v7447 = vpop.permute.xlu0 %7446
        %7448 = vrot.lane.b32.xlu0 %v6664, 126
        %v7449 = vpop.permute.xlu0 %7448
        %7450 = vrot.lane.b32.xlu0 %v6665, 126
        %v7451 = vpop.permute.xlu0 %7450
        %v7468 = vsel %vm974, %v7421, 0.0
        %7469 = vadd.xlane.f32.xlu0 %v7468
        %v7470 = vpop.xlane.xlu0 %7469
        %v7471 = vsel %vm974, %v7423, 0.0
        %7472 = vadd.xlane.f32.xlu0 %v7471
        %v7473 = vpop.xlane.xlu0 %7472
        %v7474 = vsel %vm974, %v7425, 0.0
        %7475 = vadd.xlane.f32.xlu0 %v7474
        %v7476 = vpop.xlane.xlu0 %7475
        %v7477 = vsel %vm974, %v7427, 0.0
        %7478 = vadd.xlane.f32.xlu0 %v7477
        %v7479 = vpop.xlane.xlu0 %7478
        %v7480 = vsel %vm974, %v7429, 0.0
        %7481 = vadd.xlane.f32.xlu0 %v7480
        %v7482 = vpop.xlane.xlu0 %7481
        %v7483 = vsel %vm974, %v7431, 0.0
        %7484 = vadd.xlane.f32.xlu0 %v7483
        %v7485 = vpop.xlane.xlu0 %7484
        %v7486 = vsel %vm974, %v7433, 0.0
        %7487 = vadd.xlane.f32.xlu0 %v7486
        %v7488 = vpop.xlane.xlu0 %7487
        %v7489 = vsel %vm974, %v7435, 0.0
        %7490 = vadd.xlane.f32.xlu0 %v7489
        %v7491 = vpop.xlane.xlu0 %7490
        %v7492 = vsel %vm974, %v7437, 0.0
        %7493 = vadd.xlane.f32.xlu0 %v7492
        %v7494 = vpop.xlane.xlu0 %7493
        %v7495 = vsel %vm974, %v7439, 0.0
        %7496 = vadd.xlane.f32.xlu0 %v7495
        %v7497 = vpop.xlane.xlu0 %7496
        %v7498 = vsel %vm974, %v7441, 0.0
        %7499 = vadd.xlane.f32.xlu0 %v7498
        %v7500 = vpop.xlane.xlu0 %7499
        %v7501 = vsel %vm974, %v7443, 0.0
        %7502 = vadd.xlane.f32.xlu0 %v7501
        %v7503 = vpop.xlane.xlu0 %7502
        %v7504 = vsel %vm974, %v7445, 0.0
        %7505 = vadd.xlane.f32.xlu0 %v7504
        %v7506 = vpop.xlane.xlu0 %7505
        %v7507 = vsel %vm974, %v7447, 0.0
        %7508 = vadd.xlane.f32.xlu0 %v7507
        %v7509 = vpop.xlane.xlu0 %7508
        %v7510 = vsel %vm974, %v7449, 0.0
        %7511 = vadd.xlane.f32.xlu0 %v7510
        %v7512 = vpop.xlane.xlu0 %7511
        %v7513 = vsel %vm974, %v7451, 0.0
        %7514 = vadd.xlane.f32.xlu0 %v7513
        %v7515 = vpop.xlane.xlu0 %7514
        %v7532 = vlaneseq
        %v7533 = vshrl.u32 %v7532, 7
        %v7534 = vsub.s32 %v1040, %v7533
        %v7535 = vrot.slane %v7470, %v7534
        %v7536 = vlaneseq
        %v7537 = vshrl.u32 %v7536, 7
        %v7538 = vsub.s32 %v1040, %v7537
        %v7539 = vrot.slane %v7473, %v7538
        %v7540 = vlaneseq
        %v7541 = vshrl.u32 %v7540, 7
        %v7542 = vsub.s32 %v1040, %v7541
        %v7543 = vrot.slane %v7476, %v7542
        %v7544 = vlaneseq
        %v7545 = vshrl.u32 %v7544, 7
        %v7546 = vsub.s32 %v1040, %v7545
        %v7547 = vrot.slane %v7479, %v7546
        %v7548 = vlaneseq
        %v7549 = vshrl.u32 %v7548, 7
        %v7550 = vsub.s32 %v1040, %v7549
        %v7551 = vrot.slane %v7482, %v7550
        %v7552 = vlaneseq
        %v7553 = vshrl.u32 %v7552, 7
        %v7554 = vsub.s32 %v1040, %v7553
        %v7555 = vrot.slane %v7485, %v7554
        %v7556 = vlaneseq
        %v7557 = vshrl.u32 %v7556, 7
        %v7558 = vsub.s32 %v1040, %v7557
        %v7559 = vrot.slane %v7488, %v7558
        %v7560 = vlaneseq
        %v7561 = vshrl.u32 %v7560, 7
        %v7562 = vsub.s32 %v1040, %v7561
        %v7563 = vrot.slane %v7491, %v7562
        %v7564 = vlaneseq
        %v7565 = vshrl.u32 %v7564, 7
        %v7566 = vsub.s32 %v1040, %v7565
        %v7567 = vrot.slane %v7494, %v7566
        %v7568 = vlaneseq
        %v7569 = vshrl.u32 %v7568, 7
        %v7570 = vsub.s32 %v1040, %v7569
        %v7571 = vrot.slane %v7497, %v7570
        %v7572 = vlaneseq
        %v7573 = vshrl.u32 %v7572, 7
        %v7574 = vsub.s32 %v1040, %v7573
        %v7575 = vrot.slane %v7500, %v7574
        %v7576 = vlaneseq
        %v7577 = vshrl.u32 %v7576, 7
        %v7578 = vsub.s32 %v1040, %v7577
        %v7579 = vrot.slane %v7503, %v7578
        %v7580 = vlaneseq
        %v7581 = vshrl.u32 %v7580, 7
        %v7582 = vsub.s32 %v1040, %v7581
        %v7583 = vrot.slane %v7506, %v7582
        %v7584 = vlaneseq
        %v7585 = vshrl.u32 %v7584, 7
        %v7586 = vsub.s32 %v1040, %v7585
        %v7587 = vrot.slane %v7509, %v7586
        %v7588 = vlaneseq
        %v7589 = vshrl.u32 %v7588, 7
        %v7590 = vsub.s32 %v1040, %v7589
        %v7591 = vrot.slane %v7512, %v7590
        %v7592 = vlaneseq
        %v7593 = vshrl.u32 %v7592, 7
        %v7594 = vsub.s32 %v1040, %v7593
        %v7595 = vrot.slane %v7515, %v7594
        %v7596 = vsel %vm1105, %v7539, %v7535
        %v7597 = vsel %vm1107, %v7543, %v7596
        %v7598 = vsel %vm1109, %v7547, %v7597
        %v7599 = vsel %vm1111, %v7551, %v7598
        %v7600 = vsel %vm1113, %v7555, %v7599
        %v7601 = vsel %vm1115, %v7559, %v7600
        %v7602 = vsel %vm1117, %v7563, %v7601
        %v7603 = vsel %vm1105, %v7571, %v7567
        %v7604 = vsel %vm1107, %v7575, %v7603
        %v7605 = vsel %vm1109, %v7579, %v7604
        %v7606 = vsel %vm1111, %v7583, %v7605
        %v7607 = vsel %vm1113, %v7587, %v7606
        %v7608 = vsel %vm1115, %v7591, %v7607
        %v7609 = vsel %vm1117, %v7595, %v7608
        %v7612 = vsel %vm686, %v7602, -inf
        %7613 = vmax.xlane.f32.xlu0 %v7612
        %v7614 = vpop.xlane.xlu0 %7613
        %v7615 = vsel %vm686, %v7609, -inf
        %7616 = vmax.xlane.f32.xlu0 %v7615
        %v7617 = vpop.xlane.xlu0 %7616
        %v7620 = vlaneseq
        %v7621 = vshrl.u32 %v7620, 7
        %v7622 = vsub.s32 0, %v7621
        %v7623 = vrot.slane %v7614, %v7622
        %v7624 = vlaneseq
        %v7625 = vshrl.u32 %v7624, 7
        %v7626 = vsub.s32 1, %v7625
        %v7627 = vrot.slane %v7614, %v7626
        %v7628 = vlaneseq
        %v7629 = vshrl.u32 %v7628, 7
        %v7630 = vsub.s32 2, %v7629
        %v7631 = vrot.slane %v7614, %v7630
        %v7632 = vlaneseq
        %v7633 = vshrl.u32 %v7632, 7
        %v7634 = vsub.s32 3, %v7633
        %v7635 = vrot.slane %v7614, %v7634
        %v7636 = vlaneseq
        %v7637 = vshrl.u32 %v7636, 7
        %v7638 = vsub.s32 4, %v7637
        %v7639 = vrot.slane %v7614, %v7638
        %v7640 = vlaneseq
        %v7641 = vshrl.u32 %v7640, 7
        %v7642 = vsub.s32 5, %v7641
        %v7643 = vrot.slane %v7614, %v7642
        %v7644 = vlaneseq
        %v7645 = vshrl.u32 %v7644, 7
        %v7646 = vsub.s32 6, %v7645
        %v7647 = vrot.slane %v7614, %v7646
        %v7648 = vlaneseq
        %v7649 = vshrl.u32 %v7648, 7
        %v7650 = vsub.s32 7, %v7649
        %v7651 = vrot.slane %v7614, %v7650
        %v7652 = vlaneseq
        %v7653 = vshrl.u32 %v7652, 7
        %v7654 = vsub.s32 0, %v7653
        %v7655 = vrot.slane %v7617, %v7654
        %v7656 = vlaneseq
        %v7657 = vshrl.u32 %v7656, 7
        %v7658 = vsub.s32 1, %v7657
        %v7659 = vrot.slane %v7617, %v7658
        %v7660 = vlaneseq
        %v7661 = vshrl.u32 %v7660, 7
        %v7662 = vsub.s32 2, %v7661
        %v7663 = vrot.slane %v7617, %v7662
        %v7664 = vlaneseq
        %v7665 = vshrl.u32 %v7664, 7
        %v7666 = vsub.s32 3, %v7665
        %v7667 = vrot.slane %v7617, %v7666
        %v7668 = vlaneseq
        %v7669 = vshrl.u32 %v7668, 7
        %v7670 = vsub.s32 4, %v7669
        %v7671 = vrot.slane %v7617, %v7670
        %v7672 = vlaneseq
        %v7673 = vshrl.u32 %v7672, 7
        %v7674 = vsub.s32 5, %v7673
        %v7675 = vrot.slane %v7617, %v7674
        %v7676 = vlaneseq
        %v7677 = vshrl.u32 %v7676, 7
        %v7678 = vsub.s32 6, %v7677
        %v7679 = vrot.slane %v7617, %v7678
        %v7680 = vlaneseq
        %v7681 = vshrl.u32 %v7680, 7
        %v7682 = vsub.s32 7, %v7681
        %v7683 = vrot.slane %v7617, %v7682
        %v7700 = vsub.f32 %v7470, %v7623
        %v7701 = vsub.f32 %v7473, %v7627
        %v7702 = vsub.f32 %v7476, %v7631
        %v7703 = vsub.f32 %v7479, %v7635
        %v7704 = vsub.f32 %v7482, %v7639
        %v7705 = vsub.f32 %v7485, %v7643
        %v7706 = vsub.f32 %v7488, %v7647
        %v7707 = vsub.f32 %v7491, %v7651
        %v7708 = vsub.f32 %v7494, %v7655
        %v7709 = vsub.f32 %v7497, %v7659
        %v7710 = vsub.f32 %v7500, %v7663
        %v7711 = vsub.f32 %v7503, %v7667
        %v7712 = vsub.f32 %v7506, %v7671
        %v7713 = vsub.f32 %v7509, %v7675
        %v7714 = vsub.f32 %v7512, %v7679
        %v7715 = vsub.f32 %v7515, %v7683
        %v7716 = vmul.f32 %v7700, 1.442695
        %v7717 = vpow.pop %v7716
        %v7718 = vmul.f32 %v7701, 1.442695
        %v7719 = vpow.pop %v7718
        %v7720 = vmul.f32 %v7702, 1.442695
        %v7721 = vpow.pop %v7720
        %v7722 = vmul.f32 %v7703, 1.442695
        %v7723 = vpow.pop %v7722
        %v7724 = vmul.f32 %v7704, 1.442695
        %v7725 = vpow.pop %v7724
        %v7726 = vmul.f32 %v7705, 1.442695
        %v7727 = vpow.pop %v7726
        %v7728 = vmul.f32 %v7706, 1.442695
        %v7729 = vpow.pop %v7728
        %v7730 = vmul.f32 %v7707, 1.442695
        %v7731 = vpow.pop %v7730
        %v7732 = vmul.f32 %v7708, 1.442695
        %v7733 = vpow.pop %v7732
        %v7734 = vmul.f32 %v7709, 1.442695
        %v7735 = vpow.pop %v7734
        %v7736 = vmul.f32 %v7710, 1.442695
        %v7737 = vpow.pop %v7736
        %v7738 = vmul.f32 %v7711, 1.442695
        %v7739 = vpow.pop %v7738
        %v7740 = vmul.f32 %v7712, 1.442695
        %v7741 = vpow.pop %v7740
        %v7742 = vmul.f32 %v7713, 1.442695
        %v7743 = vpow.pop %v7742
        %v7744 = vmul.f32 %v7714, 1.442695
        %v7745 = vpow.pop %v7744
        %v7746 = vmul.f32 %v7715, 1.442695
        %v7747 = vpow.pop %v7746
        %7764 = vset.pattern.permute.xlu0 0
        %7765 = vperm.xlu0 %7764, %v7717
        %v7766 = vpop.permute.xlu0 %7765
        %7767 = vset.pattern.permute.xlu0 0
        %7768 = vperm.xlu0 %7767, %v7719
        %v7769 = vpop.permute.xlu0 %7768
        %7770 = vset.pattern.permute.xlu0 0
        %7771 = vperm.xlu0 %7770, %v7721
        %v7772 = vpop.permute.xlu0 %7771
        %7773 = vset.pattern.permute.xlu0 0
        %7774 = vperm.xlu0 %7773, %v7723
        %v7775 = vpop.permute.xlu0 %7774
        %7776 = vset.pattern.permute.xlu0 0
        %7777 = vperm.xlu0 %7776, %v7725
        %v7778 = vpop.permute.xlu0 %7777
        %7779 = vset.pattern.permute.xlu0 0
        %7780 = vperm.xlu0 %7779, %v7727
        %v7781 = vpop.permute.xlu0 %7780
        %7782 = vset.pattern.permute.xlu0 0
        %7783 = vperm.xlu0 %7782, %v7729
        %v7784 = vpop.permute.xlu0 %7783
        %7785 = vset.pattern.permute.xlu0 0
        %7786 = vperm.xlu0 %7785, %v7731
        %v7787 = vpop.permute.xlu0 %7786
        %7788 = vset.pattern.permute.xlu0 0
        %7789 = vperm.xlu0 %7788, %v7733
        %v7790 = vpop.permute.xlu0 %7789
        %7791 = vset.pattern.permute.xlu0 0
        %7792 = vperm.xlu0 %7791, %v7735
        %v7793 = vpop.permute.xlu0 %7792
        %7794 = vset.pattern.permute.xlu0 0
        %7795 = vperm.xlu0 %7794, %v7737
        %v7796 = vpop.permute.xlu0 %7795
        %7797 = vset.pattern.permute.xlu0 0
        %7798 = vperm.xlu0 %7797, %v7739
        %v7799 = vpop.permute.xlu0 %7798
        %7800 = vset.pattern.permute.xlu0 0
        %7801 = vperm.xlu0 %7800, %v7741
        %v7802 = vpop.permute.xlu0 %7801
        %7803 = vset.pattern.permute.xlu0 0
        %7804 = vperm.xlu0 %7803, %v7743
        %v7805 = vpop.permute.xlu0 %7804
        %7806 = vset.pattern.permute.xlu0 0
        %7807 = vperm.xlu0 %7806, %v7745
        %v7808 = vpop.permute.xlu0 %7807
        %7809 = vset.pattern.permute.xlu0 0
        %7810 = vperm.xlu0 %7809, %v7747
        %v7811 = vpop.permute.xlu0 %7810
        %v7812 = vlaneseq
        %v7813 = vshrl.u32 %v7812, 7
        %v7814 = vsub.s32 %v1040, %v7813
        %v7815 = vrot.slane %v7766, %v7814
        %v7816 = vlaneseq
        %v7817 = vshrl.u32 %v7816, 7
        %v7818 = vsub.s32 %v1040, %v7817
        %v7819 = vrot.slane %v7769, %v7818
        %v7820 = vlaneseq
        %v7821 = vshrl.u32 %v7820, 7
        %v7822 = vsub.s32 %v1040, %v7821
        %v7823 = vrot.slane %v7772, %v7822
        %v7824 = vlaneseq
        %v7825 = vshrl.u32 %v7824, 7
        %v7826 = vsub.s32 %v1040, %v7825
        %v7827 = vrot.slane %v7775, %v7826
        %v7828 = vlaneseq
        %v7829 = vshrl.u32 %v7828, 7
        %v7830 = vsub.s32 %v1040, %v7829
        %v7831 = vrot.slane %v7778, %v7830
        %v7832 = vlaneseq
        %v7833 = vshrl.u32 %v7832, 7
        %v7834 = vsub.s32 %v1040, %v7833
        %v7835 = vrot.slane %v7781, %v7834
        %v7836 = vlaneseq
        %v7837 = vshrl.u32 %v7836, 7
        %v7838 = vsub.s32 %v1040, %v7837
        %v7839 = vrot.slane %v7784, %v7838
        %v7840 = vlaneseq
        %v7841 = vshrl.u32 %v7840, 7
        %v7842 = vsub.s32 %v1040, %v7841
        %v7843 = vrot.slane %v7787, %v7842
        %v7844 = vlaneseq
        %v7845 = vshrl.u32 %v7844, 7
        %v7846 = vsub.s32 %v1040, %v7845
        %v7847 = vrot.slane %v7790, %v7846
        %v7848 = vlaneseq
        %v7849 = vshrl.u32 %v7848, 7
        %v7850 = vsub.s32 %v1040, %v7849
        %v7851 = vrot.slane %v7793, %v7850
        %v7852 = vlaneseq
        %v7853 = vshrl.u32 %v7852, 7
        %v7854 = vsub.s32 %v1040, %v7853
        %v7855 = vrot.slane %v7796, %v7854
        %v7856 = vlaneseq
        %v7857 = vshrl.u32 %v7856, 7
        %v7858 = vsub.s32 %v1040, %v7857
        %v7859 = vrot.slane %v7799, %v7858
        %v7860 = vlaneseq
        %v7861 = vshrl.u32 %v7860, 7
        %v7862 = vsub.s32 %v1040, %v7861
        %v7863 = vrot.slane %v7802, %v7862
        %v7864 = vlaneseq
        %v7865 = vshrl.u32 %v7864, 7
        %v7866 = vsub.s32 %v1040, %v7865
        %v7867 = vrot.slane %v7805, %v7866
        %v7868 = vlaneseq
        %v7869 = vshrl.u32 %v7868, 7
        %v7870 = vsub.s32 %v1040, %v7869
        %v7871 = vrot.slane %v7808, %v7870
        %v7872 = vlaneseq
        %v7873 = vshrl.u32 %v7872, 7
        %v7874 = vsub.s32 %v1040, %v7873
        %v7875 = vrot.slane %v7811, %v7874
        %v7876 = vsel %vm1105, %v7819, %v7815
        %v7877 = vsel %vm1107, %v7823, %v7876
        %v7878 = vsel %vm1109, %v7827, %v7877
        %v7879 = vsel %vm1111, %v7831, %v7878
        %v7880 = vsel %vm1113, %v7835, %v7879
        %v7881 = vsel %vm1115, %v7839, %v7880
        %v7882 = vsel %vm1117, %v7843, %v7881
        %v7883 = vsel %vm1105, %v7851, %v7847
        %v7884 = vsel %vm1107, %v7855, %v7883
        %v7885 = vsel %vm1109, %v7859, %v7884
        %v7886 = vsel %vm1111, %v7863, %v7885
        %v7887 = vsel %vm1113, %v7867, %v7886
        %v7888 = vsel %vm1115, %v7871, %v7887
        %v7889 = vsel %vm1117, %v7875, %v7888
        %v7892 = vsel %vm686, %v7882, 0.0
        %7893 = vadd.xlane.f32.xlu0 %v7892
        %v7894 = vpop.xlane.xlu0 %7893
        %v7895 = vsel %vm686, %v7889, 0.0
        %7896 = vadd.xlane.f32.xlu0 %v7895
        %v7897 = vpop.xlane.xlu0 %7896
        %v7898 = vrcp.pop %v7894
        %v7899 = vrcp.pop %v7897
        %v7902 = vlaneseq
        %v7903 = vshrl.u32 %v7902, 7
        %v7904 = vsub.s32 0, %v7903
        %v7905 = vrot.slane %v7898, %v7904
        %v7906 = vlaneseq
        %v7907 = vshrl.u32 %v7906, 7
        %v7908 = vsub.s32 1, %v7907
        %v7909 = vrot.slane %v7898, %v7908
        %v7910 = vlaneseq
        %v7911 = vshrl.u32 %v7910, 7
        %v7912 = vsub.s32 2, %v7911
        %v7913 = vrot.slane %v7898, %v7912
        %v7914 = vlaneseq
        %v7915 = vshrl.u32 %v7914, 7
        %v7916 = vsub.s32 3, %v7915
        %v7917 = vrot.slane %v7898, %v7916
        %v7918 = vlaneseq
        %v7919 = vshrl.u32 %v7918, 7
        %v7920 = vsub.s32 4, %v7919
        %v7921 = vrot.slane %v7898, %v7920
        %v7922 = vlaneseq
        %v7923 = vshrl.u32 %v7922, 7
        %v7924 = vsub.s32 5, %v7923
        %v7925 = vrot.slane %v7898, %v7924
        %v7926 = vlaneseq
        %v7927 = vshrl.u32 %v7926, 7
        %v7928 = vsub.s32 6, %v7927
        %v7929 = vrot.slane %v7898, %v7928
        %v7930 = vlaneseq
        %v7931 = vshrl.u32 %v7930, 7
        %v7932 = vsub.s32 7, %v7931
        %v7933 = vrot.slane %v7898, %v7932
        %v7934 = vlaneseq
        %v7935 = vshrl.u32 %v7934, 7
        %v7936 = vsub.s32 0, %v7935
        %v7937 = vrot.slane %v7899, %v7936
        %v7938 = vlaneseq
        %v7939 = vshrl.u32 %v7938, 7
        %v7940 = vsub.s32 1, %v7939
        %v7941 = vrot.slane %v7899, %v7940
        %v7942 = vlaneseq
        %v7943 = vshrl.u32 %v7942, 7
        %v7944 = vsub.s32 2, %v7943
        %v7945 = vrot.slane %v7899, %v7944
        %v7946 = vlaneseq
        %v7947 = vshrl.u32 %v7946, 7
        %v7948 = vsub.s32 3, %v7947
        %v7949 = vrot.slane %v7899, %v7948
        %v7950 = vlaneseq
        %v7951 = vshrl.u32 %v7950, 7
        %v7952 = vsub.s32 4, %v7951
        %v7953 = vrot.slane %v7899, %v7952
        %v7954 = vlaneseq
        %v7955 = vshrl.u32 %v7954, 7
        %v7956 = vsub.s32 5, %v7955
        %v7957 = vrot.slane %v7899, %v7956
        %v7958 = vlaneseq
        %v7959 = vshrl.u32 %v7958, 7
        %v7960 = vsub.s32 6, %v7959
        %v7961 = vrot.slane %v7899, %v7960
        %v7962 = vlaneseq
        %v7963 = vshrl.u32 %v7962, 7
        %v7964 = vsub.s32 7, %v7963
        %v7965 = vrot.slane %v7899, %v7964
        %v7982 = vmul.f32 %v7717, %v7905
        %v7983 = vmul.f32 %v7719, %v7909
        %v7984 = vmul.f32 %v7721, %v7913
        %v7985 = vmul.f32 %v7723, %v7917
        %v7986 = vmul.f32 %v7725, %v7921
        %v7987 = vmul.f32 %v7727, %v7925
        %v7988 = vmul.f32 %v7729, %v7929
        %v7989 = vmul.f32 %v7731, %v7933
        %v7990 = vmul.f32 %v7733, %v7937
        %v7991 = vmul.f32 %v7735, %v7941
        %v7992 = vmul.f32 %v7737, %v7945
        %v7993 = vmul.f32 %v7739, %v7949
        %v7994 = vmul.f32 %v7741, %v7953
        %v7995 = vmul.f32 %v7743, %v7957
        %v7996 = vmul.f32 %v7745, %v7961
        %v7997 = vmul.f32 %v7747, %v7965
        %7999 = vset.pattern.permute.xlu0 0
        %8000 = vperm.xlu0 %7999, %v7982
        %v8001 = vpop.permute.xlu0 %8000
        %8004 = vset.pattern.permute.xlu0 0
        %8005 = vperm.xlu0 %8004, %v7983
        %v8006 = vpop.permute.xlu0 %8005
        %8009 = vset.pattern.permute.xlu0 0
        %8010 = vperm.xlu0 %8009, %v7984
        %v8011 = vpop.permute.xlu0 %8010
        %8014 = vset.pattern.permute.xlu0 0
        %8015 = vperm.xlu0 %8014, %v7985
        %v8016 = vpop.permute.xlu0 %8015
        %8019 = vset.pattern.permute.xlu0 0
        %8020 = vperm.xlu0 %8019, %v7986
        %v8021 = vpop.permute.xlu0 %8020
        %8024 = vset.pattern.permute.xlu0 0
        %8025 = vperm.xlu0 %8024, %v7987
        %v8026 = vpop.permute.xlu0 %8025
        %8029 = vset.pattern.permute.xlu0 0
        %8030 = vperm.xlu0 %8029, %v7988
        %v8031 = vpop.permute.xlu0 %8030
        %8034 = vset.pattern.permute.xlu0 0
        %8035 = vperm.xlu0 %8034, %v7989
        %v8036 = vpop.permute.xlu0 %8035
        %8039 = vset.pattern.permute.xlu0 0
        %8040 = vperm.xlu0 %8039, %v7990
        %v8041 = vpop.permute.xlu0 %8040
        %8044 = vset.pattern.permute.xlu0 0
        %8045 = vperm.xlu0 %8044, %v7991
        %v8046 = vpop.permute.xlu0 %8045
        %8049 = vset.pattern.permute.xlu0 0
        %8050 = vperm.xlu0 %8049, %v7992
        %v8051 = vpop.permute.xlu0 %8050
        %8054 = vset.pattern.permute.xlu0 0
        %8055 = vperm.xlu0 %8054, %v7993
        %v8056 = vpop.permute.xlu0 %8055
        %8059 = vset.pattern.permute.xlu0 0
        %8060 = vperm.xlu0 %8059, %v7994
        %v8061 = vpop.permute.xlu0 %8060
        %8064 = vset.pattern.permute.xlu0 0
        %8065 = vperm.xlu0 %8064, %v7995
        %v8066 = vpop.permute.xlu0 %8065
        %8069 = vset.pattern.permute.xlu0 0
        %8070 = vperm.xlu0 %8069, %v7996
        %v8071 = vpop.permute.xlu0 %8070
        %8074 = vset.pattern.permute.xlu0 0
        %8075 = vperm.xlu0 %8074, %v7997
        %v8076 = vpop.permute.xlu0 %8075
        %v8078 = vmul.f32 %v8001, %v6452
        %v8079 = vmul.f32 %v8006, %v6452
        %v8080 = vmul.f32 %v8011, %v6452
        %v8081 = vmul.f32 %v8016, %v6452
        %v8082 = vmul.f32 %v8021, %v6452
        %v8083 = vmul.f32 %v8026, %v6452
        %v8084 = vmul.f32 %v8031, %v6452
        %v8085 = vmul.f32 %v8036, %v6452
        %v8086 = vmul.f32 %v8041, %v6457
        %v8087 = vmul.f32 %v8046, %v6457
        %v8088 = vmul.f32 %v8051, %v6457
        %v8089 = vmul.f32 %v8056, %v6457
        %v8090 = vmul.f32 %v8061, %v6457
        %v8091 = vmul.f32 %v8066, %v6457
        %v8092 = vmul.f32 %v8071, %v6457
        %v8093 = vmul.f32 %v8076, %v6457
        %v8094 = vsel %vm2413, %v8078, 0.0
        %v8095 = vrot.slane %v8094, 4
        %v8096 = vadd.f32 %v8094, %v8095
        %v8097 = vrot.slane %v8096, 2
        %v8098 = vadd.f32 %v8096, %v8097
        %v8099 = vrot.slane %v8098, 1
        %v8100 = vadd.f32 %v8098, %v8099
        %v8101 = vsel %vm2413, %v8079, 0.0
        %v8102 = vrot.slane %v8101, 4
        %v8103 = vadd.f32 %v8101, %v8102
        %v8104 = vrot.slane %v8103, 2
        %v8105 = vadd.f32 %v8103, %v8104
        %v8106 = vrot.slane %v8105, 1
        %v8107 = vadd.f32 %v8105, %v8106
        %v8108 = vsel %vm2413, %v8080, 0.0
        %v8109 = vrot.slane %v8108, 4
        %v8110 = vadd.f32 %v8108, %v8109
        %v8111 = vrot.slane %v8110, 2
        %v8112 = vadd.f32 %v8110, %v8111
        %v8113 = vrot.slane %v8112, 1
        %v8114 = vadd.f32 %v8112, %v8113
        %v8115 = vsel %vm2413, %v8081, 0.0
        %v8116 = vrot.slane %v8115, 4
        %v8117 = vadd.f32 %v8115, %v8116
        %v8118 = vrot.slane %v8117, 2
        %v8119 = vadd.f32 %v8117, %v8118
        %v8120 = vrot.slane %v8119, 1
        %v8121 = vadd.f32 %v8119, %v8120
        %v8122 = vsel %vm2413, %v8082, 0.0
        %v8123 = vrot.slane %v8122, 4
        %v8124 = vadd.f32 %v8122, %v8123
        %v8125 = vrot.slane %v8124, 2
        %v8126 = vadd.f32 %v8124, %v8125
        %v8127 = vrot.slane %v8126, 1
        %v8128 = vadd.f32 %v8126, %v8127
        %v8129 = vsel %vm2413, %v8083, 0.0
        %v8130 = vrot.slane %v8129, 4
        %v8131 = vadd.f32 %v8129, %v8130
        %v8132 = vrot.slane %v8131, 2
        %v8133 = vadd.f32 %v8131, %v8132
        %v8134 = vrot.slane %v8133, 1
        %v8135 = vadd.f32 %v8133, %v8134
        %v8136 = vsel %vm2413, %v8084, 0.0
        %v8137 = vrot.slane %v8136, 4
        %v8138 = vadd.f32 %v8136, %v8137
        %v8139 = vrot.slane %v8138, 2
        %v8140 = vadd.f32 %v8138, %v8139
        %v8141 = vrot.slane %v8140, 1
        %v8142 = vadd.f32 %v8140, %v8141
        %v8143 = vsel %vm2413, %v8085, 0.0
        %v8144 = vrot.slane %v8143, 4
        %v8145 = vadd.f32 %v8143, %v8144
        %v8146 = vrot.slane %v8145, 2
        %v8147 = vadd.f32 %v8145, %v8146
        %v8148 = vrot.slane %v8147, 1
        %v8149 = vadd.f32 %v8147, %v8148
        %v8150 = vsel %vm2413, %v8086, 0.0
        %v8151 = vrot.slane %v8150, 4
        %v8152 = vadd.f32 %v8150, %v8151
        %v8153 = vrot.slane %v8152, 2
        %v8154 = vadd.f32 %v8152, %v8153
        %v8155 = vrot.slane %v8154, 1
        %v8156 = vadd.f32 %v8154, %v8155
        %v8157 = vsel %vm2413, %v8087, 0.0
        %v8158 = vrot.slane %v8157, 4
        %v8159 = vadd.f32 %v8157, %v8158
        %v8160 = vrot.slane %v8159, 2
        %v8161 = vadd.f32 %v8159, %v8160
        %v8162 = vrot.slane %v8161, 1
        %v8163 = vadd.f32 %v8161, %v8162
        %v8164 = vsel %vm2413, %v8088, 0.0
        %v8165 = vrot.slane %v8164, 4
        %v8166 = vadd.f32 %v8164, %v8165
        %v8167 = vrot.slane %v8166, 2
        %v8168 = vadd.f32 %v8166, %v8167
        %v8169 = vrot.slane %v8168, 1
        %v8170 = vadd.f32 %v8168, %v8169
        %v8171 = vsel %vm2413, %v8089, 0.0
        %v8172 = vrot.slane %v8171, 4
        %v8173 = vadd.f32 %v8171, %v8172
        %v8174 = vrot.slane %v8173, 2
        %v8175 = vadd.f32 %v8173, %v8174
        %v8176 = vrot.slane %v8175, 1
        %v8177 = vadd.f32 %v8175, %v8176
        %v8178 = vsel %vm2413, %v8090, 0.0
        %v8179 = vrot.slane %v8178, 4
        %v8180 = vadd.f32 %v8178, %v8179
        %v8181 = vrot.slane %v8180, 2
        %v8182 = vadd.f32 %v8180, %v8181
        %v8183 = vrot.slane %v8182, 1
        %v8184 = vadd.f32 %v8182, %v8183
        %v8185 = vsel %vm2413, %v8091, 0.0
        %v8186 = vrot.slane %v8185, 4
        %v8187 = vadd.f32 %v8185, %v8186
        %v8188 = vrot.slane %v8187, 2
        %v8189 = vadd.f32 %v8187, %v8188
        %v8190 = vrot.slane %v8189, 1
        %v8191 = vadd.f32 %v8189, %v8190
        %v8192 = vsel %vm2413, %v8092, 0.0
        %v8193 = vrot.slane %v8192, 4
        %v8194 = vadd.f32 %v8192, %v8193
        %v8195 = vrot.slane %v8194, 2
        %v8196 = vadd.f32 %v8194, %v8195
        %v8197 = vrot.slane %v8196, 1
        %v8198 = vadd.f32 %v8196, %v8197
        %v8199 = vsel %vm2413, %v8093, 0.0
        %v8200 = vrot.slane %v8199, 4
        %v8201 = vadd.f32 %v8199, %v8200
        %v8202 = vrot.slane %v8201, 2
        %v8203 = vadd.f32 %v8201, %v8202
        %v8204 = vrot.slane %v8203, 1
        %v8205 = vadd.f32 %v8203, %v8204
        %8206 = vrot.lane.b32.xlu0 %v6650, 124
        %v8207 = vpop.permute.xlu0 %8206
        %8208 = vrot.lane.b32.xlu0 %v6651, 124
        %v8209 = vpop.permute.xlu0 %8208
        %8210 = vrot.lane.b32.xlu0 %v6652, 124
        %v8211 = vpop.permute.xlu0 %8210
        %8212 = vrot.lane.b32.xlu0 %v6653, 124
        %v8213 = vpop.permute.xlu0 %8212
        %8214 = vrot.lane.b32.xlu0 %v6654, 124
        %v8215 = vpop.permute.xlu0 %8214
        %8216 = vrot.lane.b32.xlu0 %v6655, 124
        %v8217 = vpop.permute.xlu0 %8216
        %8218 = vrot.lane.b32.xlu0 %v6656, 124
        %v8219 = vpop.permute.xlu0 %8218
        %8220 = vrot.lane.b32.xlu0 %v6657, 124
        %v8221 = vpop.permute.xlu0 %8220
        %8222 = vrot.lane.b32.xlu0 %v6658, 124
        %v8223 = vpop.permute.xlu0 %8222
        %8224 = vrot.lane.b32.xlu0 %v6659, 124
        %v8225 = vpop.permute.xlu0 %8224
        %8226 = vrot.lane.b32.xlu0 %v6660, 124
        %v8227 = vpop.permute.xlu0 %8226
        %8228 = vrot.lane.b32.xlu0 %v6661, 124
        %v8229 = vpop.permute.xlu0 %8228
        %8230 = vrot.lane.b32.xlu0 %v6662, 124
        %v8231 = vpop.permute.xlu0 %8230
        %8232 = vrot.lane.b32.xlu0 %v6663, 124
        %v8233 = vpop.permute.xlu0 %8232
        %8234 = vrot.lane.b32.xlu0 %v6664, 124
        %v8235 = vpop.permute.xlu0 %8234
        %8236 = vrot.lane.b32.xlu0 %v6665, 124
        %v8237 = vpop.permute.xlu0 %8236
        %v8254 = vsel %vm974, %v8207, 0.0
        %8255 = vadd.xlane.f32.xlu0 %v8254
        %v8256 = vpop.xlane.xlu0 %8255
        %v8257 = vsel %vm974, %v8209, 0.0
        %8258 = vadd.xlane.f32.xlu0 %v8257
        %v8259 = vpop.xlane.xlu0 %8258
        %v8260 = vsel %vm974, %v8211, 0.0
        %8261 = vadd.xlane.f32.xlu0 %v8260
        %v8262 = vpop.xlane.xlu0 %8261
        %v8263 = vsel %vm974, %v8213, 0.0
        %8264 = vadd.xlane.f32.xlu0 %v8263
        %v8265 = vpop.xlane.xlu0 %8264
        %v8266 = vsel %vm974, %v8215, 0.0
        %8267 = vadd.xlane.f32.xlu0 %v8266
        %v8268 = vpop.xlane.xlu0 %8267
        %v8269 = vsel %vm974, %v8217, 0.0
        %8270 = vadd.xlane.f32.xlu0 %v8269
        %v8271 = vpop.xlane.xlu0 %8270
        %v8272 = vsel %vm974, %v8219, 0.0
        %8273 = vadd.xlane.f32.xlu0 %v8272
        %v8274 = vpop.xlane.xlu0 %8273
        %v8275 = vsel %vm974, %v8221, 0.0
        %8276 = vadd.xlane.f32.xlu0 %v8275
        %v8277 = vpop.xlane.xlu0 %8276
        %v8278 = vsel %vm974, %v8223, 0.0
        %8279 = vadd.xlane.f32.xlu0 %v8278
        %v8280 = vpop.xlane.xlu0 %8279
        %v8281 = vsel %vm974, %v8225, 0.0
        %8282 = vadd.xlane.f32.xlu0 %v8281
        %v8283 = vpop.xlane.xlu0 %8282
        %v8284 = vsel %vm974, %v8227, 0.0
        %8285 = vadd.xlane.f32.xlu0 %v8284
        %v8286 = vpop.xlane.xlu0 %8285
        %v8287 = vsel %vm974, %v8229, 0.0
        %8288 = vadd.xlane.f32.xlu0 %v8287
        %v8289 = vpop.xlane.xlu0 %8288
        %v8290 = vsel %vm974, %v8231, 0.0
        %8291 = vadd.xlane.f32.xlu0 %v8290
        %v8292 = vpop.xlane.xlu0 %8291
        %v8293 = vsel %vm974, %v8233, 0.0
        %8294 = vadd.xlane.f32.xlu0 %v8293
        %v8295 = vpop.xlane.xlu0 %8294
        %v8296 = vsel %vm974, %v8235, 0.0
        %8297 = vadd.xlane.f32.xlu0 %v8296
        %v8298 = vpop.xlane.xlu0 %8297
        %v8299 = vsel %vm974, %v8237, 0.0
        %8300 = vadd.xlane.f32.xlu0 %v8299
        %v8301 = vpop.xlane.xlu0 %8300
        %v8318 = vlaneseq
        %v8319 = vshrl.u32 %v8318, 7
        %v8320 = vsub.s32 %v1040, %v8319
        %v8321 = vrot.slane %v8256, %v8320
        %v8322 = vlaneseq
        %v8323 = vshrl.u32 %v8322, 7
        %v8324 = vsub.s32 %v1040, %v8323
        %v8325 = vrot.slane %v8259, %v8324
        %v8326 = vlaneseq
        %v8327 = vshrl.u32 %v8326, 7
        %v8328 = vsub.s32 %v1040, %v8327
        %v8329 = vrot.slane %v8262, %v8328
        %v8330 = vlaneseq
        %v8331 = vshrl.u32 %v8330, 7
        %v8332 = vsub.s32 %v1040, %v8331
        %v8333 = vrot.slane %v8265, %v8332
        %v8334 = vlaneseq
        %v8335 = vshrl.u32 %v8334, 7
        %v8336 = vsub.s32 %v1040, %v8335
        %v8337 = vrot.slane %v8268, %v8336
        %v8338 = vlaneseq
        %v8339 = vshrl.u32 %v8338, 7
        %v8340 = vsub.s32 %v1040, %v8339
        %v8341 = vrot.slane %v8271, %v8340
        %v8342 = vlaneseq
        %v8343 = vshrl.u32 %v8342, 7
        %v8344 = vsub.s32 %v1040, %v8343
        %v8345 = vrot.slane %v8274, %v8344
        %v8346 = vlaneseq
        %v8347 = vshrl.u32 %v8346, 7
        %v8348 = vsub.s32 %v1040, %v8347
        %v8349 = vrot.slane %v8277, %v8348
        %v8350 = vlaneseq
        %v8351 = vshrl.u32 %v8350, 7
        %v8352 = vsub.s32 %v1040, %v8351
        %v8353 = vrot.slane %v8280, %v8352
        %v8354 = vlaneseq
        %v8355 = vshrl.u32 %v8354, 7
        %v8356 = vsub.s32 %v1040, %v8355
        %v8357 = vrot.slane %v8283, %v8356
        %v8358 = vlaneseq
        %v8359 = vshrl.u32 %v8358, 7
        %v8360 = vsub.s32 %v1040, %v8359
        %v8361 = vrot.slane %v8286, %v8360
        %v8362 = vlaneseq
        %v8363 = vshrl.u32 %v8362, 7
        %v8364 = vsub.s32 %v1040, %v8363
        %v8365 = vrot.slane %v8289, %v8364
        %v8366 = vlaneseq
        %v8367 = vshrl.u32 %v8366, 7
        %v8368 = vsub.s32 %v1040, %v8367
        %v8369 = vrot.slane %v8292, %v8368
        %v8370 = vlaneseq
        %v8371 = vshrl.u32 %v8370, 7
        %v8372 = vsub.s32 %v1040, %v8371
        %v8373 = vrot.slane %v8295, %v8372
        %v8374 = vlaneseq
        %v8375 = vshrl.u32 %v8374, 7
        %v8376 = vsub.s32 %v1040, %v8375
        %v8377 = vrot.slane %v8298, %v8376
        %v8378 = vlaneseq
        %v8379 = vshrl.u32 %v8378, 7
        %v8380 = vsub.s32 %v1040, %v8379
        %v8381 = vrot.slane %v8301, %v8380
        %v8382 = vsel %vm1105, %v8325, %v8321
        %v8383 = vsel %vm1107, %v8329, %v8382
        %v8384 = vsel %vm1109, %v8333, %v8383
        %v8385 = vsel %vm1111, %v8337, %v8384
        %v8386 = vsel %vm1113, %v8341, %v8385
        %v8387 = vsel %vm1115, %v8345, %v8386
        %v8388 = vsel %vm1117, %v8349, %v8387
        %v8389 = vsel %vm1105, %v8357, %v8353
        %v8390 = vsel %vm1107, %v8361, %v8389
        %v8391 = vsel %vm1109, %v8365, %v8390
        %v8392 = vsel %vm1111, %v8369, %v8391
        %v8393 = vsel %vm1113, %v8373, %v8392
        %v8394 = vsel %vm1115, %v8377, %v8393
        %v8395 = vsel %vm1117, %v8381, %v8394
        %v8398 = vsel %vm686, %v8388, -inf
        %8399 = vmax.xlane.f32.xlu0 %v8398
        %v8400 = vpop.xlane.xlu0 %8399
        %v8401 = vsel %vm686, %v8395, -inf
        %8402 = vmax.xlane.f32.xlu0 %v8401
        %v8403 = vpop.xlane.xlu0 %8402
        %v8406 = vlaneseq
        %v8407 = vshrl.u32 %v8406, 7
        %v8408 = vsub.s32 0, %v8407
        %v8409 = vrot.slane %v8400, %v8408
        %v8410 = vlaneseq
        %v8411 = vshrl.u32 %v8410, 7
        %v8412 = vsub.s32 1, %v8411
        %v8413 = vrot.slane %v8400, %v8412
        %v8414 = vlaneseq
        %v8415 = vshrl.u32 %v8414, 7
        %v8416 = vsub.s32 2, %v8415
        %v8417 = vrot.slane %v8400, %v8416
        %v8418 = vlaneseq
        %v8419 = vshrl.u32 %v8418, 7
        %v8420 = vsub.s32 3, %v8419
        %v8421 = vrot.slane %v8400, %v8420
        %v8422 = vlaneseq
        %v8423 = vshrl.u32 %v8422, 7
        %v8424 = vsub.s32 4, %v8423
        %v8425 = vrot.slane %v8400, %v8424
        %v8426 = vlaneseq
        %v8427 = vshrl.u32 %v8426, 7
        %v8428 = vsub.s32 5, %v8427
        %v8429 = vrot.slane %v8400, %v8428
        %v8430 = vlaneseq
        %v8431 = vshrl.u32 %v8430, 7
        %v8432 = vsub.s32 6, %v8431
        %v8433 = vrot.slane %v8400, %v8432
        %v8434 = vlaneseq
        %v8435 = vshrl.u32 %v8434, 7
        %v8436 = vsub.s32 7, %v8435
        %v8437 = vrot.slane %v8400, %v8436
        %v8438 = vlaneseq
        %v8439 = vshrl.u32 %v8438, 7
        %v8440 = vsub.s32 0, %v8439
        %v8441 = vrot.slane %v8403, %v8440
        %v8442 = vlaneseq
        %v8443 = vshrl.u32 %v8442, 7
        %v8444 = vsub.s32 1, %v8443
        %v8445 = vrot.slane %v8403, %v8444
        %v8446 = vlaneseq
        %v8447 = vshrl.u32 %v8446, 7
        %v8448 = vsub.s32 2, %v8447
        %v8449 = vrot.slane %v8403, %v8448
        %v8450 = vlaneseq
        %v8451 = vshrl.u32 %v8450, 7
        %v8452 = vsub.s32 3, %v8451
        %v8453 = vrot.slane %v8403, %v8452
        %v8454 = vlaneseq
        %v8455 = vshrl.u32 %v8454, 7
        %v8456 = vsub.s32 4, %v8455
        %v8457 = vrot.slane %v8403, %v8456
        %v8458 = vlaneseq
        %v8459 = vshrl.u32 %v8458, 7
        %v8460 = vsub.s32 5, %v8459
        %v8461 = vrot.slane %v8403, %v8460
        %v8462 = vlaneseq
        %v8463 = vshrl.u32 %v8462, 7
        %v8464 = vsub.s32 6, %v8463
        %v8465 = vrot.slane %v8403, %v8464
        %v8466 = vlaneseq
        %v8467 = vshrl.u32 %v8466, 7
        %v8468 = vsub.s32 7, %v8467
        %v8469 = vrot.slane %v8403, %v8468
        %v8486 = vsub.f32 %v8256, %v8409
        %v8487 = vsub.f32 %v8259, %v8413
        %v8488 = vsub.f32 %v8262, %v8417
        %v8489 = vsub.f32 %v8265, %v8421
        %v8490 = vsub.f32 %v8268, %v8425
        %v8491 = vsub.f32 %v8271, %v8429
        %v8492 = vsub.f32 %v8274, %v8433
        %v8493 = vsub.f32 %v8277, %v8437
        %v8494 = vsub.f32 %v8280, %v8441
        %v8495 = vsub.f32 %v8283, %v8445
        %v8496 = vsub.f32 %v8286, %v8449
        %v8497 = vsub.f32 %v8289, %v8453
        %v8498 = vsub.f32 %v8292, %v8457
        %v8499 = vsub.f32 %v8295, %v8461
        %v8500 = vsub.f32 %v8298, %v8465
        %v8501 = vsub.f32 %v8301, %v8469
        %v8502 = vmul.f32 %v8486, 1.442695
        %v8503 = vpow.pop %v8502
        %v8504 = vmul.f32 %v8487, 1.442695
        %v8505 = vpow.pop %v8504
        %v8506 = vmul.f32 %v8488, 1.442695
        %v8507 = vpow.pop %v8506
        %v8508 = vmul.f32 %v8489, 1.442695
        %v8509 = vpow.pop %v8508
        %v8510 = vmul.f32 %v8490, 1.442695
        %v8511 = vpow.pop %v8510
        %v8512 = vmul.f32 %v8491, 1.442695
        %v8513 = vpow.pop %v8512
        %v8514 = vmul.f32 %v8492, 1.442695
        %v8515 = vpow.pop %v8514
        %v8516 = vmul.f32 %v8493, 1.442695
        %v8517 = vpow.pop %v8516
        %v8518 = vmul.f32 %v8494, 1.442695
        %v8519 = vpow.pop %v8518
        %v8520 = vmul.f32 %v8495, 1.442695
        %v8521 = vpow.pop %v8520
        %v8522 = vmul.f32 %v8496, 1.442695
        %v8523 = vpow.pop %v8522
        %v8524 = vmul.f32 %v8497, 1.442695
        %v8525 = vpow.pop %v8524
        %v8526 = vmul.f32 %v8498, 1.442695
        %v8527 = vpow.pop %v8526
        %v8528 = vmul.f32 %v8499, 1.442695
        %v8529 = vpow.pop %v8528
        %v8530 = vmul.f32 %v8500, 1.442695
        %v8531 = vpow.pop %v8530
        %v8532 = vmul.f32 %v8501, 1.442695
        %v8533 = vpow.pop %v8532
        %8550 = vset.pattern.permute.xlu0 0
        %8551 = vperm.xlu0 %8550, %v8503
        %v8552 = vpop.permute.xlu0 %8551
        %8553 = vset.pattern.permute.xlu0 0
        %8554 = vperm.xlu0 %8553, %v8505
        %v8555 = vpop.permute.xlu0 %8554
        %8556 = vset.pattern.permute.xlu0 0
        %8557 = vperm.xlu0 %8556, %v8507
        %v8558 = vpop.permute.xlu0 %8557
        %8559 = vset.pattern.permute.xlu0 0
        %8560 = vperm.xlu0 %8559, %v8509
        %v8561 = vpop.permute.xlu0 %8560
        %8562 = vset.pattern.permute.xlu0 0
        %8563 = vperm.xlu0 %8562, %v8511
        %v8564 = vpop.permute.xlu0 %8563
        %8565 = vset.pattern.permute.xlu0 0
        %8566 = vperm.xlu0 %8565, %v8513
        %v8567 = vpop.permute.xlu0 %8566
        %8568 = vset.pattern.permute.xlu0 0
        %8569 = vperm.xlu0 %8568, %v8515
        %v8570 = vpop.permute.xlu0 %8569
        %8571 = vset.pattern.permute.xlu0 0
        %8572 = vperm.xlu0 %8571, %v8517
        %v8573 = vpop.permute.xlu0 %8572
        %8574 = vset.pattern.permute.xlu0 0
        %8575 = vperm.xlu0 %8574, %v8519
        %v8576 = vpop.permute.xlu0 %8575
        %8577 = vset.pattern.permute.xlu0 0
        %8578 = vperm.xlu0 %8577, %v8521
        %v8579 = vpop.permute.xlu0 %8578
        %8580 = vset.pattern.permute.xlu0 0
        %8581 = vperm.xlu0 %8580, %v8523
        %v8582 = vpop.permute.xlu0 %8581
        %8583 = vset.pattern.permute.xlu0 0
        %8584 = vperm.xlu0 %8583, %v8525
        %v8585 = vpop.permute.xlu0 %8584
        %8586 = vset.pattern.permute.xlu0 0
        %8587 = vperm.xlu0 %8586, %v8527
        %v8588 = vpop.permute.xlu0 %8587
        %8589 = vset.pattern.permute.xlu0 0
        %8590 = vperm.xlu0 %8589, %v8529
        %v8591 = vpop.permute.xlu0 %8590
        %8592 = vset.pattern.permute.xlu0 0
        %8593 = vperm.xlu0 %8592, %v8531
        %v8594 = vpop.permute.xlu0 %8593
        %8595 = vset.pattern.permute.xlu0 0
        %8596 = vperm.xlu0 %8595, %v8533
        %v8597 = vpop.permute.xlu0 %8596
        %v8598 = vlaneseq
        %v8599 = vshrl.u32 %v8598, 7
        %v8600 = vsub.s32 %v1040, %v8599
        %v8601 = vrot.slane %v8552, %v8600
        %v8602 = vlaneseq
        %v8603 = vshrl.u32 %v8602, 7
        %v8604 = vsub.s32 %v1040, %v8603
        %v8605 = vrot.slane %v8555, %v8604
        %v8606 = vlaneseq
        %v8607 = vshrl.u32 %v8606, 7
        %v8608 = vsub.s32 %v1040, %v8607
        %v8609 = vrot.slane %v8558, %v8608
        %v8610 = vlaneseq
        %v8611 = vshrl.u32 %v8610, 7
        %v8612 = vsub.s32 %v1040, %v8611
        %v8613 = vrot.slane %v8561, %v8612
        %v8614 = vlaneseq
        %v8615 = vshrl.u32 %v8614, 7
        %v8616 = vsub.s32 %v1040, %v8615
        %v8617 = vrot.slane %v8564, %v8616
        %v8618 = vlaneseq
        %v8619 = vshrl.u32 %v8618, 7
        %v8620 = vsub.s32 %v1040, %v8619
        %v8621 = vrot.slane %v8567, %v8620
        %v8622 = vlaneseq
        %v8623 = vshrl.u32 %v8622, 7
        %v8624 = vsub.s32 %v1040, %v8623
        %v8625 = vrot.slane %v8570, %v8624
        %v8626 = vlaneseq
        %v8627 = vshrl.u32 %v8626, 7
        %v8628 = vsub.s32 %v1040, %v8627
        %v8629 = vrot.slane %v8573, %v8628
        %v8630 = vlaneseq
        %v8631 = vshrl.u32 %v8630, 7
        %v8632 = vsub.s32 %v1040, %v8631
        %v8633 = vrot.slane %v8576, %v8632
        %v8634 = vlaneseq
        %v8635 = vshrl.u32 %v8634, 7
        %v8636 = vsub.s32 %v1040, %v8635
        %v8637 = vrot.slane %v8579, %v8636
        %v8638 = vlaneseq
        %v8639 = vshrl.u32 %v8638, 7
        %v8640 = vsub.s32 %v1040, %v8639
        %v8641 = vrot.slane %v8582, %v8640
        %v8642 = vlaneseq
        %v8643 = vshrl.u32 %v8642, 7
        %v8644 = vsub.s32 %v1040, %v8643
        %v8645 = vrot.slane %v8585, %v8644
        %v8646 = vlaneseq
        %v8647 = vshrl.u32 %v8646, 7
        %v8648 = vsub.s32 %v1040, %v8647
        %v8649 = vrot.slane %v8588, %v8648
        %v8650 = vlaneseq
        %v8651 = vshrl.u32 %v8650, 7
        %v8652 = vsub.s32 %v1040, %v8651
        %v8653 = vrot.slane %v8591, %v8652
        %v8654 = vlaneseq
        %v8655 = vshrl.u32 %v8654, 7
        %v8656 = vsub.s32 %v1040, %v8655
        %v8657 = vrot.slane %v8594, %v8656
        %v8658 = vlaneseq
        %v8659 = vshrl.u32 %v8658, 7
        %v8660 = vsub.s32 %v1040, %v8659
        %v8661 = vrot.slane %v8597, %v8660
        %v8662 = vsel %vm1105, %v8605, %v8601
        %v8663 = vsel %vm1107, %v8609, %v8662
        %v8664 = vsel %vm1109, %v8613, %v8663
        %v8665 = vsel %vm1111, %v8617, %v8664
        %v8666 = vsel %vm1113, %v8621, %v8665
        %v8667 = vsel %vm1115, %v8625, %v8666
        %v8668 = vsel %vm1117, %v8629, %v8667
        %v8669 = vsel %vm1105, %v8637, %v8633
        %v8670 = vsel %vm1107, %v8641, %v8669
        %v8671 = vsel %vm1109, %v8645, %v8670
        %v8672 = vsel %vm1111, %v8649, %v8671
        %v8673 = vsel %vm1113, %v8653, %v8672
        %v8674 = vsel %vm1115, %v8657, %v8673
        %v8675 = vsel %vm1117, %v8661, %v8674
        %v8678 = vsel %vm686, %v8668, 0.0
        %8679 = vadd.xlane.f32.xlu0 %v8678
        %v8680 = vpop.xlane.xlu0 %8679
        %v8681 = vsel %vm686, %v8675, 0.0
        %8682 = vadd.xlane.f32.xlu0 %v8681
        %v8683 = vpop.xlane.xlu0 %8682
        %v8684 = vrcp.pop %v8680
        %v8685 = vrcp.pop %v8683
        %v8688 = vlaneseq
        %v8689 = vshrl.u32 %v8688, 7
        %v8690 = vsub.s32 0, %v8689
        %v8691 = vrot.slane %v8684, %v8690
        %v8692 = vlaneseq
        %v8693 = vshrl.u32 %v8692, 7
        %v8694 = vsub.s32 1, %v8693
        %v8695 = vrot.slane %v8684, %v8694
        %v8696 = vlaneseq
        %v8697 = vshrl.u32 %v8696, 7
        %v8698 = vsub.s32 2, %v8697
        %v8699 = vrot.slane %v8684, %v8698
        %v8700 = vlaneseq
        %v8701 = vshrl.u32 %v8700, 7
        %v8702 = vsub.s32 3, %v8701
        %v8703 = vrot.slane %v8684, %v8702
        %v8704 = vlaneseq
        %v8705 = vshrl.u32 %v8704, 7
        %v8706 = vsub.s32 4, %v8705
        %v8707 = vrot.slane %v8684, %v8706
        %v8708 = vlaneseq
        %v8709 = vshrl.u32 %v8708, 7
        %v8710 = vsub.s32 5, %v8709
        %v8711 = vrot.slane %v8684, %v8710
        %v8712 = vlaneseq
        %v8713 = vshrl.u32 %v8712, 7
        %v8714 = vsub.s32 6, %v8713
        %v8715 = vrot.slane %v8684, %v8714
        %v8716 = vlaneseq
        %v8717 = vshrl.u32 %v8716, 7
        %v8718 = vsub.s32 7, %v8717
        %v8719 = vrot.slane %v8684, %v8718
        %v8720 = vlaneseq
        %v8721 = vshrl.u32 %v8720, 7
        %v8722 = vsub.s32 0, %v8721
        %v8723 = vrot.slane %v8685, %v8722
        %v8724 = vlaneseq
        %v8725 = vshrl.u32 %v8724, 7
        %v8726 = vsub.s32 1, %v8725
        %v8727 = vrot.slane %v8685, %v8726
        %v8728 = vlaneseq
        %v8729 = vshrl.u32 %v8728, 7
        %v8730 = vsub.s32 2, %v8729
        %v8731 = vrot.slane %v8685, %v8730
        %v8732 = vlaneseq
        %v8733 = vshrl.u32 %v8732, 7
        %v8734 = vsub.s32 3, %v8733
        %v8735 = vrot.slane %v8685, %v8734
        %v8736 = vlaneseq
        %v8737 = vshrl.u32 %v8736, 7
        %v8738 = vsub.s32 4, %v8737
        %v8739 = vrot.slane %v8685, %v8738
        %v8740 = vlaneseq
        %v8741 = vshrl.u32 %v8740, 7
        %v8742 = vsub.s32 5, %v8741
        %v8743 = vrot.slane %v8685, %v8742
        %v8744 = vlaneseq
        %v8745 = vshrl.u32 %v8744, 7
        %v8746 = vsub.s32 6, %v8745
        %v8747 = vrot.slane %v8685, %v8746
        %v8748 = vlaneseq
        %v8749 = vshrl.u32 %v8748, 7
        %v8750 = vsub.s32 7, %v8749
        %v8751 = vrot.slane %v8685, %v8750
        %v8768 = vmul.f32 %v8503, %v8691
        %v8769 = vmul.f32 %v8505, %v8695
        %v8770 = vmul.f32 %v8507, %v8699
        %v8771 = vmul.f32 %v8509, %v8703
        %v8772 = vmul.f32 %v8511, %v8707
        %v8773 = vmul.f32 %v8513, %v8711
        %v8774 = vmul.f32 %v8515, %v8715
        %v8775 = vmul.f32 %v8517, %v8719
        %v8776 = vmul.f32 %v8519, %v8723
        %v8777 = vmul.f32 %v8521, %v8727
        %v8778 = vmul.f32 %v8523, %v8731
        %v8779 = vmul.f32 %v8525, %v8735
        %v8780 = vmul.f32 %v8527, %v8739
        %v8781 = vmul.f32 %v8529, %v8743
        %v8782 = vmul.f32 %v8531, %v8747
        %v8783 = vmul.f32 %v8533, %v8751
        %8785 = vset.pattern.permute.xlu0 0
        %8786 = vperm.xlu0 %8785, %v8768
        %v8787 = vpop.permute.xlu0 %8786
        %8790 = vset.pattern.permute.xlu0 0
        %8791 = vperm.xlu0 %8790, %v8769
        %v8792 = vpop.permute.xlu0 %8791
        %8795 = vset.pattern.permute.xlu0 0
        %8796 = vperm.xlu0 %8795, %v8770
        %v8797 = vpop.permute.xlu0 %8796
        %8800 = vset.pattern.permute.xlu0 0
        %8801 = vperm.xlu0 %8800, %v8771
        %v8802 = vpop.permute.xlu0 %8801
        %8805 = vset.pattern.permute.xlu0 0
        %8806 = vperm.xlu0 %8805, %v8772
        %v8807 = vpop.permute.xlu0 %8806
        %8810 = vset.pattern.permute.xlu0 0
        %8811 = vperm.xlu0 %8810, %v8773
        %v8812 = vpop.permute.xlu0 %8811
        %8815 = vset.pattern.permute.xlu0 0
        %8816 = vperm.xlu0 %8815, %v8774
        %v8817 = vpop.permute.xlu0 %8816
        %8820 = vset.pattern.permute.xlu0 0
        %8821 = vperm.xlu0 %8820, %v8775
        %v8822 = vpop.permute.xlu0 %8821
        %8825 = vset.pattern.permute.xlu0 0
        %8826 = vperm.xlu0 %8825, %v8776
        %v8827 = vpop.permute.xlu0 %8826
        %8830 = vset.pattern.permute.xlu0 0
        %8831 = vperm.xlu0 %8830, %v8777
        %v8832 = vpop.permute.xlu0 %8831
        %8835 = vset.pattern.permute.xlu0 0
        %8836 = vperm.xlu0 %8835, %v8778
        %v8837 = vpop.permute.xlu0 %8836
        %8840 = vset.pattern.permute.xlu0 0
        %8841 = vperm.xlu0 %8840, %v8779
        %v8842 = vpop.permute.xlu0 %8841
        %8845 = vset.pattern.permute.xlu0 0
        %8846 = vperm.xlu0 %8845, %v8780
        %v8847 = vpop.permute.xlu0 %8846
        %8850 = vset.pattern.permute.xlu0 0
        %8851 = vperm.xlu0 %8850, %v8781
        %v8852 = vpop.permute.xlu0 %8851
        %8855 = vset.pattern.permute.xlu0 0
        %8856 = vperm.xlu0 %8855, %v8782
        %v8857 = vpop.permute.xlu0 %8856
        %8860 = vset.pattern.permute.xlu0 0
        %8861 = vperm.xlu0 %8860, %v8783
        %v8862 = vpop.permute.xlu0 %8861
        %v8864 = vmul.f32 %v8787, %v6452
        %v8865 = vmul.f32 %v8792, %v6452
        %v8866 = vmul.f32 %v8797, %v6452
        %v8867 = vmul.f32 %v8802, %v6452
        %v8868 = vmul.f32 %v8807, %v6452
        %v8869 = vmul.f32 %v8812, %v6452
        %v8870 = vmul.f32 %v8817, %v6452
        %v8871 = vmul.f32 %v8822, %v6452
        %v8872 = vmul.f32 %v8827, %v6457
        %v8873 = vmul.f32 %v8832, %v6457
        %v8874 = vmul.f32 %v8837, %v6457
        %v8875 = vmul.f32 %v8842, %v6457
        %v8876 = vmul.f32 %v8847, %v6457
        %v8877 = vmul.f32 %v8852, %v6457
        %v8878 = vmul.f32 %v8857, %v6457
        %v8879 = vmul.f32 %v8862, %v6457
        %v8880 = vsel %vm3200, %v8864, 0.0
        %v8881 = vrot.slane %v8880, 4
        %v8882 = vadd.f32 %v8880, %v8881
        %v8883 = vrot.slane %v8882, 2
        %v8884 = vadd.f32 %v8882, %v8883
        %v8885 = vrot.slane %v8884, 1
        %v8886 = vadd.f32 %v8884, %v8885
        %v8887 = vsel %vm3200, %v8865, 0.0
        %v8888 = vrot.slane %v8887, 4
        %v8889 = vadd.f32 %v8887, %v8888
        %v8890 = vrot.slane %v8889, 2
        %v8891 = vadd.f32 %v8889, %v8890
        %v8892 = vrot.slane %v8891, 1
        %v8893 = vadd.f32 %v8891, %v8892
        %v8894 = vsel %vm3200, %v8866, 0.0
        %v8895 = vrot.slane %v8894, 4
        %v8896 = vadd.f32 %v8894, %v8895
        %v8897 = vrot.slane %v8896, 2
        %v8898 = vadd.f32 %v8896, %v8897
        %v8899 = vrot.slane %v8898, 1
        %v8900 = vadd.f32 %v8898, %v8899
        %v8901 = vsel %vm3200, %v8867, 0.0
        %v8902 = vrot.slane %v8901, 4
        %v8903 = vadd.f32 %v8901, %v8902
        %v8904 = vrot.slane %v8903, 2
        %v8905 = vadd.f32 %v8903, %v8904
        %v8906 = vrot.slane %v8905, 1
        %v8907 = vadd.f32 %v8905, %v8906
        %v8908 = vsel %vm3200, %v8868, 0.0
        %v8909 = vrot.slane %v8908, 4
        %v8910 = vadd.f32 %v8908, %v8909
        %v8911 = vrot.slane %v8910, 2
        %v8912 = vadd.f32 %v8910, %v8911
        %v8913 = vrot.slane %v8912, 1
        %v8914 = vadd.f32 %v8912, %v8913
        %v8915 = vsel %vm3200, %v8869, 0.0
        %v8916 = vrot.slane %v8915, 4
        %v8917 = vadd.f32 %v8915, %v8916
        %v8918 = vrot.slane %v8917, 2
        %v8919 = vadd.f32 %v8917, %v8918
        %v8920 = vrot.slane %v8919, 1
        %v8921 = vadd.f32 %v8919, %v8920
        %v8922 = vsel %vm3200, %v8870, 0.0
        %v8923 = vrot.slane %v8922, 4
        %v8924 = vadd.f32 %v8922, %v8923
        %v8925 = vrot.slane %v8924, 2
        %v8926 = vadd.f32 %v8924, %v8925
        %v8927 = vrot.slane %v8926, 1
        %v8928 = vadd.f32 %v8926, %v8927
        %v8929 = vsel %vm3200, %v8871, 0.0
        %v8930 = vrot.slane %v8929, 4
        %v8931 = vadd.f32 %v8929, %v8930
        %v8932 = vrot.slane %v8931, 2
        %v8933 = vadd.f32 %v8931, %v8932
        %v8934 = vrot.slane %v8933, 1
        %v8935 = vadd.f32 %v8933, %v8934
        %v8936 = vsel %vm3200, %v8872, 0.0
        %v8937 = vrot.slane %v8936, 4
        %v8938 = vadd.f32 %v8936, %v8937
        %v8939 = vrot.slane %v8938, 2
        %v8940 = vadd.f32 %v8938, %v8939
        %v8941 = vrot.slane %v8940, 1
        %v8942 = vadd.f32 %v8940, %v8941
        %v8943 = vsel %vm3200, %v8873, 0.0
        %v8944 = vrot.slane %v8943, 4
        %v8945 = vadd.f32 %v8943, %v8944
        %v8946 = vrot.slane %v8945, 2
        %v8947 = vadd.f32 %v8945, %v8946
        %v8948 = vrot.slane %v8947, 1
        %v8949 = vadd.f32 %v8947, %v8948
        %v8950 = vsel %vm3200, %v8874, 0.0
        %v8951 = vrot.slane %v8950, 4
        %v8952 = vadd.f32 %v8950, %v8951
        %v8953 = vrot.slane %v8952, 2
        %v8954 = vadd.f32 %v8952, %v8953
        %v8955 = vrot.slane %v8954, 1
        %v8956 = vadd.f32 %v8954, %v8955
        %v8957 = vsel %vm3200, %v8875, 0.0
        %v8958 = vrot.slane %v8957, 4
        %v8959 = vadd.f32 %v8957, %v8958
        %v8960 = vrot.slane %v8959, 2
        %v8961 = vadd.f32 %v8959, %v8960
        %v8962 = vrot.slane %v8961, 1
        %v8963 = vadd.f32 %v8961, %v8962
        %v8964 = vsel %vm3200, %v8876, 0.0
        %v8965 = vrot.slane %v8964, 4
        %v8966 = vadd.f32 %v8964, %v8965
        %v8967 = vrot.slane %v8966, 2
        %v8968 = vadd.f32 %v8966, %v8967
        %v8969 = vrot.slane %v8968, 1
        %v8970 = vadd.f32 %v8968, %v8969
        %v8971 = vsel %vm3200, %v8877, 0.0
        %v8972 = vrot.slane %v8971, 4
        %v8973 = vadd.f32 %v8971, %v8972
        %v8974 = vrot.slane %v8973, 2
        %v8975 = vadd.f32 %v8973, %v8974
        %v8976 = vrot.slane %v8975, 1
        %v8977 = vadd.f32 %v8975, %v8976
        %v8978 = vsel %vm3200, %v8878, 0.0
        %v8979 = vrot.slane %v8978, 4
        %v8980 = vadd.f32 %v8978, %v8979
        %v8981 = vrot.slane %v8980, 2
        %v8982 = vadd.f32 %v8980, %v8981
        %v8983 = vrot.slane %v8982, 1
        %v8984 = vadd.f32 %v8982, %v8983
        %v8985 = vsel %vm3200, %v8879, 0.0
        %v8986 = vrot.slane %v8985, 4
        %v8987 = vadd.f32 %v8985, %v8986
        %v8988 = vrot.slane %v8987, 2
        %v8989 = vadd.f32 %v8987, %v8988
        %v8990 = vrot.slane %v8989, 1
        %v8991 = vadd.f32 %v8989, %v8990
        %8992 = vrot.lane.b32.xlu0 %v6650, 122
        %v8993 = vpop.permute.xlu0 %8992
        %8994 = vrot.lane.b32.xlu0 %v6651, 122
        %v8995 = vpop.permute.xlu0 %8994
        %8996 = vrot.lane.b32.xlu0 %v6652, 122
        %v8997 = vpop.permute.xlu0 %8996
        %8998 = vrot.lane.b32.xlu0 %v6653, 122
        %v8999 = vpop.permute.xlu0 %8998
        %9000 = vrot.lane.b32.xlu0 %v6654, 122
        %v9001 = vpop.permute.xlu0 %9000
        %9002 = vrot.lane.b32.xlu0 %v6655, 122
        %v9003 = vpop.permute.xlu0 %9002
        %9004 = vrot.lane.b32.xlu0 %v6656, 122
        %v9005 = vpop.permute.xlu0 %9004
        %9006 = vrot.lane.b32.xlu0 %v6657, 122
        %v9007 = vpop.permute.xlu0 %9006
        %9008 = vrot.lane.b32.xlu0 %v6658, 122
        %v9009 = vpop.permute.xlu0 %9008
        %9010 = vrot.lane.b32.xlu0 %v6659, 122
        %v9011 = vpop.permute.xlu0 %9010
        %9012 = vrot.lane.b32.xlu0 %v6660, 122
        %v9013 = vpop.permute.xlu0 %9012
        %9014 = vrot.lane.b32.xlu0 %v6661, 122
        %v9015 = vpop.permute.xlu0 %9014
        %9016 = vrot.lane.b32.xlu0 %v6662, 122
        %v9017 = vpop.permute.xlu0 %9016
        %9018 = vrot.lane.b32.xlu0 %v6663, 122
        %v9019 = vpop.permute.xlu0 %9018
        %9020 = vrot.lane.b32.xlu0 %v6664, 122
        %v9021 = vpop.permute.xlu0 %9020
        %9022 = vrot.lane.b32.xlu0 %v6665, 122
        %v9023 = vpop.permute.xlu0 %9022
        %v9040 = vsel %vm974, %v8993, 0.0
        %9041 = vadd.xlane.f32.xlu0 %v9040
        %v9042 = vpop.xlane.xlu0 %9041
        %v9043 = vsel %vm974, %v8995, 0.0
        %9044 = vadd.xlane.f32.xlu0 %v9043
        %v9045 = vpop.xlane.xlu0 %9044
        %v9046 = vsel %vm974, %v8997, 0.0
        %9047 = vadd.xlane.f32.xlu0 %v9046
        %v9048 = vpop.xlane.xlu0 %9047
        %v9049 = vsel %vm974, %v8999, 0.0
        %9050 = vadd.xlane.f32.xlu0 %v9049
        %v9051 = vpop.xlane.xlu0 %9050
        %v9052 = vsel %vm974, %v9001, 0.0
        %9053 = vadd.xlane.f32.xlu0 %v9052
        %v9054 = vpop.xlane.xlu0 %9053
        %v9055 = vsel %vm974, %v9003, 0.0
        %9056 = vadd.xlane.f32.xlu0 %v9055
        %v9057 = vpop.xlane.xlu0 %9056
        %v9058 = vsel %vm974, %v9005, 0.0
        %9059 = vadd.xlane.f32.xlu0 %v9058
        %v9060 = vpop.xlane.xlu0 %9059
        %v9061 = vsel %vm974, %v9007, 0.0
        %9062 = vadd.xlane.f32.xlu0 %v9061
        %v9063 = vpop.xlane.xlu0 %9062
        %v9064 = vsel %vm974, %v9009, 0.0
        %9065 = vadd.xlane.f32.xlu0 %v9064
        %v9066 = vpop.xlane.xlu0 %9065
        %v9067 = vsel %vm974, %v9011, 0.0
        %9068 = vadd.xlane.f32.xlu0 %v9067
        %v9069 = vpop.xlane.xlu0 %9068
        %v9070 = vsel %vm974, %v9013, 0.0
        %9071 = vadd.xlane.f32.xlu0 %v9070
        %v9072 = vpop.xlane.xlu0 %9071
        %v9073 = vsel %vm974, %v9015, 0.0
        %9074 = vadd.xlane.f32.xlu0 %v9073
        %v9075 = vpop.xlane.xlu0 %9074
        %v9076 = vsel %vm974, %v9017, 0.0
        %9077 = vadd.xlane.f32.xlu0 %v9076
        %v9078 = vpop.xlane.xlu0 %9077
        %v9079 = vsel %vm974, %v9019, 0.0
        %9080 = vadd.xlane.f32.xlu0 %v9079
        %v9081 = vpop.xlane.xlu0 %9080
        %v9082 = vsel %vm974, %v9021, 0.0
        %9083 = vadd.xlane.f32.xlu0 %v9082
        %v9084 = vpop.xlane.xlu0 %9083
        %v9085 = vsel %vm974, %v9023, 0.0
        %9086 = vadd.xlane.f32.xlu0 %v9085
        %v9087 = vpop.xlane.xlu0 %9086
        %v9104 = vlaneseq
        %v9105 = vshrl.u32 %v9104, 7
        %v9106 = vsub.s32 %v1040, %v9105
        %v9107 = vrot.slane %v9042, %v9106
        %v9108 = vlaneseq
        %v9109 = vshrl.u32 %v9108, 7
        %v9110 = vsub.s32 %v1040, %v9109
        %v9111 = vrot.slane %v9045, %v9110
        %v9112 = vlaneseq
        %v9113 = vshrl.u32 %v9112, 7
        %v9114 = vsub.s32 %v1040, %v9113
        %v9115 = vrot.slane %v9048, %v9114
        %v9116 = vlaneseq
        %v9117 = vshrl.u32 %v9116, 7
        %v9118 = vsub.s32 %v1040, %v9117
        %v9119 = vrot.slane %v9051, %v9118
        %v9120 = vlaneseq
        %v9121 = vshrl.u32 %v9120, 7
        %v9122 = vsub.s32 %v1040, %v9121
        %v9123 = vrot.slane %v9054, %v9122
        %v9124 = vlaneseq
        %v9125 = vshrl.u32 %v9124, 7
        %v9126 = vsub.s32 %v1040, %v9125
        %v9127 = vrot.slane %v9057, %v9126
        %v9128 = vlaneseq
        %v9129 = vshrl.u32 %v9128, 7
        %v9130 = vsub.s32 %v1040, %v9129
        %v9131 = vrot.slane %v9060, %v9130
        %v9132 = vlaneseq
        %v9133 = vshrl.u32 %v9132, 7
        %v9134 = vsub.s32 %v1040, %v9133
        %v9135 = vrot.slane %v9063, %v9134
        %v9136 = vlaneseq
        %v9137 = vshrl.u32 %v9136, 7
        %v9138 = vsub.s32 %v1040, %v9137
        %v9139 = vrot.slane %v9066, %v9138
        %v9140 = vlaneseq
        %v9141 = vshrl.u32 %v9140, 7
        %v9142 = vsub.s32 %v1040, %v9141
        %v9143 = vrot.slane %v9069, %v9142
        %v9144 = vlaneseq
        %v9145 = vshrl.u32 %v9144, 7
        %v9146 = vsub.s32 %v1040, %v9145
        %v9147 = vrot.slane %v9072, %v9146
        %v9148 = vlaneseq
        %v9149 = vshrl.u32 %v9148, 7
        %v9150 = vsub.s32 %v1040, %v9149
        %v9151 = vrot.slane %v9075, %v9150
        %v9152 = vlaneseq
        %v9153 = vshrl.u32 %v9152, 7
        %v9154 = vsub.s32 %v1040, %v9153
        %v9155 = vrot.slane %v9078, %v9154
        %v9156 = vlaneseq
        %v9157 = vshrl.u32 %v9156, 7
        %v9158 = vsub.s32 %v1040, %v9157
        %v9159 = vrot.slane %v9081, %v9158
        %v9160 = vlaneseq
        %v9161 = vshrl.u32 %v9160, 7
        %v9162 = vsub.s32 %v1040, %v9161
        %v9163 = vrot.slane %v9084, %v9162
        %v9164 = vlaneseq
        %v9165 = vshrl.u32 %v9164, 7
        %v9166 = vsub.s32 %v1040, %v9165
        %v9167 = vrot.slane %v9087, %v9166
        %v9168 = vsel %vm1105, %v9111, %v9107
        %v9169 = vsel %vm1107, %v9115, %v9168
        %v9170 = vsel %vm1109, %v9119, %v9169
        %v9171 = vsel %vm1111, %v9123, %v9170
        %v9172 = vsel %vm1113, %v9127, %v9171
        %v9173 = vsel %vm1115, %v9131, %v9172
        %v9174 = vsel %vm1117, %v9135, %v9173
        %v9175 = vsel %vm1105, %v9143, %v9139
        %v9176 = vsel %vm1107, %v9147, %v9175
        %v9177 = vsel %vm1109, %v9151, %v9176
        %v9178 = vsel %vm1111, %v9155, %v9177
        %v9179 = vsel %vm1113, %v9159, %v9178
        %v9180 = vsel %vm1115, %v9163, %v9179
        %v9181 = vsel %vm1117, %v9167, %v9180
        %v9184 = vsel %vm686, %v9174, -inf
        %9185 = vmax.xlane.f32.xlu0 %v9184
        %v9186 = vpop.xlane.xlu0 %9185
        %v9187 = vsel %vm686, %v9181, -inf
        %9188 = vmax.xlane.f32.xlu0 %v9187
        %v9189 = vpop.xlane.xlu0 %9188
        %v9192 = vlaneseq
        %v9193 = vshrl.u32 %v9192, 7
        %v9194 = vsub.s32 0, %v9193
        %v9195 = vrot.slane %v9186, %v9194
        %v9196 = vlaneseq
        %v9197 = vshrl.u32 %v9196, 7
        %v9198 = vsub.s32 1, %v9197
        %v9199 = vrot.slane %v9186, %v9198
        %v9200 = vlaneseq
        %v9201 = vshrl.u32 %v9200, 7
        %v9202 = vsub.s32 2, %v9201
        %v9203 = vrot.slane %v9186, %v9202
        %v9204 = vlaneseq
        %v9205 = vshrl.u32 %v9204, 7
        %v9206 = vsub.s32 3, %v9205
        %v9207 = vrot.slane %v9186, %v9206
        %v9208 = vlaneseq
        %v9209 = vshrl.u32 %v9208, 7
        %v9210 = vsub.s32 4, %v9209
        %v9211 = vrot.slane %v9186, %v9210
        %v9212 = vlaneseq
        %v9213 = vshrl.u32 %v9212, 7
        %v9214 = vsub.s32 5, %v9213
        %v9215 = vrot.slane %v9186, %v9214
        %v9216 = vlaneseq
        %v9217 = vshrl.u32 %v9216, 7
        %v9218 = vsub.s32 6, %v9217
        %v9219 = vrot.slane %v9186, %v9218
        %v9220 = vlaneseq
        %v9221 = vshrl.u32 %v9220, 7
        %v9222 = vsub.s32 7, %v9221
        %v9223 = vrot.slane %v9186, %v9222
        %v9224 = vlaneseq
        %v9225 = vshrl.u32 %v9224, 7
        %v9226 = vsub.s32 0, %v9225
        %v9227 = vrot.slane %v9189, %v9226
        %v9228 = vlaneseq
        %v9229 = vshrl.u32 %v9228, 7
        %v9230 = vsub.s32 1, %v9229
        %v9231 = vrot.slane %v9189, %v9230
        %v9232 = vlaneseq
        %v9233 = vshrl.u32 %v9232, 7
        %v9234 = vsub.s32 2, %v9233
        %v9235 = vrot.slane %v9189, %v9234
        %v9236 = vlaneseq
        %v9237 = vshrl.u32 %v9236, 7
        %v9238 = vsub.s32 3, %v9237
        %v9239 = vrot.slane %v9189, %v9238
        %v9240 = vlaneseq
        %v9241 = vshrl.u32 %v9240, 7
        %v9242 = vsub.s32 4, %v9241
        %v9243 = vrot.slane %v9189, %v9242
        %v9244 = vlaneseq
        %v9245 = vshrl.u32 %v9244, 7
        %v9246 = vsub.s32 5, %v9245
        %v9247 = vrot.slane %v9189, %v9246
        %v9248 = vlaneseq
        %v9249 = vshrl.u32 %v9248, 7
        %v9250 = vsub.s32 6, %v9249
        %v9251 = vrot.slane %v9189, %v9250
        %v9252 = vlaneseq
        %v9253 = vshrl.u32 %v9252, 7
        %v9254 = vsub.s32 7, %v9253
        %v9255 = vrot.slane %v9189, %v9254
        %v9272 = vsub.f32 %v9042, %v9195
        %v9273 = vsub.f32 %v9045, %v9199
        %v9274 = vsub.f32 %v9048, %v9203
        %v9275 = vsub.f32 %v9051, %v9207
        %v9276 = vsub.f32 %v9054, %v9211
        %v9277 = vsub.f32 %v9057, %v9215
        %v9278 = vsub.f32 %v9060, %v9219
        %v9279 = vsub.f32 %v9063, %v9223
        %v9280 = vsub.f32 %v9066, %v9227
        %v9281 = vsub.f32 %v9069, %v9231
        %v9282 = vsub.f32 %v9072, %v9235
        %v9283 = vsub.f32 %v9075, %v9239
        %v9284 = vsub.f32 %v9078, %v9243
        %v9285 = vsub.f32 %v9081, %v9247
        %v9286 = vsub.f32 %v9084, %v9251
        %v9287 = vsub.f32 %v9087, %v9255
        %v9288 = vmul.f32 %v9272, 1.442695
        %v9289 = vpow.pop %v9288
        %v9290 = vmul.f32 %v9273, 1.442695
        %v9291 = vpow.pop %v9290
        %v9292 = vmul.f32 %v9274, 1.442695
        %v9293 = vpow.pop %v9292
        %v9294 = vmul.f32 %v9275, 1.442695
        %v9295 = vpow.pop %v9294
        %v9296 = vmul.f32 %v9276, 1.442695
        %v9297 = vpow.pop %v9296
        %v9298 = vmul.f32 %v9277, 1.442695
        %v9299 = vpow.pop %v9298
        %v9300 = vmul.f32 %v9278, 1.442695
        %v9301 = vpow.pop %v9300
        %v9302 = vmul.f32 %v9279, 1.442695
        %v9303 = vpow.pop %v9302
        %v9304 = vmul.f32 %v9280, 1.442695
        %v9305 = vpow.pop %v9304
        %v9306 = vmul.f32 %v9281, 1.442695
        %v9307 = vpow.pop %v9306
        %v9308 = vmul.f32 %v9282, 1.442695
        %v9309 = vpow.pop %v9308
        %v9310 = vmul.f32 %v9283, 1.442695
        %v9311 = vpow.pop %v9310
        %v9312 = vmul.f32 %v9284, 1.442695
        %v9313 = vpow.pop %v9312
        %v9314 = vmul.f32 %v9285, 1.442695
        %v9315 = vpow.pop %v9314
        %v9316 = vmul.f32 %v9286, 1.442695
        %v9317 = vpow.pop %v9316
        %v9318 = vmul.f32 %v9287, 1.442695
        %v9319 = vpow.pop %v9318
        %9336 = vset.pattern.permute.xlu0 0
        %9337 = vperm.xlu0 %9336, %v9289
        %v9338 = vpop.permute.xlu0 %9337
        %9339 = vset.pattern.permute.xlu0 0
        %9340 = vperm.xlu0 %9339, %v9291
        %v9341 = vpop.permute.xlu0 %9340
        %9342 = vset.pattern.permute.xlu0 0
        %9343 = vperm.xlu0 %9342, %v9293
        %v9344 = vpop.permute.xlu0 %9343
        %9345 = vset.pattern.permute.xlu0 0
        %9346 = vperm.xlu0 %9345, %v9295
        %v9347 = vpop.permute.xlu0 %9346
        %9348 = vset.pattern.permute.xlu0 0
        %9349 = vperm.xlu0 %9348, %v9297
        %v9350 = vpop.permute.xlu0 %9349
        %9351 = vset.pattern.permute.xlu0 0
        %9352 = vperm.xlu0 %9351, %v9299
        %v9353 = vpop.permute.xlu0 %9352
        %9354 = vset.pattern.permute.xlu0 0
        %9355 = vperm.xlu0 %9354, %v9301
        %v9356 = vpop.permute.xlu0 %9355
        %9357 = vset.pattern.permute.xlu0 0
        %9358 = vperm.xlu0 %9357, %v9303
        %v9359 = vpop.permute.xlu0 %9358
        %9360 = vset.pattern.permute.xlu0 0
        %9361 = vperm.xlu0 %9360, %v9305
        %v9362 = vpop.permute.xlu0 %9361
        %9363 = vset.pattern.permute.xlu0 0
        %9364 = vperm.xlu0 %9363, %v9307
        %v9365 = vpop.permute.xlu0 %9364
        %9366 = vset.pattern.permute.xlu0 0
        %9367 = vperm.xlu0 %9366, %v9309
        %v9368 = vpop.permute.xlu0 %9367
        %9369 = vset.pattern.permute.xlu0 0
        %9370 = vperm.xlu0 %9369, %v9311
        %v9371 = vpop.permute.xlu0 %9370
        %9372 = vset.pattern.permute.xlu0 0
        %9373 = vperm.xlu0 %9372, %v9313
        %v9374 = vpop.permute.xlu0 %9373
        %9375 = vset.pattern.permute.xlu0 0
        %9376 = vperm.xlu0 %9375, %v9315
        %v9377 = vpop.permute.xlu0 %9376
        %9378 = vset.pattern.permute.xlu0 0
        %9379 = vperm.xlu0 %9378, %v9317
        %v9380 = vpop.permute.xlu0 %9379
        %9381 = vset.pattern.permute.xlu0 0
        %9382 = vperm.xlu0 %9381, %v9319
        %v9383 = vpop.permute.xlu0 %9382
        %v9384 = vlaneseq
        %v9385 = vshrl.u32 %v9384, 7
        %v9386 = vsub.s32 %v1040, %v9385
        %v9387 = vrot.slane %v9338, %v9386
        %v9388 = vlaneseq
        %v9389 = vshrl.u32 %v9388, 7
        %v9390 = vsub.s32 %v1040, %v9389
        %v9391 = vrot.slane %v9341, %v9390
        %v9392 = vlaneseq
        %v9393 = vshrl.u32 %v9392, 7
        %v9394 = vsub.s32 %v1040, %v9393
        %v9395 = vrot.slane %v9344, %v9394
        %v9396 = vlaneseq
        %v9397 = vshrl.u32 %v9396, 7
        %v9398 = vsub.s32 %v1040, %v9397
        %v9399 = vrot.slane %v9347, %v9398
        %v9400 = vlaneseq
        %v9401 = vshrl.u32 %v9400, 7
        %v9402 = vsub.s32 %v1040, %v9401
        %v9403 = vrot.slane %v9350, %v9402
        %v9404 = vlaneseq
        %v9405 = vshrl.u32 %v9404, 7
        %v9406 = vsub.s32 %v1040, %v9405
        %v9407 = vrot.slane %v9353, %v9406
        %v9408 = vlaneseq
        %v9409 = vshrl.u32 %v9408, 7
        %v9410 = vsub.s32 %v1040, %v9409
        %v9411 = vrot.slane %v9356, %v9410
        %v9412 = vlaneseq
        %v9413 = vshrl.u32 %v9412, 7
        %v9414 = vsub.s32 %v1040, %v9413
        %v9415 = vrot.slane %v9359, %v9414
        %v9416 = vlaneseq
        %v9417 = vshrl.u32 %v9416, 7
        %v9418 = vsub.s32 %v1040, %v9417
        %v9419 = vrot.slane %v9362, %v9418
        %v9420 = vlaneseq
        %v9421 = vshrl.u32 %v9420, 7
        %v9422 = vsub.s32 %v1040, %v9421
        %v9423 = vrot.slane %v9365, %v9422
        %v9424 = vlaneseq
        %v9425 = vshrl.u32 %v9424, 7
        %v9426 = vsub.s32 %v1040, %v9425
        %v9427 = vrot.slane %v9368, %v9426
        %v9428 = vlaneseq
        %v9429 = vshrl.u32 %v9428, 7
        %v9430 = vsub.s32 %v1040, %v9429
        %v9431 = vrot.slane %v9371, %v9430
        %v9432 = vlaneseq
        %v9433 = vshrl.u32 %v9432, 7
        %v9434 = vsub.s32 %v1040, %v9433
        %v9435 = vrot.slane %v9374, %v9434
        %v9436 = vlaneseq
        %v9437 = vshrl.u32 %v9436, 7
        %v9438 = vsub.s32 %v1040, %v9437
        %v9439 = vrot.slane %v9377, %v9438
        %v9440 = vlaneseq
        %v9441 = vshrl.u32 %v9440, 7
        %v9442 = vsub.s32 %v1040, %v9441
        %v9443 = vrot.slane %v9380, %v9442
        %v9444 = vlaneseq
        %v9445 = vshrl.u32 %v9444, 7
        %v9446 = vsub.s32 %v1040, %v9445
        %v9447 = vrot.slane %v9383, %v9446
        %v9448 = vsel %vm1105, %v9391, %v9387
        %v9449 = vsel %vm1107, %v9395, %v9448
        %v9450 = vsel %vm1109, %v9399, %v9449
        %v9451 = vsel %vm1111, %v9403, %v9450
        %v9452 = vsel %vm1113, %v9407, %v9451
        %v9453 = vsel %vm1115, %v9411, %v9452
        %v9454 = vsel %vm1117, %v9415, %v9453
        %v9455 = vsel %vm1105, %v9423, %v9419
        %v9456 = vsel %vm1107, %v9427, %v9455
        %v9457 = vsel %vm1109, %v9431, %v9456
        %v9458 = vsel %vm1111, %v9435, %v9457
        %v9459 = vsel %vm1113, %v9439, %v9458
        %v9460 = vsel %vm1115, %v9443, %v9459
        %v9461 = vsel %vm1117, %v9447, %v9460
        %v9464 = vsel %vm686, %v9454, 0.0
        %9465 = vadd.xlane.f32.xlu0 %v9464
        %v9466 = vpop.xlane.xlu0 %9465
        %v9467 = vsel %vm686, %v9461, 0.0
        %9468 = vadd.xlane.f32.xlu0 %v9467
        %v9469 = vpop.xlane.xlu0 %9468
        %v9470 = vrcp.pop %v9466
        %v9471 = vrcp.pop %v9469
        %v9474 = vlaneseq
        %v9475 = vshrl.u32 %v9474, 7
        %v9476 = vsub.s32 0, %v9475
        %v9477 = vrot.slane %v9470, %v9476
        %v9478 = vlaneseq
        %v9479 = vshrl.u32 %v9478, 7
        %v9480 = vsub.s32 1, %v9479
        %v9481 = vrot.slane %v9470, %v9480
        %v9482 = vlaneseq
        %v9483 = vshrl.u32 %v9482, 7
        %v9484 = vsub.s32 2, %v9483
        %v9485 = vrot.slane %v9470, %v9484
        %v9486 = vlaneseq
        %v9487 = vshrl.u32 %v9486, 7
        %v9488 = vsub.s32 3, %v9487
        %v9489 = vrot.slane %v9470, %v9488
        %v9490 = vlaneseq
        %v9491 = vshrl.u32 %v9490, 7
        %v9492 = vsub.s32 4, %v9491
        %v9493 = vrot.slane %v9470, %v9492
        %v9494 = vlaneseq
        %v9495 = vshrl.u32 %v9494, 7
        %v9496 = vsub.s32 5, %v9495
        %v9497 = vrot.slane %v9470, %v9496
        %v9498 = vlaneseq
        %v9499 = vshrl.u32 %v9498, 7
        %v9500 = vsub.s32 6, %v9499
        %v9501 = vrot.slane %v9470, %v9500
        %v9502 = vlaneseq
        %v9503 = vshrl.u32 %v9502, 7
        %v9504 = vsub.s32 7, %v9503
        %v9505 = vrot.slane %v9470, %v9504
        %v9506 = vlaneseq
        %v9507 = vshrl.u32 %v9506, 7
        %v9508 = vsub.s32 0, %v9507
        %v9509 = vrot.slane %v9471, %v9508
        %v9510 = vlaneseq
        %v9511 = vshrl.u32 %v9510, 7
        %v9512 = vsub.s32 1, %v9511
        %v9513 = vrot.slane %v9471, %v9512
        %v9514 = vlaneseq
        %v9515 = vshrl.u32 %v9514, 7
        %v9516 = vsub.s32 2, %v9515
        %v9517 = vrot.slane %v9471, %v9516
        %v9518 = vlaneseq
        %v9519 = vshrl.u32 %v9518, 7
        %v9520 = vsub.s32 3, %v9519
        %v9521 = vrot.slane %v9471, %v9520
        %v9522 = vlaneseq
        %v9523 = vshrl.u32 %v9522, 7
        %v9524 = vsub.s32 4, %v9523
        %v9525 = vrot.slane %v9471, %v9524
        %v9526 = vlaneseq
        %v9527 = vshrl.u32 %v9526, 7
        %v9528 = vsub.s32 5, %v9527
        %v9529 = vrot.slane %v9471, %v9528
        %v9530 = vlaneseq
        %v9531 = vshrl.u32 %v9530, 7
        %v9532 = vsub.s32 6, %v9531
        %v9533 = vrot.slane %v9471, %v9532
        %v9534 = vlaneseq
        %v9535 = vshrl.u32 %v9534, 7
        %v9536 = vsub.s32 7, %v9535
        %v9537 = vrot.slane %v9471, %v9536
        %v9554 = vmul.f32 %v9289, %v9477
        %v9555 = vmul.f32 %v9291, %v9481
        %v9556 = vmul.f32 %v9293, %v9485
        %v9557 = vmul.f32 %v9295, %v9489
        %v9558 = vmul.f32 %v9297, %v9493
        %v9559 = vmul.f32 %v9299, %v9497
        %v9560 = vmul.f32 %v9301, %v9501
        %v9561 = vmul.f32 %v9303, %v9505
        %v9562 = vmul.f32 %v9305, %v9509
        %v9563 = vmul.f32 %v9307, %v9513
        %v9564 = vmul.f32 %v9309, %v9517
        %v9565 = vmul.f32 %v9311, %v9521
        %v9566 = vmul.f32 %v9313, %v9525
        %v9567 = vmul.f32 %v9315, %v9529
        %v9568 = vmul.f32 %v9317, %v9533
        %v9569 = vmul.f32 %v9319, %v9537
        %9571 = vset.pattern.permute.xlu0 0
        %9572 = vperm.xlu0 %9571, %v9554
        %v9573 = vpop.permute.xlu0 %9572
        %9576 = vset.pattern.permute.xlu0 0
        %9577 = vperm.xlu0 %9576, %v9555
        %v9578 = vpop.permute.xlu0 %9577
        %9581 = vset.pattern.permute.xlu0 0
        %9582 = vperm.xlu0 %9581, %v9556
        %v9583 = vpop.permute.xlu0 %9582
        %9586 = vset.pattern.permute.xlu0 0
        %9587 = vperm.xlu0 %9586, %v9557
        %v9588 = vpop.permute.xlu0 %9587
        %9591 = vset.pattern.permute.xlu0 0
        %9592 = vperm.xlu0 %9591, %v9558
        %v9593 = vpop.permute.xlu0 %9592
        %9596 = vset.pattern.permute.xlu0 0
        %9597 = vperm.xlu0 %9596, %v9559
        %v9598 = vpop.permute.xlu0 %9597
        %9601 = vset.pattern.permute.xlu0 0
        %9602 = vperm.xlu0 %9601, %v9560
        %v9603 = vpop.permute.xlu0 %9602
        %9606 = vset.pattern.permute.xlu0 0
        %9607 = vperm.xlu0 %9606, %v9561
        %v9608 = vpop.permute.xlu0 %9607
        %9611 = vset.pattern.permute.xlu0 0
        %9612 = vperm.xlu0 %9611, %v9562
        %v9613 = vpop.permute.xlu0 %9612
        %9616 = vset.pattern.permute.xlu0 0
        %9617 = vperm.xlu0 %9616, %v9563
        %v9618 = vpop.permute.xlu0 %9617
        %9621 = vset.pattern.permute.xlu0 0
        %9622 = vperm.xlu0 %9621, %v9564
        %v9623 = vpop.permute.xlu0 %9622
        %9626 = vset.pattern.permute.xlu0 0
        %9627 = vperm.xlu0 %9626, %v9565
        %v9628 = vpop.permute.xlu0 %9627
        %9631 = vset.pattern.permute.xlu0 0
        %9632 = vperm.xlu0 %9631, %v9566
        %v9633 = vpop.permute.xlu0 %9632
        %9636 = vset.pattern.permute.xlu0 0
        %9637 = vperm.xlu0 %9636, %v9567
        %v9638 = vpop.permute.xlu0 %9637
        %9641 = vset.pattern.permute.xlu0 0
        %9642 = vperm.xlu0 %9641, %v9568
        %v9643 = vpop.permute.xlu0 %9642
        %9646 = vset.pattern.permute.xlu0 0
        %9647 = vperm.xlu0 %9646, %v9569
        %v9648 = vpop.permute.xlu0 %9647
        %v9650 = vmul.f32 %v9573, %v6452
        %v9651 = vmul.f32 %v9578, %v6452
        %v9652 = vmul.f32 %v9583, %v6452
        %v9653 = vmul.f32 %v9588, %v6452
        %v9654 = vmul.f32 %v9593, %v6452
        %v9655 = vmul.f32 %v9598, %v6452
        %v9656 = vmul.f32 %v9603, %v6452
        %v9657 = vmul.f32 %v9608, %v6452
        %v9658 = vmul.f32 %v9613, %v6457
        %v9659 = vmul.f32 %v9618, %v6457
        %v9660 = vmul.f32 %v9623, %v6457
        %v9661 = vmul.f32 %v9628, %v6457
        %v9662 = vmul.f32 %v9633, %v6457
        %v9663 = vmul.f32 %v9638, %v6457
        %v9664 = vmul.f32 %v9643, %v6457
        %v9665 = vmul.f32 %v9648, %v6457
        %v9666 = vsel %vm3987, %v9650, 0.0
        %v9667 = vrot.slane %v9666, 4
        %v9668 = vadd.f32 %v9666, %v9667
        %v9669 = vrot.slane %v9668, 2
        %v9670 = vadd.f32 %v9668, %v9669
        %v9671 = vrot.slane %v9670, 1
        %v9672 = vadd.f32 %v9670, %v9671
        %v9673 = vsel %vm3987, %v9651, 0.0
        %v9674 = vrot.slane %v9673, 4
        %v9675 = vadd.f32 %v9673, %v9674
        %v9676 = vrot.slane %v9675, 2
        %v9677 = vadd.f32 %v9675, %v9676
        %v9678 = vrot.slane %v9677, 1
        %v9679 = vadd.f32 %v9677, %v9678
        %v9680 = vsel %vm3987, %v9652, 0.0
        %v9681 = vrot.slane %v9680, 4
        %v9682 = vadd.f32 %v9680, %v9681
        %v9683 = vrot.slane %v9682, 2
        %v9684 = vadd.f32 %v9682, %v9683
        %v9685 = vrot.slane %v9684, 1
        %v9686 = vadd.f32 %v9684, %v9685
        %v9687 = vsel %vm3987, %v9653, 0.0
        %v9688 = vrot.slane %v9687, 4
        %v9689 = vadd.f32 %v9687, %v9688
        %v9690 = vrot.slane %v9689, 2
        %v9691 = vadd.f32 %v9689, %v9690
        %v9692 = vrot.slane %v9691, 1
        %v9693 = vadd.f32 %v9691, %v9692
        %v9694 = vsel %vm3987, %v9654, 0.0
        %v9695 = vrot.slane %v9694, 4
        %v9696 = vadd.f32 %v9694, %v9695
        %v9697 = vrot.slane %v9696, 2
        %v9698 = vadd.f32 %v9696, %v9697
        %v9699 = vrot.slane %v9698, 1
        %v9700 = vadd.f32 %v9698, %v9699
        %v9701 = vsel %vm3987, %v9655, 0.0
        %v9702 = vrot.slane %v9701, 4
        %v9703 = vadd.f32 %v9701, %v9702
        %v9704 = vrot.slane %v9703, 2
        %v9705 = vadd.f32 %v9703, %v9704
        %v9706 = vrot.slane %v9705, 1
        %v9707 = vadd.f32 %v9705, %v9706
        %v9708 = vsel %vm3987, %v9656, 0.0
        %v9709 = vrot.slane %v9708, 4
        %v9710 = vadd.f32 %v9708, %v9709
        %v9711 = vrot.slane %v9710, 2
        %v9712 = vadd.f32 %v9710, %v9711
        %v9713 = vrot.slane %v9712, 1
        %v9714 = vadd.f32 %v9712, %v9713
        %v9715 = vsel %vm3987, %v9657, 0.0
        %v9716 = vrot.slane %v9715, 4
        %v9717 = vadd.f32 %v9715, %v9716
        %v9718 = vrot.slane %v9717, 2
        %v9719 = vadd.f32 %v9717, %v9718
        %v9720 = vrot.slane %v9719, 1
        %v9721 = vadd.f32 %v9719, %v9720
        %v9722 = vsel %vm3987, %v9658, 0.0
        %v9723 = vrot.slane %v9722, 4
        %v9724 = vadd.f32 %v9722, %v9723
        %v9725 = vrot.slane %v9724, 2
        %v9726 = vadd.f32 %v9724, %v9725
        %v9727 = vrot.slane %v9726, 1
        %v9728 = vadd.f32 %v9726, %v9727
        %v9729 = vsel %vm3987, %v9659, 0.0
        %v9730 = vrot.slane %v9729, 4
        %v9731 = vadd.f32 %v9729, %v9730
        %v9732 = vrot.slane %v9731, 2
        %v9733 = vadd.f32 %v9731, %v9732
        %v9734 = vrot.slane %v9733, 1
        %v9735 = vadd.f32 %v9733, %v9734
        %v9736 = vsel %vm3987, %v9660, 0.0
        %v9737 = vrot.slane %v9736, 4
        %v9738 = vadd.f32 %v9736, %v9737
        %v9739 = vrot.slane %v9738, 2
        %v9740 = vadd.f32 %v9738, %v9739
        %v9741 = vrot.slane %v9740, 1
        %v9742 = vadd.f32 %v9740, %v9741
        %v9743 = vsel %vm3987, %v9661, 0.0
        %v9744 = vrot.slane %v9743, 4
        %v9745 = vadd.f32 %v9743, %v9744
        %v9746 = vrot.slane %v9745, 2
        %v9747 = vadd.f32 %v9745, %v9746
        %v9748 = vrot.slane %v9747, 1
        %v9749 = vadd.f32 %v9747, %v9748
        %v9750 = vsel %vm3987, %v9662, 0.0
        %v9751 = vrot.slane %v9750, 4
        %v9752 = vadd.f32 %v9750, %v9751
        %v9753 = vrot.slane %v9752, 2
        %v9754 = vadd.f32 %v9752, %v9753
        %v9755 = vrot.slane %v9754, 1
        %v9756 = vadd.f32 %v9754, %v9755
        %v9757 = vsel %vm3987, %v9663, 0.0
        %v9758 = vrot.slane %v9757, 4
        %v9759 = vadd.f32 %v9757, %v9758
        %v9760 = vrot.slane %v9759, 2
        %v9761 = vadd.f32 %v9759, %v9760
        %v9762 = vrot.slane %v9761, 1
        %v9763 = vadd.f32 %v9761, %v9762
        %v9764 = vsel %vm3987, %v9664, 0.0
        %v9765 = vrot.slane %v9764, 4
        %v9766 = vadd.f32 %v9764, %v9765
        %v9767 = vrot.slane %v9766, 2
        %v9768 = vadd.f32 %v9766, %v9767
        %v9769 = vrot.slane %v9768, 1
        %v9770 = vadd.f32 %v9768, %v9769
        %v9771 = vsel %vm3987, %v9665, 0.0
        %v9772 = vrot.slane %v9771, 4
        %v9773 = vadd.f32 %v9771, %v9772
        %v9774 = vrot.slane %v9773, 2
        %v9775 = vadd.f32 %v9773, %v9774
        %v9776 = vrot.slane %v9775, 1
        %v9777 = vadd.f32 %v9775, %v9776
        %v9794 = vsel %vm1105, %v7305, %v7298
        %v9795 = vsel %vm1107, %v7312, %v9794
        %v9796 = vsel %vm1109, %v7319, %v9795
        %v9797 = vsel %vm1111, %v7326, %v9796
        %v9798 = vsel %vm1113, %v7333, %v9797
        %v9799 = vsel %vm1115, %v7340, %v9798
        %v9800 = vsel %vm1117, %v7347, %v9799
        %v9801 = vsel %vm1105, %v7361, %v7354
        %v9802 = vsel %vm1107, %v7368, %v9801
        %v9803 = vsel %vm1109, %v7375, %v9802
        %v9804 = vsel %vm1111, %v7382, %v9803
        %v9805 = vsel %vm1113, %v7389, %v9804
        %v9806 = vsel %vm1115, %v7396, %v9805
        %v9807 = vsel %vm1117, %v7403, %v9806
        %9808 = vrot.lane.b32.xlu0 %v9800, 112
        %v9809 = vpop.permute.xlu0 %9808
        %9810 = vrot.lane.b32.xlu0 %v9807, 112
        %v9811 = vpop.permute.xlu0 %9810
        %v9830 = vsel %vm1105, %v8107, %v8100
        %v9831 = vsel %vm1107, %v8114, %v9830
        %v9832 = vsel %vm1109, %v8121, %v9831
        %v9833 = vsel %vm1111, %v8128, %v9832
        %v9834 = vsel %vm1113, %v8135, %v9833
        %v9835 = vsel %vm1115, %v8142, %v9834
        %v9836 = vsel %vm1117, %v8149, %v9835
        %v9837 = vsel %vm1105, %v8163, %v8156
        %v9838 = vsel %vm1107, %v8170, %v9837
        %v9839 = vsel %vm1109, %v8177, %v9838
        %v9840 = vsel %vm1111, %v8184, %v9839
        %v9841 = vsel %vm1113, %v8191, %v9840
        %v9842 = vsel %vm1115, %v8198, %v9841
        %v9843 = vsel %vm1117, %v8205, %v9842
        %9844 = vrot.lane.b32.xlu0 %v9836, 112
        %v9845 = vpop.permute.xlu0 %9844
        %9846 = vrot.lane.b32.xlu0 %v9843, 112
        %v9847 = vpop.permute.xlu0 %9846
        %v9866 = vsel %vm1105, %v8893, %v8886
        %v9867 = vsel %vm1107, %v8900, %v9866
        %v9868 = vsel %vm1109, %v8907, %v9867
        %v9869 = vsel %vm1111, %v8914, %v9868
        %v9870 = vsel %vm1113, %v8921, %v9869
        %v9871 = vsel %vm1115, %v8928, %v9870
        %v9872 = vsel %vm1117, %v8935, %v9871
        %v9873 = vsel %vm1105, %v8949, %v8942
        %v9874 = vsel %vm1107, %v8956, %v9873
        %v9875 = vsel %vm1109, %v8963, %v9874
        %v9876 = vsel %vm1111, %v8970, %v9875
        %v9877 = vsel %vm1113, %v8977, %v9876
        %v9878 = vsel %vm1115, %v8984, %v9877
        %v9879 = vsel %vm1117, %v8991, %v9878
        %9880 = vrot.lane.b32.xlu0 %v9872, 112
        %v9881 = vpop.permute.xlu0 %9880
        %9882 = vrot.lane.b32.xlu0 %v9879, 112
        %v9883 = vpop.permute.xlu0 %9882
        %v9902 = vsel %vm1105, %v9679, %v9672
        %v9903 = vsel %vm1107, %v9686, %v9902
        %v9904 = vsel %vm1109, %v9693, %v9903
        %v9905 = vsel %vm1111, %v9700, %v9904
        %v9906 = vsel %vm1113, %v9707, %v9905
        %v9907 = vsel %vm1115, %v9714, %v9906
        %v9908 = vsel %vm1117, %v9721, %v9907
        %v9909 = vsel %vm1105, %v9735, %v9728
        %v9910 = vsel %vm1107, %v9742, %v9909
        %v9911 = vsel %vm1109, %v9749, %v9910
        %v9912 = vsel %vm1111, %v9756, %v9911
        %v9913 = vsel %vm1113, %v9763, %v9912
        %v9914 = vsel %vm1115, %v9770, %v9913
        %v9915 = vsel %vm1117, %v9777, %v9914
        %9916 = vrot.lane.b32.xlu0 %v9908, 112
        %v9917 = vpop.permute.xlu0 %9916
        %9918 = vrot.lane.b32.xlu0 %v9915, 112
        %v9919 = vpop.permute.xlu0 %9918
        %v9922 = vsel %vm974, %v9809, %v9845
        %v9923 = vsel %vm974, %v9811, %v9847
        %v9924 = vsel %vm4246, %v9922, %v9881
        %v9925 = vsel %vm4246, %v9923, %v9883
        %v9926 = vsel %vm589, %v9924, %v9917
        %v9927 = vsel %vm589, %v9925, %v9919
        %s9928 = scalar_lea.vmem %s6, 8
        %v9929 = vld [vmem:[%s9928] sm:$0xff]
        %s9930 = scalar_lea.vmem %s7, 1
        %v9931 = vld [vmem:[%s9930] sm:$0x1]
        %v9933 = vlaneseq
        %v9934 = vshrl.u32 %v9933, 7
        %v9935 = vsub.s32 0, %v9934
        %v9936 = vrot.slane %v9931, %v9935
        %v9939 = vsel %vm686, %v9926, 0
        %v9942 = vsel %vm686, %v9927, 0
        %9944 = vmatprep.subr.mxu0 0.0
        %9945 = vmatpush1.msra.mxu0 %v9929
        %9946 = vmatprep.subr.mxu0 0.0
        %9947 = vmatpush1.msra.mxu0 0.0
        %9948 = vmatprep.subr.mxu0 0.0
        %9949 = vmatpush1.msra.mxu0 0.0
        %9950 = vmatprep.subr.mxu0 0.0
        %9951 = vmatpush1.msra.mxu0 0.0
        %9952 = vmatprep.subr.mxu0 0.0
        %9953 = vmatpush1.msra.mxu0 0.0
        %9954 = vmatprep.subr.mxu0 0.0
        %9955 = vmatpush1.msra.mxu0 0.0
        %9956 = vmatprep.subr.mxu0 0.0
        %9957 = vmatpush1.msra.mxu0 0.0
        %9958 = vmatprep.subr.mxu0 0.0
        %9959 = vmatpush1.msra.mxu0 0.0
        %9960 = vmatprep.subr.mxu0 0.0
        %9961 = vmatpush1.msra.mxu0 0.0
        %9962 = vmatprep.subr.mxu0 0.0
        %9963 = vmatpush1.msra.mxu0 0.0
        %9964 = vmatprep.subr.mxu0 0.0
        %9965 = vmatpush1.msra.mxu0 0.0
        %9966 = vmatprep.subr.mxu0 0.0
        %9967 = vmatpush1.msra.mxu0 0.0
        %9968 = vmatprep.subr.mxu0 0.0
        %9969 = vmatpush1.msra.mxu0 0.0
        %9970 = vmatprep.subr.mxu0 0.0
        %9971 = vmatpush1.msra.mxu0 0.0
        %9972 = vmatprep.subr.mxu0 0.0
        %9973 = vmatpush1.msra.mxu0 0.0
        %9974 = vmatprep.subr.mxu0 0.0
        %9975 = vmatpush1.msra.mxu0 0.0
        %9976 = vmatprep.subr.mxu0 0.0
        %9977 = vmatpush1.msra.mxu0 0.0
        %9978 = vmatprep.subr.mxu0 0.0
        %9979 = vmatpush1.msra.mxu0 0.0
        %9980 = vmatprep.subr.mxu0 0.0
        %9981 = vmatpush1.msra.mxu0 0.0
        %9982 = vmatprep.subr.mxu0 0.0
        %9983 = vmatpush1.msra.mxu0 0.0
        %9984 = vmatprep.subr.mxu0 0.0
        %9985 = vmatpush1.msra.mxu0 0.0
        %9986 = vmatprep.subr.mxu0 0.0
        %9987 = vmatpush1.msra.mxu0 0.0
        %9988 = vmatprep.subr.mxu0 0.0
        %9989 = vmatpush1.msra.mxu0 0.0
        %9990 = vmatprep.subr.mxu0 0.0
        %9991 = vmatpush1.msra.mxu0 0.0
        %9992 = vmatprep.subr.mxu0 0.0
        %9993 = vmatpush1.msra.mxu0 0.0
        %9994 = vmatprep.subr.mxu0 0.0
        %9995 = vmatpush1.msra.mxu0 0.0
        %9996 = vmatprep.subr.mxu0 0.0
        %9997 = vmatpush1.msra.mxu0 0.0
        %9998 = vmatprep.subr.mxu0 0.0
        %9999 = vmatpush1.msra.mxu0 0.0
        %10000 = vmatprep.subr.mxu0 0.0
        %10001 = vmatpush1.msra.mxu0 0.0
        %10002 = vmatprep.subr.mxu0 0.0
        %10003 = vmatpush1.msra.mxu0 0.0
        %10004 = vmatprep.subr.mxu0 0.0
        %10005 = vmatpush1.msra.mxu0 0.0
        %10006 = vmatprep.subr.mxu0 0.0
        %10007 = vmatpush1.msra.mxu0 0.0
        %10008 = vmatprep.mubr.f32.mxu0 0.0
        %10009 = vmatmul.mubr.f32.gmra.mrb[0].mxu0 %v9939
        %v10010 = vpop.f32.mrb[0].mxu0
        %v10011 = vadd.f32 %v9936, %v10010
        %v10012 = vpop.f32.mrb[0].mxu0
        %10013 = vmatprep.mubr.f32.mxu0 0.0
        %10014 = vmatmul.mubr.f32.gmra.mrb[0].mxu0 %v9942
        %v10015 = vpop.f32.mrb[0].mxu0
        %v10016 = vadd.f32 %v9936, %v10015
        %v10017 = vpop.f32.mrb[0].mxu0
        %10018 = vdwg.mxu0
        %v10019 = vadd.f32 %v6367, %v10011
        %v10020 = vadd.f32 %v6368, %v10016
        %s10021 = scalar_lea.vmem %s8, 1
        %v10022 = vld [vmem:[%s10021] sm:$0x1]
        %s10023 = scalar_lea.vmem %s9, 1
        %v10024 = vld [vmem:[%s10023] sm:$0x1]
        %v10025 = vsel %vm686, %v10019, 0.0
        %10026 = vadd.xlane.f32.xlu0 %v10025
        %v10027 = vpop.xlane.xlu0 %10026
        %v10028 = vsel %vm686, %v10020, 0.0
        %10029 = vadd.xlane.f32.xlu0 %v10028
        %v10030 = vpop.xlane.xlu0 %10029
        %v10031 = vmul.f32 %v10027, %v4350
        %v10032 = vmul.f32 %v10030, %v4350
        %v10033 = vsub.f32 %v10019, %v10031
        %v10034 = vsub.f32 %v10020, %v10032
        %v10035 = vmul.f32 %v10033, %v10033
        %v10036 = vmul.f32 %v10034, %v10034
        %v10037 = vsel %vm686, %v10035, 0.0
        %10038 = vadd.xlane.f32.xlu0 %v10037
        %v10039 = vpop.xlane.xlu0 %10038
        %v10040 = vsel %vm686, %v10036, 0.0
        %10041 = vadd.xlane.f32.xlu0 %v10040
        %v10042 = vpop.xlane.xlu0 %10041
        %v10043 = vmul.f32 %v10039, %v4350
        %v10044 = vmul.f32 %v10042, %v4350
        %v10045 = vadd.f32 %v10043, 1e-05
        %v10046 = vadd.f32 %v10044, 1e-05
        %v10047 = vrsqrt.pop %v10045
        %v10048 = vrsqrt.pop %v10046
        %v10049 = vmul.f32 %v10033, %v10047
        %v10050 = vmul.f32 %v10034, %v10048
        %v10052 = vlaneseq
        %v10053 = vshrl.u32 %v10052, 7
        %v10054 = vsub.s32 0, %v10053
        %v10055 = vrot.slane %v10022, %v10054
        %v10057 = vmul.f32 %v10049, %v10055
        %v10058 = vmul.f32 %v10050, %v10055
        %v10060 = vlaneseq
        %v10061 = vshrl.u32 %v10060, 7
        %v10062 = vsub.s32 0, %v10061
        %v10063 = vrot.slane %v10024, %v10062
        %v10065 = vadd.f32 %v10057, %v10063
        %v10066 = vadd.f32 %v10058, %v10063
        %v10067 = vpack.c.bf16 %v10066, %v10065
        %s10068 = scalar_lea.vmem %s12, 64
        %v10069 = vld [vmem:[%s10068] sm:$0xff]
        %v10070 = vld [vmem:[%s10068 + $0x8] sm:$0xff]
        %v10071 = vld [vmem:[%s10068 + $0x10] sm:$0xff]
        %v10072 = vld [vmem:[%s10068 + $0x18] sm:$0xff]
        %v10073 = vld [vmem:[%s10068 + $0x20] sm:$0xff]
        %v10074 = vld [vmem:[%s10068 + $0x28] sm:$0xff]
        %v10075 = vld [vmem:[%s10068 + $0x30] sm:$0xff]
        %v10076 = vld [vmem:[%s10068 + $0x38] sm:$0xff]
        %s10077 = scalar_lea.vmem %s13, 16
        %v10078 = vld [vmem:[%s10077] sm:$0xff]
        %v10079 = vld [vmem:[%s10077 + $0x8] sm:$0xff]
        %v10082 = vlaneseq
        %v10083 = vshrl.u32 %v10082, 7
        %v10084 = vsub.s32 0, %v10083
        %v10085 = vrot.slane %v10078, %v10084
        %v10086 = vlaneseq
        %v10087 = vshrl.u32 %v10086, 7
        %v10088 = vsub.s32 1, %v10087
        %v10089 = vrot.slane %v10078, %v10088
        %v10090 = vlaneseq
        %v10091 = vshrl.u32 %v10090, 7
        %v10092 = vsub.s32 2, %v10091
        %v10093 = vrot.slane %v10078, %v10092
        %v10094 = vlaneseq
        %v10095 = vshrl.u32 %v10094, 7
        %v10096 = vsub.s32 3, %v10095
        %v10097 = vrot.slane %v10078, %v10096
        %v10098 = vlaneseq
        %v10099 = vshrl.u32 %v10098, 7
        %v10100 = vsub.s32 4, %v10099
        %v10101 = vrot.slane %v10078, %v10100
        %v10102 = vlaneseq
        %v10103 = vshrl.u32 %v10102, 7
        %v10104 = vsub.s32 5, %v10103
        %v10105 = vrot.slane %v10078, %v10104
        %v10106 = vlaneseq
        %v10107 = vshrl.u32 %v10106, 7
        %v10108 = vsub.s32 6, %v10107
        %v10109 = vrot.slane %v10078, %v10108
        %v10110 = vlaneseq
        %v10111 = vshrl.u32 %v10110, 7
        %v10112 = vsub.s32 7, %v10111
        %v10113 = vrot.slane %v10078, %v10112
        %v10114 = vlaneseq
        %v10115 = vshrl.u32 %v10114, 7
        %v10116 = vsub.s32 0, %v10115
        %v10117 = vrot.slane %v10079, %v10116
        %v10118 = vlaneseq
        %v10119 = vshrl.u32 %v10118, 7
        %v10120 = vsub.s32 1, %v10119
        %v10121 = vrot.slane %v10079, %v10120
        %v10122 = vlaneseq
        %v10123 = vshrl.u32 %v10122, 7
        %v10124 = vsub.s32 2, %v10123
        %v10125 = vrot.slane %v10079, %v10124
        %v10126 = vlaneseq
        %v10127 = vshrl.u32 %v10126, 7
        %v10128 = vsub.s32 3, %v10127
        %v10129 = vrot.slane %v10079, %v10128
        %v10130 = vlaneseq
        %v10131 = vshrl.u32 %v10130, 7
        %v10132 = vsub.s32 4, %v10131
        %v10133 = vrot.slane %v10079, %v10132
        %v10134 = vlaneseq
        %v10135 = vshrl.u32 %v10134, 7
        %v10136 = vsub.s32 5, %v10135
        %v10137 = vrot.slane %v10079, %v10136
        %v10138 = vlaneseq
        %v10139 = vshrl.u32 %v10138, 7
        %v10140 = vsub.s32 6, %v10139
        %v10141 = vrot.slane %v10079, %v10140
        %v10142 = vlaneseq
        %v10143 = vshrl.u32 %v10142, 7
        %v10144 = vsub.s32 7, %v10143
        %v10145 = vrot.slane %v10079, %v10144
        %v10170 = vunpack.c.l.b16 %v10069
        %v10171 = vunpack.c.h.b16 %v10069
        %v10172 = vunpack.c.l.b16 %v10070
        %v10173 = vunpack.c.h.b16 %v10070
        %v10174 = vunpack.c.l.b16 %v10071
        %v10175 = vunpack.c.h.b16 %v10071
        %v10176 = vunpack.c.l.b16 %v10072
        %v10177 = vunpack.c.h.b16 %v10072
        %v10178 = vunpack.c.l.b16 %v10073
        %v10179 = vunpack.c.h.b16 %v10073
        %v10180 = vunpack.c.l.b16 %v10074
        %v10181 = vunpack.c.h.b16 %v10074
        %v10182 = vunpack.c.l.b16 %v10075
        %v10183 = vunpack.c.h.b16 %v10075
        %v10184 = vunpack.c.l.b16 %v10076
        %v10185 = vunpack.c.h.b16 %v10076
        %v10186 = vpack.c.b16 %v10170, %v10170
        %v10187 = vpack.c.b16 %v10171, %v10171
        %v10188 = vpack.c.b16 %v10172, %v10172
        %v10189 = vpack.c.b16 %v10173, %v10173
        %v10190 = vpack.c.b16 %v10174, %v10174
        %v10191 = vpack.c.b16 %v10175, %v10175
        %v10192 = vpack.c.b16 %v10176, %v10176
        %v10193 = vpack.c.b16 %v10177, %v10177
        %v10194 = vpack.c.b16 %v10178, %v10178
        %v10195 = vpack.c.b16 %v10179, %v10179
        %v10196 = vpack.c.b16 %v10180, %v10180
        %v10197 = vpack.c.b16 %v10181, %v10181
        %v10198 = vpack.c.b16 %v10182, %v10182
        %v10199 = vpack.c.b16 %v10183, %v10183
        %v10200 = vpack.c.b16 %v10184, %v10184
        %v10201 = vpack.c.b16 %v10185, %v10185
        %v10203 = vsel %vm686, %v10067, 0
        %v10206 = vsel %vm4523, %v10186, 0
        %v10209 = vsel %vm4523, %v10187, 0
        %v10212 = vsel %vm4523, %v10188, 0
        %v10215 = vsel %vm4523, %v10189, 0
        %v10218 = vsel %vm4523, %v10190, 0
        %v10221 = vsel %vm4523, %v10191, 0
        %v10224 = vsel %vm4523, %v10192, 0
        %v10227 = vsel %vm4523, %v10193, 0
        %v10230 = vsel %vm4523, %v10194, 0
        %v10233 = vsel %vm4523, %v10195, 0
        %v10236 = vsel %vm4523, %v10196, 0
        %v10239 = vsel %vm4523, %v10197, 0
        %v10242 = vsel %vm4523, %v10198, 0
        %v10245 = vsel %vm4523, %v10199, 0
        %v10248 = vsel %vm4523, %v10200, 0
        %v10251 = vsel %vm4523, %v10201, 0
        %10253 = vmatprep.subr.bf16.mxu0 %v10209
        %10254 = vmatpush1.bf16.msra.mxu0 %v10206
        %10255 = vmatprep.subr.bf16.mxu0 0
        %10256 = vmatpush1.bf16.msra.mxu0 0
        %10257 = vmatprep.subr.bf16.mxu0 0
        %10258 = vmatpush1.bf16.msra.mxu0 0
        %10259 = vmatprep.subr.bf16.mxu0 0
        %10260 = vmatpush1.bf16.msra.mxu0 0
        %10261 = vmatprep.subr.bf16.mxu0 0
        %10262 = vmatpush1.bf16.msra.mxu0 0
        %10263 = vmatprep.subr.bf16.mxu0 0
        %10264 = vmatpush1.bf16.msra.mxu0 0
        %10265 = vmatprep.subr.bf16.mxu0 0
        %10266 = vmatpush1.bf16.msra.mxu0 0
        %10267 = vmatprep.subr.bf16.mxu0 0
        %10268 = vmatpush1.bf16.msra.mxu0 0
        %10269 = vmatprep.subr.bf16.mxu0 0
        %10270 = vmatpush1.bf16.msra.mxu0 0
        %10271 = vmatprep.subr.bf16.mxu0 0
        %10272 = vmatpush1.bf16.msra.mxu0 0
        %10273 = vmatprep.subr.bf16.mxu0 0
        %10274 = vmatpush1.bf16.msra.mxu0 0
        %10275 = vmatprep.subr.bf16.mxu0 0
        %10276 = vmatpush1.bf16.msra.mxu0 0
        %10277 = vmatprep.subr.bf16.mxu0 0
        %10278 = vmatpush1.bf16.msra.mxu0 0
        %10279 = vmatprep.subr.bf16.mxu0 0
        %10280 = vmatpush1.bf16.msra.mxu0 0
        %10281 = vmatprep.subr.bf16.mxu0 0
        %10282 = vmatpush1.bf16.msra.mxu0 0
        %10283 = vmatprep.subr.bf16.mxu0 0
        %10284 = vmatpush1.bf16.msra.mxu0 0
        %10285 = vmatprep.mubr.bf16.mxu0 0
        %10286 = vmatmul.mubr.bf16.gmra.mrb[0].mxu0 %v10203
        %v10287 = vpop.f32.mrb[0].mxu0
        %v10288 = vadd.f32 %v10085, %v10287
        %v10289 = vpop.f32.mrb[0].mxu0
        %v10290 = vadd.f32 %v10089, %v10289
        %v10291 = vpop.f32.mrb[0].mxu0
        %v10292 = vadd.f32 %v10085, %v10291
        %v10293 = vpop.f32.mrb[0].mxu0
        %v10294 = vadd.f32 %v10089, %v10293
        %10295 = vdwg.mxu0
        %10296 = vmatprep.subr.bf16.mxu0 %v10215
        %10297 = vmatpush1.bf16.msra.mxu0 %v10212
        %10298 = vmatprep.subr.bf16.mxu0 0
        %10299 = vmatpush1.bf16.msra.mxu0 0
        %10300 = vmatprep.subr.bf16.mxu0 0
        %10301 = vmatpush1.bf16.msra.mxu0 0
        %10302 = vmatprep.subr.bf16.mxu0 0
        %10303 = vmatpush1.bf16.msra.mxu0 0
        %10304 = vmatprep.subr.bf16.mxu0 0
        %10305 = vmatpush1.bf16.msra.mxu0 0
        %10306 = vmatprep.subr.bf16.mxu0 0
        %10307 = vmatpush1.bf16.msra.mxu0 0
        %10308 = vmatprep.subr.bf16.mxu0 0
        %10309 = vmatpush1.bf16.msra.mxu0 0
        %10310 = vmatprep.subr.bf16.mxu0 0
        %10311 = vmatpush1.bf16.msra.mxu0 0
        %10312 = vmatprep.subr.bf16.mxu0 0
        %10313 = vmatpush1.bf16.msra.mxu0 0
        %10314 = vmatprep.subr.bf16.mxu0 0
        %10315 = vmatpush1.bf16.msra.mxu0 0
        %10316 = vmatprep.subr.bf16.mxu0 0
        %10317 = vmatpush1.bf16.msra.mxu0 0
        %10318 = vmatprep.subr.bf16.mxu0 0
        %10319 = vmatpush1.bf16.msra.mxu0 0
        %10320 = vmatprep.subr.bf16.mxu0 0
        %10321 = vmatpush1.bf16.msra.mxu0 0
        %10322 = vmatprep.subr.bf16.mxu0 0
        %10323 = vmatpush1.bf16.msra.mxu0 0
        %10324 = vmatprep.subr.bf16.mxu0 0
        %10325 = vmatpush1.bf16.msra.mxu0 0
        %10326 = vmatprep.subr.bf16.mxu0 0
        %10327 = vmatpush1.bf16.msra.mxu0 0
        %10328 = vmatprep.mubr.bf16.mxu0 0
        %10329 = vmatmul.mubr.bf16.gmra.mrb[0].mxu0 %v10203
        %v10330 = vpop.f32.mrb[0].mxu0
        %v10331 = vadd.f32 %v10093, %v10330
        %v10332 = vpop.f32.mrb[0].mxu0
        %v10333 = vadd.f32 %v10097, %v10332
        %v10334 = vpop.f32.mrb[0].mxu0
        %v10335 = vadd.f32 %v10093, %v10334
        %v10336 = vpop.f32.mrb[0].mxu0
        %v10337 = vadd.f32 %v10097, %v10336
        %10338 = vdwg.mxu0
        %10339 = vmatprep.subr.bf16.mxu0 %v10221
        %10340 = vmatpush1.bf16.msra.mxu0 %v10218
        %10341 = vmatprep.subr.bf16.mxu0 0
        %10342 = vmatpush1.bf16.msra.mxu0 0
        %10343 = vmatprep.subr.bf16.mxu0 0
        %10344 = vmatpush1.bf16.msra.mxu0 0
        %10345 = vmatprep.subr.bf16.mxu0 0
        %10346 = vmatpush1.bf16.msra.mxu0 0
        %10347 = vmatprep.subr.bf16.mxu0 0
        %10348 = vmatpush1.bf16.msra.mxu0 0
        %10349 = vmatprep.subr.bf16.mxu0 0
        %10350 = vmatpush1.bf16.msra.mxu0 0
        %10351 = vmatprep.subr.bf16.mxu0 0
        %10352 = vmatpush1.bf16.msra.mxu0 0
        %10353 = vmatprep.subr.bf16.mxu0 0
        %10354 = vmatpush1.bf16.msra.mxu0 0
        %10355 = vmatprep.subr.bf16.mxu0 0
        %10356 = vmatpush1.bf16.msra.mxu0 0
        %10357 = vmatprep.subr.bf16.mxu0 0
        %10358 = vmatpush1.bf16.msra.mxu0 0
        %10359 = vmatprep.subr.bf16.mxu0 0
        %10360 = vmatpush1.bf16.msra.mxu0 0
        %10361 = vmatprep.subr.bf16.mxu0 0
        %10362 = vmatpush1.bf16.msra.mxu0 0
        %10363 = vmatprep.subr.bf16.mxu0 0
        %10364 = vmatpush1.bf16.msra.mxu0 0
        %10365 = vmatprep.subr.bf16.mxu0 0
        %10366 = vmatpush1.bf16.msra.mxu0 0
        %10367 = vmatprep.subr.bf16.mxu0 0
        %10368 = vmatpush1.bf16.msra.mxu0 0
        %10369 = vmatprep.subr.bf16.mxu0 0
        %10370 = vmatpush1.bf16.msra.mxu0 0
        %10371 = vmatprep.mubr.bf16.mxu0 0
        %10372 = vmatmul.mubr.bf16.gmra.mrb[0].mxu0 %v10203
        %v10373 = vpop.f32.mrb[0].mxu0
        %v10374 = vadd.f32 %v10101, %v10373
        %v10375 = vpop.f32.mrb[0].mxu0
        %v10376 = vadd.f32 %v10105, %v10375
        %v10377 = vpop.f32.mrb[0].mxu0
        %v10378 = vadd.f32 %v10101, %v10377
        %v10379 = vpop.f32.mrb[0].mxu0
        %v10380 = vadd.f32 %v10105, %v10379
        %10381 = vdwg.mxu0
        %10382 = vmatprep.subr.bf16.mxu0 %v10227
        %10383 = vmatpush1.bf16.msra.mxu0 %v10224
        %10384 = vmatprep.subr.bf16.mxu0 0
        %10385 = vmatpush1.bf16.msra.mxu0 0
        %10386 = vmatprep.subr.bf16.mxu0 0
        %10387 = vmatpush1.bf16.msra.mxu0 0
        %10388 = vmatprep.subr.bf16.mxu0 0
        %10389 = vmatpush1.bf16.msra.mxu0 0
        %10390 = vmatprep.subr.bf16.mxu0 0
        %10391 = vmatpush1.bf16.msra.mxu0 0
        %10392 = vmatprep.subr.bf16.mxu0 0
        %10393 = vmatpush1.bf16.msra.mxu0 0
        %10394 = vmatprep.subr.bf16.mxu0 0
        %10395 = vmatpush1.bf16.msra.mxu0 0
        %10396 = vmatprep.subr.bf16.mxu0 0
        %10397 = vmatpush1.bf16.msra.mxu0 0
        %10398 = vmatprep.subr.bf16.mxu0 0
        %10399 = vmatpush1.bf16.msra.mxu0 0
        %10400 = vmatprep.subr.bf16.mxu0 0
        %10401 = vmatpush1.bf16.msra.mxu0 0
        %10402 = vmatprep.subr.bf16.mxu0 0
        %10403 = vmatpush1.bf16.msra.mxu0 0
        %10404 = vmatprep.subr.bf16.mxu0 0
        %10405 = vmatpush1.bf16.msra.mxu0 0
        %10406 = vmatprep.subr.bf16.mxu0 0
        %10407 = vmatpush1.bf16.msra.mxu0 0
        %10408 = vmatprep.subr.bf16.mxu0 0
        %10409 = vmatpush1.bf16.msra.mxu0 0
        %10410 = vmatprep.subr.bf16.mxu0 0
        %10411 = vmatpush1.bf16.msra.mxu0 0
        %10412 = vmatprep.subr.bf16.mxu0 0
        %10413 = vmatpush1.bf16.msra.mxu0 0
        %10414 = vmatprep.mubr.bf16.mxu0 0
        %10415 = vmatmul.mubr.bf16.gmra.mrb[0].mxu0 %v10203
        %v10416 = vpop.f32.mrb[0].mxu0
        %v10417 = vadd.f32 %v10109, %v10416
        %v10418 = vpop.f32.mrb[0].mxu0
        %v10419 = vadd.f32 %v10113, %v10418
        %v10420 = vpop.f32.mrb[0].mxu0
        %v10421 = vadd.f32 %v10109, %v10420
        %v10422 = vpop.f32.mrb[0].mxu0
        %v10423 = vadd.f32 %v10113, %v10422
        %10424 = vdwg.mxu0
        %10425 = vmatprep.subr.bf16.mxu0 %v10233
        %10426 = vmatpush1.bf16.msra.mxu0 %v10230
        %10427 = vmatprep.subr.bf16.mxu0 0
        %10428 = vmatpush1.bf16.msra.mxu0 0
        %10429 = vmatprep.subr.bf16.mxu0 0
        %10430 = vmatpush1.bf16.msra.mxu0 0
        %10431 = vmatprep.subr.bf16.mxu0 0
        %10432 = vmatpush1.bf16.msra.mxu0 0
        %10433 = vmatprep.subr.bf16.mxu0 0
        %10434 = vmatpush1.bf16.msra.mxu0 0
        %10435 = vmatprep.subr.bf16.mxu0 0
        %10436 = vmatpush1.bf16.msra.mxu0 0
        %10437 = vmatprep.subr.bf16.mxu0 0
        %10438 = vmatpush1.bf16.msra.mxu0 0
        %10439 = vmatprep.subr.bf16.mxu0 0
        %10440 = vmatpush1.bf16.msra.mxu0 0
        %10441 = vmatprep.subr.bf16.mxu0 0
        %10442 = vmatpush1.bf16.msra.mxu0 0
        %10443 = vmatprep.subr.bf16.mxu0 0
        %10444 = vmatpush1.bf16.msra.mxu0 0
        %10445 = vmatprep.subr.bf16.mxu0 0
        %10446 = vmatpush1.bf16.msra.mxu0 0
        %10447 = vmatprep.subr.bf16.mxu0 0
        %10448 = vmatpush1.bf16.msra.mxu0 0
        %10449 = vmatprep.subr.bf16.mxu0 0
        %10450 = vmatpush1.bf16.msra.mxu0 0
        %10451 = vmatprep.subr.bf16.mxu0 0
        %10452 = vmatpush1.bf16.msra.mxu0 0
        %10453 = vmatprep.subr.bf16.mxu0 0
        %10454 = vmatpush1.bf16.msra.mxu0 0
        %10455 = vmatprep.subr.bf16.mxu0 0
        %10456 = vmatpush1.bf16.msra.mxu0 0
        %10457 = vmatprep.mubr.bf16.mxu0 0
        %10458 = vmatmul.mubr.bf16.gmra.mrb[0].mxu0 %v10203
        %v10459 = vpop.f32.mrb[0].mxu0
        %v10460 = vadd.f32 %v10117, %v10459
        %v10461 = vpop.f32.mrb[0].mxu0
        %v10462 = vadd.f32 %v10121, %v10461
        %v10463 = vpop.f32.mrb[0].mxu0
        %v10464 = vadd.f32 %v10117, %v10463
        %v10465 = vpop.f32.mrb[0].mxu0
        %v10466 = vadd.f32 %v10121, %v10465
        %10467 = vdwg.mxu0
        %10468 = vmatprep.subr.bf16.mxu0 %v10239
        %10469 = vmatpush1.bf16.msra.mxu0 %v10236
        %10470 = vmatprep.subr.bf16.mxu0 0
        %10471 = vmatpush1.bf16.msra.mxu0 0
        %10472 = vmatprep.subr.bf16.mxu0 0
        %10473 = vmatpush1.bf16.msra.mxu0 0
        %10474 = vmatprep.subr.bf16.mxu0 0
        %10475 = vmatpush1.bf16.msra.mxu0 0
        %10476 = vmatprep.subr.bf16.mxu0 0
        %10477 = vmatpush1.bf16.msra.mxu0 0
        %10478 = vmatprep.subr.bf16.mxu0 0
        %10479 = vmatpush1.bf16.msra.mxu0 0
        %10480 = vmatprep.subr.bf16.mxu0 0
        %10481 = vmatpush1.bf16.msra.mxu0 0
        %10482 = vmatprep.subr.bf16.mxu0 0
        %10483 = vmatpush1.bf16.msra.mxu0 0
        %10484 = vmatprep.subr.bf16.mxu0 0
        %10485 = vmatpush1.bf16.msra.mxu0 0
        %10486 = vmatprep.subr.bf16.mxu0 0
        %10487 = vmatpush1.bf16.msra.mxu0 0
        %10488 = vmatprep.subr.bf16.mxu0 0
        %10489 = vmatpush1.bf16.msra.mxu0 0
        %10490 = vmatprep.subr.bf16.mxu0 0
        %10491 = vmatpush1.bf16.msra.mxu0 0
        %10492 = vmatprep.subr.bf16.mxu0 0
        %10493 = vmatpush1.bf16.msra.mxu0 0
        %10494 = vmatprep.subr.bf16.mxu0 0
        %10495 = vmatpush1.bf16.msra.mxu0 0
        %10496 = vmatprep.subr.bf16.mxu0 0
        %10497 = vmatpush1.bf16.msra.mxu0 0
        %10498 = vmatprep.subr.bf16.mxu0 0
        %10499 = vmatpush1.bf16.msra.mxu0 0
        %10500 = vmatprep.mubr.bf16.mxu0 0
        %10501 = vmatmul.mubr.bf16.gmra.mrb[0].mxu0 %v10203
        %v10502 = vpop.f32.mrb[0].mxu0
        %v10503 = vadd.f32 %v10125, %v10502
        %v10504 = vpop.f32.mrb[0].mxu0
        %v10505 = vadd.f32 %v10129, %v10504
        %v10506 = vpop.f32.mrb[0].mxu0
        %v10507 = vadd.f32 %v10125, %v10506
        %v10508 = vpop.f32.mrb[0].mxu0
        %v10509 = vadd.f32 %v10129, %v10508
        %10510 = vdwg.mxu0
        %10511 = vmatprep.subr.bf16.mxu0 %v10245
        %10512 = vmatpush1.bf16.msra.mxu0 %v10242
        %10513 = vmatprep.subr.bf16.mxu0 0
        %10514 = vmatpush1.bf16.msra.mxu0 0
        %10515 = vmatprep.subr.bf16.mxu0 0
        %10516 = vmatpush1.bf16.msra.mxu0 0
        %10517 = vmatprep.subr.bf16.mxu0 0
        %10518 = vmatpush1.bf16.msra.mxu0 0
        %10519 = vmatprep.subr.bf16.mxu0 0
        %10520 = vmatpush1.bf16.msra.mxu0 0
        %10521 = vmatprep.subr.bf16.mxu0 0
        %10522 = vmatpush1.bf16.msra.mxu0 0
        %10523 = vmatprep.subr.bf16.mxu0 0
        %10524 = vmatpush1.bf16.msra.mxu0 0
        %10525 = vmatprep.subr.bf16.mxu0 0
        %10526 = vmatpush1.bf16.msra.mxu0 0
        %10527 = vmatprep.subr.bf16.mxu0 0
        %10528 = vmatpush1.bf16.msra.mxu0 0
        %10529 = vmatprep.subr.bf16.mxu0 0
        %10530 = vmatpush1.bf16.msra.mxu0 0
        %10531 = vmatprep.subr.bf16.mxu0 0
        %10532 = vmatpush1.bf16.msra.mxu0 0
        %10533 = vmatprep.subr.bf16.mxu0 0
        %10534 = vmatpush1.bf16.msra.mxu0 0
        %10535 = vmatprep.subr.bf16.mxu0 0
        %10536 = vmatpush1.bf16.msra.mxu0 0
        %10537 = vmatprep.subr.bf16.mxu0 0
        %10538 = vmatpush1.bf16.msra.mxu0 0
        %10539 = vmatprep.subr.bf16.mxu0 0
        %10540 = vmatpush1.bf16.msra.mxu0 0
        %10541 = vmatprep.subr.bf16.mxu0 0
        %10542 = vmatpush1.bf16.msra.mxu0 0
        %10543 = vmatprep.mubr.bf16.mxu0 0
        %10544 = vmatmul.mubr.bf16.gmra.mrb[0].mxu0 %v10203
        %v10545 = vpop.f32.mrb[0].mxu0
        %v10546 = vadd.f32 %v10133, %v10545
        %v10547 = vpop.f32.mrb[0].mxu0
        %v10548 = vadd.f32 %v10137, %v10547
        %v10549 = vpop.f32.mrb[0].mxu0
        %v10550 = vadd.f32 %v10133, %v10549
        %v10551 = vpop.f32.mrb[0].mxu0
        %v10552 = vadd.f32 %v10137, %v10551
        %10553 = vdwg.mxu0
        %10554 = vmatprep.subr.bf16.mxu0 %v10251
        %10555 = vmatpush1.bf16.msra.mxu0 %v10248
        %10556 = vmatprep.subr.bf16.mxu0 0
        %10557 = vmatpush1.bf16.msra.mxu0 0
        %10558 = vmatprep.subr.bf16.mxu0 0
        %10559 = vmatpush1.bf16.msra.mxu0 0
        %10560 = vmatprep.subr.bf16.mxu0 0
        %10561 = vmatpush1.bf16.msra.mxu0 0
        %10562 = vmatprep.subr.bf16.mxu0 0
        %10563 = vmatpush1.bf16.msra.mxu0 0
        %10564 = vmatprep.subr.bf16.mxu0 0
        %10565 = vmatpush1.bf16.msra.mxu0 0
        %10566 = vmatprep.subr.bf16.mxu0 0
        %10567 = vmatpush1.bf16.msra.mxu0 0
        %10568 = vmatprep.subr.bf16.mxu0 0
        %10569 = vmatpush1.bf16.msra.mxu0 0
        %10570 = vmatprep.subr.bf16.mxu0 0
        %10571 = vmatpush1.bf16.msra.mxu0 0
        %10572 = vmatprep.subr.bf16.mxu0 0
        %10573 = vmatpush1.bf16.msra.mxu0 0
        %10574 = vmatprep.subr.bf16.mxu0 0
        %10575 = vmatpush1.bf16.msra.mxu0 0
        %10576 = vmatprep.subr.bf16.mxu0 0
        %10577 = vmatpush1.bf16.msra.mxu0 0
        %10578 = vmatprep.subr.bf16.mxu0 0
        %10579 = vmatpush1.bf16.msra.mxu0 0
        %10580 = vmatprep.subr.bf16.mxu0 0
        %10581 = vmatpush1.bf16.msra.mxu0 0
        %10582 = vmatprep.subr.bf16.mxu0 0
        %10583 = vmatpush1.bf16.msra.mxu0 0
        %10584 = vmatprep.subr.bf16.mxu0 0
        %10585 = vmatpush1.bf16.msra.mxu0 0
        %10586 = vmatprep.mubr.bf16.mxu0 0
        %10587 = vmatmul.mubr.bf16.gmra.mrb[0].mxu0 %v10203
        %v10588 = vpop.f32.mrb[0].mxu0
        %v10589 = vadd.f32 %v10141, %v10588
        %v10590 = vpop.f32.mrb[0].mxu0
        %v10591 = vadd.f32 %v10145, %v10590
        %v10592 = vpop.f32.mrb[0].mxu0
        %v10593 = vadd.f32 %v10141, %v10592
        %v10594 = vpop.f32.mrb[0].mxu0
        %v10595 = vadd.f32 %v10145, %v10594
        %10596 = vdwg.mxu0
        %v10597 = vmax.f32 %v10288, 0.0
        %v10598 = vmax.f32 %v10290, 0.0
        %v10599 = vmax.f32 %v10331, 0.0
        %v10600 = vmax.f32 %v10333, 0.0
        %v10601 = vmax.f32 %v10374, 0.0
        %v10602 = vmax.f32 %v10376, 0.0
        %v10603 = vmax.f32 %v10417, 0.0
        %v10604 = vmax.f32 %v10419, 0.0
        %v10605 = vmax.f32 %v10460, 0.0
        %v10606 = vmax.f32 %v10462, 0.0
        %v10607 = vmax.f32 %v10503, 0.0
        %v10608 = vmax.f32 %v10505, 0.0
        %v10609 = vmax.f32 %v10546, 0.0
        %v10610 = vmax.f32 %v10548, 0.0
        %v10611 = vmax.f32 %v10589, 0.0
        %v10612 = vmax.f32 %v10591, 0.0
        %v10613 = vmax.f32 %v10292, 0.0
        %v10614 = vmax.f32 %v10294, 0.0
        %v10615 = vmax.f32 %v10335, 0.0
        %v10616 = vmax.f32 %v10337, 0.0
        %v10617 = vmax.f32 %v10378, 0.0
        %v10618 = vmax.f32 %v10380, 0.0
        %v10619 = vmax.f32 %v10421, 0.0
        %v10620 = vmax.f32 %v10423, 0.0
        %v10621 = vmax.f32 %v10464, 0.0
        %v10622 = vmax.f32 %v10466, 0.0
        %v10623 = vmax.f32 %v10507, 0.0
        %v10624 = vmax.f32 %v10509, 0.0
        %v10625 = vmax.f32 %v10550, 0.0
        %v10626 = vmax.f32 %v10552, 0.0
        %v10627 = vmax.f32 %v10593, 0.0
        %v10628 = vmax.f32 %v10595, 0.0
        %v10629 = vpack.c.bf16 %v10613, %v10597
        %v10630 = vpack.c.bf16 %v10614, %v10598
        %v10631 = vpack.c.bf16 %v10615, %v10599
        %v10632 = vpack.c.bf16 %v10616, %v10600
        %v10633 = vpack.c.bf16 %v10617, %v10601
        %v10634 = vpack.c.bf16 %v10618, %v10602
        %v10635 = vpack.c.bf16 %v10619, %v10603
        %v10636 = vpack.c.bf16 %v10620, %v10604
        %v10637 = vpack.c.bf16 %v10621, %v10605
        %v10638 = vpack.c.bf16 %v10622, %v10606
        %v10639 = vpack.c.bf16 %v10623, %v10607
        %v10640 = vpack.c.bf16 %v10624, %v10608
        %v10641 = vpack.c.bf16 %v10625, %v10609
        %v10642 = vpack.c.bf16 %v10626, %v10610
        %v10643 = vpack.c.bf16 %v10627, %v10611
        %v10644 = vpack.c.bf16 %v10628, %v10612
        %s10645 = scalar_lea.vmem %s14, 1024
        %v10646 = vld [vmem:[%s10645] sm:$0xf]
        %v10647 = vld [vmem:[%s10645 + $0x4] sm:$0xf]
        %v10648 = vld [vmem:[%s10645 + $0x8] sm:$0xf]
        %v10649 = vld [vmem:[%s10645 + $0xc] sm:$0xf]
        %v10650 = vld [vmem:[%s10645 + $0x10] sm:$0xf]
        %v10651 = vld [vmem:[%s10645 + $0x14] sm:$0xf]
        %v10652 = vld [vmem:[%s10645 + $0x18] sm:$0xf]
        %v10653 = vld [vmem:[%s10645 + $0x1c] sm:$0xf]
        %v10654 = vld [vmem:[%s10645 + $0x20] sm:$0xf]
        %v10655 = vld [vmem:[%s10645 + $0x24] sm:$0xf]
        %v10656 = vld [vmem:[%s10645 + $0x28] sm:$0xf]
        %v10657 = vld [vmem:[%s10645 + $0x2c] sm:$0xf]
        %v10658 = vld [vmem:[%s10645 + $0x30] sm:$0xf]
        %v10659 = vld [vmem:[%s10645 + $0x34] sm:$0xf]
        %v10660 = vld [vmem:[%s10645 + $0x38] sm:$0xf]
        %v10661 = vld [vmem:[%s10645 + $0x3c] sm:$0xf]
        %v10662 = vld [vmem:[%s10645 + $0x40] sm:$0xf]
        %v10663 = vld [vmem:[%s10645 + $0x44] sm:$0xf]
        %v10664 = vld [vmem:[%s10645 + $0x48] sm:$0xf]
        %v10665 = vld [vmem:[%s10645 + $0x4c] sm:$0xf]
        %v10666 = vld [vmem:[%s10645 + $0x50] sm:$0xf]
        %v10667 = vld [vmem:[%s10645 + $0x54] sm:$0xf]
        %v10668 = vld [vmem:[%s10645 + $0x58] sm:$0xf]
        %v10669 = vld [vmem:[%s10645 + $0x5c] sm:$0xf]
        %v10670 = vld [vmem:[%s10645 + $0x60] sm:$0xf]
        %v10671 = vld [vmem:[%s10645 + $0x64] sm:$0xf]
        %v10672 = vld [vmem:[%s10645 + $0x68] sm:$0xf]
        %v10673 = vld [vmem:[%s10645 + $0x6c] sm:$0xf]
        %v10674 = vld [vmem:[%s10645 + $0x70] sm:$0xf]
        %v10675 = vld [vmem:[%s10645 + $0x74] sm:$0xf]
        %v10676 = vld [vmem:[%s10645 + $0x78] sm:$0xf]
        %v10677 = vld [vmem:[%s10645 + $0x7c] sm:$0xf]
        %v10678 = vld [vmem:[%s10645 + $0x80] sm:$0xf]
        %v10679 = vld [vmem:[%s10645 + $0x84] sm:$0xf]
        %v10680 = vld [vmem:[%s10645 + $0x88] sm:$0xf]
        %v10681 = vld [vmem:[%s10645 + $0x8c] sm:$0xf]
        %v10682 = vld [vmem:[%s10645 + $0x90] sm:$0xf]
        %v10683 = vld [vmem:[%s10645 + $0x94] sm:$0xf]
        %v10684 = vld [vmem:[%s10645 + $0x98] sm:$0xf]
        %v10685 = vld [vmem:[%s10645 + $0x9c] sm:$0xf]
        %v10686 = vld [vmem:[%s10645 + $0xa0] sm:$0xf]
        %v10687 = vld [vmem:[%s10645 + $0xa4] sm:$0xf]
        %v10688 = vld [vmem:[%s10645 + $0xa8] sm:$0xf]
        %v10689 = vld [vmem:[%s10645 + $0xac] sm:$0xf]
        %v10690 = vld [vmem:[%s10645 + $0xb0] sm:$0xf]
        %v10691 = vld [vmem:[%s10645 + $0xb4] sm:$0xf]
        %v10692 = vld [vmem:[%s10645 + $0xb8] sm:$0xf]
        %v10693 = vld [vmem:[%s10645 + $0xbc] sm:$0xf]
        %v10694 = vld [vmem:[%s10645 + $0xc0] sm:$0xf]
        %v10695 = vld [vmem:[%s10645 + $0xc4] sm:$0xf]
        %v10696 = vld [vmem:[%s10645 + $0xc8] sm:$0xf]
        %v10697 = vld [vmem:[%s10645 + $0xcc] sm:$0xf]
        %v10698 = vld [vmem:[%s10645 + $0xd0] sm:$0xf]
        %v10699 = vld [vmem:[%s10645 + $0xd4] sm:$0xf]
        %v10700 = vld [vmem:[%s10645 + $0xd8] sm:$0xf]
        %v10701 = vld [vmem:[%s10645 + $0xdc] sm:$0xf]
        %v10702 = vld [vmem:[%s10645 + $0xe0] sm:$0xf]
        %v10703 = vld [vmem:[%s10645 + $0xe4] sm:$0xf]
        %v10704 = vld [vmem:[%s10645 + $0xe8] sm:$0xf]
        %v10705 = vld [vmem:[%s10645 + $0xec] sm:$0xf]
        %v10706 = vld [vmem:[%s10645 + $0xf0] sm:$0xf]
        %v10707 = vld [vmem:[%s10645 + $0xf4] sm:$0xf]
        %v10708 = vld [vmem:[%s10645 + $0xf8] sm:$0xf]
        %v10709 = vld [vmem:[%s10645 + $0xfc] sm:$0xf]
        %v10710 = vld [vmem:[%s10645 + $0x100] sm:$0xf]
        %v10711 = vld [vmem:[%s10645 + $0x104] sm:$0xf]
        %v10712 = vld [vmem:[%s10645 + $0x108] sm:$0xf]
        %v10713 = vld [vmem:[%s10645 + $0x10c] sm:$0xf]
        %v10714 = vld [vmem:[%s10645 + $0x110] sm:$0xf]
        %v10715 = vld [vmem:[%s10645 + $0x114] sm:$0xf]
        %v10716 = vld [vmem:[%s10645 + $0x118] sm:$0xf]
        %v10717 = vld [vmem:[%s10645 + $0x11c] sm:$0xf]
        %v10718 = vld [vmem:[%s10645 + $0x120] sm:$0xf]
        %v10719 = vld [vmem:[%s10645 + $0x124] sm:$0xf]
        %v10720 = vld [vmem:[%s10645 + $0x128] sm:$0xf]
        %v10721 = vld [vmem:[%s10645 + $0x12c] sm:$0xf]
        %v10722 = vld [vmem:[%s10645 + $0x130] sm:$0xf]
        %v10723 = vld [vmem:[%s10645 + $0x134] sm:$0xf]
        %v10724 = vld [vmem:[%s10645 + $0x138] sm:$0xf]
        %v10725 = vld [vmem:[%s10645 + $0x13c] sm:$0xf]
        %v10726 = vld [vmem:[%s10645 + $0x140] sm:$0xf]
        %v10727 = vld [vmem:[%s10645 + $0x144] sm:$0xf]
        %v10728 = vld [vmem:[%s10645 + $0x148] sm:$0xf]
        %v10729 = vld [vmem:[%s10645 + $0x14c] sm:$0xf]
        %v10730 = vld [vmem:[%s10645 + $0x150] sm:$0xf]
        %v10731 = vld [vmem:[%s10645 + $0x154] sm:$0xf]
        %v10732 = vld [vmem:[%s10645 + $0x158] sm:$0xf]
        %v10733 = vld [vmem:[%s10645 + $0x15c] sm:$0xf]
        %v10734 = vld [vmem:[%s10645 + $0x160] sm:$0xf]
        %v10735 = vld [vmem:[%s10645 + $0x164] sm:$0xf]
        %v10736 = vld [vmem:[%s10645 + $0x168] sm:$0xf]
        %v10737 = vld [vmem:[%s10645 + $0x16c] sm:$0xf]
        %v10738 = vld [vmem:[%s10645 + $0x170] sm:$0xf]
        %v10739 = vld [vmem:[%s10645 + $0x174] sm:$0xf]
        %v10740 = vld [vmem:[%s10645 + $0x178] sm:$0xf]
        %v10741 = vld [vmem:[%s10645 + $0x17c] sm:$0xf]
        %v10742 = vld [vmem:[%s10645 + $0x180] sm:$0xf]
        %v10743 = vld [vmem:[%s10645 + $0x184] sm:$0xf]
        %v10744 = vld [vmem:[%s10645 + $0x188] sm:$0xf]
        %v10745 = vld [vmem:[%s10645 + $0x18c] sm:$0xf]
        %v10746 = vld [vmem:[%s10645 + $0x190] sm:$0xf]
        %v10747 = vld [vmem:[%s10645 + $0x194] sm:$0xf]
        %v10748 = vld [vmem:[%s10645 + $0x198] sm:$0xf]
        %v10749 = vld [vmem:[%s10645 + $0x19c] sm:$0xf]
        %v10750 = vld [vmem:[%s10645 + $0x1a0] sm:$0xf]
        %v10751 = vld [vmem:[%s10645 + $0x1a4] sm:$0xf]
        %v10752 = vld [vmem:[%s10645 + $0x1a8] sm:$0xf]
        %v10753 = vld [vmem:[%s10645 + $0x1ac] sm:$0xf]
        %v10754 = vld [vmem:[%s10645 + $0x1b0] sm:$0xf]
        %v10755 = vld [vmem:[%s10645 + $0x1b4] sm:$0xf]
        %v10756 = vld [vmem:[%s10645 + $0x1b8] sm:$0xf]
        %v10757 = vld [vmem:[%s10645 + $0x1bc] sm:$0xf]
        %v10758 = vld [vmem:[%s10645 + $0x1c0] sm:$0xf]
        %v10759 = vld [vmem:[%s10645 + $0x1c4] sm:$0xf]
        %v10760 = vld [vmem:[%s10645 + $0x1c8] sm:$0xf]
        %v10761 = vld [vmem:[%s10645 + $0x1cc] sm:$0xf]
        %v10762 = vld [vmem:[%s10645 + $0x1d0] sm:$0xf]
        %v10763 = vld [vmem:[%s10645 + $0x1d4] sm:$0xf]
        %v10764 = vld [vmem:[%s10645 + $0x1d8] sm:$0xf]
        %v10765 = vld [vmem:[%s10645 + $0x1dc] sm:$0xf]
        %v10766 = vld [vmem:[%s10645 + $0x1e0] sm:$0xf]
        %v10767 = vld [vmem:[%s10645 + $0x1e4] sm:$0xf]
        %v10768 = vld [vmem:[%s10645 + $0x1e8] sm:$0xf]
        %v10769 = vld [vmem:[%s10645 + $0x1ec] sm:$0xf]
        %v10770 = vld [vmem:[%s10645 + $0x1f0] sm:$0xf]
        %v10771 = vld [vmem:[%s10645 + $0x1f4] sm:$0xf]
        %v10772 = vld [vmem:[%s10645 + $0x1f8] sm:$0xf]
        %v10773 = vld [vmem:[%s10645 + $0x1fc] sm:$0xf]
        %v10774 = vld [vmem:[%s10645 + $0x200] sm:$0xf]
        %v10775 = vld [vmem:[%s10645 + $0x204] sm:$0xf]
        %v10776 = vld [vmem:[%s10645 + $0x208] sm:$0xf]
        %v10777 = vld [vmem:[%s10645 + $0x20c] sm:$0xf]
        %v10778 = vld [vmem:[%s10645 + $0x210] sm:$0xf]
        %v10779 = vld [vmem:[%s10645 + $0x214] sm:$0xf]
        %v10780 = vld [vmem:[%s10645 + $0x218] sm:$0xf]
        %v10781 = vld [vmem:[%s10645 + $0x21c] sm:$0xf]
        %v10782 = vld [vmem:[%s10645 + $0x220] sm:$0xf]
        %v10783 = vld [vmem:[%s10645 + $0x224] sm:$0xf]
        %v10784 = vld [vmem:[%s10645 + $0x228] sm:$0xf]
        %v10785 = vld [vmem:[%s10645 + $0x22c] sm:$0xf]
        %v10786 = vld [vmem:[%s10645 + $0x230] sm:$0xf]
        %v10787 = vld [vmem:[%s10645 + $0x234] sm:$0xf]
        %v10788 = vld [vmem:[%s10645 + $0x238] sm:$0xf]
        %v10789 = vld [vmem:[%s10645 + $0x23c] sm:$0xf]
        %v10790 = vld [vmem:[%s10645 + $0x240] sm:$0xf]
        %v10791 = vld [vmem:[%s10645 + $0x244] sm:$0xf]
        %v10792 = vld [vmem:[%s10645 + $0x248] sm:$0xf]
        %v10793 = vld [vmem:[%s10645 + $0x24c] sm:$0xf]
        %v10794 = vld [vmem:[%s10645 + $0x250] sm:$0xf]
        %v10795 = vld [vmem:[%s10645 + $0x254] sm:$0xf]
        %v10796 = vld [vmem:[%s10645 + $0x258] sm:$0xf]
        %v10797 = vld [vmem:[%s10645 + $0x25c] sm:$0xf]
        %v10798 = vld [vmem:[%s10645 + $0x260] sm:$0xf]
        %v10799 = vld [vmem:[%s10645 + $0x264] sm:$0xf]
        %v10800 = vld [vmem:[%s10645 + $0x268] sm:$0xf]
        %v10801 = vld [vmem:[%s10645 + $0x26c] sm:$0xf]
        %v10802 = vld [vmem:[%s10645 + $0x270] sm:$0xf]
        %v10803 = vld [vmem:[%s10645 + $0x274] sm:$0xf]
        %v10804 = vld [vmem:[%s10645 + $0x278] sm:$0xf]
        %v10805 = vld [vmem:[%s10645 + $0x27c] sm:$0xf]
        %v10806 = vld [vmem:[%s10645 + $0x280] sm:$0xf]
        %v10807 = vld [vmem:[%s10645 + $0x284] sm:$0xf]
        %v10808 = vld [vmem:[%s10645 + $0x288] sm:$0xf]
        %v10809 = vld [vmem:[%s10645 + $0x28c] sm:$0xf]
        %v10810 = vld [vmem:[%s10645 + $0x290] sm:$0xf]
        %v10811 = vld [vmem:[%s10645 + $0x294] sm:$0xf]
        %v10812 = vld [vmem:[%s10645 + $0x298] sm:$0xf]
        %v10813 = vld [vmem:[%s10645 + $0x29c] sm:$0xf]
        %v10814 = vld [vmem:[%s10645 + $0x2a0] sm:$0xf]
        %v10815 = vld [vmem:[%s10645 + $0x2a4] sm:$0xf]
        %v10816 = vld [vmem:[%s10645 + $0x2a8] sm:$0xf]
        %v10817 = vld [vmem:[%s10645 + $0x2ac] sm:$0xf]
        %v10818 = vld [vmem:[%s10645 + $0x2b0] sm:$0xf]
        %v10819 = vld [vmem:[%s10645 + $0x2b4] sm:$0xf]
        %v10820 = vld [vmem:[%s10645 + $0x2b8] sm:$0xf]
        %v10821 = vld [vmem:[%s10645 + $0x2bc] sm:$0xf]
        %v10822 = vld [vmem:[%s10645 + $0x2c0] sm:$0xf]
        %v10823 = vld [vmem:[%s10645 + $0x2c4] sm:$0xf]
        %v10824 = vld [vmem:[%s10645 + $0x2c8] sm:$0xf]
        %v10825 = vld [vmem:[%s10645 + $0x2cc] sm:$0xf]
        %v10826 = vld [vmem:[%s10645 + $0x2d0] sm:$0xf]
        %v10827 = vld [vmem:[%s10645 + $0x2d4] sm:$0xf]
        %v10828 = vld [vmem:[%s10645 + $0x2d8] sm:$0xf]
        %v10829 = vld [vmem:[%s10645 + $0x2dc] sm:$0xf]
        %v10830 = vld [vmem:[%s10645 + $0x2e0] sm:$0xf]
        %v10831 = vld [vmem:[%s10645 + $0x2e4] sm:$0xf]
        %v10832 = vld [vmem:[%s10645 + $0x2e8] sm:$0xf]
        %v10833 = vld [vmem:[%s10645 + $0x2ec] sm:$0xf]
        %v10834 = vld [vmem:[%s10645 + $0x2f0] sm:$0xf]
        %v10835 = vld [vmem:[%s10645 + $0x2f4] sm:$0xf]
        %v10836 = vld [vmem:[%s10645 + $0x2f8] sm:$0xf]
        %v10837 = vld [vmem:[%s10645 + $0x2fc] sm:$0xf]
        %v10838 = vld [vmem:[%s10645 + $0x300] sm:$0xf]
        %v10839 = vld [vmem:[%s10645 + $0x304] sm:$0xf]
        %v10840 = vld [vmem:[%s10645 + $0x308] sm:$0xf]
        %v10841 = vld [vmem:[%s10645 + $0x30c] sm:$0xf]
        %v10842 = vld [vmem:[%s10645 + $0x310] sm:$0xf]
        %v10843 = vld [vmem:[%s10645 + $0x314] sm:$0xf]
        %v10844 = vld [vmem:[%s10645 + $0x318] sm:$0xf]
        %v10845 = vld [vmem:[%s10645 + $0x31c] sm:$0xf]
        %v10846 = vld [vmem:[%s10645 + $0x320] sm:$0xf]
        %v10847 = vld [vmem:[%s10645 + $0x324] sm:$0xf]
        %v10848 = vld [vmem:[%s10645 + $0x328] sm:$0xf]
        %v10849 = vld [vmem:[%s10645 + $0x32c] sm:$0xf]
        %v10850 = vld [vmem:[%s10645 + $0x330] sm:$0xf]
        %v10851 = vld [vmem:[%s10645 + $0x334] sm:$0xf]
        %v10852 = vld [vmem:[%s10645 + $0x338] sm:$0xf]
        %v10853 = vld [vmem:[%s10645 + $0x33c] sm:$0xf]
        %v10854 = vld [vmem:[%s10645 + $0x340] sm:$0xf]
        %v10855 = vld [vmem:[%s10645 + $0x344] sm:$0xf]
        %v10856 = vld [vmem:[%s10645 + $0x348] sm:$0xf]
        %v10857 = vld [vmem:[%s10645 + $0x34c] sm:$0xf]
        %v10858 = vld [vmem:[%s10645 + $0x350] sm:$0xf]
        %v10859 = vld [vmem:[%s10645 + $0x354] sm:$0xf]
        %v10860 = vld [vmem:[%s10645 + $0x358] sm:$0xf]
        %v10861 = vld [vmem:[%s10645 + $0x35c] sm:$0xf]
        %v10862 = vld [vmem:[%s10645 + $0x360] sm:$0xf]
        %v10863 = vld [vmem:[%s10645 + $0x364] sm:$0xf]
        %v10864 = vld [vmem:[%s10645 + $0x368] sm:$0xf]
        %v10865 = vld [vmem:[%s10645 + $0x36c] sm:$0xf]
        %v10866 = vld [vmem:[%s10645 + $0x370] sm:$0xf]
        %v10867 = vld [vmem:[%s10645 + $0x374] sm:$0xf]
        %v10868 = vld [vmem:[%s10645 + $0x378] sm:$0xf]
        %v10869 = vld [vmem:[%s10645 + $0x37c] sm:$0xf]
        %v10870 = vld [vmem:[%s10645 + $0x380] sm:$0xf]
        %v10871 = vld [vmem:[%s10645 + $0x384] sm:$0xf]
        %v10872 = vld [vmem:[%s10645 + $0x388] sm:$0xf]
        %v10873 = vld [vmem:[%s10645 + $0x38c] sm:$0xf]
        %v10874 = vld [vmem:[%s10645 + $0x390] sm:$0xf]
        %v10875 = vld [vmem:[%s10645 + $0x394] sm:$0xf]
        %v10876 = vld [vmem:[%s10645 + $0x398] sm:$0xf]
        %v10877 = vld [vmem:[%s10645 + $0x39c] sm:$0xf]
        %v10878 = vld [vmem:[%s10645 + $0x3a0] sm:$0xf]
        %v10879 = vld [vmem:[%s10645 + $0x3a4] sm:$0xf]
        %v10880 = vld [vmem:[%s10645 + $0x3a8] sm:$0xf]
        %v10881 = vld [vmem:[%s10645 + $0x3ac] sm:$0xf]
        %v10882 = vld [vmem:[%s10645 + $0x3b0] sm:$0xf]
        %v10883 = vld [vmem:[%s10645 + $0x3b4] sm:$0xf]
        %v10884 = vld [vmem:[%s10645 + $0x3b8] sm:$0xf]
        %v10885 = vld [vmem:[%s10645 + $0x3bc] sm:$0xf]
        %v10886 = vld [vmem:[%s10645 + $0x3c0] sm:$0xf]
        %v10887 = vld [vmem:[%s10645 + $0x3c4] sm:$0xf]
        %v10888 = vld [vmem:[%s10645 + $0x3c8] sm:$0xf]
        %v10889 = vld [vmem:[%s10645 + $0x3cc] sm:$0xf]
        %v10890 = vld [vmem:[%s10645 + $0x3d0] sm:$0xf]
        %v10891 = vld [vmem:[%s10645 + $0x3d4] sm:$0xf]
        %v10892 = vld [vmem:[%s10645 + $0x3d8] sm:$0xf]
        %v10893 = vld [vmem:[%s10645 + $0x3dc] sm:$0xf]
        %v10894 = vld [vmem:[%s10645 + $0x3e0] sm:$0xf]
        %v10895 = vld [vmem:[%s10645 + $0x3e4] sm:$0xf]
        %v10896 = vld [vmem:[%s10645 + $0x3e8] sm:$0xf]
        %v10897 = vld [vmem:[%s10645 + $0x3ec] sm:$0xf]
        %v10898 = vld [vmem:[%s10645 + $0x3f0] sm:$0xf]
        %v10899 = vld [vmem:[%s10645 + $0x3f4] sm:$0xf]
        %v10900 = vld [vmem:[%s10645 + $0x3f8] sm:$0xf]
        %v10901 = vld [vmem:[%s10645 + $0x3fc] sm:$0xf]
        %s10902 = scalar_lea.vmem %s15, 1
        %v10903 = vld [vmem:[%s10902] sm:$0x1]
        %v10905 = vlaneseq
        %v10906 = vshrl.u32 %v10905, 7
        %v10907 = vsub.s32 0, %v10906
        %v10908 = vrot.slane %v10903, %v10907
        %v11166 = vunpack.c.l.b16 %v10646
        %v11167 = vunpack.c.l.b16 %v10647
        %v11168 = vunpack.c.l.b16 %v10648
        %v11169 = vunpack.c.l.b16 %v10649
        %v11170 = vunpack.c.l.b16 %v10650
        %v11171 = vunpack.c.l.b16 %v10651
        %v11172 = vunpack.c.l.b16 %v10652
        %v11173 = vunpack.c.l.b16 %v10653
        %v11174 = vunpack.c.l.b16 %v10654
        %v11175 = vunpack.c.l.b16 %v10655
        %v11176 = vunpack.c.l.b16 %v10656
        %v11177 = vunpack.c.l.b16 %v10657
        %v11178 = vunpack.c.l.b16 %v10658
        %v11179 = vunpack.c.l.b16 %v10659
        %v11180 = vunpack.c.l.b16 %v10660
        %v11181 = vunpack.c.l.b16 %v10661
        %v11182 = vunpack.c.l.b16 %v10662
        %v11183 = vunpack.c.l.b16 %v10663
        %v11184 = vunpack.c.l.b16 %v10664
        %v11185 = vunpack.c.l.b16 %v10665
        %v11186 = vunpack.c.l.b16 %v10666
        %v11187 = vunpack.c.l.b16 %v10667
        %v11188 = vunpack.c.l.b16 %v10668
        %v11189 = vunpack.c.l.b16 %v10669
        %v11190 = vunpack.c.l.b16 %v10670
        %v11191 = vunpack.c.l.b16 %v10671
        %v11192 = vunpack.c.l.b16 %v10672
        %v11193 = vunpack.c.l.b16 %v10673
        %v11194 = vunpack.c.l.b16 %v10674
        %v11195 = vunpack.c.l.b16 %v10675
        %v11196 = vunpack.c.l.b16 %v10676
        %v11197 = vunpack.c.l.b16 %v10677
        %v11198 = vunpack.c.l.b16 %v10678
        %v11199 = vunpack.c.l.b16 %v10679
        %v11200 = vunpack.c.l.b16 %v10680
        %v11201 = vunpack.c.l.b16 %v10681
        %v11202 = vunpack.c.l.b16 %v10682
        %v11203 = vunpack.c.l.b16 %v10683
        %v11204 = vunpack.c.l.b16 %v10684
        %v11205 = vunpack.c.l.b16 %v10685
        %v11206 = vunpack.c.l.b16 %v10686
        %v11207 = vunpack.c.l.b16 %v10687
        %v11208 = vunpack.c.l.b16 %v10688
        %v11209 = vunpack.c.l.b16 %v10689
        %v11210 = vunpack.c.l.b16 %v10690
        %v11211 = vunpack.c.l.b16 %v10691
        %v11212 = vunpack.c.l.b16 %v10692
        %v11213 = vunpack.c.l.b16 %v10693
        %v11214 = vunpack.c.l.b16 %v10694
        %v11215 = vunpack.c.l.b16 %v10695
        %v11216 = vunpack.c.l.b16 %v10696
        %v11217 = vunpack.c.l.b16 %v10697
        %v11218 = vunpack.c.l.b16 %v10698
        %v11219 = vunpack.c.l.b16 %v10699
        %v11220 = vunpack.c.l.b16 %v10700
        %v11221 = vunpack.c.l.b16 %v10701
        %v11222 = vunpack.c.l.b16 %v10702
        %v11223 = vunpack.c.l.b16 %v10703
        %v11224 = vunpack.c.l.b16 %v10704
        %v11225 = vunpack.c.l.b16 %v10705
        %v11226 = vunpack.c.l.b16 %v10706
        %v11227 = vunpack.c.l.b16 %v10707
        %v11228 = vunpack.c.l.b16 %v10708
        %v11229 = vunpack.c.l.b16 %v10709
        %v11230 = vunpack.c.l.b16 %v10710
        %v11231 = vunpack.c.l.b16 %v10711
        %v11232 = vunpack.c.l.b16 %v10712
        %v11233 = vunpack.c.l.b16 %v10713
        %v11234 = vunpack.c.l.b16 %v10714
        %v11235 = vunpack.c.l.b16 %v10715
        %v11236 = vunpack.c.l.b16 %v10716
        %v11237 = vunpack.c.l.b16 %v10717
        %v11238 = vunpack.c.l.b16 %v10718
        %v11239 = vunpack.c.l.b16 %v10719
        %v11240 = vunpack.c.l.b16 %v10720
        %v11241 = vunpack.c.l.b16 %v10721
        %v11242 = vunpack.c.l.b16 %v10722
        %v11243 = vunpack.c.l.b16 %v10723
        %v11244 = vunpack.c.l.b16 %v10724
        %v11245 = vunpack.c.l.b16 %v10725
        %v11246 = vunpack.c.l.b16 %v10726
        %v11247 = vunpack.c.l.b16 %v10727
        %v11248 = vunpack.c.l.b16 %v10728
        %v11249 = vunpack.c.l.b16 %v10729
        %v11250 = vunpack.c.l.b16 %v10730
        %v11251 = vunpack.c.l.b16 %v10731
        %v11252 = vunpack.c.l.b16 %v10732
        %v11253 = vunpack.c.l.b16 %v10733
        %v11254 = vunpack.c.l.b16 %v10734
        %v11255 = vunpack.c.l.b16 %v10735
        %v11256 = vunpack.c.l.b16 %v10736
        %v11257 = vunpack.c.l.b16 %v10737
        %v11258 = vunpack.c.l.b16 %v10738
        %v11259 = vunpack.c.l.b16 %v10739
        %v11260 = vunpack.c.l.b16 %v10740
        %v11261 = vunpack.c.l.b16 %v10741
        %v11262 = vunpack.c.l.b16 %v10742
        %v11263 = vunpack.c.l.b16 %v10743
        %v11264 = vunpack.c.l.b16 %v10744
        %v11265 = vunpack.c.l.b16 %v10745
        %v11266 = vunpack.c.l.b16 %v10746
        %v11267 = vunpack.c.l.b16 %v10747
        %v11268 = vunpack.c.l.b16 %v10748
        %v11269 = vunpack.c.l.b16 %v10749
        %v11270 = vunpack.c.l.b16 %v10750
        %v11271 = vunpack.c.l.b16 %v10751
        %v11272 = vunpack.c.l.b16 %v10752
        %v11273 = vunpack.c.l.b16 %v10753
        %v11274 = vunpack.c.l.b16 %v10754
        %v11275 = vunpack.c.l.b16 %v10755
        %v11276 = vunpack.c.l.b16 %v10756
        %v11277 = vunpack.c.l.b16 %v10757
        %v11278 = vunpack.c.l.b16 %v10758
        %v11279 = vunpack.c.l.b16 %v10759
        %v11280 = vunpack.c.l.b16 %v10760
        %v11281 = vunpack.c.l.b16 %v10761
        %v11282 = vunpack.c.l.b16 %v10762
        %v11283 = vunpack.c.l.b16 %v10763
        %v11284 = vunpack.c.l.b16 %v10764
        %v11285 = vunpack.c.l.b16 %v10765
        %v11286 = vunpack.c.l.b16 %v10766
        %v11287 = vunpack.c.l.b16 %v10767
        %v11288 = vunpack.c.l.b16 %v10768
        %v11289 = vunpack.c.l.b16 %v10769
        %v11290 = vunpack.c.l.b16 %v10770
        %v11291 = vunpack.c.l.b16 %v10771
        %v11292 = vunpack.c.l.b16 %v10772
        %v11293 = vunpack.c.l.b16 %v10773
        %v11294 = vunpack.c.l.b16 %v10774
        %v11295 = vunpack.c.l.b16 %v10775
        %v11296 = vunpack.c.l.b16 %v10776
        %v11297 = vunpack.c.l.b16 %v10777
        %v11298 = vunpack.c.l.b16 %v10778
        %v11299 = vunpack.c.l.b16 %v10779
        %v11300 = vunpack.c.l.b16 %v10780
        %v11301 = vunpack.c.l.b16 %v10781
        %v11302 = vunpack.c.l.b16 %v10782
        %v11303 = vunpack.c.l.b16 %v10783
        %v11304 = vunpack.c.l.b16 %v10784
        %v11305 = vunpack.c.l.b16 %v10785
        %v11306 = vunpack.c.l.b16 %v10786
        %v11307 = vunpack.c.l.b16 %v10787
        %v11308 = vunpack.c.l.b16 %v10788
        %v11309 = vunpack.c.l.b16 %v10789
        %v11310 = vunpack.c.l.b16 %v10790
        %v11311 = vunpack.c.l.b16 %v10791
        %v11312 = vunpack.c.l.b16 %v10792
        %v11313 = vunpack.c.l.b16 %v10793
        %v11314 = vunpack.c.l.b16 %v10794
        %v11315 = vunpack.c.l.b16 %v10795
        %v11316 = vunpack.c.l.b16 %v10796
        %v11317 = vunpack.c.l.b16 %v10797
        %v11318 = vunpack.c.l.b16 %v10798
        %v11319 = vunpack.c.l.b16 %v10799
        %v11320 = vunpack.c.l.b16 %v10800
        %v11321 = vunpack.c.l.b16 %v10801
        %v11322 = vunpack.c.l.b16 %v10802
        %v11323 = vunpack.c.l.b16 %v10803
        %v11324 = vunpack.c.l.b16 %v10804
        %v11325 = vunpack.c.l.b16 %v10805
        %v11326 = vunpack.c.l.b16 %v10806
        %v11327 = vunpack.c.l.b16 %v10807
        %v11328 = vunpack.c.l.b16 %v10808
        %v11329 = vunpack.c.l.b16 %v10809
        %v11330 = vunpack.c.l.b16 %v10810
        %v11331 = vunpack.c.l.b16 %v10811
        %v11332 = vunpack.c.l.b16 %v10812
        %v11333 = vunpack.c.l.b16 %v10813
        %v11334 = vunpack.c.l.b16 %v10814
        %v11335 = vunpack.c.l.b16 %v10815
        %v11336 = vunpack.c.l.b16 %v10816
        %v11337 = vunpack.c.l.b16 %v10817
        %v11338 = vunpack.c.l.b16 %v10818
        %v11339 = vunpack.c.l.b16 %v10819
        %v11340 = vunpack.c.l.b16 %v10820
        %v11341 = vunpack.c.l.b16 %v10821
        %v11342 = vunpack.c.l.b16 %v10822
        %v11343 = vunpack.c.l.b16 %v10823
        %v11344 = vunpack.c.l.b16 %v10824
        %v11345 = vunpack.c.l.b16 %v10825
        %v11346 = vunpack.c.l.b16 %v10826
        %v11347 = vunpack.c.l.b16 %v10827
        %v11348 = vunpack.c.l.b16 %v10828
        %v11349 = vunpack.c.l.b16 %v10829
        %v11350 = vunpack.c.l.b16 %v10830
        %v11351 = vunpack.c.l.b16 %v10831
        %v11352 = vunpack.c.l.b16 %v10832
        %v11353 = vunpack.c.l.b16 %v10833
        %v11354 = vunpack.c.l.b16 %v10834
        %v11355 = vunpack.c.l.b16 %v10835
        %v11356 = vunpack.c.l.b16 %v10836
        %v11357 = vunpack.c.l.b16 %v10837
        %v11358 = vunpack.c.l.b16 %v10838
        %v11359 = vunpack.c.l.b16 %v10839
        %v11360 = vunpack.c.l.b16 %v10840
        %v11361 = vunpack.c.l.b16 %v10841
        %v11362 = vunpack.c.l.b16 %v10842
        %v11363 = vunpack.c.l.b16 %v10843
        %v11364 = vunpack.c.l.b16 %v10844
        %v11365 = vunpack.c.l.b16 %v10845
        %v11366 = vunpack.c.l.b16 %v10846
        %v11367 = vunpack.c.l.b16 %v10847
        %v11368 = vunpack.c.l.b16 %v10848
        %v11369 = vunpack.c.l.b16 %v10849
        %v11370 = vunpack.c.l.b16 %v10850
        %v11371 = vunpack.c.l.b16 %v10851
        %v11372 = vunpack.c.l.b16 %v10852
        %v11373 = vunpack.c.l.b16 %v10853
        %v11374 = vunpack.c.l.b16 %v10854
        %v11375 = vunpack.c.l.b16 %v10855
        %v11376 = vunpack.c.l.b16 %v10856
        %v11377 = vunpack.c.l.b16 %v10857
        %v11378 = vunpack.c.l.b16 %v10858
        %v11379 = vunpack.c.l.b16 %v10859
        %v11380 = vunpack.c.l.b16 %v10860
        %v11381 = vunpack.c.l.b16 %v10861
        %v11382 = vunpack.c.l.b16 %v10862
        %v11383 = vunpack.c.l.b16 %v10863
        %v11384 = vunpack.c.l.b16 %v10864
        %v11385 = vunpack.c.l.b16 %v10865
        %v11386 = vunpack.c.l.b16 %v10866
        %v11387 = vunpack.c.l.b16 %v10867
        %v11388 = vunpack.c.l.b16 %v10868
        %v11389 = vunpack.c.l.b16 %v10869
        %v11390 = vunpack.c.l.b16 %v10870
        %v11391 = vunpack.c.l.b16 %v10871
        %v11392 = vunpack.c.l.b16 %v10872
        %v11393 = vunpack.c.l.b16 %v10873
        %v11394 = vunpack.c.l.b16 %v10874
        %v11395 = vunpack.c.l.b16 %v10875
        %v11396 = vunpack.c.l.b16 %v10876
        %v11397 = vunpack.c.l.b16 %v10877
        %v11398 = vunpack.c.l.b16 %v10878
        %v11399 = vunpack.c.l.b16 %v10879
        %v11400 = vunpack.c.l.b16 %v10880
        %v11401 = vunpack.c.l.b16 %v10881
        %v11402 = vunpack.c.l.b16 %v10882
        %v11403 = vunpack.c.l.b16 %v10883
        %v11404 = vunpack.c.l.b16 %v10884
        %v11405 = vunpack.c.l.b16 %v10885
        %v11406 = vunpack.c.l.b16 %v10886
        %v11407 = vunpack.c.l.b16 %v10887
        %v11408 = vunpack.c.l.b16 %v10888
        %v11409 = vunpack.c.l.b16 %v10889
        %v11410 = vunpack.c.l.b16 %v10890
        %v11411 = vunpack.c.l.b16 %v10891
        %v11412 = vunpack.c.l.b16 %v10892
        %v11413 = vunpack.c.l.b16 %v10893
        %v11414 = vunpack.c.l.b16 %v10894
        %v11415 = vunpack.c.l.b16 %v10895
        %v11416 = vunpack.c.l.b16 %v10896
        %v11417 = vunpack.c.l.b16 %v10897
        %v11418 = vunpack.c.l.b16 %v10898
        %v11419 = vunpack.c.l.b16 %v10899
        %v11420 = vunpack.c.l.b16 %v10900
        %v11421 = vunpack.c.l.b16 %v10901
        %v11422 = vpack.c.b16 %v11167, %v11166
        %v11423 = vpack.c.b16 %v11169, %v11168
        %v11424 = vpack.c.b16 %v11171, %v11170
        %v11425 = vpack.c.b16 %v11173, %v11172
        %v11426 = vpack.c.b16 %v11175, %v11174
        %v11427 = vpack.c.b16 %v11177, %v11176
        %v11428 = vpack.c.b16 %v11179, %v11178
        %v11429 = vpack.c.b16 %v11181, %v11180
        %v11430 = vpack.c.b16 %v11183, %v11182
        %v11431 = vpack.c.b16 %v11185, %v11184
        %v11432 = vpack.c.b16 %v11187, %v11186
        %v11433 = vpack.c.b16 %v11189, %v11188
        %v11434 = vpack.c.b16 %v11191, %v11190
        %v11435 = vpack.c.b16 %v11193, %v11192
        %v11436 = vpack.c.b16 %v11195, %v11194
        %v11437 = vpack.c.b16 %v11197, %v11196
        %v11438 = vpack.c.b16 %v11199, %v11198
        %v11439 = vpack.c.b16 %v11201, %v11200
        %v11440 = vpack.c.b16 %v11203, %v11202
        %v11441 = vpack.c.b16 %v11205, %v11204
        %v11442 = vpack.c.b16 %v11207, %v11206
        %v11443 = vpack.c.b16 %v11209, %v11208
        %v11444 = vpack.c.b16 %v11211, %v11210
        %v11445 = vpack.c.b16 %v11213, %v11212
        %v11446 = vpack.c.b16 %v11215, %v11214
        %v11447 = vpack.c.b16 %v11217, %v11216
        %v11448 = vpack.c.b16 %v11219, %v11218
        %v11449 = vpack.c.b16 %v11221, %v11220
        %v11450 = vpack.c.b16 %v11223, %v11222
        %v11451 = vpack.c.b16 %v11225, %v11224
        %v11452 = vpack.c.b16 %v11227, %v11226
        %v11453 = vpack.c.b16 %v11229, %v11228
        %v11454 = vpack.c.b16 %v11231, %v11230
        %v11455 = vpack.c.b16 %v11233, %v11232
        %v11456 = vpack.c.b16 %v11235, %v11234
        %v11457 = vpack.c.b16 %v11237, %v11236
        %v11458 = vpack.c.b16 %v11239, %v11238
        %v11459 = vpack.c.b16 %v11241, %v11240
        %v11460 = vpack.c.b16 %v11243, %v11242
        %v11461 = vpack.c.b16 %v11245, %v11244
        %v11462 = vpack.c.b16 %v11247, %v11246
        %v11463 = vpack.c.b16 %v11249, %v11248
        %v11464 = vpack.c.b16 %v11251, %v11250
        %v11465 = vpack.c.b16 %v11253, %v11252
        %v11466 = vpack.c.b16 %v11255, %v11254
        %v11467 = vpack.c.b16 %v11257, %v11256
        %v11468 = vpack.c.b16 %v11259, %v11258
        %v11469 = vpack.c.b16 %v11261, %v11260
        %v11470 = vpack.c.b16 %v11263, %v11262
        %v11471 = vpack.c.b16 %v11265, %v11264
        %v11472 = vpack.c.b16 %v11267, %v11266
        %v11473 = vpack.c.b16 %v11269, %v11268
        %v11474 = vpack.c.b16 %v11271, %v11270
        %v11475 = vpack.c.b16 %v11273, %v11272
        %v11476 = vpack.c.b16 %v11275, %v11274
        %v11477 = vpack.c.b16 %v11277, %v11276
        %v11478 = vpack.c.b16 %v11279, %v11278
        %v11479 = vpack.c.b16 %v11281, %v11280
        %v11480 = vpack.c.b16 %v11283, %v11282
        %v11481 = vpack.c.b16 %v11285, %v11284
        %v11482 = vpack.c.b16 %v11287, %v11286
        %v11483 = vpack.c.b16 %v11289, %v11288
        %v11484 = vpack.c.b16 %v11291, %v11290
        %v11485 = vpack.c.b16 %v11293, %v11292
        %v11486 = vpack.c.b16 %v11295, %v11294
        %v11487 = vpack.c.b16 %v11297, %v11296
        %v11488 = vpack.c.b16 %v11299, %v11298
        %v11489 = vpack.c.b16 %v11301, %v11300
        %v11490 = vpack.c.b16 %v11303, %v11302
        %v11491 = vpack.c.b16 %v11305, %v11304
        %v11492 = vpack.c.b16 %v11307, %v11306
        %v11493 = vpack.c.b16 %v11309, %v11308
        %v11494 = vpack.c.b16 %v11311, %v11310
        %v11495 = vpack.c.b16 %v11313, %v11312
        %v11496 = vpack.c.b16 %v11315, %v11314
        %v11497 = vpack.c.b16 %v11317, %v11316
        %v11498 = vpack.c.b16 %v11319, %v11318
        %v11499 = vpack.c.b16 %v11321, %v11320
        %v11500 = vpack.c.b16 %v11323, %v11322
        %v11501 = vpack.c.b16 %v11325, %v11324
        %v11502 = vpack.c.b16 %v11327, %v11326
        %v11503 = vpack.c.b16 %v11329, %v11328
        %v11504 = vpack.c.b16 %v11331, %v11330
        %v11505 = vpack.c.b16 %v11333, %v11332
        %v11506 = vpack.c.b16 %v11335, %v11334
        %v11507 = vpack.c.b16 %v11337, %v11336
        %v11508 = vpack.c.b16 %v11339, %v11338
        %v11509 = vpack.c.b16 %v11341, %v11340
        %v11510 = vpack.c.b16 %v11343, %v11342
        %v11511 = vpack.c.b16 %v11345, %v11344
        %v11512 = vpack.c.b16 %v11347, %v11346
        %v11513 = vpack.c.b16 %v11349, %v11348
        %v11514 = vpack.c.b16 %v11351, %v11350
        %v11515 = vpack.c.b16 %v11353, %v11352
        %v11516 = vpack.c.b16 %v11355, %v11354
        %v11517 = vpack.c.b16 %v11357, %v11356
        %v11518 = vpack.c.b16 %v11359, %v11358
        %v11519 = vpack.c.b16 %v11361, %v11360
        %v11520 = vpack.c.b16 %v11363, %v11362
        %v11521 = vpack.c.b16 %v11365, %v11364
        %v11522 = vpack.c.b16 %v11367, %v11366
        %v11523 = vpack.c.b16 %v11369, %v11368
        %v11524 = vpack.c.b16 %v11371, %v11370
        %v11525 = vpack.c.b16 %v11373, %v11372
        %v11526 = vpack.c.b16 %v11375, %v11374
        %v11527 = vpack.c.b16 %v11377, %v11376
        %v11528 = vpack.c.b16 %v11379, %v11378
        %v11529 = vpack.c.b16 %v11381, %v11380
        %v11530 = vpack.c.b16 %v11383, %v11382
        %v11531 = vpack.c.b16 %v11385, %v11384
        %v11532 = vpack.c.b16 %v11387, %v11386
        %v11533 = vpack.c.b16 %v11389, %v11388
        %v11534 = vpack.c.b16 %v11391, %v11390
        %v11535 = vpack.c.b16 %v11393, %v11392
        %v11536 = vpack.c.b16 %v11395, %v11394
        %v11537 = vpack.c.b16 %v11397, %v11396
        %v11538 = vpack.c.b16 %v11399, %v11398
        %v11539 = vpack.c.b16 %v11401, %v11400
        %v11540 = vpack.c.b16 %v11403, %v11402
        %v11541 = vpack.c.b16 %v11405, %v11404
        %v11542 = vpack.c.b16 %v11407, %v11406
        %v11543 = vpack.c.b16 %v11409, %v11408
        %v11544 = vpack.c.b16 %v11411, %v11410
        %v11545 = vpack.c.b16 %v11413, %v11412
        %v11546 = vpack.c.b16 %v11415, %v11414
        %v11547 = vpack.c.b16 %v11417, %v11416
        %v11548 = vpack.c.b16 %v11419, %v11418
        %v11549 = vpack.c.b16 %v11421, %v11420
        %11678 = vmatprep.subr.bf16.mxu0 0
        %11679 = vmatpush1.bf16.msra.mxu0 %v11422
        %11680 = vmatprep.subr.bf16.mxu0 0
        %11681 = vmatpush1.bf16.msra.mxu0 %v11423
        %11682 = vmatprep.subr.bf16.mxu0 0
        %11683 = vmatpush1.bf16.msra.mxu0 %v11424
        %11684 = vmatprep.subr.bf16.mxu0 0
        %11685 = vmatpush1.bf16.msra.mxu0 %v11425
        %11686 = vmatprep.subr.bf16.mxu0 0
        %11687 = vmatpush1.bf16.msra.mxu0 %v11426
        %11688 = vmatprep.subr.bf16.mxu0 0
        %11689 = vmatpush1.bf16.msra.mxu0 %v11427
        %11690 = vmatprep.subr.bf16.mxu0 0
        %11691 = vmatpush1.bf16.msra.mxu0 %v11428
        %11692 = vmatprep.subr.bf16.mxu0 0
        %11693 = vmatpush1.bf16.msra.mxu0 %v11429
        %11694 = vmatprep.subr.bf16.mxu0 0
        %11695 = vmatpush1.bf16.msra.mxu0 %v11430
        %11696 = vmatprep.subr.bf16.mxu0 0
        %11697 = vmatpush1.bf16.msra.mxu0 %v11431
        %11698 = vmatprep.subr.bf16.mxu0 0
        %11699 = vmatpush1.bf16.msra.mxu0 %v11432
        %11700 = vmatprep.subr.bf16.mxu0 0
        %11701 = vmatpush1.bf16.msra.mxu0 %v11433
        %11702 = vmatprep.subr.bf16.mxu0 0
        %11703 = vmatpush1.bf16.msra.mxu0 %v11434
        %11704 = vmatprep.subr.bf16.mxu0 0
        %11705 = vmatpush1.bf16.msra.mxu0 %v11435
        %11706 = vmatprep.subr.bf16.mxu0 0
        %11707 = vmatpush1.bf16.msra.mxu0 %v11436
        %11708 = vmatprep.subr.bf16.mxu0 0
        %11709 = vmatpush1.bf16.msra.mxu0 %v11437
        %11710 = vmatprep.mubr.bf16.mxu0 %v10630
        %11711 = vmatmul.mubr.bf16.gmra.mrb[0].mxu0 %v10629
        %v11712 = vpop.f32.mrb[0].mxu0
        %v11713 = vadd.f32 %v10908, %v11712
        %v11714 = vpop.f32.mrb[0].mxu0
        %v11715 = vpop.f32.mrb[0].mxu0
        %v11716 = vadd.f32 %v10908, %v11715
        %v11717 = vpop.f32.mrb[0].mxu0
        %11718 = vdwg.mxu0
        %11719 = vmatprep.subr.bf16.mxu0 0
        %11720 = vmatpush1.bf16.msra.mxu0 %v11438
        %11721 = vmatprep.subr.bf16.mxu0 0
        %11722 = vmatpush1.bf16.msra.mxu0 %v11439
        %11723 = vmatprep.subr.bf16.mxu0 0
        %11724 = vmatpush1.bf16.msra.mxu0 %v11440
        %11725 = vmatprep.subr.bf16.mxu0 0
        %11726 = vmatpush1.bf16.msra.mxu0 %v11441
        %11727 = vmatprep.subr.bf16.mxu0 0
        %11728 = vmatpush1.bf16.msra.mxu0 %v11442
        %11729 = vmatprep.subr.bf16.mxu0 0
        %11730 = vmatpush1.bf16.msra.mxu0 %v11443
        %11731 = vmatprep.subr.bf16.mxu0 0
        %11732 = vmatpush1.bf16.msra.mxu0 %v11444
        %11733 = vmatprep.subr.bf16.mxu0 0
        %11734 = vmatpush1.bf16.msra.mxu0 %v11445
        %11735 = vmatprep.subr.bf16.mxu0 0
        %11736 = vmatpush1.bf16.msra.mxu0 %v11446
        %11737 = vmatprep.subr.bf16.mxu0 0
        %11738 = vmatpush1.bf16.msra.mxu0 %v11447
        %11739 = vmatprep.subr.bf16.mxu0 0
        %11740 = vmatpush1.bf16.msra.mxu0 %v11448
        %11741 = vmatprep.subr.bf16.mxu0 0
        %11742 = vmatpush1.bf16.msra.mxu0 %v11449
        %11743 = vmatprep.subr.bf16.mxu0 0
        %11744 = vmatpush1.bf16.msra.mxu0 %v11450
        %11745 = vmatprep.subr.bf16.mxu0 0
        %11746 = vmatpush1.bf16.msra.mxu0 %v11451
        %11747 = vmatprep.subr.bf16.mxu0 0
        %11748 = vmatpush1.bf16.msra.mxu0 %v11452
        %11749 = vmatprep.subr.bf16.mxu0 0
        %11750 = vmatpush1.bf16.msra.mxu0 %v11453
        %11751 = vmatprep.mubr.bf16.mxu0 %v10632
        %11752 = vmatmul.mubr.bf16.gmra.mrb[0].mxu0 %v10631
        %v11753 = vpop.f32.mrb[0].mxu0
        %v11754 = vadd.f32 %v11713, %v11753
        %v11755 = vpop.f32.mrb[0].mxu0
        %v11756 = vpop.f32.mrb[0].mxu0
        %v11757 = vadd.f32 %v11716, %v11756
        %v11758 = vpop.f32.mrb[0].mxu0
        %11759 = vdwg.mxu0
        %11760 = vmatprep.subr.bf16.mxu0 0
        %11761 = vmatpush1.bf16.msra.mxu0 %v11454
        %11762 = vmatprep.subr.bf16.mxu0 0
        %11763 = vmatpush1.bf16.msra.mxu0 %v11455
        %11764 = vmatprep.subr.bf16.mxu0 0
        %11765 = vmatpush1.bf16.msra.mxu0 %v11456
        %11766 = vmatprep.subr.bf16.mxu0 0
        %11767 = vmatpush1.bf16.msra.mxu0 %v11457
        %11768 = vmatprep.subr.bf16.mxu0 0
        %11769 = vmatpush1.bf16.msra.mxu0 %v11458
        %11770 = vmatprep.subr.bf16.mxu0 0
        %11771 = vmatpush1.bf16.msra.mxu0 %v11459
        %11772 = vmatprep.subr.bf16.mxu0 0
        %11773 = vmatpush1.bf16.msra.mxu0 %v11460
        %11774 = vmatprep.subr.bf16.mxu0 0
        %11775 = vmatpush1.bf16.msra.mxu0 %v11461
        %11776 = vmatprep.subr.bf16.mxu0 0
        %11777 = vmatpush1.bf16.msra.mxu0 %v11462
        %11778 = vmatprep.subr.bf16.mxu0 0
        %11779 = vmatpush1.bf16.msra.mxu0 %v11463
        %11780 = vmatprep.subr.bf16.mxu0 0
        %11781 = vmatpush1.bf16.msra.mxu0 %v11464
        %11782 = vmatprep.subr.bf16.mxu0 0
        %11783 = vmatpush1.bf16.msra.mxu0 %v11465
        %11784 = vmatprep.subr.bf16.mxu0 0
        %11785 = vmatpush1.bf16.msra.mxu0 %v11466
        %11786 = vmatprep.subr.bf16.mxu0 0
        %11787 = vmatpush1.bf16.msra.mxu0 %v11467
        %11788 = vmatprep.subr.bf16.mxu0 0
        %11789 = vmatpush1.bf16.msra.mxu0 %v11468
        %11790 = vmatprep.subr.bf16.mxu0 0
        %11791 = vmatpush1.bf16.msra.mxu0 %v11469
        %11792 = vmatprep.mubr.bf16.mxu0 %v10634
        %11793 = vmatmul.mubr.bf16.gmra.mrb[0].mxu0 %v10633
        %v11794 = vpop.f32.mrb[0].mxu0
        %v11795 = vadd.f32 %v11754, %v11794
        %v11796 = vpop.f32.mrb[0].mxu0
        %v11797 = vpop.f32.mrb[0].mxu0
        %v11798 = vadd.f32 %v11757, %v11797
        %v11799 = vpop.f32.mrb[0].mxu0
        %11800 = vdwg.mxu0
        %11801 = vmatprep.subr.bf16.mxu0 0
        %11802 = vmatpush1.bf16.msra.mxu0 %v11470
        %11803 = vmatprep.subr.bf16.mxu0 0
        %11804 = vmatpush1.bf16.msra.mxu0 %v11471
        %11805 = vmatprep.subr.bf16.mxu0 0
        %11806 = vmatpush1.bf16.msra.mxu0 %v11472
        %11807 = vmatprep.subr.bf16.mxu0 0
        %11808 = vmatpush1.bf16.msra.mxu0 %v11473
        %11809 = vmatprep.subr.bf16.mxu0 0
        %11810 = vmatpush1.bf16.msra.mxu0 %v11474
        %11811 = vmatprep.subr.bf16.mxu0 0
        %11812 = vmatpush1.bf16.msra.mxu0 %v11475
        %11813 = vmatprep.subr.bf16.mxu0 0
        %11814 = vmatpush1.bf16.msra.mxu0 %v11476
        %11815 = vmatprep.subr.bf16.mxu0 0
        %11816 = vmatpush1.bf16.msra.mxu0 %v11477
        %11817 = vmatprep.subr.bf16.mxu0 0
        %11818 = vmatpush1.bf16.msra.mxu0 %v11478
        %11819 = vmatprep.subr.bf16.mxu0 0
        %11820 = vmatpush1.bf16.msra.mxu0 %v11479
        %11821 = vmatprep.subr.bf16.mxu0 0
        %11822 = vmatpush1.bf16.msra.mxu0 %v11480
        %11823 = vmatprep.subr.bf16.mxu0 0
        %11824 = vmatpush1.bf16.msra.mxu0 %v11481
        %11825 = vmatprep.subr.bf16.mxu0 0
        %11826 = vmatpush1.bf16.msra.mxu0 %v11482
        %11827 = vmatprep.subr.bf16.mxu0 0
        %11828 = vmatpush1.bf16.msra.mxu0 %v11483
        %11829 = vmatprep.subr.bf16.mxu0 0
        %11830 = vmatpush1.bf16.msra.mxu0 %v11484
        %11831 = vmatprep.subr.bf16.mxu0 0
        %11832 = vmatpush1.bf16.msra.mxu0 %v11485
        %11833 = vmatprep.mubr.bf16.mxu0 %v10636
        %11834 = vmatmul.mubr.bf16.gmra.mrb[0].mxu0 %v10635
        %v11835 = vpop.f32.mrb[0].mxu0
        %v11836 = vadd.f32 %v11795, %v11835
        %v11837 = vpop.f32.mrb[0].mxu0
        %v11838 = vpop.f32.mrb[0].mxu0
        %v11839 = vadd.f32 %v11798, %v11838
        %v11840 = vpop.f32.mrb[0].mxu0
        %11841 = vdwg.mxu0
        %11842 = vmatprep.subr.bf16.mxu0 0
        %11843 = vmatpush1.bf16.msra.mxu0 %v11486
        %11844 = vmatprep.subr.bf16.mxu0 0
        %11845 = vmatpush1.bf16.msra.mxu0 %v11487
        %11846 = vmatprep.subr.bf16.mxu0 0
        %11847 = vmatpush1.bf16.msra.mxu0 %v11488
        %11848 = vmatprep.subr.bf16.mxu0 0
        %11849 = vmatpush1.bf16.msra.mxu0 %v11489
        %11850 = vmatprep.subr.bf16.mxu0 0
        %11851 = vmatpush1.bf16.msra.mxu0 %v11490
        %11852 = vmatprep.subr.bf16.mxu0 0
        %11853 = vmatpush1.bf16.msra.mxu0 %v11491
        %11854 = vmatprep.subr.bf16.mxu0 0
        %11855 = vmatpush1.bf16.msra.mxu0 %v11492
        %11856 = vmatprep.subr.bf16.mxu0 0
        %11857 = vmatpush1.bf16.msra.mxu0 %v11493
        %11858 = vmatprep.subr.bf16.mxu0 0
        %11859 = vmatpush1.bf16.msra.mxu0 %v11494
        %11860 = vmatprep.subr.bf16.mxu0 0
        %11861 = vmatpush1.bf16.msra.mxu0 %v11495
        %11862 = vmatprep.subr.bf16.mxu0 0
        %11863 = vmatpush1.bf16.msra.mxu0 %v11496
        %11864 = vmatprep.subr.bf16.mxu0 0
        %11865 = vmatpush1.bf16.msra.mxu0 %v11497
        %11866 = vmatprep.subr.bf16.mxu0 0
        %11867 = vmatpush1.bf16.msra.mxu0 %v11498
        %11868 = vmatprep.subr.bf16.mxu0 0
        %11869 = vmatpush1.bf16.msra.mxu0 %v11499
        %11870 = vmatprep.subr.bf16.mxu0 0
        %11871 = vmatpush1.bf16.msra.mxu0 %v11500
        %11872 = vmatprep.subr.bf16.mxu0 0
        %11873 = vmatpush1.bf16.msra.mxu0 %v11501
        %11874 = vmatprep.mubr.bf16.mxu0 %v10638
        %11875 = vmatmul.mubr.bf16.gmra.mrb[0].mxu0 %v10637
        %v11876 = vpop.f32.mrb[0].mxu0
        %v11877 = vadd.f32 %v11836, %v11876
        %v11878 = vpop.f32.mrb[0].mxu0
        %v11879 = vpop.f32.mrb[0].mxu0
        %v11880 = vadd.f32 %v11839, %v11879
        %v11881 = vpop.f32.mrb[0].mxu0
        %11882 = vdwg.mxu0
        %11883 = vmatprep.subr.bf16.mxu0 0
        %11884 = vmatpush1.bf16.msra.mxu0 %v11502
        %11885 = vmatprep.subr.bf16.mxu0 0
        %11886 = vmatpush1.bf16.msra.mxu0 %v11503
        %11887 = vmatprep.subr.bf16.mxu0 0
        %11888 = vmatpush1.bf16.msra.mxu0 %v11504
        %11889 = vmatprep.subr.bf16.mxu0 0
        %11890 = vmatpush1.bf16.msra.mxu0 %v11505
        %11891 = vmatprep.subr.bf16.mxu0 0
        %11892 = vmatpush1.bf16.msra.mxu0 %v11506
        %11893 = vmatprep.subr.bf16.mxu0 0
        %11894 = vmatpush1.bf16.msra.mxu0 %v11507
        %11895 = vmatprep.subr.bf16.mxu0 0
        %11896 = vmatpush1.bf16.msra.mxu0 %v11508
        %11897 = vmatprep.subr.bf16.mxu0 0
        %11898 = vmatpush1.bf16.msra.mxu0 %v11509
        %11899 = vmatprep.subr.bf16.mxu0 0
        %11900 = vmatpush1.bf16.msra.mxu0 %v11510
        %11901 = vmatprep.subr.bf16.mxu0 0
        %11902 = vmatpush1.bf16.msra.mxu0 %v11511
        %11903 = vmatprep.subr.bf16.mxu0 0
        %11904 = vmatpush1.bf16.msra.mxu0 %v11512
        %11905 = vmatprep.subr.bf16.mxu0 0
        %11906 = vmatpush1.bf16.msra.mxu0 %v11513
        %11907 = vmatprep.subr.bf16.mxu0 0
        %11908 = vmatpush1.bf16.msra.mxu0 %v11514
        %11909 = vmatprep.subr.bf16.mxu0 0
        %11910 = vmatpush1.bf16.msra.mxu0 %v11515
        %11911 = vmatprep.subr.bf16.mxu0 0
        %11912 = vmatpush1.bf16.msra.mxu0 %v11516
        %11913 = vmatprep.subr.bf16.mxu0 0
        %11914 = vmatpush1.bf16.msra.mxu0 %v11517
        %11915 = vmatprep.mubr.bf16.mxu0 %v10640
        %11916 = vmatmul.mubr.bf16.gmra.mrb[0].mxu0 %v10639
        %v11917 = vpop.f32.mrb[0].mxu0
        %v11918 = vadd.f32 %v11877, %v11917
        %v11919 = vpop.f32.mrb[0].mxu0
        %v11920 = vpop.f32.mrb[0].mxu0
        %v11921 = vadd.f32 %v11880, %v11920
        %v11922 = vpop.f32.mrb[0].mxu0
        %11923 = vdwg.mxu0
        %11924 = vmatprep.subr.bf16.mxu0 0
        %11925 = vmatpush1.bf16.msra.mxu0 %v11518
        %11926 = vmatprep.subr.bf16.mxu0 0
        %11927 = vmatpush1.bf16.msra.mxu0 %v11519
        %11928 = vmatprep.subr.bf16.mxu0 0
        %11929 = vmatpush1.bf16.msra.mxu0 %v11520
        %11930 = vmatprep.subr.bf16.mxu0 0
        %11931 = vmatpush1.bf16.msra.mxu0 %v11521
        %11932 = vmatprep.subr.bf16.mxu0 0
        %11933 = vmatpush1.bf16.msra.mxu0 %v11522
        %11934 = vmatprep.subr.bf16.mxu0 0
        %11935 = vmatpush1.bf16.msra.mxu0 %v11523
        %11936 = vmatprep.subr.bf16.mxu0 0
        %11937 = vmatpush1.bf16.msra.mxu0 %v11524
        %11938 = vmatprep.subr.bf16.mxu0 0
        %11939 = vmatpush1.bf16.msra.mxu0 %v11525
        %11940 = vmatprep.subr.bf16.mxu0 0
        %11941 = vmatpush1.bf16.msra.mxu0 %v11526
        %11942 = vmatprep.subr.bf16.mxu0 0
        %11943 = vmatpush1.bf16.msra.mxu0 %v11527
        %11944 = vmatprep.subr.bf16.mxu0 0
        %11945 = vmatpush1.bf16.msra.mxu0 %v11528
        %11946 = vmatprep.subr.bf16.mxu0 0
        %11947 = vmatpush1.bf16.msra.mxu0 %v11529
        %11948 = vmatprep.subr.bf16.mxu0 0
        %11949 = vmatpush1.bf16.msra.mxu0 %v11530
        %11950 = vmatprep.subr.bf16.mxu0 0
        %11951 = vmatpush1.bf16.msra.mxu0 %v11531
        %11952 = vmatprep.subr.bf16.mxu0 0
        %11953 = vmatpush1.bf16.msra.mxu0 %v11532
        %11954 = vmatprep.subr.bf16.mxu0 0
        %11955 = vmatpush1.bf16.msra.mxu0 %v11533
        %11956 = vmatprep.mubr.bf16.mxu0 %v10642
        %11957 = vmatmul.mubr.bf16.gmra.mrb[0].mxu0 %v10641
        %v11958 = vpop.f32.mrb[0].mxu0
        %v11959 = vadd.f32 %v11918, %v11958
        %v11960 = vpop.f32.mrb[0].mxu0
        %v11961 = vpop.f32.mrb[0].mxu0
        %v11962 = vadd.f32 %v11921, %v11961
        %v11963 = vpop.f32.mrb[0].mxu0
        %11964 = vdwg.mxu0
        %11965 = vmatprep.subr.bf16.mxu0 0
        %11966 = vmatpush1.bf16.msra.mxu0 %v11534
        %11967 = vmatprep.subr.bf16.mxu0 0
        %11968 = vmatpush1.bf16.msra.mxu0 %v11535
        %11969 = vmatprep.subr.bf16.mxu0 0
        %11970 = vmatpush1.bf16.msra.mxu0 %v11536
        %11971 = vmatprep.subr.bf16.mxu0 0
        %11972 = vmatpush1.bf16.msra.mxu0 %v11537
        %11973 = vmatprep.subr.bf16.mxu0 0
        %11974 = vmatpush1.bf16.msra.mxu0 %v11538
        %11975 = vmatprep.subr.bf16.mxu0 0
        %11976 = vmatpush1.bf16.msra.mxu0 %v11539
        %11977 = vmatprep.subr.bf16.mxu0 0
        %11978 = vmatpush1.bf16.msra.mxu0 %v11540
        %11979 = vmatprep.subr.bf16.mxu0 0
        %11980 = vmatpush1.bf16.msra.mxu0 %v11541
        %11981 = vmatprep.subr.bf16.mxu0 0
        %11982 = vmatpush1.bf16.msra.mxu0 %v11542
        %11983 = vmatprep.subr.bf16.mxu0 0
        %11984 = vmatpush1.bf16.msra.mxu0 %v11543
        %11985 = vmatprep.subr.bf16.mxu0 0
        %11986 = vmatpush1.bf16.msra.mxu0 %v11544
        %11987 = vmatprep.subr.bf16.mxu0 0
        %11988 = vmatpush1.bf16.msra.mxu0 %v11545
        %11989 = vmatprep.subr.bf16.mxu0 0
        %11990 = vmatpush1.bf16.msra.mxu0 %v11546
        %11991 = vmatprep.subr.bf16.mxu0 0
        %11992 = vmatpush1.bf16.msra.mxu0 %v11547
        %11993 = vmatprep.subr.bf16.mxu0 0
        %11994 = vmatpush1.bf16.msra.mxu0 %v11548
        %11995 = vmatprep.subr.bf16.mxu0 0
        %11996 = vmatpush1.bf16.msra.mxu0 %v11549
        %11997 = vmatprep.mubr.bf16.mxu0 %v10644
        %11998 = vmatmul.mubr.bf16.gmra.mrb[0].mxu0 %v10643
        %v11999 = vpop.f32.mrb[0].mxu0
        %v12000 = vadd.f32 %v11959, %v11999
        %v12001 = vpop.f32.mrb[0].mxu0
        %v12002 = vpop.f32.mrb[0].mxu0
        %v12003 = vadd.f32 %v11962, %v12002
        %v12004 = vpop.f32.mrb[0].mxu0
        %12005 = vdwg.mxu0
        %v12006 = vadd.f32 %v10065, %v12000
        %v12007 = vadd.f32 %v10066, %v12003
        %s12008 = scalar_lea.vmem %s10, 1
        %v12009 = vld [vmem:[%s12008] sm:$0x1]
        %s12010 = scalar_lea.vmem %s11, 1
        %v12011 = vld [vmem:[%s12010] sm:$0x1]
        %v12012 = vsel %vm686, %v12006, 0.0
        %12013 = vadd.xlane.f32.xlu0 %v12012
        %v12014 = vpop.xlane.xlu0 %12013
        %v12015 = vsel %vm686, %v12007, 0.0
        %12016 = vadd.xlane.f32.xlu0 %v12015
        %v12017 = vpop.xlane.xlu0 %12016
        %v12018 = vmul.f32 %v12014, %v4350
        %v12019 = vmul.f32 %v12017, %v4350
        %v12020 = vsub.f32 %v12006, %v12018
        %v12021 = vsub.f32 %v12007, %v12019
        %v12022 = vmul.f32 %v12020, %v12020
        %v12023 = vmul.f32 %v12021, %v12021
        %v12024 = vsel %vm686, %v12022, 0.0
        %12025 = vadd.xlane.f32.xlu0 %v12024
        %v12026 = vpop.xlane.xlu0 %12025
        %v12027 = vsel %vm686, %v12023, 0.0
        %12028 = vadd.xlane.f32.xlu0 %v12027
        %v12029 = vpop.xlane.xlu0 %12028
        %v12030 = vmul.f32 %v12026, %v4350
        %v12031 = vmul.f32 %v12029, %v4350
        %v12032 = vadd.f32 %v12030, 1e-05
        %v12033 = vadd.f32 %v12031, 1e-05
        %v12034 = vrsqrt.pop %v12032
        %v12035 = vrsqrt.pop %v12033
        %v12036 = vmul.f32 %v12020, %v12034
        %v12037 = vmul.f32 %v12021, %v12035
        %v12039 = vlaneseq
        %v12040 = vshrl.u32 %v12039, 7
        %v12041 = vsub.s32 0, %v12040
        %v12042 = vrot.slane %v12009, %v12041
        %v12044 = vmul.f32 %v12036, %v12042
        %v12045 = vmul.f32 %v12037, %v12042
        %v12047 = vlaneseq
        %v12048 = vshrl.u32 %v12047, 7
        %v12049 = vsub.s32 0, %v12048
        %v12050 = vrot.slane %v12011, %v12049
        %v12052 = vadd.f32 %v12044, %v12050
        %v12053 = vadd.f32 %v12045, %v12050
        %v12054 = vld [vmem:[%s16] sm:$0x1]
        %v12056 = vlaneseq
        %v12057 = vshrl.u32 %v12056, 7
        %v12058 = vsub.s32 0, %v12057
        %v12059 = vrot.slane %v12054, %v12058
        %v12061 = vmul.f32 %v12052, %v12059
        %v12062 = vmul.f32 %v12053, %v12059
        %v12065 = vrot.slane %v12062, 7
        %vm12068 = vcmask 64519
        %v12069 = vsel %vm12068, %v12061, 0.0
        %12070 = vadd.xlane.f32.xlu0 %v12069
        %v12071 = vpop.xlane.xlu0 %12070
        %vm12072 = vcmask 57344
        %v12073 = vsel %vm12072, %v12065, 0.0
        %12074 = vadd.xlane.f32.xlu0 %v12073
        %v12075 = vpop.xlane.xlu0 %12074
        %v12076 = vld [vmem:[#allocation2] sm:$0x1]
        %v12078 = vlaneseq
        %v12079 = vshrl.u32 %v12078, 7
        %v12080 = vsub.s32 0, %v12079
        %v12081 = vrot.slane %v12076, %v12080
        %v12083 = vadd.f32 %v12071, %v12081
        %v12084 = vadd.f32 %v12075, %v12081
        %12086 = vset.pattern.permute.xlu0 0
        %12087 = vperm.xlu0 %12086, %v12083
        %v12088 = vpop.permute.xlu0 %12087
        %12091 = vset.pattern.permute.xlu0 0
        %12092 = vperm.xlu0 %12091, %v12084
        %v12093 = vpop.permute.xlu0 %12092
        %12095 = vst [vmem:[%s571 - $0x7] sm:$0x80] %v12088
        %12096 = vst [vmem:[%s571 + $0x1] sm:$0x1] %v12093
        %s12097 = sand.u32 %s425, 1
        %s12098 = scalar_lea.sflag [#allocation4], %s12097
        %s12099 = sand.u32 %s425, 1
        %s12100 = smul.addr %s12099, 2
        %s12101 = scalar_lea.vmem [#allocation3], %s12100
        // Predicated region
        $region93: #{tpu_custom_call.1} parent=91 // pred_check
          %p12102 = pneg %p435
        $region94: #{tpu_custom_call.1} parent=91 // pred_check_branch
          %12104 = sbr.rel (%p12102) target = $region96
        $region95: #{tpu_custom_call.1} parent=91 // pred_region
          %s12106 = ssub.s32 32, 32
          %12107 = vsyncadd %s12098, %s12106
          %s12108 = smul.addr %s34, 32
          %s12109 = scalar_lea.hbm %s18, %s12108
          %s12111 = sshll.u32 %s12101, 4
          %s12112 = int_to_ptr.vmem [resolvable:$true] %s12111
          %12114 = dma.vmem_to_hbm [thread:$0]  %s12112, 32, %s12109, %s12098
        $region96: #{tpu_custom_call.1} parent=91 // pred_fallthru
          _
      $region92: #{tpu_custom_call.1} parent=5 // pred_fallthru
        _
      %p12115 = scmp.le.s32.totalorder 2, %s29
      // Predicated region
      $region97: #{tpu_custom_call.1} parent=5 // pred_check
        %p12116 = pneg %p12115
      $region98: #{tpu_custom_call.1} parent=5 // pred_check_branch
        %12118 = sbr.rel (%p12116) target = $region100
      $region99: #{tpu_custom_call.1} parent=5 // pred_region
        %s12119 = ssub.s32 %s29, 2
        // Predicated region
        $region101: #{tpu_custom_call.1} parent=99 // pred_check
          %p12120 = pneg %p441
        $region102: #{tpu_custom_call.1} parent=99 // pred_check_branch
          %12122 = sbr.rel (%p12120) target = $region104
        $region103: #{tpu_custom_call.1} parent=99 // pred_region
          %s12123 = sand.u32 %s426, 1
          %s12124 = scalar_lea.sflag [#allocation4], %s12123
          %s12125 = sand.u32 %s426, 1
          %s12126 = smul.addr %s12125, 2
          %s12127 = scalar_lea.vmem [#allocation3], %s12126
          %12128 = dma.done %s12124, 32
        $region104: #{tpu_custom_call.1} parent=99 // pred_fallthru
          _
      $region100: #{tpu_custom_call.1} parent=5 // pred_fallthru
        _
    $region6: #{tpu_custom_call.1} parent=1 // loop_footer
      %s33 = sadd.s32 1, %s29
    $region7: #{tpu_custom_call.1} parent=1 // loop_footer_branch
      %28 = sbr.rel target = $region3
    $region8: #{tpu_custom_call.1} parent=1 // loop_exit
      _
    %12129 = vsyncpa [#allocation4], 1
    %s12130 = scalar_lea.sflag [#allocation4], 1
    %12131 = vsyncpa %s12130, 1

</llo_original>
